<compile_context>
chip_gen: v6e
topology: v6e:2x2x1
jax: 0.10.0
libtpu: 0.0.40
codegen_flags: <defaults>
</compile_context>

<pallas_src>
import jax
import jax.numpy as jnp
import numpy as np
from jax.experimental import pallas as pl
from jax.experimental.pallas import tpu as pltpu


# ----------------------------------------------------------------------------
# One-time weight preprocessing (runs once, outside the jitted forward)
# ----------------------------------------------------------------------------
def _conv_lane_toeplitz(weight, L):
    """weight: (Cout, Cin, 3, 3) in PyTorch layout.

    Activations are 2-D slabs with rows=(batch, padded_x) and lanes=(y, chan).
    For each horizontal tap kx return a (L*Cin, L*Cout) block-Toeplitz matrix
    over the lane (height) axis with the vertical SAME padding folded in
    (out-of-range taps are zero), so that row-slab @ mat[kx] accumulates that
    tap's contribution to the conv output laid out as lanes=(y, cout).
    """
    Cout, Cin, KH, KW = weight.shape
    w = np.asarray(weight, np.float32)
    mats = []
    for kx in range(KW):
        m = np.zeros((L * Cin, L * Cout), np.float32)
        for ky in range(KH):
            # ones at (y_in, y_out) with y_in = y_out + ky - 1 (SAME pad folded)
            shift = np.eye(L, L, k=1 - ky, dtype=np.float32)
            m += np.kron(shift, w[:, :, ky, kx].T)
        mats.append(m)
    return np.stack(mats, axis=0)


def prepare_params(params, B, H, W):
    """Precompute kernel-side layouts: lane-Toeplitz conv matrices (BN scale
    folded into conv1), lane-tiled affines, 0/1 pooling selection matrices,
    the interior-row mask, and bf16 transposed FC weights."""
    p = params
    C = p["conv1_w"].shape[0]
    assert p["conv1_w"].shape[2] == 3 and p["conv1_w"].shape[3] == 3
    assert H % 2 == 0 and W % 2 == 0
    assert p["fc1_w"].shape[0] == W // 2, "fc1 in_features must equal pooled W"
    Wpad = W + 2
    Hp, Wp = H // 2, W // 2
    M = B * Hp * C
    nrows = B * Wpad - 2

    m1 = _conv_lane_toeplitz(p["conv1_w"], H)          # (3, H*Cin, H*C)
    m2 = _conv_lane_toeplitz(p["conv2_w"], H)          # (3, H*C,  H*C)

    # Fold BN scale into m1 columns; fold conv1 bias into the BN shift.
    gamma = np.asarray(p["bn1_gamma"], np.float32)
    var = np.asarray(p["bn1_var"], np.float32)
    s = gamma / np.sqrt(var + 1e-5)
    m1 = m1 * np.tile(s, H)[None, None, :]
    shift = (np.asarray(p["conv1_b"], np.float32) * s
             + np.asarray(p["bn1_beta"], np.float32)
             - np.asarray(p["bn1_mean"], np.float32) * s)
    t1 = np.tile(shift, H).reshape(1, H * C)
    cb2 = np.tile(np.asarray(p["conv2_b"], np.float32), H).reshape(1, H * C)

    # Interior-row mask (zeroes the junk rows between batches after conv1).
    rmask = np.zeros((nrows, 1), np.float32)
    for b in range(B):
        rmask[b * Wpad: b * Wpad + W, 0] = 1.0

    # 0/1 pooling selection matrices (applied on the MXU inside the kernel):
    #   rows:  pick conv row b*Wpad + 2*px  -> pall row px
    #   lanes: pick lane 2*py*C + c         -> pall lane (b*Hp + py)*C + c
    rsel = np.zeros((B, 8, nrows - 1), np.float32)
    csel = np.zeros((B, (H - 1) * C, M), np.float32)
    for b in range(B):
        for px in range(Wp):
            rsel[b, px, b * Wpad + 2 * px] = 1.0
        for py in range(Hp):
            for c in range(C):
                csel[b, 2 * py * C + c, (b * Hp + py) * C + c] = 1.0

    # Transposed FC weights (bf16), fc1 padded from Wp to 8 contraction rows.
    w1 = np.zeros((8, p["fc1_w"].shape[1]), np.float32)
    w1[:Wp] = np.asarray(p["fc1_w"], np.float32)

    return {
        "m1": jnp.asarray(m1), "t1": jnp.asarray(t1),
        "m2": jnp.asarray(m2), "cb2": jnp.asarray(cb2),
        "rmask": jnp.asarray(rmask),
        "rsel": jnp.asarray(rsel), "csel": jnp.asarray(csel),
        "w1t": jnp.asarray(w1.T, jnp.bfloat16),                       # (2048, 8)
        "b1": jnp.asarray(np.asarray(p["fc1_b"]).reshape(-1, 1)),     # (2048, 1)
        "w2t": jnp.asarray(np.asarray(p["fc2_w"]).T, jnp.bfloat16),   # (512, 2048)
        "b2": jnp.asarray(np.asarray(p["fc2_b"]).reshape(-1, 1)),     # (512, 1)
        "w3t": jnp.asarray(np.asarray(p["fc3_w"]).T, jnp.bfloat16),   # (8, 512)
        "b3": jnp.asarray(np.asarray(p["fc3_b"]).reshape(-1, 1)),     # (8, 1)
    }


# ----------------------------------------------------------------------------
# The fused kernel
# ----------------------------------------------------------------------------
def _fused_forward(xp2d, prep, *, B, H, W, C):
    Wpad = W + 2
    Hp = H // 2
    M = B * Hp * C                     # fc columns, ordered (b, pooled_y, c)
    nrows = B * Wpad - 2               # conv output rows, ordered (b, x)+pads
    LC = H * C                         # conv lane width (y, c)
    Nout, K3 = prep["w3t"].shape
    N1 = prep["w1t"].shape[0]
    N2, K2 = prep["w2t"].shape

    def kernel(xp_ref, m1_ref, t1_ref, rmask_ref, m2_ref, cb2_ref,
               rsel_ref, csel_ref, w1t_ref, b1_ref, w2t_hbm_ref, b2_ref,
               w3t_ref, b3_ref, out_ref, xpad2_ref, w2_vmem, w2_sem):
        # Kick off the (dominant) fc2 weight fetch immediately so its
        # HBM->VMEM DMA overlaps the whole conv / pool / fc1 phase.
        w2_copy = pltpu.make_async_copy(w2t_hbm_ref, w2_vmem, w2_sem)
        w2_copy.start()

        # conv2 input slab: zero rows give horizontal SAME padding and the
        # separation between batches.
        xpad2_ref[...] = jnp.zeros_like(xpad2_ref)

        # ---- conv1 (Cin -> C) + folded BN + ReLU, batched over B ----------
        acc = jnp.dot(xp_ref[0:nrows, :], m1_ref[0],
                      preferred_element_type=jnp.float32)
        for kx in range(1, 3):
            acc = acc + jnp.dot(xp_ref[kx:kx + nrows, :], m1_ref[kx],
                                preferred_element_type=jnp.float32)
        y1 = jnp.maximum(acc + t1_ref[...], 0.0) * rmask_ref[...]
        xpad2_ref[1:1 + nrows, :] = y1          # single lane-dense store

        # ---- conv2 (C -> C) + bias + ReLU, batched over B ------------------
        acc = jnp.dot(xpad2_ref[0:nrows, :], m2_ref[0],
                      preferred_element_type=jnp.float32)
        for kx in range(1, 3):
            acc = acc + jnp.dot(xpad2_ref[kx:kx + nrows, :], m2_ref[kx],
                                preferred_element_type=jnp.float32)
        y2 = jnp.maximum(acc + cb2_ref[...], 0.0)           # (nrows, H*C)

        # ---- fused 2x2 maxpool -> pall (8, M), built as a value ------------
        zl = jnp.maximum(y2[:, :(H - 1) * C], y2[:, C:])    # height-pair max
        zr = jnp.maximum(zl[:-1, :], zl[1:, :])             # width-pair max
        pall = jnp.dot(
            jnp.dot(rsel_ref[0], zr, preferred_element_type=jnp.float32),
            csel_ref[0], preferred_element_type=jnp.float32)
        for b in range(1, B):
            pall = pall + jnp.dot(
                jnp.dot(rsel_ref[b], zr, preferred_element_type=jnp.float32),
                csel_ref[b], preferred_element_type=jnp.float32)

        # ---- fc stack: transposed, bf16 weights/activations, f32 accum -----
        h = jnp.dot(w1t_ref[...], pall.astype(jnp.bfloat16),
                    preferred_element_type=jnp.float32)      # (2048, M)
        h = jnp.maximum(h + b1_ref[...], 0.0)
        w2_copy.wait()                                       # fc2 weights ready
        h = jnp.dot(w2_vmem[...], h.astype(jnp.bfloat16),
                    preferred_element_type=jnp.float32)      # (512, M)
        h = jnp.maximum(h + b2_ref[...], 0.0)
        out_ref[...] = (jnp.dot(w3t_ref[...], h.astype(jnp.bfloat16),
                                preferred_element_type=jnp.float32)
                        + b3_ref[...])                       # (8, M)

    vmem = pl.BlockSpec(memory_space=pltpu.MemorySpace.VMEM)
    hbm = pl.BlockSpec(memory_space=pl.ANY)

    inputs = (xp2d, prep["m1"], prep["t1"], prep["rmask"], prep["m2"],
              prep["cb2"], prep["rsel"], prep["csel"], prep["w1t"], prep["b1"],
              prep["w2t"], prep["b2"], prep["w3t"], prep["b3"])
    flops = (2 * M * (N1 * 8 + N2 * K2 + Nout * K3)
             + 2 * 3 * nrows * LC * (xp2d.shape[1] + LC))
    bytes_accessed = int(sum(a.size * a.dtype.itemsize for a in inputs)
                         + Nout * M * 4)

    return pl.pallas_call(
        kernel,
        out_shape=jax.ShapeDtypeStruct((Nout, M), jnp.float32),
        in_specs=[vmem] * 10 + [hbm] + [vmem] * 3,
        out_specs=vmem,
        scratch_shapes=[
            pltpu.VMEM((B * Wpad, LC), jnp.float32),      # padded conv2 input
            pltpu.VMEM((N2, K2), jnp.bfloat16),           # fc2 weights (DMA dst)
            pltpu.SemaphoreType.DMA,
        ],
        cost_estimate=pl.CostEstimate(flops=int(flops), transcendentals=0,
                                      bytes_accessed=bytes_accessed),
    )(*inputs)


# ----------------------------------------------------------------------------
# Host wrapper: one pallas_call + trivial layout plumbing
# ----------------------------------------------------------------------------
def mario_buttons_forward(x, prep):
    """x: (B, Cin, H, W) f32 -> (B, 16, H//2, 8); eval-mode forward of
    first_conv followed by fc_layers (broken residual stack skipped)."""
    B, Cin, H, W = x.shape
    C = prep["cb2"].shape[1] // H
    Hp = H // 2
    Nout = prep["w3t"].shape[0]

    # rows = (b, padded_x), lanes = (y, cin); horizontal pad rows are zeros,
    # vertical pad is folded into the Toeplitz matrices.  (~1 KB of data.)
    x_bwhc = jnp.transpose(x, (0, 3, 2, 1))
    xp2d = jnp.pad(x_bwhc, ((0, 0), (1, 1), (0, 0), (0, 0))).reshape(
        B * (W + 2), H * Cin)

    outT = _fused_forward(xp2d, prep, B=B, H=H, W=W, C=C)   # (8, B*Hp*C)
    out = outT.T.reshape(B, Hp, C, Nout)                    # columns = (b,py,c)
    return jnp.transpose(out, (0, 2, 1, 3))                 # (B, C, Hp, 8)


# ----------------------------------------------------------------------------
# Pure-JAX reference of the same (eval-mode) forward, for a numerical check
# ----------------------------------------------------------------------------
def _reference_forward(x, params):
    p = params
    hi = jax.lax.Precision.HIGHEST
    z = jax.lax.conv_general_dilated(
        x, p["conv1_w"], (1, 1), "SAME",
        dimension_numbers=("NCHW", "OIHW", "NCHW"),
        precision=hi) + p["conv1_b"][None, :, None, None]
    s = p["bn1_gamma"] / jnp.sqrt(p["bn1_var"] + 1e-5)
    t = p["bn1_beta"] - p["bn1_mean"] * s
    z = jnp.maximum(z * s[None, :, None, None] + t[None, :, None, None], 0.0)
    z = jax.lax.conv_general_dilated(
        z, p["conv2_w"], (1, 1), "SAME",
        dimension_numbers=("NCHW", "OIHW", "NCHW"),
        precision=hi) + p["conv2_b"][None, :, None, None]
    z = jnp.maximum(z, 0.0)
    z = jax.lax.reduce_window(z, -jnp.inf, jax.lax.max,
                              (1, 1, 2, 2), (1, 1, 2, 2), "VALID")
    h = jnp.maximum(jnp.einsum("bchw,wn->bchn", z, p["fc1_w"],
                               precision=hi) + p["fc1_b"], 0.0)
    h = jnp.maximum(jnp.einsum("bchn,nm->bchm", h, p["fc2_w"],
                               precision=hi) + p["fc2_b"], 0.0)
    return jnp.einsum("bchm,mo->bcho", h, p["fc3_w"], precision=hi) + p["fc3_b"]


def init_params(key):
    ks = jax.random.split(key, 12)
    f32 = jnp.float32
    return {
        "conv1_w": 0.20 * jax.random.normal(ks[0], (16, 1, 3, 3), f32),
        "conv1_b": 0.10 * jax.random.normal(ks[1], (16,), f32),
        "bn1_gamma": 1.0 + 0.10 * jax.random.normal(ks[2], (16,), f32),
        "bn1_beta": 0.10 * jax.random.normal(ks[3], (16,), f32),
        "bn1_mean": jnp.zeros((16,), f32),
        "bn1_var": jnp.ones((16,), f32),
        "conv2_w": 0.08 * jax.random.normal(ks[4], (16, 16, 3, 3), f32),
        "conv2_b": 0.10 * jax.random.normal(ks[5], (16,), f32),
        "fc1_w": 0.30 * jax.random.normal(ks[6], (5, 2048), f32),
        "fc1_b": 0.05 * jax.random.normal(ks[7], (2048,), f32),
        "fc2_w": 0.02 * jax.random.normal(ks[8], (2048, 512), f32),
        "fc2_b": 0.05 * jax.random.normal(ks[9], (512,), f32),
        "fc3_w": 0.04 * jax.random.normal(ks[10], (512, 8), f32),
        "fc3_b": 0.05 * jax.random.normal(ks[11], (8,), f32),
    }


if __name__ == "__main__":
    key = jax.random.PRNGKey(0)
    k_params, k_x = jax.random.split(key)
    params = init_params(k_params)

    # group_size=1 input channel; H=W=10 so the pooled width is 5 == (2 ^ 7),
    # matching nn.Linear(in_features=2 ^ res_blocks, ...).
    x = jax.random.normal(k_x, (2, 1, 10, 10), jnp.float32)
    B, Cin, H, W = x.shape

    prep = prepare_params(params, B=B, H=H, W=W)   # one-time weight preprocessing
    fwd = jax.jit(mario_buttons_forward)
    out = jax.block_until_ready(fwd(x, prep))

    assert out.shape == (2, 16, 5, 8), out.shape
    assert out.dtype == jnp.float32
    assert bool(jnp.all(jnp.isfinite(out)))

    # Numerical check against the pure-JAX/XLA reference of the same forward
    # (FC stack runs with bf16 weights/activations + f32 accumulation).
    ref = _reference_forward(x, params)
    assert bool(jnp.allclose(out, ref, atol=5e-2, rtol=5e-2)), float(
        jnp.max(jnp.abs(out - ref)))

    print("KERNEL_OK")
</pallas_src>

<mosaic_0001>
module attributes {stable_mosaic.version = 11 : i64} {
  func.func @kernel(%arg0: memref<24x10xf32, #tpu.memory_space<vmem>>, %arg1: memref<3x10x160xf32, #tpu.memory_space<vmem>>, %arg2: memref<1x160xf32, #tpu.memory_space<vmem>>, %arg3: memref<22x1xf32, #tpu.memory_space<vmem>>, %arg4: memref<3x160x160xf32, #tpu.memory_space<vmem>>, %arg5: memref<1x160xf32, #tpu.memory_space<vmem>>, %arg6: memref<2x8x21xf32, #tpu.memory_space<vmem>>, %arg7: memref<2x144x160xf32, #tpu.memory_space<vmem>>, %arg8: memref<2048x8xbf16, #tpu.memory_space<vmem>>, %arg9: memref<2048x1xf32, #tpu.memory_space<vmem>>, %arg10: memref<512x2048xbf16, #tpu.memory_space<any>>, %arg11: memref<512x1xf32, #tpu.memory_space<vmem>>, %arg12: memref<8x512xbf16, #tpu.memory_space<vmem>>, %arg13: memref<8x1xf32, #tpu.memory_space<vmem>>, %arg14: memref<8x160xf32, #tpu.memory_space<vmem>>, %arg15: memref<24x160xf32, #tpu.memory_space<vmem>>, %arg16: memref<512x2048xbf16, #tpu.memory_space<vmem>>, %arg17: memref<!tpu.dma_semaphore, #tpu.memory_space<semaphore_mem>>) attributes {dimension_semantics = [], scalar_prefetch = 0 : i64, scratch_operands = 3 : i64, tpu.core_type = #tpu.core_type<tc>} {
    tpu.enqueue_dma source(%arg10 : memref<512x2048xbf16, #tpu.memory_space<any>>) target(%arg16 : memref<512x2048xbf16, #tpu.memory_space<vmem>>) target_semaphore(%arg17 : memref<!tpu.dma_semaphore, #tpu.memory_space<semaphore_mem>>)
    %cst = arith.constant 0.000000e+00 : f32
    %0 = vector.broadcast %cst : f32 to vector<24x160xf32>
    %c0 = arith.constant 0 : index
    %c0_0 = arith.constant 0 : index
    %1 = vector.load %arg15[%c0, %c0_0] : memref<24x160xf32, #tpu.memory_space<vmem>>, vector<24x160xf32>
    tpu.vector_store %arg15[%c0, %c0_0], %0 {strides = array<i32>} : memref<24x160xf32, #tpu.memory_space<vmem>>, vector<24x160xf32>,
    %c0_1 = arith.constant 0 : index
    %c0_2 = arith.constant 0 : index
    %2 = vector.load %arg0[%c0_1, %c0_2] : memref<24x10xf32, #tpu.memory_space<vmem>>, vector<22x10xf32>
    %c0_3 = arith.constant 0 : index
    %c0_4 = arith.constant 0 : index
    %c0_5 = arith.constant 0 : index
    %3 = vector.load %arg1[%c0_3, %c0_4, %c0_5] : memref<3x10x160xf32, #tpu.memory_space<vmem>>, vector<1x10x160xf32>
    %4 = vector.shape_cast %3 : vector<1x10x160xf32> to vector<10x160xf32>
    %cst_6 = arith.constant dense<0.000000e+00> : vector<22x160xf32>
    %5 = tpu.matmul %2, %4, %cst_6 {dimension_numbers = #tpu.dot_dimension_numbers<[1], [0], [0], [1], [0, 0, 1, 1], [], []>} : vector<22x10xf32>, vector<10x160xf32>, vector<22x160xf32> -> vector<22x160xf32>
    %c1 = arith.constant 1 : index
    %c0_7 = arith.constant 0 : index
    %6 = vector.load %arg0[%c1, %c0_7] : memref<24x10xf32, #tpu.memory_space<vmem>>, vector<22x10xf32>
    %c1_8 = arith.constant 1 : index
    %c0_9 = arith.constant 0 : index
    %c0_10 = arith.constant 0 : index
    %7 = vector.load %arg1[%c1_8, %c0_9, %c0_10] : memref<3x10x160xf32, #tpu.memory_space<vmem>>, vector<1x10x160xf32>
    %8 = vector.shape_cast %7 : vector<1x10x160xf32> to vector<10x160xf32>
    %cst_11 = arith.constant dense<0.000000e+00> : vector<22x160xf32>
    %9 = tpu.matmul %6, %8, %cst_11 {dimension_numbers = #tpu.dot_dimension_numbers<[1], [0], [0], [1], [0, 0, 1, 1], [], []>} : vector<22x10xf32>, vector<10x160xf32>, vector<22x160xf32> -> vector<22x160xf32>
    %10 = arith.addf %5, %9 : vector<22x160xf32>
    %c2 = arith.constant 2 : index
    %c0_12 = arith.constant 0 : index
    %11 = vector.load %arg0[%c2, %c0_12] : memref<24x10xf32, #tpu.memory_space<vmem>>, vector<22x10xf32>
    %c2_13 = arith.constant 2 : index
    %c0_14 = arith.constant 0 : index
    %c0_15 = arith.constant 0 : index
    %12 = vector.load %arg1[%c2_13, %c0_14, %c0_15] : memref<3x10x160xf32, #tpu.memory_space<vmem>>, vector<1x10x160xf32>
    %13 = vector.shape_cast %12 : vector<1x10x160xf32> to vector<10x160xf32>
    %cst_16 = arith.constant dense<0.000000e+00> : vector<22x160xf32>
    %14 = tpu.matmul %11, %13, %cst_16 {dimension_numbers = #tpu.dot_dimension_numbers<[1], [0], [0], [1], [0, 0, 1, 1], [], []>} : vector<22x10xf32>, vector<10x160xf32>, vector<22x160xf32> -> vector<22x160xf32>
    %15 = arith.addf %10, %14 : vector<22x160xf32>
    %c0_17 = arith.constant 0 : index
    %c0_18 = arith.constant 0 : index
    %16 = vector.load %arg2[%c0_17, %c0_18] : memref<1x160xf32, #tpu.memory_space<vmem>>, vector<1x160xf32>
    %17 = vector.broadcast %16 : vector<1x160xf32> to vector<22x160xf32>
    %18 = arith.addf %15, %17 : vector<22x160xf32>
    %cst_19 = arith.constant 0.000000e+00 : f32
    %19 = vector.broadcast %cst_19 : f32 to vector<22x160xf32>
    %20 = arith.maximumf %18, %19 : vector<22x160xf32>
    %c0_20 = arith.constant 0 : index
    %c0_21 = arith.constant 0 : index
    %21 = vector.load %arg3[%c0_20, %c0_21] : memref<22x1xf32, #tpu.memory_space<vmem>>, vector<22x1xf32>
    %22 = vector.broadcast %21 : vector<22x1xf32> to vector<22x160xf32>
    %23 = arith.mulf %20, %22 : vector<22x160xf32>
    %c1_22 = arith.constant 1 : index
    %c0_23 = arith.constant 0 : index
    %24 = vector.load %arg15[%c1_22, %c0_23] : memref<24x160xf32, #tpu.memory_space<vmem>>, vector<22x160xf32>
    tpu.vector_store %arg15[%c1_22, %c0_23], %23 {strides = array<i32>} : memref<24x160xf32, #tpu.memory_space<vmem>>, vector<22x160xf32>,
    %c0_24 = arith.constant 0 : index
    %c0_25 = arith.constant 0 : index
    %25 = vector.load %arg15[%c0_24, %c0_25] : memref<24x160xf32, #tpu.memory_space<vmem>>, vector<22x160xf32>
    %c0_26 = arith.constant 0 : index
    %c0_27 = arith.constant 0 : index
    %c0_28 = arith.constant 0 : index
    %26 = vector.load %arg4[%c0_26, %c0_27, %c0_28] : memref<3x160x160xf32, #tpu.memory_space<vmem>>, vector<1x160x160xf32>
    %27 = vector.shape_cast %26 : vector<1x160x160xf32> to vector<160x160xf32>
    %cst_29 = arith.constant dense<0.000000e+00> : vector<22x160xf32>
    %28 = tpu.matmul %25, %27, %cst_29 {dimension_numbers = #tpu.dot_dimension_numbers<[1], [0], [0], [1], [0, 0, 1, 1], [], []>} : vector<22x160xf32>, vector<160x160xf32>, vector<22x160xf32> -> vector<22x160xf32>
    %c1_30 = arith.constant 1 : index
    %c0_31 = arith.constant 0 : index
    %29 = vector.load %arg15[%c1_30, %c0_31] : memref<24x160xf32, #tpu.memory_space<vmem>>, vector<22x160xf32>
    %c1_32 = arith.constant 1 : index
    %c0_33 = arith.constant 0 : index
    %c0_34 = arith.constant 0 : index
    %30 = vector.load %arg4[%c1_32, %c0_33, %c0_34] : memref<3x160x160xf32, #tpu.memory_space<vmem>>, vector<1x160x160xf32>
    %31 = vector.shape_cast %30 : vector<1x160x160xf32> to vector<160x160xf32>
    %cst_35 = arith.constant dense<0.000000e+00> : vector<22x160xf32>
    %32 = tpu.matmul %29, %31, %cst_35 {dimension_numbers = #tpu.dot_dimension_numbers<[1], [0], [0], [1], [0, 0, 1, 1], [], []>} : vector<22x160xf32>, vector<160x160xf32>, vector<22x160xf32> -> vector<22x160xf32>
    %33 = arith.addf %28, %32 : vector<22x160xf32>
    %c2_36 = arith.constant 2 : index
    %c0_37 = arith.constant 0 : index
    %34 = vector.load %arg15[%c2_36, %c0_37] : memref<24x160xf32, #tpu.memory_space<vmem>>, vector<22x160xf32>
    %c2_38 = arith.constant 2 : index
    %c0_39 = arith.constant 0 : index
    %c0_40 = arith.constant 0 : index
    %35 = vector.load %arg4[%c2_38, %c0_39, %c0_40] : memref<3x160x160xf32, #tpu.memory_space<vmem>>, vector<1x160x160xf32>
    %36 = vector.shape_cast %35 : vector<1x160x160xf32> to vector<160x160xf32>
    %cst_41 = arith.constant dense<0.000000e+00> : vector<22x160xf32>
    %37 = tpu.matmul %34, %36, %cst_41 {dimension_numbers = #tpu.dot_dimension_numbers<[1], [0], [0], [1], [0, 0, 1, 1], [], []>} : vector<22x160xf32>, vector<160x160xf32>, vector<22x160xf32> -> vector<22x160xf32>
    %38 = arith.addf %33, %37 : vector<22x160xf32>
    %c0_42 = arith.constant 0 : index
    %c0_43 = arith.constant 0 : index
    %39 = vector.load %arg5[%c0_42, %c0_43] : memref<1x160xf32, #tpu.memory_space<vmem>>, vector<1x160xf32>
    %40 = vector.broadcast %39 : vector<1x160xf32> to vector<22x160xf32>
    %41 = arith.addf %38, %40 : vector<22x160xf32>
    %cst_44 = arith.constant 0.000000e+00 : f32
    %42 = vector.broadcast %cst_44 : f32 to vector<22x160xf32>
    %43 = arith.maximumf %41, %42 : vector<22x160xf32>
    %44 = vector.extract_strided_slice %43 {offsets = [0, 0], sizes = [22, 144], strides = [1, 1]} : vector<22x160xf32> to vector<22x144xf32>
    %45 = vector.extract_strided_slice %43 {offsets = [0, 16], sizes = [22, 144], strides = [1, 1]} : vector<22x160xf32> to vector<22x144xf32>
    %46 = arith.maximumf %44, %45 : vector<22x144xf32>
    %47 = vector.extract_strided_slice %46 {offsets = [0, 0], sizes = [21, 144], strides = [1, 1]} : vector<22x144xf32> to vector<21x144xf32>
    %48 = vector.extract_strided_slice %46 {offsets = [1, 0], sizes = [21, 144], strides = [1, 1]} : vector<22x144xf32> to vector<21x144xf32>
    %49 = arith.maximumf %47, %48 : vector<21x144xf32>
    %c0_45 = arith.constant 0 : index
    %c0_46 = arith.constant 0 : index
    %c0_47 = arith.constant 0 : index
    %50 = vector.load %arg6[%c0_45, %c0_46, %c0_47] : memref<2x8x21xf32, #tpu.memory_space<vmem>>, vector<1x8x21xf32>
    %51 = vector.shape_cast %50 : vector<1x8x21xf32> to vector<8x21xf32>
    %cst_48 = arith.constant dense<0.000000e+00> : vector<8x144xf32>
    %52 = tpu.matmul %51, %49, %cst_48 {dimension_numbers = #tpu.dot_dimension_numbers<[1], [0], [0], [1], [0, 0, 1, 1], [], []>} : vector<8x21xf32>, vector<21x144xf32>, vector<8x144xf32> -> vector<8x144xf32>
    %c0_49 = arith.constant 0 : index
    %c0_50 = arith.constant 0 : index
    %c0_51 = arith.constant 0 : index
    %53 = vector.load %arg7[%c0_49, %c0_50, %c0_51] : memref<2x144x160xf32, #tpu.memory_space<vmem>>, vector<1x144x160xf32>
    %54 = vector.shape_cast %53 : vector<1x144x160xf32> to vector<144x160xf32>
    %cst_52 = arith.constant dense<0.000000e+00> : vector<8x160xf32>
    %55 = tpu.matmul %52, %54, %cst_52 {dimension_numbers = #tpu.dot_dimension_numbers<[1], [0], [0], [1], [0, 0, 1, 1], [], []>} : vector<8x144xf32>, vector<144x160xf32>, vector<8x160xf32> -> vector<8x160xf32>
    %c1_53 = arith.constant 1 : index
    %c0_54 = arith.constant 0 : index
    %c0_55 = arith.constant 0 : index
    %56 = vector.load %arg6[%c1_53, %c0_54, %c0_55] : memref<2x8x21xf32, #tpu.memory_space<vmem>>, vector<1x8x21xf32>
    %57 = vector.shape_cast %56 : vector<1x8x21xf32> to vector<8x21xf32>
    %cst_56 = arith.constant dense<0.000000e+00> : vector<8x144xf32>
    %58 = tpu.matmul %57, %49, %cst_56 {dimension_numbers = #tpu.dot_dimension_numbers<[1], [0], [0], [1], [0, 0, 1, 1], [], []>} : vector<8x21xf32>, vector<21x144xf32>, vector<8x144xf32> -> vector<8x144xf32>
    %c1_57 = arith.constant 1 : index
    %c0_58 = arith.constant 0 : index
    %c0_59 = arith.constant 0 : index
    %59 = vector.load %arg7[%c1_57, %c0_58, %c0_59] : memref<2x144x160xf32, #tpu.memory_space<vmem>>, vector<1x144x160xf32>
    %60 = vector.shape_cast %59 : vector<1x144x160xf32> to vector<144x160xf32>
    %cst_60 = arith.constant dense<0.000000e+00> : vector<8x160xf32>
    %61 = tpu.matmul %58, %60, %cst_60 {dimension_numbers = #tpu.dot_dimension_numbers<[1], [0], [0], [1], [0, 0, 1, 1], [], []>} : vector<8x144xf32>, vector<144x160xf32>, vector<8x160xf32> -> vector<8x160xf32>
    %62 = arith.addf %55, %61 : vector<8x160xf32>
    %c0_61 = arith.constant 0 : index
    %c0_62 = arith.constant 0 : index
    %63 = vector.load %arg8[%c0_61, %c0_62] : memref<2048x8xbf16, #tpu.memory_space<vmem>>, vector<2048x8xbf16>
    %64 = arith.truncf %62 : vector<8x160xf32> to vector<8x160xbf16>
    %cst_63 = arith.constant dense<0.000000e+00> : vector<2048x160xf32>
    %65 = tpu.matmul %63, %64, %cst_63 {dimension_numbers = #tpu.dot_dimension_numbers<[1], [0], [0], [1], [0, 0, 1, 1], [], []>} : vector<2048x8xbf16>, vector<8x160xbf16>, vector<2048x160xf32> -> vector<2048x160xf32>
    %c0_64 = arith.constant 0 : index
    %c0_65 = arith.constant 0 : index
    %66 = vector.load %arg9[%c0_64, %c0_65] : memref<2048x1xf32, #tpu.memory_space<vmem>>, vector<2048x1xf32>
    %67 = vector.broadcast %66 : vector<2048x1xf32> to vector<2048x160xf32>
    %68 = arith.addf %65, %67 : vector<2048x160xf32>
    %cst_66 = arith.constant 0.000000e+00 : f32
    %69 = vector.broadcast %cst_66 : f32 to vector<2048x160xf32>
    %70 = arith.maximumf %68, %69 : vector<2048x160xf32>
    tpu.wait_dma2 semaphore(%arg17 : memref<!tpu.dma_semaphore, #tpu.memory_space<semaphore_mem>>) src(%arg10 : memref<512x2048xbf16, #tpu.memory_space<any>>) dst(%arg16 : memref<512x2048xbf16, #tpu.memory_space<vmem>>)
    %c0_67 = arith.constant 0 : index
    %c0_68 = arith.constant 0 : index
    %71 = vector.load %arg16[%c0_67, %c0_68] : memref<512x2048xbf16, #tpu.memory_space<vmem>>, vector<512x2048xbf16>
    %72 = arith.truncf %70 : vector<2048x160xf32> to vector<2048x160xbf16>
    %cst_69 = arith.constant dense<0.000000e+00> : vector<512x160xf32>
    %73 = tpu.matmul %71, %72, %cst_69 {dimension_numbers = #tpu.dot_dimension_numbers<[1], [0], [0], [1], [0, 0, 1, 1], [], []>} : vector<512x2048xbf16>, vector<2048x160xbf16>, vector<512x160xf32> -> vector<512x160xf32>
    %c0_70 = arith.constant 0 : index
    %c0_71 = arith.constant 0 : index
    %74 = vector.load %arg11[%c0_70, %c0_71] : memref<512x1xf32, #tpu.memory_space<vmem>>, vector<512x1xf32>
    %75 = vector.broadcast %74 : vector<512x1xf32> to vector<512x160xf32>
    %76 = arith.addf %73, %75 : vector<512x160xf32>
    %cst_72 = arith.constant 0.000000e+00 : f32
    %77 = vector.broadcast %cst_72 : f32 to vector<512x160xf32>
    %78 = arith.maximumf %76, %77 : vector<512x160xf32>
    %c0_73 = arith.constant 0 : index
    %c0_74 = arith.constant 0 : index
    %79 = vector.load %arg12[%c0_73, %c0_74] : memref<8x512xbf16, #tpu.memory_space<vmem>>, vector<8x512xbf16>
    %80 = arith.truncf %78 : vector<512x160xf32> to vector<512x160xbf16>
    %cst_75 = arith.constant dense<0.000000e+00> : vector<8x160xf32>
    %81 = tpu.matmul %79, %80, %cst_75 {dimension_numbers = #tpu.dot_dimension_numbers<[1], [0], [0], [1], [0, 0, 1, 1], [], []>} : vector<8x512xbf16>, vector<512x160xbf16>, vector<8x160xf32> -> vector<8x160xf32>
    %c0_76 = arith.constant 0 : index
    %c0_77 = arith.constant 0 : index
    %82 = vector.load %arg13[%c0_76, %c0_77] : memref<8x1xf32, #tpu.memory_space<vmem>>, vector<8x1xf32>
    %83 = vector.broadcast %82 : vector<8x1xf32> to vector<8x160xf32>
    %84 = arith.addf %81, %83 : vector<8x160xf32>
    %c0_78 = arith.constant 0 : index
    %c0_79 = arith.constant 0 : index
    %85 = vector.load %arg14[%c0_78, %c0_79] : memref<8x160xf32, #tpu.memory_space<vmem>>, vector<8x160xf32>
    tpu.vector_store %arg14[%c0_78, %c0_79], %84 {strides = array<i32>} : memref<8x160xf32, #tpu.memory_space<vmem>>, vector<8x160xf32>,
    return
  }
}

</mosaic_0001>

<llo_original>
// kernel: mario_buttons_forward.1
$region0: #{mario_buttons_forward.1}
  #allocation0 [shape = 'u32[]', space=smem, size = 0x4, offset = 0x4, fixed_abs, tag = 'smem constant byte address 0x4 - core index']
  #allocation1 [shape = 'u32[144,128]{1,0:T(1,128)}', space=vmem, size = 0x12000, scoped, tag = 'internal scratch']
  #allocation2 [shape = 'f32[24,160]{1,0:T(8,128)}', space=vmem, size = 0x6000, scoped, tag = 'scratch operand']
  #allocation3 [shape = 'bf16[512,2048]{1,0:T(8,128)(2,1)}', space=vmem, size = 0x200000, scoped, tag = 'scratch operand']
  #allocation4 [shape = 's32[1]{0}', space=sflag, size = 0x4, scoped, tag = 'scratch operand']
  #allocation12 [shape = 's32[]', space=sflag, size = 0x4, offset = 0, fixed_abs, tag = 'sflag constant byte address 0x0 - dummy sync flag']
  #allocation13 [shape = 's32[]', space=sflag, size = 0x4, offset = 0, fixed_abs, tag = 'sflag constant byte address 0x0 - dummy sync flag']
  #allocation14 [shape = 'u32[]', space=smem, size = 0x4, offset = 0x44, fixed_abs, tag = 'smem constant byte address 0x44 - assertion arg 0']
  #allocation15 [shape = 'u32[]', space=smem, size = 0x4, offset = 0x48, fixed_abs, tag = 'smem constant byte address 0x48 - assertion arg 1']
  %s0 = inlined_call_operand.vmem [shape: f32[24,10], index: 0, kind: input, shape index: {}]
  %s1 = inlined_call_operand.vmem [shape: f32[3,10,160], index: 1, kind: input, shape index: {}]
  %s2 = inlined_call_operand.hbm [shape: f32[1,160], index: 2, kind: input, shape index: {}]
  %s3 = inlined_call_operand.vmem [shape: f32[22,1], index: 3, kind: input, shape index: {}]
  %s4 = inlined_call_operand.vmem [shape: f32[3,160,160], index: 4, kind: input, shape index: {}]
  %s5 = inlined_call_operand.hbm [shape: f32[1,160], index: 5, kind: input, shape index: {}]
  %s6 = inlined_call_operand.hbm [shape: f32[2,8,21], index: 6, kind: input, shape index: {}]
  %s7 = inlined_call_operand.vmem [shape: f32[2,144,160], index: 7, kind: input, shape index: {}]
  %s8 = inlined_call_operand.vmem [shape: bf16[2048,8], index: 8, kind: input, shape index: {}]
  %s9 = inlined_call_operand.vmem [shape: f32[2048,1], index: 9, kind: input, shape index: {}]
  %s10 = inlined_call_operand.hbm [shape: bf16[512,2048], index: 10, kind: input, shape index: {}]
  %s11 = inlined_call_operand.vmem [shape: f32[512,1], index: 11, kind: input, shape index: {}]
  %s12 = inlined_call_operand.hbm [shape: bf16[8,512], index: 12, kind: input, shape index: {}]
  %s13 = inlined_call_operand.vmem [shape: f32[8,1], index: 13, kind: input, shape index: {}]
  %s14 = inlined_call_operand.vmem [shape: f32[8,160], index: 14, kind: output, shape index: {}]
  %s15 = sld [smem:[#allocation0]]
  $region82: #{mario_buttons_forward.1} parent=0
    _
  %s17 = ssub.s32 1, %s15
  %s18 = scalar_select 0, %s17, %s15
  $region1: #{mario_buttons_forward.1} parent=0
    #allocation5 [shape = 'u8[1024]{0}', space=vmem, size = 0x400, scoped, tag = 'input window, operand 2, single buffered']
    #allocation6 [shape = 's32[1]{0}', space=sflag, size = 0x4, scoped, tag = 'scoped memory for mario_buttons_forward.1']
    #allocation7 [shape = 'u8[1024]{0}', space=vmem, size = 0x400, scoped, tag = 'input window, operand 5, single buffered']
    #allocation8 [shape = 's32[1]{0}', space=sflag, size = 0x4, scoped, tag = 'scoped memory for mario_buttons_forward.1']
    #allocation9 [shape = 'u8[8192]{0}', space=vmem, size = 0x2000, scoped, tag = 'input window, operand 6, single buffered']
    #allocation10 [shape = 'u8[8192]{0}', space=vmem, size = 0x2000, scoped, tag = 'input window, operand 12, single buffered']
    #allocation11 [shape = 's32[1]{0}', space=sflag, size = 0x4, scoped, tag = 'scoped memory for mario_buttons_forward.1']
    %19 = vsyncpa [#allocation6], 0
    %20 = vsyncpa [#allocation8], 0
    %21 = vsyncpa [#allocation11], 0
    // Predicated region
    $region2: #{mario_buttons_forward.1} parent=1 // pred_check
      _
    $region3: #{mario_buttons_forward.1} parent=1 // pred_check_branch
      %23 = sbr.rel (0) target = $region5
    $region4: #{mario_buttons_forward.1} parent=1 // pred_region
      _
    $region5: #{mario_buttons_forward.1} parent=1 // pred_fallthru
      _
    // Predicated region
    $region6: #{mario_buttons_forward.1} parent=1 // pred_check
      _
    $region7: #{mario_buttons_forward.1} parent=1 // pred_check_branch
      %25 = sbr.rel (0) target = $region9
    $region8: #{mario_buttons_forward.1} parent=1 // pred_region
      _
    $region9: #{mario_buttons_forward.1} parent=1 // pred_fallthru
      _
    // Predicated region
    $region10: #{mario_buttons_forward.1} parent=1 // pred_check
      _
    $region11: #{mario_buttons_forward.1} parent=1 // pred_check_branch
      %27 = sbr.rel (0) target = $region13
    $region12: #{mario_buttons_forward.1} parent=1 // pred_region
      %s29 = ssub.s32 32, 32
      %30 = vsyncadd [#allocation6], %s29
      %s32 = sshll.u32 [#allocation5], 4
      %s33 = int_to_ptr.vmem [resolvable:$true] %s32
      %35 = dma.hbm_to_vmem [thread:$0]  %s2, 32, %s33, [#allocation6]
    $region13: #{mario_buttons_forward.1} parent=1 // pred_fallthru
      _
    // Predicated region
    $region14: #{mario_buttons_forward.1} parent=1 // pred_check
      _
    $region15: #{mario_buttons_forward.1} parent=1 // pred_check_branch
      %37 = sbr.rel (0) target = $region17
    $region16: #{mario_buttons_forward.1} parent=1 // pred_region
      _
    $region17: #{mario_buttons_forward.1} parent=1 // pred_fallthru
      _
    // Predicated region
    $region18: #{mario_buttons_forward.1} parent=1 // pred_check
      _
    $region19: #{mario_buttons_forward.1} parent=1 // pred_check_branch
      %39 = sbr.rel (0) target = $region21
    $region20: #{mario_buttons_forward.1} parent=1 // pred_region
      _
    $region21: #{mario_buttons_forward.1} parent=1 // pred_fallthru
      _
    // Predicated region
    $region22: #{mario_buttons_forward.1} parent=1 // pred_check
      _
    $region23: #{mario_buttons_forward.1} parent=1 // pred_check_branch
      %41 = sbr.rel (0) target = $region25
    $region24: #{mario_buttons_forward.1} parent=1 // pred_region
      %s43 = ssub.s32 32, 32
      %44 = vsyncadd [#allocation8], %s43
      %s46 = sshll.u32 [#allocation7], 4
      %s47 = int_to_ptr.vmem [resolvable:$true] %s46
      %49 = dma.hbm_to_vmem [thread:$0]  %s5, 32, %s47, [#allocation8]
    $region25: #{mario_buttons_forward.1} parent=1 // pred_fallthru
      _
    // Predicated region
    $region26: #{mario_buttons_forward.1} parent=1 // pred_check
      _
    $region27: #{mario_buttons_forward.1} parent=1 // pred_check_branch
      %51 = sbr.rel (0) target = $region29
    $region28: #{mario_buttons_forward.1} parent=1 // pred_region
      %s53 = ssub.s32 256, 256
      %54 = vsyncadd [#allocation8], %s53
      %s55 = sshll.u32 [#allocation9], 4
      %s56 = int_to_ptr.vmem [resolvable:$true] %s55
      %61 = dma.hbm_to_vmem [thread:$0]  %s6, 256, %s56, [#allocation8], 128, 128, 8
    $region29: #{mario_buttons_forward.1} parent=1 // pred_fallthru
      _
    // Predicated region
    $region30: #{mario_buttons_forward.1} parent=1 // pred_check
      _
    $region31: #{mario_buttons_forward.1} parent=1 // pred_check_branch
      %63 = sbr.rel (0) target = $region33
    $region32: #{mario_buttons_forward.1} parent=1 // pred_region
      _
    $region33: #{mario_buttons_forward.1} parent=1 // pred_fallthru
      _
    // Predicated region
    $region34: #{mario_buttons_forward.1} parent=1 // pred_check
      _
    $region35: #{mario_buttons_forward.1} parent=1 // pred_check_branch
      %65 = sbr.rel (0) target = $region37
    $region36: #{mario_buttons_forward.1} parent=1 // pred_region
      _
    $region37: #{mario_buttons_forward.1} parent=1 // pred_fallthru
      _
    // Predicated region
    $region38: #{mario_buttons_forward.1} parent=1 // pred_check
      _
    $region39: #{mario_buttons_forward.1} parent=1 // pred_check_branch
      %67 = sbr.rel (0) target = $region41
    $region40: #{mario_buttons_forward.1} parent=1 // pred_region
      _
    $region41: #{mario_buttons_forward.1} parent=1 // pred_fallthru
      _
    // Predicated region
    $region42: #{mario_buttons_forward.1} parent=1 // pred_check
      _
    $region43: #{mario_buttons_forward.1} parent=1 // pred_check_branch
      %69 = sbr.rel (0) target = $region45
    $region44: #{mario_buttons_forward.1} parent=1 // pred_region
      _
    $region45: #{mario_buttons_forward.1} parent=1 // pred_fallthru
      _
    // Predicated region
    $region46: #{mario_buttons_forward.1} parent=1 // pred_check
      _
    $region47: #{mario_buttons_forward.1} parent=1 // pred_check_branch
      %71 = sbr.rel (0) target = $region49
    $region48: #{mario_buttons_forward.1} parent=1 // pred_region
      %s73 = ssub.s32 256, 256
      %74 = vsyncadd [#allocation11], %s73
      %s76 = sshll.u32 [#allocation10], 4
      %s77 = int_to_ptr.vmem [resolvable:$true] %s76
      %79 = dma.hbm_to_vmem [thread:$0]  %s12, 256, %s77, [#allocation11]
    $region49: #{mario_buttons_forward.1} parent=1 // pred_fallthru
      _
    // Predicated region
    $region50: #{mario_buttons_forward.1} parent=1 // pred_check
      _
    $region51: #{mario_buttons_forward.1} parent=1 // pred_check_branch
      %81 = sbr.rel (0) target = $region53
    $region52: #{mario_buttons_forward.1} parent=1 // pred_region
      _
    $region53: #{mario_buttons_forward.1} parent=1 // pred_fallthru
      _
    // Predicated region
    $region54: #{mario_buttons_forward.1} parent=1 // pred_check
      _
    $region55: #{mario_buttons_forward.1} parent=1 // pred_check_branch
      %83 = sbr.rel (0) target = $region57
    $region56: #{mario_buttons_forward.1} parent=1 // pred_region
      %84 = dma.done [#allocation6], 32
    $region57: #{mario_buttons_forward.1} parent=1 // pred_fallthru
      _
    // Predicated region
    $region58: #{mario_buttons_forward.1} parent=1 // pred_check
      _
    $region59: #{mario_buttons_forward.1} parent=1 // pred_check_branch
      %86 = sbr.rel (0) target = $region61
    $region60: #{mario_buttons_forward.1} parent=1 // pred_region
      %87 = dma.done [#allocation8], 32
    $region61: #{mario_buttons_forward.1} parent=1 // pred_fallthru
      _
    // Predicated region
    $region62: #{mario_buttons_forward.1} parent=1 // pred_check
      _
    $region63: #{mario_buttons_forward.1} parent=1 // pred_check_branch
      %89 = sbr.rel (0) target = $region65
    $region64: #{mario_buttons_forward.1} parent=1 // pred_region
      %90 = dma.done [#allocation8], 256
    $region65: #{mario_buttons_forward.1} parent=1 // pred_fallthru
      _
    // Predicated region
    $region66: #{mario_buttons_forward.1} parent=1 // pred_check
      _
    $region67: #{mario_buttons_forward.1} parent=1 // pred_check_branch
      %92 = sbr.rel (0) target = $region69
    $region68: #{mario_buttons_forward.1} parent=1 // pred_region
      %93 = dma.done [#allocation11], 256
    $region69: #{mario_buttons_forward.1} parent=1 // pred_fallthru
      _
    // Predicated region
    $region70: #{mario_buttons_forward.1} parent=1 // pred_check
      _
    $region71: #{mario_buttons_forward.1} parent=1 // pred_check_branch
      %96 = sbr.rel target = $region73
    $region72: #{mario_buttons_forward.1} parent=1 // pred_region
      %97 = sst [smem:[#allocation14]] [#allocation13]
      %98 = sst [smem:[#allocation15]] [#allocation12]
    $region73: #{mario_buttons_forward.1} parent=1 // pred_fallthru
      _
    %100 = shalt.err (0)
    %s102 = sshll.u32 [#allocation3], 4
    %s103 = int_to_ptr.vmem [resolvable:$true] %s102
    %105 = dma.hbm_to_vmem [thread:$0]  %s10, 65536, %s103, [#allocation4]
    %106 = vst [vmem:[#allocation2] sm:$0xff] 0.0
    %vm107 = vcmask 261120
    %108 = vst.msk [vmem:[#allocation2 + $0x8] sm:$0xff] %vm107, 0.0
    %109 = vst [vmem:[#allocation2 + $0x10] sm:$0xff] 0.0
    %110 = vst.msk [vmem:[#allocation2 + $0x18] sm:$0xff] %vm107, 0.0
    %111 = vst [vmem:[#allocation2 + $0x20] sm:$0xff] 0.0
    %112 = vst.msk [vmem:[#allocation2 + $0x28] sm:$0xff] %vm107, 0.0
    %v113 = vld [vmem:[%s0] sm:$0xff]
    %v114 = vld [vmem:[%s0 + $0x8] sm:$0xff]
    %v115 = vld [vmem:[%s0 + $0x10] sm:$0x3f]
    %v116 = vld [vmem:[%s1] sm:$0xff]
    %v117 = vld [vmem:[%s1 + $0x8] sm:$0xff]
    %v118 = vld [vmem:[%s1 + $0x10] sm:$0x3]
    %v119 = vld [vmem:[%s1 + $0x18] sm:$0x3]
    %v120 = vld [vmem:[%s0 + $0x1] sm:$0xff]
    %v121 = vld [vmem:[%s0 + $0x9] sm:$0xff]
    %v122 = vld [vmem:[%s0 + $0x11] sm:$0x3f]
    %s123 = scalar_lea.vmem %s1, 32
    %v124 = vld [vmem:[%s123] sm:$0xff]
    %v125 = vld [vmem:[%s123 + $0x8] sm:$0xff]
    %v126 = vld [vmem:[%s123 + $0x10] sm:$0x3]
    %v127 = vld [vmem:[%s123 + $0x18] sm:$0x3]
    %vm128 = vcmask 80896
    %v130 = vsel %vm128, %v120, 0
    %v133 = vsel %vm128, %v121, 0
    %v136 = vsel %vm128, %v122, 0
    %vm138 = vcmask 1041408
    %v140 = vsel %vm138, %v126, 0
    %v143 = vsel %vm138, %v127, 0
    %145 = vmatprep.subr.mxu0 0.0
    %146 = vmatpush1.msra.mxu0 0.0
    %147 = vmatprep.subr.mxu0 0.0
    %148 = vmatpush1.msra.mxu0 0.0
    %149 = vmatprep.subr.mxu0 0.0
    %150 = vmatpush1.msra.mxu0 0.0
    %151 = vmatprep.subr.mxu0 0.0
    %152 = vmatpush1.msra.mxu0 0.0
    %153 = vmatprep.subr.mxu0 0.0
    %154 = vmatpush1.msra.mxu0 0.0
    %155 = vmatprep.subr.mxu0 0.0
    %156 = vmatpush1.msra.mxu0 0.0
    %157 = vmatprep.subr.mxu0 0.0
    %158 = vmatpush1.msra.mxu0 0.0
    %159 = vmatprep.subr.mxu0 0.0
    %160 = vmatpush1.msra.mxu0 0.0
    %161 = vmatprep.subr.mxu0 0.0
    %162 = vmatpush1.msra.mxu0 0.0
    %163 = vmatprep.subr.mxu0 0.0
    %164 = vmatpush1.msra.mxu0 0.0
    %165 = vmatprep.subr.mxu0 0.0
    %166 = vmatpush1.msra.mxu0 0.0
    %167 = vmatprep.subr.mxu0 0.0
    %168 = vmatpush1.msra.mxu0 0.0
    %169 = vmatprep.subr.mxu0 0.0
    %170 = vmatpush1.msra.mxu0 0.0
    %171 = vmatprep.subr.mxu0 0.0
    %172 = vmatpush1.msra.mxu0 0.0
    %173 = vmatprep.subr.mxu0 %v143
    %174 = vmatpush1.msra.mxu0 %v140
    %175 = vmatprep.subr.mxu0 %v125
    %176 = vmatpush1.msra.mxu0 %v124
    %177 = vmatprep.subr.mxu0 0.0
    %178 = vmatpush2.msra.mxu0 0.0
    %179 = vmatprep.subr.mxu0 0.0
    %180 = vmatpush2.msra.mxu0 0.0
    %181 = vmatprep.subr.mxu0 0.0
    %182 = vmatpush2.msra.mxu0 0.0
    %183 = vmatprep.subr.mxu0 0.0
    %184 = vmatpush2.msra.mxu0 0.0
    %185 = vmatprep.subr.mxu0 0.0
    %186 = vmatpush2.msra.mxu0 0.0
    %187 = vmatprep.subr.mxu0 0.0
    %188 = vmatpush2.msra.mxu0 0.0
    %189 = vmatprep.subr.mxu0 0.0
    %190 = vmatpush2.msra.mxu0 0.0
    %191 = vmatprep.subr.mxu0 0.0
    %192 = vmatpush2.msra.mxu0 0.0
    %193 = vmatprep.subr.mxu0 0.0
    %194 = vmatpush2.msra.mxu0 0.0
    %195 = vmatprep.subr.mxu0 0.0
    %196 = vmatpush2.msra.mxu0 0.0
    %197 = vmatprep.subr.mxu0 0.0
    %198 = vmatpush2.msra.mxu0 0.0
    %199 = vmatprep.subr.mxu0 0.0
    %200 = vmatpush2.msra.mxu0 0.0
    %201 = vmatprep.subr.mxu0 0.0
    %202 = vmatpush2.msra.mxu0 0.0
    %203 = vmatprep.subr.mxu0 0.0
    %204 = vmatpush2.msra.mxu0 0.0
    %205 = vmatprep.subr.mxu0 0.0
    %206 = vmatpush2.msra.mxu0 0.0
    %207 = vmatprep.subr.mxu0 0.0
    %208 = vmatpush2.msra.mxu0 0.0
    %209 = vmatprep.mubr.f32.mxu0 0.0
    %210 = vmatmul.mubr.f32.gmra.mxu0 %v130
    %v211 = vpop.f32.mrf.mxu0
    %v212 = vadd.f32 0.0, %v211
    %v213 = vpop.f32.mrf.mxu0
    %v214 = vadd.f32 0.0, %v213
    %215 = vmatprep.mubr.f32.mxu0 0.0
    %216 = vmatmul.mubr.f32.gmra.mxu0 %v133
    %v217 = vpop.f32.mrf.mxu0
    %v218 = vadd.f32 0.0, %v217
    %v219 = vpop.f32.mrf.mxu0
    %v220 = vadd.f32 0.0, %v219
    %221 = vmatprep.mubr.f32.mxu0 0.0
    %222 = vmatmul.mubr.f32.gmra.mxu0 %v136
    %v223 = vpop.f32.mrf.mxu0
    %v224 = vadd.f32 0.0, %v223
    %v225 = vpop.f32.mrf.mxu0
    %v226 = vadd.f32 0.0, %v225
    %227 = vdwg.mxu0
    %v229 = vsel %vm128, %v113, 0
    %v232 = vsel %vm128, %v114, 0
    %v235 = vsel %vm128, %v115, 0
    %v238 = vsel %vm138, %v118, 0
    %v241 = vsel %vm138, %v119, 0
    %243 = vmatprep.subr.mxu0 0.0
    %244 = vmatpush1.msra.mxu0 0.0
    %245 = vmatprep.subr.mxu0 0.0
    %246 = vmatpush1.msra.mxu0 0.0
    %247 = vmatprep.subr.mxu0 0.0
    %248 = vmatpush1.msra.mxu0 0.0
    %249 = vmatprep.subr.mxu0 0.0
    %250 = vmatpush1.msra.mxu0 0.0
    %251 = vmatprep.subr.mxu0 0.0
    %252 = vmatpush1.msra.mxu0 0.0
    %253 = vmatprep.subr.mxu0 0.0
    %254 = vmatpush1.msra.mxu0 0.0
    %255 = vmatprep.subr.mxu0 0.0
    %256 = vmatpush1.msra.mxu0 0.0
    %257 = vmatprep.subr.mxu0 0.0
    %258 = vmatpush1.msra.mxu0 0.0
    %259 = vmatprep.subr.mxu0 0.0
    %260 = vmatpush1.msra.mxu0 0.0
    %261 = vmatprep.subr.mxu0 0.0
    %262 = vmatpush1.msra.mxu0 0.0
    %263 = vmatprep.subr.mxu0 0.0
    %264 = vmatpush1.msra.mxu0 0.0
    %265 = vmatprep.subr.mxu0 0.0
    %266 = vmatpush1.msra.mxu0 0.0
    %267 = vmatprep.subr.mxu0 0.0
    %268 = vmatpush1.msra.mxu0 0.0
    %269 = vmatprep.subr.mxu0 0.0
    %270 = vmatpush1.msra.mxu0 0.0
    %271 = vmatprep.subr.mxu0 %v241
    %272 = vmatpush1.msra.mxu0 %v238
    %273 = vmatprep.subr.mxu0 %v117
    %274 = vmatpush1.msra.mxu0 %v116
    %275 = vmatprep.subr.mxu0 0.0
    %276 = vmatpush2.msra.mxu0 0.0
    %277 = vmatprep.subr.mxu0 0.0
    %278 = vmatpush2.msra.mxu0 0.0
    %279 = vmatprep.subr.mxu0 0.0
    %280 = vmatpush2.msra.mxu0 0.0
    %281 = vmatprep.subr.mxu0 0.0
    %282 = vmatpush2.msra.mxu0 0.0
    %283 = vmatprep.subr.mxu0 0.0
    %284 = vmatpush2.msra.mxu0 0.0
    %285 = vmatprep.subr.mxu0 0.0
    %286 = vmatpush2.msra.mxu0 0.0
    %287 = vmatprep.subr.mxu0 0.0
    %288 = vmatpush2.msra.mxu0 0.0
    %289 = vmatprep.subr.mxu0 0.0
    %290 = vmatpush2.msra.mxu0 0.0
    %291 = vmatprep.subr.mxu0 0.0
    %292 = vmatpush2.msra.mxu0 0.0
    %293 = vmatprep.subr.mxu0 0.0
    %294 = vmatpush2.msra.mxu0 0.0
    %295 = vmatprep.subr.mxu0 0.0
    %296 = vmatpush2.msra.mxu0 0.0
    %297 = vmatprep.subr.mxu0 0.0
    %298 = vmatpush2.msra.mxu0 0.0
    %299 = vmatprep.subr.mxu0 0.0
    %300 = vmatpush2.msra.mxu0 0.0
    %301 = vmatprep.subr.mxu0 0.0
    %302 = vmatpush2.msra.mxu0 0.0
    %303 = vmatprep.subr.mxu0 0.0
    %304 = vmatpush2.msra.mxu0 0.0
    %305 = vmatprep.subr.mxu0 0.0
    %306 = vmatpush2.msra.mxu0 0.0
    %307 = vmatprep.mubr.f32.mxu0 0.0
    %308 = vmatmul.mubr.f32.gmra.mxu0 %v229
    %v309 = vpop.f32.mrf.mxu0
    %v310 = vadd.f32 %v212, %v309
    %v311 = vpop.f32.mrf.mxu0
    %v312 = vadd.f32 %v214, %v311
    %313 = vmatprep.mubr.f32.mxu0 0.0
    %314 = vmatmul.mubr.f32.gmra.mxu0 %v232
    %v315 = vpop.f32.mrf.mxu0
    %v316 = vadd.f32 %v218, %v315
    %v317 = vpop.f32.mrf.mxu0
    %v318 = vadd.f32 %v220, %v317
    %319 = vmatprep.mubr.f32.mxu0 0.0
    %320 = vmatmul.mubr.f32.gmra.mxu0 %v235
    %v321 = vpop.f32.mrf.mxu0
    %v322 = vadd.f32 %v224, %v321
    %v323 = vpop.f32.mrf.mxu0
    %v324 = vadd.f32 %v226, %v323
    %325 = vdwg.mxu0
    %v326 = vld [vmem:[%s0 + $0x2] sm:$0xff]
    %v327 = vld [vmem:[%s0 + $0xa] sm:$0xff]
    %v328 = vld [vmem:[%s0 + $0x12] sm:$0x3f]
    %s329 = scalar_lea.vmem %s1, 64
    %v330 = vld [vmem:[%s329] sm:$0xff]
    %v331 = vld [vmem:[%s329 + $0x8] sm:$0xff]
    %v332 = vld [vmem:[%s329 + $0x10] sm:$0x3]
    %v333 = vld [vmem:[%s329 + $0x18] sm:$0x3]
    %v335 = vsel %vm128, %v326, 0
    %v338 = vsel %vm128, %v327, 0
    %v341 = vsel %vm128, %v328, 0
    %v344 = vsel %vm138, %v332, 0
    %v347 = vsel %vm138, %v333, 0
    %349 = vmatprep.subr.mxu0 0.0
    %350 = vmatpush1.msra.mxu0 0.0
    %351 = vmatprep.subr.mxu0 0.0
    %352 = vmatpush1.msra.mxu0 0.0
    %353 = vmatprep.subr.mxu0 0.0
    %354 = vmatpush1.msra.mxu0 0.0
    %355 = vmatprep.subr.mxu0 0.0
    %356 = vmatpush1.msra.mxu0 0.0
    %357 = vmatprep.subr.mxu0 0.0
    %358 = vmatpush1.msra.mxu0 0.0
    %359 = vmatprep.subr.mxu0 0.0
    %360 = vmatpush1.msra.mxu0 0.0
    %361 = vmatprep.subr.mxu0 0.0
    %362 = vmatpush1.msra.mxu0 0.0
    %363 = vmatprep.subr.mxu0 0.0
    %364 = vmatpush1.msra.mxu0 0.0
    %365 = vmatprep.subr.mxu0 0.0
    %366 = vmatpush1.msra.mxu0 0.0
    %367 = vmatprep.subr.mxu0 0.0
    %368 = vmatpush1.msra.mxu0 0.0
    %369 = vmatprep.subr.mxu0 0.0
    %370 = vmatpush1.msra.mxu0 0.0
    %371 = vmatprep.subr.mxu0 0.0
    %372 = vmatpush1.msra.mxu0 0.0
    %373 = vmatprep.subr.mxu0 0.0
    %374 = vmatpush1.msra.mxu0 0.0
    %375 = vmatprep.subr.mxu0 0.0
    %376 = vmatpush1.msra.mxu0 0.0
    %377 = vmatprep.subr.mxu0 %v347
    %378 = vmatpush1.msra.mxu0 %v344
    %379 = vmatprep.subr.mxu0 %v331
    %380 = vmatpush1.msra.mxu0 %v330
    %381 = vmatprep.subr.mxu0 0.0
    %382 = vmatpush2.msra.mxu0 0.0
    %383 = vmatprep.subr.mxu0 0.0
    %384 = vmatpush2.msra.mxu0 0.0
    %385 = vmatprep.subr.mxu0 0.0
    %386 = vmatpush2.msra.mxu0 0.0
    %387 = vmatprep.subr.mxu0 0.0
    %388 = vmatpush2.msra.mxu0 0.0
    %389 = vmatprep.subr.mxu0 0.0
    %390 = vmatpush2.msra.mxu0 0.0
    %391 = vmatprep.subr.mxu0 0.0
    %392 = vmatpush2.msra.mxu0 0.0
    %393 = vmatprep.subr.mxu0 0.0
    %394 = vmatpush2.msra.mxu0 0.0
    %395 = vmatprep.subr.mxu0 0.0
    %396 = vmatpush2.msra.mxu0 0.0
    %397 = vmatprep.subr.mxu0 0.0
    %398 = vmatpush2.msra.mxu0 0.0
    %399 = vmatprep.subr.mxu0 0.0
    %400 = vmatpush2.msra.mxu0 0.0
    %401 = vmatprep.subr.mxu0 0.0
    %402 = vmatpush2.msra.mxu0 0.0
    %403 = vmatprep.subr.mxu0 0.0
    %404 = vmatpush2.msra.mxu0 0.0
    %405 = vmatprep.subr.mxu0 0.0
    %406 = vmatpush2.msra.mxu0 0.0
    %407 = vmatprep.subr.mxu0 0.0
    %408 = vmatpush2.msra.mxu0 0.0
    %409 = vmatprep.subr.mxu0 0.0
    %410 = vmatpush2.msra.mxu0 0.0
    %411 = vmatprep.subr.mxu0 0.0
    %412 = vmatpush2.msra.mxu0 0.0
    %413 = vmatprep.mubr.f32.mxu0 0.0
    %414 = vmatmul.mubr.f32.gmra.mxu0 %v335
    %v415 = vpop.f32.mrf.mxu0
    %v416 = vadd.f32 0.0, %v415
    %v417 = vpop.f32.mrf.mxu0
    %v418 = vadd.f32 0.0, %v417
    %419 = vmatprep.mubr.f32.mxu0 0.0
    %420 = vmatmul.mubr.f32.gmra.mxu0 %v338
    %v421 = vpop.f32.mrf.mxu0
    %v422 = vadd.f32 0.0, %v421
    %v423 = vpop.f32.mrf.mxu0
    %v424 = vadd.f32 0.0, %v423
    %425 = vmatprep.mubr.f32.mxu0 0.0
    %426 = vmatmul.mubr.f32.gmra.mxu0 %v341
    %v427 = vpop.f32.mrf.mxu0
    %v428 = vadd.f32 0.0, %v427
    %v429 = vpop.f32.mrf.mxu0
    %v430 = vadd.f32 0.0, %v429
    %431 = vdwg.mxu0
    %v432 = vadd.f32 %v310, %v416
    %v433 = vadd.f32 %v312, %v418
    %v434 = vadd.f32 %v316, %v422
    %v435 = vadd.f32 %v318, %v424
    %v436 = vadd.f32 %v322, %v428
    %v437 = vadd.f32 %v324, %v430
    %v438 = vld [vmem:[#allocation5] sm:$0x3]
    %v440 = vlaneseq
    %v441 = vshrl.u32 %v440, 7
    %v442 = vsub.s32 0, %v441
    %v443 = vrot.slane %v438, %v442
    %v444 = vlaneseq
    %v445 = vshrl.u32 %v444, 7
    %v446 = vsub.s32 1, %v445
    %v447 = vrot.slane %v438, %v446
    %v450 = vadd.f32 %v432, %v443
    %v451 = vadd.f32 %v433, %v447
    %v452 = vadd.f32 %v434, %v443
    %v453 = vadd.f32 %v435, %v447
    %v454 = vadd.f32 %v436, %v443
    %v455 = vadd.f32 %v437, %v447
    %v456 = vmax.f32 %v450, 0.0
    %v457 = vmax.f32 %v451, 0.0
    %v458 = vmax.f32 %v452, 0.0
    %v459 = vmax.f32 %v453, 0.0
    %v460 = vmax.f32 %v454, 0.0
    %v461 = vmax.f32 %v455, 0.0
    %v462 = vld [vmem:[%s3] sm:$0xff]
    %v463 = vld [vmem:[%s3 + $0x8] sm:$0xff]
    %v464 = vld [vmem:[%s3 + $0x10] sm:$0x3f]
    %466 = vset.pattern.permute.xlu0 0
    %467 = vperm.xlu0 %466, %v462
    %v468 = vpop.permute.xlu0 %467
    %471 = vset.pattern.permute.xlu0 0
    %472 = vperm.xlu0 %471, %v463
    %v473 = vpop.permute.xlu0 %472
    %476 = vset.pattern.permute.xlu0 0
    %477 = vperm.xlu0 %476, %v464
    %v478 = vpop.permute.xlu0 %477
    %v480 = vmul.f32 %v456, %v468
    %v481 = vmul.f32 %v457, %v468
    %v482 = vmul.f32 %v458, %v473
    %v483 = vmul.f32 %v459, %v473
    %v484 = vmul.f32 %v460, %v478
    %v485 = vmul.f32 %v461, %v478
    %vm492 = vcmask 1040384
    %v493 = vrot.slane %v480, 7
    %v494 = vrot.slane %v481, 7
    %v495 = vrot.slane %v482, 7
    %v496 = vsel %vm492, %v493, %v495
    %v497 = vrot.slane %v483, 7
    %v498 = vsel %vm492, %v494, %v497
    %v499 = vrot.slane %v484, 7
    %v500 = vsel %vm492, %v495, %v499
    %v501 = vrot.slane %v485, 7
    %v502 = vsel %vm492, %v497, %v501
    %509 = vst [vmem:[#allocation2] sm:$0xfe] %v493
    %vm510 = vcmask 261121
    %511 = vst.msk [vmem:[#allocation2 + $0x8] sm:$0xfe] %vm510, %v494
    %512 = vst [vmem:[#allocation2 + $0x10] sm:$0xff] %v496
    %513 = vst.msk [vmem:[#allocation2 + $0x18] sm:$0xff] %vm107, %v498
    %514 = vst [vmem:[#allocation2 + $0x20] sm:$0x7f] %v500
    %vm515 = vcmask 260096
    %516 = vst.msk [vmem:[#allocation2 + $0x28] sm:$0x7f] %vm515, %v502
    %v517 = vld [vmem:[#allocation2] sm:$0xff]
    %v518 = vld [vmem:[#allocation2 + $0x8] sm:$0xff]
    %v519 = vld [vmem:[#allocation2 + $0x10] sm:$0xff]
    %v520 = vld [vmem:[#allocation2 + $0x18] sm:$0xff]
    %v521 = vld [vmem:[#allocation2 + $0x20] sm:$0x3f]
    %v522 = vld [vmem:[#allocation2 + $0x28] sm:$0x3f]
    %v523 = vld [vmem:[%s4] sm:$0xff]
    %v524 = vld [vmem:[%s4 + $0x8] sm:$0xff]
    %v525 = vld [vmem:[%s4 + $0x10] sm:$0xff]
    %v526 = vld [vmem:[%s4 + $0x18] sm:$0xff]
    %v527 = vld [vmem:[%s4 + $0x20] sm:$0xff]
    %v528 = vld [vmem:[%s4 + $0x28] sm:$0xff]
    %v529 = vld [vmem:[%s4 + $0x30] sm:$0xff]
    %v530 = vld [vmem:[%s4 + $0x38] sm:$0xff]
    %v531 = vld [vmem:[%s4 + $0x40] sm:$0xff]
    %v532 = vld [vmem:[%s4 + $0x48] sm:$0xff]
    %v533 = vld [vmem:[%s4 + $0x50] sm:$0xff]
    %v534 = vld [vmem:[%s4 + $0x58] sm:$0xff]
    %v535 = vld [vmem:[%s4 + $0x60] sm:$0xff]
    %v536 = vld [vmem:[%s4 + $0x68] sm:$0xff]
    %v537 = vld [vmem:[%s4 + $0x70] sm:$0xff]
    %v538 = vld [vmem:[%s4 + $0x78] sm:$0xff]
    %v539 = vld [vmem:[%s4 + $0x80] sm:$0xff]
    %v540 = vld [vmem:[%s4 + $0x88] sm:$0xff]
    %v541 = vld [vmem:[%s4 + $0x90] sm:$0xff]
    %v542 = vld [vmem:[%s4 + $0x98] sm:$0xff]
    %v543 = vld [vmem:[%s4 + $0xa0] sm:$0xff]
    %v544 = vld [vmem:[%s4 + $0xa8] sm:$0xff]
    %v545 = vld [vmem:[%s4 + $0xb0] sm:$0xff]
    %v546 = vld [vmem:[%s4 + $0xb8] sm:$0xff]
    %v547 = vld [vmem:[%s4 + $0xc0] sm:$0xff]
    %v548 = vld [vmem:[%s4 + $0xc8] sm:$0xff]
    %v549 = vld [vmem:[%s4 + $0xd0] sm:$0xff]
    %v550 = vld [vmem:[%s4 + $0xd8] sm:$0xff]
    %v551 = vld [vmem:[%s4 + $0xe0] sm:$0xff]
    %v552 = vld [vmem:[%s4 + $0xe8] sm:$0xff]
    %v553 = vld [vmem:[%s4 + $0xf0] sm:$0xff]
    %v554 = vld [vmem:[%s4 + $0xf8] sm:$0xff]
    %v555 = vld [vmem:[%s4 + $0x100] sm:$0xff]
    %v556 = vld [vmem:[%s4 + $0x108] sm:$0xff]
    %v557 = vld [vmem:[%s4 + $0x110] sm:$0xff]
    %v558 = vld [vmem:[%s4 + $0x118] sm:$0xff]
    %v559 = vld [vmem:[%s4 + $0x120] sm:$0xff]
    %v560 = vld [vmem:[%s4 + $0x128] sm:$0xff]
    %v561 = vld [vmem:[%s4 + $0x130] sm:$0xff]
    %v562 = vld [vmem:[%s4 + $0x138] sm:$0xff]
    %v563 = vld [vmem:[#allocation2] sm:$0xfe]
    %v564 = vld [vmem:[#allocation2 + $0x8] sm:$0xfe]
    %v565 = vld [vmem:[#allocation2 + $0x20] sm:$0x7f]
    %v566 = vld [vmem:[#allocation2 + $0x28] sm:$0x7f]
    %s567 = scalar_lea.vmem %s4, 320
    %v568 = vld [vmem:[%s567] sm:$0xff]
    %v569 = vld [vmem:[%s567 + $0x8] sm:$0xff]
    %v570 = vld [vmem:[%s567 + $0x10] sm:$0xff]
    %v571 = vld [vmem:[%s567 + $0x18] sm:$0xff]
    %v572 = vld [vmem:[%s567 + $0x20] sm:$0xff]
    %v573 = vld [vmem:[%s567 + $0x28] sm:$0xff]
    %v574 = vld [vmem:[%s567 + $0x30] sm:$0xff]
    %v575 = vld [vmem:[%s567 + $0x38] sm:$0xff]
    %v576 = vld [vmem:[%s567 + $0x40] sm:$0xff]
    %v577 = vld [vmem:[%s567 + $0x48] sm:$0xff]
    %v578 = vld [vmem:[%s567 + $0x50] sm:$0xff]
    %v579 = vld [vmem:[%s567 + $0x58] sm:$0xff]
    %v580 = vld [vmem:[%s567 + $0x60] sm:$0xff]
    %v581 = vld [vmem:[%s567 + $0x68] sm:$0xff]
    %v582 = vld [vmem:[%s567 + $0x70] sm:$0xff]
    %v583 = vld [vmem:[%s567 + $0x78] sm:$0xff]
    %v584 = vld [vmem:[%s567 + $0x80] sm:$0xff]
    %v585 = vld [vmem:[%s567 + $0x88] sm:$0xff]
    %v586 = vld [vmem:[%s567 + $0x90] sm:$0xff]
    %v587 = vld [vmem:[%s567 + $0x98] sm:$0xff]
    %v588 = vld [vmem:[%s567 + $0xa0] sm:$0xff]
    %v589 = vld [vmem:[%s567 + $0xa8] sm:$0xff]
    %v590 = vld [vmem:[%s567 + $0xb0] sm:$0xff]
    %v591 = vld [vmem:[%s567 + $0xb8] sm:$0xff]
    %v592 = vld [vmem:[%s567 + $0xc0] sm:$0xff]
    %v593 = vld [vmem:[%s567 + $0xc8] sm:$0xff]
    %v594 = vld [vmem:[%s567 + $0xd0] sm:$0xff]
    %v595 = vld [vmem:[%s567 + $0xd8] sm:$0xff]
    %v596 = vld [vmem:[%s567 + $0xe0] sm:$0xff]
    %v597 = vld [vmem:[%s567 + $0xe8] sm:$0xff]
    %v598 = vld [vmem:[%s567 + $0xf0] sm:$0xff]
    %v599 = vld [vmem:[%s567 + $0xf8] sm:$0xff]
    %v600 = vld [vmem:[%s567 + $0x100] sm:$0xff]
    %v601 = vld [vmem:[%s567 + $0x108] sm:$0xff]
    %v602 = vld [vmem:[%s567 + $0x110] sm:$0xff]
    %v603 = vld [vmem:[%s567 + $0x118] sm:$0xff]
    %v604 = vld [vmem:[%s567 + $0x120] sm:$0xff]
    %v605 = vld [vmem:[%s567 + $0x128] sm:$0xff]
    %v606 = vld [vmem:[%s567 + $0x130] sm:$0xff]
    %v607 = vld [vmem:[%s567 + $0x138] sm:$0xff]
    %vm614 = vcmask 1046528
    %v615 = vrot.slane %v563, 1
    %v616 = vrot.slane %v519, 1
    %v617 = vsel %vm614, %v615, %v616
    %v618 = vrot.slane %v564, 1
    %v619 = vrot.slane %v520, 1
    %v620 = vsel %vm614, %v618, %v619
    %v621 = vrot.slane %v565, 1
    %v622 = vsel %vm614, %v616, %v621
    %v623 = vrot.slane %v566, 1
    %v624 = vsel %vm614, %v619, %v623
    %v628 = vsel %vm107, %v620, 0
    %v630 = vsel %vm107, %v624, 0
    %v632 = vsel %vm107, %v623, 0
    %634 = vmatprep.subr.mxu0 %v599
    %635 = vmatpush1.msra.mxu0 %v598
    %636 = vmatprep.subr.mxu0 %v597
    %637 = vmatpush1.msra.mxu0 %v596
    %638 = vmatprep.subr.mxu0 %v595
    %639 = vmatpush1.msra.mxu0 %v594
    %640 = vmatprep.subr.mxu0 %v593
    %641 = vmatpush1.msra.mxu0 %v592
    %642 = vmatprep.subr.mxu0 %v591
    %643 = vmatpush1.msra.mxu0 %v590
    %644 = vmatprep.subr.mxu0 %v589
    %645 = vmatpush1.msra.mxu0 %v588
    %646 = vmatprep.subr.mxu0 %v587
    %647 = vmatpush1.msra.mxu0 %v586
    %648 = vmatprep.subr.mxu0 %v585
    %649 = vmatpush1.msra.mxu0 %v584
    %650 = vmatprep.subr.mxu0 %v583
    %651 = vmatpush1.msra.mxu0 %v582
    %652 = vmatprep.subr.mxu0 %v581
    %653 = vmatpush1.msra.mxu0 %v580
    %654 = vmatprep.subr.mxu0 %v579
    %655 = vmatpush1.msra.mxu0 %v578
    %656 = vmatprep.subr.mxu0 %v577
    %657 = vmatpush1.msra.mxu0 %v576
    %658 = vmatprep.subr.mxu0 %v575
    %659 = vmatpush1.msra.mxu0 %v574
    %660 = vmatprep.subr.mxu0 %v573
    %661 = vmatpush1.msra.mxu0 %v572
    %662 = vmatprep.subr.mxu0 %v571
    %663 = vmatpush1.msra.mxu0 %v570
    %664 = vmatprep.subr.mxu0 %v569
    %665 = vmatpush1.msra.mxu0 %v568
    %666 = vmatprep.subr.mxu0 0.0
    %667 = vmatpush2.msra.mxu0 0.0
    %668 = vmatprep.subr.mxu0 0.0
    %669 = vmatpush2.msra.mxu0 0.0
    %670 = vmatprep.subr.mxu0 0.0
    %671 = vmatpush2.msra.mxu0 0.0
    %672 = vmatprep.subr.mxu0 0.0
    %673 = vmatpush2.msra.mxu0 0.0
    %674 = vmatprep.subr.mxu0 0.0
    %675 = vmatpush2.msra.mxu0 0.0
    %676 = vmatprep.subr.mxu0 0.0
    %677 = vmatpush2.msra.mxu0 0.0
    %678 = vmatprep.subr.mxu0 0.0
    %679 = vmatpush2.msra.mxu0 0.0
    %680 = vmatprep.subr.mxu0 0.0
    %681 = vmatpush2.msra.mxu0 0.0
    %682 = vmatprep.subr.mxu0 0.0
    %683 = vmatpush2.msra.mxu0 0.0
    %684 = vmatprep.subr.mxu0 0.0
    %685 = vmatpush2.msra.mxu0 0.0
    %686 = vmatprep.subr.mxu0 0.0
    %687 = vmatpush2.msra.mxu0 0.0
    %688 = vmatprep.subr.mxu0 0.0
    %689 = vmatpush2.msra.mxu0 0.0
    %690 = vmatprep.subr.mxu0 %v607
    %691 = vmatpush2.msra.mxu0 %v606
    %692 = vmatprep.subr.mxu0 %v605
    %693 = vmatpush2.msra.mxu0 %v604
    %694 = vmatprep.subr.mxu0 %v603
    %695 = vmatpush2.msra.mxu0 %v602
    %696 = vmatprep.subr.mxu0 %v601
    %697 = vmatpush2.msra.mxu0 %v600
    %698 = vmatprep.mubr.f32.mxu0 %v628
    %699 = vmatmul.mubr.f32.gmra.mxu0 %v617
    %v700 = vpop.f32.mrf.mxu0
    %v701 = vadd.f32 0.0, %v700
    %v702 = vpop.f32.mrf.mxu0
    %v703 = vadd.f32 0.0, %v702
    %704 = vmatprep.mubr.f32.mxu0 %v630
    %705 = vmatmul.mubr.f32.gmra.mxu0 %v622
    %v706 = vpop.f32.mrf.mxu0
    %v707 = vadd.f32 0.0, %v706
    %v708 = vpop.f32.mrf.mxu0
    %v709 = vadd.f32 0.0, %v708
    %710 = vmatprep.mubr.f32.mxu0 %v632
    %711 = vmatmul.mubr.f32.gmra.mxu0 %v621
    %v712 = vpop.f32.mrf.mxu0
    %v713 = vadd.f32 0.0, %v712
    %v714 = vpop.f32.mrf.mxu0
    %v715 = vadd.f32 0.0, %v714
    %716 = vdwg.mxu0
    %v718 = vsel %vm107, %v518, 0
    %v720 = vsel %vm107, %v520, 0
    %v723 = vsel %vm107, %v522, 0
    %725 = vmatprep.subr.mxu0 %v554
    %726 = vmatpush1.msra.mxu0 %v553
    %727 = vmatprep.subr.mxu0 %v552
    %728 = vmatpush1.msra.mxu0 %v551
    %729 = vmatprep.subr.mxu0 %v550
    %730 = vmatpush1.msra.mxu0 %v549
    %731 = vmatprep.subr.mxu0 %v548
    %732 = vmatpush1.msra.mxu0 %v547
    %733 = vmatprep.subr.mxu0 %v546
    %734 = vmatpush1.msra.mxu0 %v545
    %735 = vmatprep.subr.mxu0 %v544
    %736 = vmatpush1.msra.mxu0 %v543
    %737 = vmatprep.subr.mxu0 %v542
    %738 = vmatpush1.msra.mxu0 %v541
    %739 = vmatprep.subr.mxu0 %v540
    %740 = vmatpush1.msra.mxu0 %v539
    %741 = vmatprep.subr.mxu0 %v538
    %742 = vmatpush1.msra.mxu0 %v537
    %743 = vmatprep.subr.mxu0 %v536
    %744 = vmatpush1.msra.mxu0 %v535
    %745 = vmatprep.subr.mxu0 %v534
    %746 = vmatpush1.msra.mxu0 %v533
    %747 = vmatprep.subr.mxu0 %v532
    %748 = vmatpush1.msra.mxu0 %v531
    %749 = vmatprep.subr.mxu0 %v530
    %750 = vmatpush1.msra.mxu0 %v529
    %751 = vmatprep.subr.mxu0 %v528
    %752 = vmatpush1.msra.mxu0 %v527
    %753 = vmatprep.subr.mxu0 %v526
    %754 = vmatpush1.msra.mxu0 %v525
    %755 = vmatprep.subr.mxu0 %v524
    %756 = vmatpush1.msra.mxu0 %v523
    %757 = vmatprep.subr.mxu0 0.0
    %758 = vmatpush2.msra.mxu0 0.0
    %759 = vmatprep.subr.mxu0 0.0
    %760 = vmatpush2.msra.mxu0 0.0
    %761 = vmatprep.subr.mxu0 0.0
    %762 = vmatpush2.msra.mxu0 0.0
    %763 = vmatprep.subr.mxu0 0.0
    %764 = vmatpush2.msra.mxu0 0.0
    %765 = vmatprep.subr.mxu0 0.0
    %766 = vmatpush2.msra.mxu0 0.0
    %767 = vmatprep.subr.mxu0 0.0
    %768 = vmatpush2.msra.mxu0 0.0
    %769 = vmatprep.subr.mxu0 0.0
    %770 = vmatpush2.msra.mxu0 0.0
    %771 = vmatprep.subr.mxu0 0.0
    %772 = vmatpush2.msra.mxu0 0.0
    %773 = vmatprep.subr.mxu0 0.0
    %774 = vmatpush2.msra.mxu0 0.0
    %775 = vmatprep.subr.mxu0 0.0
    %776 = vmatpush2.msra.mxu0 0.0
    %777 = vmatprep.subr.mxu0 0.0
    %778 = vmatpush2.msra.mxu0 0.0
    %779 = vmatprep.subr.mxu0 0.0
    %780 = vmatpush2.msra.mxu0 0.0
    %781 = vmatprep.subr.mxu0 %v562
    %782 = vmatpush2.msra.mxu0 %v561
    %783 = vmatprep.subr.mxu0 %v560
    %784 = vmatpush2.msra.mxu0 %v559
    %785 = vmatprep.subr.mxu0 %v558
    %786 = vmatpush2.msra.mxu0 %v557
    %787 = vmatprep.subr.mxu0 %v556
    %788 = vmatpush2.msra.mxu0 %v555
    %789 = vmatprep.mubr.f32.mxu0 %v718
    %790 = vmatmul.mubr.f32.gmra.mxu0 %v517
    %v791 = vpop.f32.mrf.mxu0
    %v792 = vadd.f32 %v701, %v791
    %v793 = vpop.f32.mrf.mxu0
    %v794 = vadd.f32 %v703, %v793
    %795 = vmatprep.mubr.f32.mxu0 %v720
    %796 = vmatmul.mubr.f32.gmra.mxu0 %v519
    %v797 = vpop.f32.mrf.mxu0
    %v798 = vadd.f32 %v707, %v797
    %v799 = vpop.f32.mrf.mxu0
    %v800 = vadd.f32 %v709, %v799
    %801 = vmatprep.mubr.f32.mxu0 %v723
    %802 = vmatmul.mubr.f32.gmra.mxu0 %v521
    %v803 = vpop.f32.mrf.mxu0
    %v804 = vadd.f32 %v713, %v803
    %v805 = vpop.f32.mrf.mxu0
    %v806 = vadd.f32 %v715, %v805
    %807 = vdwg.mxu0
    %v808 = vld [vmem:[#allocation2] sm:$0xfc]
    %v809 = vld [vmem:[#allocation2 + $0x8] sm:$0xfc]
    %v810 = vld [vmem:[#allocation2 + $0x20] sm:$0xff]
    %v811 = vld [vmem:[#allocation2 + $0x28] sm:$0xff]
    %s812 = scalar_lea.vmem %s4, 640
    %v813 = vld [vmem:[%s812] sm:$0xff]
    %v814 = vld [vmem:[%s812 + $0x8] sm:$0xff]
    %v815 = vld [vmem:[%s812 + $0x10] sm:$0xff]
    %v816 = vld [vmem:[%s812 + $0x18] sm:$0xff]
    %v817 = vld [vmem:[%s812 + $0x20] sm:$0xff]
    %v818 = vld [vmem:[%s812 + $0x28] sm:$0xff]
    %v819 = vld [vmem:[%s812 + $0x30] sm:$0xff]
    %v820 = vld [vmem:[%s812 + $0x38] sm:$0xff]
    %v821 = vld [vmem:[%s812 + $0x40] sm:$0xff]
    %v822 = vld [vmem:[%s812 + $0x48] sm:$0xff]
    %v823 = vld [vmem:[%s812 + $0x50] sm:$0xff]
    %v824 = vld [vmem:[%s812 + $0x58] sm:$0xff]
    %v825 = vld [vmem:[%s812 + $0x60] sm:$0xff]
    %v826 = vld [vmem:[%s812 + $0x68] sm:$0xff]
    %v827 = vld [vmem:[%s812 + $0x70] sm:$0xff]
    %v828 = vld [vmem:[%s812 + $0x78] sm:$0xff]
    %v829 = vld [vmem:[%s812 + $0x80] sm:$0xff]
    %v830 = vld [vmem:[%s812 + $0x88] sm:$0xff]
    %v831 = vld [vmem:[%s812 + $0x90] sm:$0xff]
    %v832 = vld [vmem:[%s812 + $0x98] sm:$0xff]
    %v833 = vld [vmem:[%s812 + $0xa0] sm:$0xff]
    %v834 = vld [vmem:[%s812 + $0xa8] sm:$0xff]
    %v835 = vld [vmem:[%s812 + $0xb0] sm:$0xff]
    %v836 = vld [vmem:[%s812 + $0xb8] sm:$0xff]
    %v837 = vld [vmem:[%s812 + $0xc0] sm:$0xff]
    %v838 = vld [vmem:[%s812 + $0xc8] sm:$0xff]
    %v839 = vld [vmem:[%s812 + $0xd0] sm:$0xff]
    %v840 = vld [vmem:[%s812 + $0xd8] sm:$0xff]
    %v841 = vld [vmem:[%s812 + $0xe0] sm:$0xff]
    %v842 = vld [vmem:[%s812 + $0xe8] sm:$0xff]
    %v843 = vld [vmem:[%s812 + $0xf0] sm:$0xff]
    %v844 = vld [vmem:[%s812 + $0xf8] sm:$0xff]
    %v845 = vld [vmem:[%s812 + $0x100] sm:$0xff]
    %v846 = vld [vmem:[%s812 + $0x108] sm:$0xff]
    %v847 = vld [vmem:[%s812 + $0x110] sm:$0xff]
    %v848 = vld [vmem:[%s812 + $0x118] sm:$0xff]
    %v849 = vld [vmem:[%s812 + $0x120] sm:$0xff]
    %v850 = vld [vmem:[%s812 + $0x128] sm:$0xff]
    %v851 = vld [vmem:[%s812 + $0x130] sm:$0xff]
    %v852 = vld [vmem:[%s812 + $0x138] sm:$0xff]
    %vm857 = vcmask 1045504
    %v858 = vrot.slane %v808, 2
    %v859 = vrot.slane %v519, 2
    %v860 = vsel %vm857, %v858, %v859
    %v861 = vrot.slane %v809, 2
    %v862 = vrot.slane %v520, 2
    %v863 = vsel %vm857, %v861, %v862
    %v864 = vrot.slane %v810, 2
    %v865 = vsel %vm857, %v859, %v864
    %v866 = vrot.slane %v811, 2
    %v867 = vsel %vm857, %v862, %v866
    %v871 = vsel %vm107, %v863, 0
    %v873 = vsel %vm107, %v867, 0
    %v875 = vsel %vm107, %v866, 0
    %877 = vmatprep.subr.mxu0 %v844
    %878 = vmatpush1.msra.mxu0 %v843
    %879 = vmatprep.subr.mxu0 %v842
    %880 = vmatpush1.msra.mxu0 %v841
    %881 = vmatprep.subr.mxu0 %v840
    %882 = vmatpush1.msra.mxu0 %v839
    %883 = vmatprep.subr.mxu0 %v838
    %884 = vmatpush1.msra.mxu0 %v837
    %885 = vmatprep.subr.mxu0 %v836
    %886 = vmatpush1.msra.mxu0 %v835
    %887 = vmatprep.subr.mxu0 %v834
    %888 = vmatpush1.msra.mxu0 %v833
    %889 = vmatprep.subr.mxu0 %v832
    %890 = vmatpush1.msra.mxu0 %v831
    %891 = vmatprep.subr.mxu0 %v830
    %892 = vmatpush1.msra.mxu0 %v829
    %893 = vmatprep.subr.mxu0 %v828
    %894 = vmatpush1.msra.mxu0 %v827
    %895 = vmatprep.subr.mxu0 %v826
    %896 = vmatpush1.msra.mxu0 %v825
    %897 = vmatprep.subr.mxu0 %v824
    %898 = vmatpush1.msra.mxu0 %v823
    %899 = vmatprep.subr.mxu0 %v822
    %900 = vmatpush1.msra.mxu0 %v821
    %901 = vmatprep.subr.mxu0 %v820
    %902 = vmatpush1.msra.mxu0 %v819
    %903 = vmatprep.subr.mxu0 %v818
    %904 = vmatpush1.msra.mxu0 %v817
    %905 = vmatprep.subr.mxu0 %v816
    %906 = vmatpush1.msra.mxu0 %v815
    %907 = vmatprep.subr.mxu0 %v814
    %908 = vmatpush1.msra.mxu0 %v813
    %909 = vmatprep.subr.mxu0 0.0
    %910 = vmatpush2.msra.mxu0 0.0
    %911 = vmatprep.subr.mxu0 0.0
    %912 = vmatpush2.msra.mxu0 0.0
    %913 = vmatprep.subr.mxu0 0.0
    %914 = vmatpush2.msra.mxu0 0.0
    %915 = vmatprep.subr.mxu0 0.0
    %916 = vmatpush2.msra.mxu0 0.0
    %917 = vmatprep.subr.mxu0 0.0
    %918 = vmatpush2.msra.mxu0 0.0
    %919 = vmatprep.subr.mxu0 0.0
    %920 = vmatpush2.msra.mxu0 0.0
    %921 = vmatprep.subr.mxu0 0.0
    %922 = vmatpush2.msra.mxu0 0.0
    %923 = vmatprep.subr.mxu0 0.0
    %924 = vmatpush2.msra.mxu0 0.0
    %925 = vmatprep.subr.mxu0 0.0
    %926 = vmatpush2.msra.mxu0 0.0
    %927 = vmatprep.subr.mxu0 0.0
    %928 = vmatpush2.msra.mxu0 0.0
    %929 = vmatprep.subr.mxu0 0.0
    %930 = vmatpush2.msra.mxu0 0.0
    %931 = vmatprep.subr.mxu0 0.0
    %932 = vmatpush2.msra.mxu0 0.0
    %933 = vmatprep.subr.mxu0 %v852
    %934 = vmatpush2.msra.mxu0 %v851
    %935 = vmatprep.subr.mxu0 %v850
    %936 = vmatpush2.msra.mxu0 %v849
    %937 = vmatprep.subr.mxu0 %v848
    %938 = vmatpush2.msra.mxu0 %v847
    %939 = vmatprep.subr.mxu0 %v846
    %940 = vmatpush2.msra.mxu0 %v845
    %941 = vmatprep.mubr.f32.mxu0 %v871
    %942 = vmatmul.mubr.f32.gmra.mxu0 %v860
    %v943 = vpop.f32.mrf.mxu0
    %v944 = vadd.f32 0.0, %v943
    %v945 = vpop.f32.mrf.mxu0
    %v946 = vadd.f32 0.0, %v945
    %947 = vmatprep.mubr.f32.mxu0 %v873
    %948 = vmatmul.mubr.f32.gmra.mxu0 %v865
    %v949 = vpop.f32.mrf.mxu0
    %v950 = vadd.f32 0.0, %v949
    %v951 = vpop.f32.mrf.mxu0
    %v952 = vadd.f32 0.0, %v951
    %953 = vmatprep.mubr.f32.mxu0 %v875
    %954 = vmatmul.mubr.f32.gmra.mxu0 %v864
    %v955 = vpop.f32.mrf.mxu0
    %v956 = vadd.f32 0.0, %v955
    %v957 = vpop.f32.mrf.mxu0
    %v958 = vadd.f32 0.0, %v957
    %959 = vdwg.mxu0
    %v960 = vadd.f32 %v792, %v944
    %v961 = vadd.f32 %v794, %v946
    %v962 = vadd.f32 %v798, %v950
    %v963 = vadd.f32 %v800, %v952
    %v964 = vadd.f32 %v804, %v956
    %v965 = vadd.f32 %v806, %v958
    %v966 = vld [vmem:[#allocation7] sm:$0x3]
    %v968 = vlaneseq
    %v969 = vshrl.u32 %v968, 7
    %v970 = vsub.s32 0, %v969
    %v971 = vrot.slane %v966, %v970
    %v972 = vlaneseq
    %v973 = vshrl.u32 %v972, 7
    %v974 = vsub.s32 1, %v973
    %v975 = vrot.slane %v966, %v974
    %v978 = vadd.f32 %v960, %v971
    %v979 = vadd.f32 %v961, %v975
    %v980 = vadd.f32 %v962, %v971
    %v981 = vadd.f32 %v963, %v975
    %v982 = vadd.f32 %v964, %v971
    %v983 = vadd.f32 %v965, %v975
    %v984 = vmax.f32 %v978, 0.0
    %v985 = vmax.f32 %v979, 0.0
    %v986 = vmax.f32 %v980, 0.0
    %v987 = vmax.f32 %v981, 0.0
    %v988 = vmax.f32 %v982, 0.0
    %v989 = vmax.f32 %v983, 0.0
    %996 = vrot.lane.b32.xlu0 %v984, 112
    %v997 = vpop.permute.xlu0 %996
    %998 = vrot.lane.b32.xlu0 %v985, 112
    %v999 = vpop.permute.xlu0 %998
    %1000 = vrot.lane.b32.xlu0 %v986, 112
    %v1001 = vpop.permute.xlu0 %1000
    %1002 = vrot.lane.b32.xlu0 %v987, 112
    %v1003 = vpop.permute.xlu0 %1002
    %1004 = vrot.lane.b32.xlu0 %v988, 112
    %v1005 = vpop.permute.xlu0 %1004
    %1006 = vrot.lane.b32.xlu0 %v989, 112
    %v1007 = vpop.permute.xlu0 %1006
    %vm1008 = vcmask 916480
    %v1009 = vsel %vm1008, %v997, %v999
    %v1010 = vsel %vm1008, %v1001, %v1003
    %v1011 = vsel %vm1008, %v1005, %v1007
    %v1018 = vmax.f32 %v984, %v1009
    %v1019 = vmax.f32 %v985, %v999
    %v1020 = vmax.f32 %v986, %v1010
    %v1021 = vmax.f32 %v987, %v1003
    %v1022 = vmax.f32 %v988, %v1011
    %v1023 = vmax.f32 %v989, %v1007
    %v1030 = vrot.slane %v1018, 1
    %v1031 = vrot.slane %v1020, 1
    %v1032 = vsel %vm614, %v1030, %v1031
    %v1033 = vrot.slane %v1019, 1
    %v1034 = vrot.slane %v1021, 1
    %v1035 = vsel %vm614, %v1033, %v1034
    %v1036 = vrot.slane %v1022, 1
    %v1037 = vsel %vm614, %v1031, %v1036
    %v1038 = vrot.slane %v1023, 1
    %v1039 = vsel %vm614, %v1034, %v1038
    %v1046 = vmax.f32 %v1018, %v1032
    %v1047 = vmax.f32 %v1019, %v1035
    %v1048 = vmax.f32 %v1020, %v1037
    %v1049 = vmax.f32 %v1021, %v1039
    %v1050 = vmax.f32 %v1022, %v1036
    %v1051 = vmax.f32 %v1023, %v1038
    %v1052 = vld [vmem:[#allocation9] sm:$0xff]
    %vm1053 = vcmask 171008
    %v1055 = vsel %vm1053, %v1052, 0
    %vm1057 = vcmask 1044480
    %v1059 = vsel %vm1057, %v1050, 0
    %v1062 = vsel %vm1057, %v1051, 0
    %1064 = vmatprep.subr.mxu0 0.0
    %1065 = vmatpush1.msra.mxu0 0.0
    %1066 = vmatprep.subr.mxu0 0.0
    %1067 = vmatpush1.msra.mxu0 0.0
    %1068 = vmatprep.subr.mxu0 0.0
    %1069 = vmatpush1.msra.mxu0 0.0
    %1070 = vmatprep.subr.mxu0 0.0
    %1071 = vmatpush1.msra.mxu0 0.0
    %1072 = vmatprep.subr.mxu0 0.0
    %1073 = vmatpush1.msra.mxu0 0.0
    %1074 = vmatprep.subr.mxu0 0.0
    %1075 = vmatpush1.msra.mxu0 0.0
    %1076 = vmatprep.subr.mxu0 0.0
    %1077 = vmatpush1.msra.mxu0 0.0
    %1078 = vmatprep.subr.mxu0 0.0
    %1079 = vmatpush1.msra.mxu0 0.0
    %1080 = vmatprep.subr.mxu0 0.0
    %1081 = vmatpush1.msra.mxu0 0.0
    %1082 = vmatprep.subr.mxu0 0.0
    %1083 = vmatpush1.msra.mxu0 0.0
    %1084 = vmatprep.subr.mxu0 0.0
    %1085 = vmatpush1.msra.mxu0 0.0
    %1086 = vmatprep.subr.mxu0 0.0
    %1087 = vmatpush1.msra.mxu0 0.0
    %1088 = vmatprep.subr.mxu0 0.0
    %1089 = vmatpush1.msra.mxu0 0.0
    %1090 = vmatprep.subr.mxu0 %v1062
    %1091 = vmatpush1.msra.mxu0 %v1059
    %1092 = vmatprep.subr.mxu0 %v1049
    %1093 = vmatpush1.msra.mxu0 %v1048
    %1094 = vmatprep.subr.mxu0 %v1047
    %1095 = vmatpush1.msra.mxu0 %v1046
    %1096 = vmatprep.subr.mxu0 0.0
    %1097 = vmatpush2.msra.mxu0 0.0
    %1098 = vmatprep.subr.mxu0 0.0
    %1099 = vmatpush2.msra.mxu0 0.0
    %1100 = vmatprep.subr.mxu0 0.0
    %1101 = vmatpush2.msra.mxu0 0.0
    %1102 = vmatprep.subr.mxu0 0.0
    %1103 = vmatpush2.msra.mxu0 0.0
    %1104 = vmatprep.subr.mxu0 0.0
    %1105 = vmatpush2.msra.mxu0 0.0
    %1106 = vmatprep.subr.mxu0 0.0
    %1107 = vmatpush2.msra.mxu0 0.0
    %1108 = vmatprep.subr.mxu0 0.0
    %1109 = vmatpush2.msra.mxu0 0.0
    %1110 = vmatprep.subr.mxu0 0.0
    %1111 = vmatpush2.msra.mxu0 0.0
    %1112 = vmatprep.subr.mxu0 0.0
    %1113 = vmatpush2.msra.mxu0 0.0
    %1114 = vmatprep.subr.mxu0 0.0
    %1115 = vmatpush2.msra.mxu0 0.0
    %1116 = vmatprep.subr.mxu0 0.0
    %1117 = vmatpush2.msra.mxu0 0.0
    %1118 = vmatprep.subr.mxu0 0.0
    %1119 = vmatpush2.msra.mxu0 0.0
    %1120 = vmatprep.subr.mxu0 0.0
    %1121 = vmatpush2.msra.mxu0 0.0
    %1122 = vmatprep.subr.mxu0 0.0
    %1123 = vmatpush2.msra.mxu0 0.0
    %1124 = vmatprep.subr.mxu0 0.0
    %1125 = vmatpush2.msra.mxu0 0.0
    %1126 = vmatprep.subr.mxu0 0.0
    %1127 = vmatpush2.msra.mxu0 0.0
    %1128 = vmatprep.mubr.f32.mxu0 0.0
    %1129 = vmatmul.mubr.f32.gmra.mxu0 %v1055
    %v1130 = vpop.f32.mrf.mxu0
    %v1131 = vadd.f32 0.0, %v1130
    %v1132 = vpop.f32.mrf.mxu0
    %v1133 = vadd.f32 0.0, %v1132
    %1134 = vdwg.mxu0
    %v1135 = vld [vmem:[%s7] sm:$0xff]
    %v1136 = vld [vmem:[%s7 + $0x8] sm:$0xff]
    %v1137 = vld [vmem:[%s7 + $0x10] sm:$0xff]
    %v1138 = vld [vmem:[%s7 + $0x18] sm:$0xff]
    %v1139 = vld [vmem:[%s7 + $0x20] sm:$0xff]
    %v1140 = vld [vmem:[%s7 + $0x28] sm:$0xff]
    %v1141 = vld [vmem:[%s7 + $0x30] sm:$0xff]
    %v1142 = vld [vmem:[%s7 + $0x38] sm:$0xff]
    %v1143 = vld [vmem:[%s7 + $0x40] sm:$0xff]
    %v1144 = vld [vmem:[%s7 + $0x48] sm:$0xff]
    %v1145 = vld [vmem:[%s7 + $0x50] sm:$0xff]
    %v1146 = vld [vmem:[%s7 + $0x58] sm:$0xff]
    %v1147 = vld [vmem:[%s7 + $0x60] sm:$0xff]
    %v1148 = vld [vmem:[%s7 + $0x68] sm:$0xff]
    %v1149 = vld [vmem:[%s7 + $0x70] sm:$0xff]
    %v1150 = vld [vmem:[%s7 + $0x78] sm:$0xff]
    %v1151 = vld [vmem:[%s7 + $0x80] sm:$0xff]
    %v1152 = vld [vmem:[%s7 + $0x88] sm:$0xff]
    %v1153 = vld [vmem:[%s7 + $0x90] sm:$0xff]
    %v1154 = vld [vmem:[%s7 + $0x98] sm:$0xff]
    %v1155 = vld [vmem:[%s7 + $0xa0] sm:$0xff]
    %v1156 = vld [vmem:[%s7 + $0xa8] sm:$0xff]
    %v1157 = vld [vmem:[%s7 + $0xb0] sm:$0xff]
    %v1158 = vld [vmem:[%s7 + $0xb8] sm:$0xff]
    %v1159 = vld [vmem:[%s7 + $0xc0] sm:$0xff]
    %v1160 = vld [vmem:[%s7 + $0xc8] sm:$0xff]
    %v1161 = vld [vmem:[%s7 + $0xd0] sm:$0xff]
    %v1162 = vld [vmem:[%s7 + $0xd8] sm:$0xff]
    %v1163 = vld [vmem:[%s7 + $0xe0] sm:$0xff]
    %v1164 = vld [vmem:[%s7 + $0xe8] sm:$0xff]
    %v1165 = vld [vmem:[%s7 + $0xf0] sm:$0xff]
    %v1166 = vld [vmem:[%s7 + $0xf8] sm:$0xff]
    %v1167 = vld [vmem:[%s7 + $0x100] sm:$0xff]
    %v1168 = vld [vmem:[%s7 + $0x108] sm:$0xff]
    %v1169 = vld [vmem:[%s7 + $0x110] sm:$0xff]
    %v1170 = vld [vmem:[%s7 + $0x118] sm:$0xff]
    %s1171 = scalar_lea.vmem [#allocation9], 8
    %v1172 = vld [vmem:[%s1171] sm:$0xff]
    %v1174 = vsel %vm1053, %v1172, 0
    %1176 = vmatprep.subr.mxu0 0.0
    %1177 = vmatpush1.msra.mxu0 0.0
    %1178 = vmatprep.subr.mxu0 0.0
    %1179 = vmatpush1.msra.mxu0 0.0
    %1180 = vmatprep.subr.mxu0 0.0
    %1181 = vmatpush1.msra.mxu0 0.0
    %1182 = vmatprep.subr.mxu0 0.0
    %1183 = vmatpush1.msra.mxu0 0.0
    %1184 = vmatprep.subr.mxu0 0.0
    %1185 = vmatpush1.msra.mxu0 0.0
    %1186 = vmatprep.subr.mxu0 0.0
    %1187 = vmatpush1.msra.mxu0 0.0
    %1188 = vmatprep.subr.mxu0 0.0
    %1189 = vmatpush1.msra.mxu0 0.0
    %1190 = vmatprep.subr.mxu0 0.0
    %1191 = vmatpush1.msra.mxu0 0.0
    %1192 = vmatprep.subr.mxu0 0.0
    %1193 = vmatpush1.msra.mxu0 0.0
    %1194 = vmatprep.subr.mxu0 0.0
    %1195 = vmatpush1.msra.mxu0 0.0
    %1196 = vmatprep.subr.mxu0 0.0
    %1197 = vmatpush1.msra.mxu0 0.0
    %1198 = vmatprep.subr.mxu0 0.0
    %1199 = vmatpush1.msra.mxu0 0.0
    %1200 = vmatprep.subr.mxu0 0.0
    %1201 = vmatpush1.msra.mxu0 0.0
    %1202 = vmatprep.subr.mxu0 %v1062
    %1203 = vmatpush1.msra.mxu0 %v1059
    %1204 = vmatprep.subr.mxu0 %v1049
    %1205 = vmatpush1.msra.mxu0 %v1048
    %1206 = vmatprep.subr.mxu0 %v1047
    %1207 = vmatpush1.msra.mxu0 %v1046
    %1208 = vmatprep.subr.mxu0 0.0
    %1209 = vmatpush2.msra.mxu0 0.0
    %1210 = vmatprep.subr.mxu0 0.0
    %1211 = vmatpush2.msra.mxu0 0.0
    %1212 = vmatprep.subr.mxu0 0.0
    %1213 = vmatpush2.msra.mxu0 0.0
    %1214 = vmatprep.subr.mxu0 0.0
    %1215 = vmatpush2.msra.mxu0 0.0
    %1216 = vmatprep.subr.mxu0 0.0
    %1217 = vmatpush2.msra.mxu0 0.0
    %1218 = vmatprep.subr.mxu0 0.0
    %1219 = vmatpush2.msra.mxu0 0.0
    %1220 = vmatprep.subr.mxu0 0.0
    %1221 = vmatpush2.msra.mxu0 0.0
    %1222 = vmatprep.subr.mxu0 0.0
    %1223 = vmatpush2.msra.mxu0 0.0
    %1224 = vmatprep.subr.mxu0 0.0
    %1225 = vmatpush2.msra.mxu0 0.0
    %1226 = vmatprep.subr.mxu0 0.0
    %1227 = vmatpush2.msra.mxu0 0.0
    %1228 = vmatprep.subr.mxu0 0.0
    %1229 = vmatpush2.msra.mxu0 0.0
    %1230 = vmatprep.subr.mxu0 0.0
    %1231 = vmatpush2.msra.mxu0 0.0
    %1232 = vmatprep.subr.mxu0 0.0
    %1233 = vmatpush2.msra.mxu0 0.0
    %1234 = vmatprep.subr.mxu0 0.0
    %1235 = vmatpush2.msra.mxu0 0.0
    %1236 = vmatprep.subr.mxu0 0.0
    %1237 = vmatpush2.msra.mxu0 0.0
    %1238 = vmatprep.subr.mxu0 0.0
    %1239 = vmatpush2.msra.mxu0 0.0
    %1240 = vmatprep.mubr.f32.mxu0 0.0
    %1241 = vmatmul.mubr.f32.gmra.mxu0 %v1174
    %v1242 = vpop.f32.mrf.mxu0
    %v1243 = vadd.f32 0.0, %v1242
    %v1244 = vpop.f32.mrf.mxu0
    %v1245 = vadd.f32 0.0, %v1244
    %1246 = vdwg.mxu0
    %s1247 = scalar_lea.vmem %s7, 288
    %v1248 = vld [vmem:[%s1247] sm:$0xff]
    %v1249 = vld [vmem:[%s1247 + $0x8] sm:$0xff]
    %v1250 = vld [vmem:[%s1247 + $0x10] sm:$0xff]
    %v1251 = vld [vmem:[%s1247 + $0x18] sm:$0xff]
    %v1252 = vld [vmem:[%s1247 + $0x20] sm:$0xff]
    %v1253 = vld [vmem:[%s1247 + $0x28] sm:$0xff]
    %v1254 = vld [vmem:[%s1247 + $0x30] sm:$0xff]
    %v1255 = vld [vmem:[%s1247 + $0x38] sm:$0xff]
    %v1256 = vld [vmem:[%s1247 + $0x40] sm:$0xff]
    %v1257 = vld [vmem:[%s1247 + $0x48] sm:$0xff]
    %v1258 = vld [vmem:[%s1247 + $0x50] sm:$0xff]
    %v1259 = vld [vmem:[%s1247 + $0x58] sm:$0xff]
    %v1260 = vld [vmem:[%s1247 + $0x60] sm:$0xff]
    %v1261 = vld [vmem:[%s1247 + $0x68] sm:$0xff]
    %v1262 = vld [vmem:[%s1247 + $0x70] sm:$0xff]
    %v1263 = vld [vmem:[%s1247 + $0x78] sm:$0xff]
    %v1264 = vld [vmem:[%s1247 + $0x80] sm:$0xff]
    %v1265 = vld [vmem:[%s1247 + $0x88] sm:$0xff]
    %v1266 = vld [vmem:[%s1247 + $0x90] sm:$0xff]
    %v1267 = vld [vmem:[%s1247 + $0x98] sm:$0xff]
    %v1268 = vld [vmem:[%s1247 + $0xa0] sm:$0xff]
    %v1269 = vld [vmem:[%s1247 + $0xa8] sm:$0xff]
    %v1270 = vld [vmem:[%s1247 + $0xb0] sm:$0xff]
    %v1271 = vld [vmem:[%s1247 + $0xb8] sm:$0xff]
    %v1272 = vld [vmem:[%s1247 + $0xc0] sm:$0xff]
    %v1273 = vld [vmem:[%s1247 + $0xc8] sm:$0xff]
    %v1274 = vld [vmem:[%s1247 + $0xd0] sm:$0xff]
    %v1275 = vld [vmem:[%s1247 + $0xd8] sm:$0xff]
    %v1276 = vld [vmem:[%s1247 + $0xe0] sm:$0xff]
    %v1277 = vld [vmem:[%s1247 + $0xe8] sm:$0xff]
    %v1278 = vld [vmem:[%s1247 + $0xf0] sm:$0xff]
    %v1279 = vld [vmem:[%s1247 + $0xf8] sm:$0xff]
    %v1280 = vld [vmem:[%s1247 + $0x100] sm:$0xff]
    %v1281 = vld [vmem:[%s1247 + $0x108] sm:$0xff]
    %v1282 = vld [vmem:[%s1247 + $0x110] sm:$0xff]
    %v1283 = vld [vmem:[%s1247 + $0x118] sm:$0xff]
    %vm1284 = vcmask 130048
    %v1286 = vsel %vm1284, %v1245, 0
    %1288 = vmatprep.subr.mxu0 %v1279
    %1289 = vmatpush1.msra.mxu0 %v1278
    %1290 = vmatprep.subr.mxu0 %v1277
    %1291 = vmatpush1.msra.mxu0 %v1276
    %1292 = vmatprep.subr.mxu0 %v1275
    %1293 = vmatpush1.msra.mxu0 %v1274
    %1294 = vmatprep.subr.mxu0 %v1273
    %1295 = vmatpush1.msra.mxu0 %v1272
    %1296 = vmatprep.subr.mxu0 %v1271
    %1297 = vmatpush1.msra.mxu0 %v1270
    %1298 = vmatprep.subr.mxu0 %v1269
    %1299 = vmatpush1.msra.mxu0 %v1268
    %1300 = vmatprep.subr.mxu0 %v1267
    %1301 = vmatpush1.msra.mxu0 %v1266
    %1302 = vmatprep.subr.mxu0 %v1265
    %1303 = vmatpush1.msra.mxu0 %v1264
    %1304 = vmatprep.subr.mxu0 %v1263
    %1305 = vmatpush1.msra.mxu0 %v1262
    %1306 = vmatprep.subr.mxu0 %v1261
    %1307 = vmatpush1.msra.mxu0 %v1260
    %1308 = vmatprep.subr.mxu0 %v1259
    %1309 = vmatpush1.msra.mxu0 %v1258
    %1310 = vmatprep.subr.mxu0 %v1257
    %1311 = vmatpush1.msra.mxu0 %v1256
    %1312 = vmatprep.subr.mxu0 %v1255
    %1313 = vmatpush1.msra.mxu0 %v1254
    %1314 = vmatprep.subr.mxu0 %v1253
    %1315 = vmatpush1.msra.mxu0 %v1252
    %1316 = vmatprep.subr.mxu0 %v1251
    %1317 = vmatpush1.msra.mxu0 %v1250
    %1318 = vmatprep.subr.mxu0 %v1249
    %1319 = vmatpush1.msra.mxu0 %v1248
    %1320 = vmatprep.subr.mxu0 0.0
    %1321 = vmatpush2.msra.mxu0 0.0
    %1322 = vmatprep.subr.mxu0 0.0
    %1323 = vmatpush2.msra.mxu0 0.0
    %1324 = vmatprep.subr.mxu0 0.0
    %1325 = vmatpush2.msra.mxu0 0.0
    %1326 = vmatprep.subr.mxu0 0.0
    %1327 = vmatpush2.msra.mxu0 0.0
    %1328 = vmatprep.subr.mxu0 0.0
    %1329 = vmatpush2.msra.mxu0 0.0
    %1330 = vmatprep.subr.mxu0 0.0
    %1331 = vmatpush2.msra.mxu0 0.0
    %1332 = vmatprep.subr.mxu0 0.0
    %1333 = vmatpush2.msra.mxu0 0.0
    %1334 = vmatprep.subr.mxu0 0.0
    %1335 = vmatpush2.msra.mxu0 0.0
    %1336 = vmatprep.subr.mxu0 0.0
    %1337 = vmatpush2.msra.mxu0 0.0
    %1338 = vmatprep.subr.mxu0 0.0
    %1339 = vmatpush2.msra.mxu0 0.0
    %1340 = vmatprep.subr.mxu0 0.0
    %1341 = vmatpush2.msra.mxu0 0.0
    %1342 = vmatprep.subr.mxu0 0.0
    %1343 = vmatpush2.msra.mxu0 0.0
    %1344 = vmatprep.subr.mxu0 0.0
    %1345 = vmatpush2.msra.mxu0 0.0
    %1346 = vmatprep.subr.mxu0 0.0
    %1347 = vmatpush2.msra.mxu0 0.0
    %1348 = vmatprep.subr.mxu0 %v1283
    %1349 = vmatpush2.msra.mxu0 %v1282
    %1350 = vmatprep.subr.mxu0 %v1281
    %1351 = vmatpush2.msra.mxu0 %v1280
    %1352 = vmatprep.mubr.f32.mxu0 %v1286
    %1353 = vmatmul.mubr.f32.gmra.mxu0 %v1243
    %v1354 = vpop.f32.mrf.mxu0
    %v1355 = vadd.f32 0.0, %v1354
    %v1356 = vpop.f32.mrf.mxu0
    %v1357 = vadd.f32 0.0, %v1356
    %1358 = vdwg.mxu0
    %v1360 = vsel %vm1284, %v1133, 0
    %1362 = vmatprep.subr.mxu0 %v1166
    %1363 = vmatpush1.msra.mxu0 %v1165
    %1364 = vmatprep.subr.mxu0 %v1164
    %1365 = vmatpush1.msra.mxu0 %v1163
    %1366 = vmatprep.subr.mxu0 %v1162
    %1367 = vmatpush1.msra.mxu0 %v1161
    %1368 = vmatprep.subr.mxu0 %v1160
    %1369 = vmatpush1.msra.mxu0 %v1159
    %1370 = vmatprep.subr.mxu0 %v1158
    %1371 = vmatpush1.msra.mxu0 %v1157
    %1372 = vmatprep.subr.mxu0 %v1156
    %1373 = vmatpush1.msra.mxu0 %v1155
    %1374 = vmatprep.subr.mxu0 %v1154
    %1375 = vmatpush1.msra.mxu0 %v1153
    %1376 = vmatprep.subr.mxu0 %v1152
    %1377 = vmatpush1.msra.mxu0 %v1151
    %1378 = vmatprep.subr.mxu0 %v1150
    %1379 = vmatpush1.msra.mxu0 %v1149
    %1380 = vmatprep.subr.mxu0 %v1148
    %1381 = vmatpush1.msra.mxu0 %v1147
    %1382 = vmatprep.subr.mxu0 %v1146
    %1383 = vmatpush1.msra.mxu0 %v1145
    %1384 = vmatprep.subr.mxu0 %v1144
    %1385 = vmatpush1.msra.mxu0 %v1143
    %1386 = vmatprep.subr.mxu0 %v1142
    %1387 = vmatpush1.msra.mxu0 %v1141
    %1388 = vmatprep.subr.mxu0 %v1140
    %1389 = vmatpush1.msra.mxu0 %v1139
    %1390 = vmatprep.subr.mxu0 %v1138
    %1391 = vmatpush1.msra.mxu0 %v1137
    %1392 = vmatprep.subr.mxu0 %v1136
    %1393 = vmatpush1.msra.mxu0 %v1135
    %1394 = vmatprep.subr.mxu0 0.0
    %1395 = vmatpush2.msra.mxu0 0.0
    %1396 = vmatprep.subr.mxu0 0.0
    %1397 = vmatpush2.msra.mxu0 0.0
    %1398 = vmatprep.subr.mxu0 0.0
    %1399 = vmatpush2.msra.mxu0 0.0
    %1400 = vmatprep.subr.mxu0 0.0
    %1401 = vmatpush2.msra.mxu0 0.0
    %1402 = vmatprep.subr.mxu0 0.0
    %1403 = vmatpush2.msra.mxu0 0.0
    %1404 = vmatprep.subr.mxu0 0.0
    %1405 = vmatpush2.msra.mxu0 0.0
    %1406 = vmatprep.subr.mxu0 0.0
    %1407 = vmatpush2.msra.mxu0 0.0
    %1408 = vmatprep.subr.mxu0 0.0
    %1409 = vmatpush2.msra.mxu0 0.0
    %1410 = vmatprep.subr.mxu0 0.0
    %1411 = vmatpush2.msra.mxu0 0.0
    %1412 = vmatprep.subr.mxu0 0.0
    %1413 = vmatpush2.msra.mxu0 0.0
    %1414 = vmatprep.subr.mxu0 0.0
    %1415 = vmatpush2.msra.mxu0 0.0
    %1416 = vmatprep.subr.mxu0 0.0
    %1417 = vmatpush2.msra.mxu0 0.0
    %1418 = vmatprep.subr.mxu0 0.0
    %1419 = vmatpush2.msra.mxu0 0.0
    %1420 = vmatprep.subr.mxu0 0.0
    %1421 = vmatpush2.msra.mxu0 0.0
    %1422 = vmatprep.subr.mxu0 %v1170
    %1423 = vmatpush2.msra.mxu0 %v1169
    %1424 = vmatprep.subr.mxu0 %v1168
    %1425 = vmatpush2.msra.mxu0 %v1167
    %1426 = vmatprep.mubr.f32.mxu0 %v1360
    %1427 = vmatmul.mubr.f32.gmra.mxu0 %v1131
    %v1428 = vpop.f32.mrf.mxu0
    %v1429 = vadd.f32 %v1355, %v1428
    %v1430 = vpop.f32.mrf.mxu0
    %v1431 = vadd.f32 %v1357, %v1430
    %1432 = vdwg.mxu0
    %v1433 = vld [vmem:[%s8] sm:$0xf]
    %v1434 = vld [vmem:[%s8 + $0x4] sm:$0xf]
    %v1435 = vld [vmem:[%s8 + $0x8] sm:$0xf]
    %v1436 = vld [vmem:[%s8 + $0xc] sm:$0xf]
    %v1437 = vld [vmem:[%s8 + $0x10] sm:$0xf]
    %v1438 = vld [vmem:[%s8 + $0x14] sm:$0xf]
    %v1439 = vld [vmem:[%s8 + $0x18] sm:$0xf]
    %v1440 = vld [vmem:[%s8 + $0x1c] sm:$0xf]
    %v1441 = vld [vmem:[%s8 + $0x20] sm:$0xf]
    %v1442 = vld [vmem:[%s8 + $0x24] sm:$0xf]
    %v1443 = vld [vmem:[%s8 + $0x28] sm:$0xf]
    %v1444 = vld [vmem:[%s8 + $0x2c] sm:$0xf]
    %v1445 = vld [vmem:[%s8 + $0x30] sm:$0xf]
    %v1446 = vld [vmem:[%s8 + $0x34] sm:$0xf]
    %v1447 = vld [vmem:[%s8 + $0x38] sm:$0xf]
    %v1448 = vld [vmem:[%s8 + $0x3c] sm:$0xf]
    %v1449 = vld [vmem:[%s8 + $0x40] sm:$0xf]
    %v1450 = vld [vmem:[%s8 + $0x44] sm:$0xf]
    %v1451 = vld [vmem:[%s8 + $0x48] sm:$0xf]
    %v1452 = vld [vmem:[%s8 + $0x4c] sm:$0xf]
    %v1453 = vld [vmem:[%s8 + $0x50] sm:$0xf]
    %v1454 = vld [vmem:[%s8 + $0x54] sm:$0xf]
    %v1455 = vld [vmem:[%s8 + $0x58] sm:$0xf]
    %v1456 = vld [vmem:[%s8 + $0x5c] sm:$0xf]
    %v1457 = vld [vmem:[%s8 + $0x60] sm:$0xf]
    %v1458 = vld [vmem:[%s8 + $0x64] sm:$0xf]
    %v1459 = vld [vmem:[%s8 + $0x68] sm:$0xf]
    %v1460 = vld [vmem:[%s8 + $0x6c] sm:$0xf]
    %v1461 = vld [vmem:[%s8 + $0x70] sm:$0xf]
    %v1462 = vld [vmem:[%s8 + $0x74] sm:$0xf]
    %v1463 = vld [vmem:[%s8 + $0x78] sm:$0xf]
    %v1464 = vld [vmem:[%s8 + $0x7c] sm:$0xf]
    %v1465 = vld [vmem:[%s8 + $0x80] sm:$0xf]
    %v1466 = vld [vmem:[%s8 + $0x84] sm:$0xf]
    %v1467 = vld [vmem:[%s8 + $0x88] sm:$0xf]
    %v1468 = vld [vmem:[%s8 + $0x8c] sm:$0xf]
    %v1469 = vld [vmem:[%s8 + $0x90] sm:$0xf]
    %v1470 = vld [vmem:[%s8 + $0x94] sm:$0xf]
    %v1471 = vld [vmem:[%s8 + $0x98] sm:$0xf]
    %v1472 = vld [vmem:[%s8 + $0x9c] sm:$0xf]
    %v1473 = vld [vmem:[%s8 + $0xa0] sm:$0xf]
    %v1474 = vld [vmem:[%s8 + $0xa4] sm:$0xf]
    %v1475 = vld [vmem:[%s8 + $0xa8] sm:$0xf]
    %v1476 = vld [vmem:[%s8 + $0xac] sm:$0xf]
    %v1477 = vld [vmem:[%s8 + $0xb0] sm:$0xf]
    %v1478 = vld [vmem:[%s8 + $0xb4] sm:$0xf]
    %v1479 = vld [vmem:[%s8 + $0xb8] sm:$0xf]
    %v1480 = vld [vmem:[%s8 + $0xbc] sm:$0xf]
    %v1481 = vld [vmem:[%s8 + $0xc0] sm:$0xf]
    %v1482 = vld [vmem:[%s8 + $0xc4] sm:$0xf]
    %v1483 = vld [vmem:[%s8 + $0xc8] sm:$0xf]
    %v1484 = vld [vmem:[%s8 + $0xcc] sm:$0xf]
    %v1485 = vld [vmem:[%s8 + $0xd0] sm:$0xf]
    %v1486 = vld [vmem:[%s8 + $0xd4] sm:$0xf]
    %v1487 = vld [vmem:[%s8 + $0xd8] sm:$0xf]
    %v1488 = vld [vmem:[%s8 + $0xdc] sm:$0xf]
    %v1489 = vld [vmem:[%s8 + $0xe0] sm:$0xf]
    %v1490 = vld [vmem:[%s8 + $0xe4] sm:$0xf]
    %v1491 = vld [vmem:[%s8 + $0xe8] sm:$0xf]
    %v1492 = vld [vmem:[%s8 + $0xec] sm:$0xf]
    %v1493 = vld [vmem:[%s8 + $0xf0] sm:$0xf]
    %v1494 = vld [vmem:[%s8 + $0xf4] sm:$0xf]
    %v1495 = vld [vmem:[%s8 + $0xf8] sm:$0xf]
    %v1496 = vld [vmem:[%s8 + $0xfc] sm:$0xf]
    %v1497 = vld [vmem:[%s8 + $0x100] sm:$0xf]
    %v1498 = vld [vmem:[%s8 + $0x104] sm:$0xf]
    %v1499 = vld [vmem:[%s8 + $0x108] sm:$0xf]
    %v1500 = vld [vmem:[%s8 + $0x10c] sm:$0xf]
    %v1501 = vld [vmem:[%s8 + $0x110] sm:$0xf]
    %v1502 = vld [vmem:[%s8 + $0x114] sm:$0xf]
    %v1503 = vld [vmem:[%s8 + $0x118] sm:$0xf]
    %v1504 = vld [vmem:[%s8 + $0x11c] sm:$0xf]
    %v1505 = vld [vmem:[%s8 + $0x120] sm:$0xf]
    %v1506 = vld [vmem:[%s8 + $0x124] sm:$0xf]
    %v1507 = vld [vmem:[%s8 + $0x128] sm:$0xf]
    %v1508 = vld [vmem:[%s8 + $0x12c] sm:$0xf]
    %v1509 = vld [vmem:[%s8 + $0x130] sm:$0xf]
    %v1510 = vld [vmem:[%s8 + $0x134] sm:$0xf]
    %v1511 = vld [vmem:[%s8 + $0x138] sm:$0xf]
    %v1512 = vld [vmem:[%s8 + $0x13c] sm:$0xf]
    %v1513 = vld [vmem:[%s8 + $0x140] sm:$0xf]
    %v1514 = vld [vmem:[%s8 + $0x144] sm:$0xf]
    %v1515 = vld [vmem:[%s8 + $0x148] sm:$0xf]
    %v1516 = vld [vmem:[%s8 + $0x14c] sm:$0xf]
    %v1517 = vld [vmem:[%s8 + $0x150] sm:$0xf]
    %v1518 = vld [vmem:[%s8 + $0x154] sm:$0xf]
    %v1519 = vld [vmem:[%s8 + $0x158] sm:$0xf]
    %v1520 = vld [vmem:[%s8 + $0x15c] sm:$0xf]
    %v1521 = vld [vmem:[%s8 + $0x160] sm:$0xf]
    %v1522 = vld [vmem:[%s8 + $0x164] sm:$0xf]
    %v1523 = vld [vmem:[%s8 + $0x168] sm:$0xf]
    %v1524 = vld [vmem:[%s8 + $0x16c] sm:$0xf]
    %v1525 = vld [vmem:[%s8 + $0x170] sm:$0xf]
    %v1526 = vld [vmem:[%s8 + $0x174] sm:$0xf]
    %v1527 = vld [vmem:[%s8 + $0x178] sm:$0xf]
    %v1528 = vld [vmem:[%s8 + $0x17c] sm:$0xf]
    %v1529 = vld [vmem:[%s8 + $0x180] sm:$0xf]
    %v1530 = vld [vmem:[%s8 + $0x184] sm:$0xf]
    %v1531 = vld [vmem:[%s8 + $0x188] sm:$0xf]
    %v1532 = vld [vmem:[%s8 + $0x18c] sm:$0xf]
    %v1533 = vld [vmem:[%s8 + $0x190] sm:$0xf]
    %v1534 = vld [vmem:[%s8 + $0x194] sm:$0xf]
    %v1535 = vld [vmem:[%s8 + $0x198] sm:$0xf]
    %v1536 = vld [vmem:[%s8 + $0x19c] sm:$0xf]
    %v1537 = vld [vmem:[%s8 + $0x1a0] sm:$0xf]
    %v1538 = vld [vmem:[%s8 + $0x1a4] sm:$0xf]
    %v1539 = vld [vmem:[%s8 + $0x1a8] sm:$0xf]
    %v1540 = vld [vmem:[%s8 + $0x1ac] sm:$0xf]
    %v1541 = vld [vmem:[%s8 + $0x1b0] sm:$0xf]
    %v1542 = vld [vmem:[%s8 + $0x1b4] sm:$0xf]
    %v1543 = vld [vmem:[%s8 + $0x1b8] sm:$0xf]
    %v1544 = vld [vmem:[%s8 + $0x1bc] sm:$0xf]
    %v1545 = vld [vmem:[%s8 + $0x1c0] sm:$0xf]
    %v1546 = vld [vmem:[%s8 + $0x1c4] sm:$0xf]
    %v1547 = vld [vmem:[%s8 + $0x1c8] sm:$0xf]
    %v1548 = vld [vmem:[%s8 + $0x1cc] sm:$0xf]
    %v1549 = vld [vmem:[%s8 + $0x1d0] sm:$0xf]
    %v1550 = vld [vmem:[%s8 + $0x1d4] sm:$0xf]
    %v1551 = vld [vmem:[%s8 + $0x1d8] sm:$0xf]
    %v1552 = vld [vmem:[%s8 + $0x1dc] sm:$0xf]
    %v1553 = vld [vmem:[%s8 + $0x1e0] sm:$0xf]
    %v1554 = vld [vmem:[%s8 + $0x1e4] sm:$0xf]
    %v1555 = vld [vmem:[%s8 + $0x1e8] sm:$0xf]
    %v1556 = vld [vmem:[%s8 + $0x1ec] sm:$0xf]
    %v1557 = vld [vmem:[%s8 + $0x1f0] sm:$0xf]
    %v1558 = vld [vmem:[%s8 + $0x1f4] sm:$0xf]
    %v1559 = vld [vmem:[%s8 + $0x1f8] sm:$0xf]
    %v1560 = vld [vmem:[%s8 + $0x1fc] sm:$0xf]
    %v1561 = vld [vmem:[%s8 + $0x200] sm:$0xf]
    %v1562 = vld [vmem:[%s8 + $0x204] sm:$0xf]
    %v1563 = vld [vmem:[%s8 + $0x208] sm:$0xf]
    %v1564 = vld [vmem:[%s8 + $0x20c] sm:$0xf]
    %v1565 = vld [vmem:[%s8 + $0x210] sm:$0xf]
    %v1566 = vld [vmem:[%s8 + $0x214] sm:$0xf]
    %v1567 = vld [vmem:[%s8 + $0x218] sm:$0xf]
    %v1568 = vld [vmem:[%s8 + $0x21c] sm:$0xf]
    %v1569 = vld [vmem:[%s8 + $0x220] sm:$0xf]
    %v1570 = vld [vmem:[%s8 + $0x224] sm:$0xf]
    %v1571 = vld [vmem:[%s8 + $0x228] sm:$0xf]
    %v1572 = vld [vmem:[%s8 + $0x22c] sm:$0xf]
    %v1573 = vld [vmem:[%s8 + $0x230] sm:$0xf]
    %v1574 = vld [vmem:[%s8 + $0x234] sm:$0xf]
    %v1575 = vld [vmem:[%s8 + $0x238] sm:$0xf]
    %v1576 = vld [vmem:[%s8 + $0x23c] sm:$0xf]
    %v1577 = vld [vmem:[%s8 + $0x240] sm:$0xf]
    %v1578 = vld [vmem:[%s8 + $0x244] sm:$0xf]
    %v1579 = vld [vmem:[%s8 + $0x248] sm:$0xf]
    %v1580 = vld [vmem:[%s8 + $0x24c] sm:$0xf]
    %v1581 = vld [vmem:[%s8 + $0x250] sm:$0xf]
    %v1582 = vld [vmem:[%s8 + $0x254] sm:$0xf]
    %v1583 = vld [vmem:[%s8 + $0x258] sm:$0xf]
    %v1584 = vld [vmem:[%s8 + $0x25c] sm:$0xf]
    %v1585 = vld [vmem:[%s8 + $0x260] sm:$0xf]
    %v1586 = vld [vmem:[%s8 + $0x264] sm:$0xf]
    %v1587 = vld [vmem:[%s8 + $0x268] sm:$0xf]
    %v1588 = vld [vmem:[%s8 + $0x26c] sm:$0xf]
    %v1589 = vld [vmem:[%s8 + $0x270] sm:$0xf]
    %v1590 = vld [vmem:[%s8 + $0x274] sm:$0xf]
    %v1591 = vld [vmem:[%s8 + $0x278] sm:$0xf]
    %v1592 = vld [vmem:[%s8 + $0x27c] sm:$0xf]
    %v1593 = vld [vmem:[%s8 + $0x280] sm:$0xf]
    %v1594 = vld [vmem:[%s8 + $0x284] sm:$0xf]
    %v1595 = vld [vmem:[%s8 + $0x288] sm:$0xf]
    %v1596 = vld [vmem:[%s8 + $0x28c] sm:$0xf]
    %v1597 = vld [vmem:[%s8 + $0x290] sm:$0xf]
    %v1598 = vld [vmem:[%s8 + $0x294] sm:$0xf]
    %v1599 = vld [vmem:[%s8 + $0x298] sm:$0xf]
    %v1600 = vld [vmem:[%s8 + $0x29c] sm:$0xf]
    %v1601 = vld [vmem:[%s8 + $0x2a0] sm:$0xf]
    %v1602 = vld [vmem:[%s8 + $0x2a4] sm:$0xf]
    %v1603 = vld [vmem:[%s8 + $0x2a8] sm:$0xf]
    %v1604 = vld [vmem:[%s8 + $0x2ac] sm:$0xf]
    %v1605 = vld [vmem:[%s8 + $0x2b0] sm:$0xf]
    %v1606 = vld [vmem:[%s8 + $0x2b4] sm:$0xf]
    %v1607 = vld [vmem:[%s8 + $0x2b8] sm:$0xf]
    %v1608 = vld [vmem:[%s8 + $0x2bc] sm:$0xf]
    %v1609 = vld [vmem:[%s8 + $0x2c0] sm:$0xf]
    %v1610 = vld [vmem:[%s8 + $0x2c4] sm:$0xf]
    %v1611 = vld [vmem:[%s8 + $0x2c8] sm:$0xf]
    %v1612 = vld [vmem:[%s8 + $0x2cc] sm:$0xf]
    %v1613 = vld [vmem:[%s8 + $0x2d0] sm:$0xf]
    %v1614 = vld [vmem:[%s8 + $0x2d4] sm:$0xf]
    %v1615 = vld [vmem:[%s8 + $0x2d8] sm:$0xf]
    %v1616 = vld [vmem:[%s8 + $0x2dc] sm:$0xf]
    %v1617 = vld [vmem:[%s8 + $0x2e0] sm:$0xf]
    %v1618 = vld [vmem:[%s8 + $0x2e4] sm:$0xf]
    %v1619 = vld [vmem:[%s8 + $0x2e8] sm:$0xf]
    %v1620 = vld [vmem:[%s8 + $0x2ec] sm:$0xf]
    %v1621 = vld [vmem:[%s8 + $0x2f0] sm:$0xf]
    %v1622 = vld [vmem:[%s8 + $0x2f4] sm:$0xf]
    %v1623 = vld [vmem:[%s8 + $0x2f8] sm:$0xf]
    %v1624 = vld [vmem:[%s8 + $0x2fc] sm:$0xf]
    %v1625 = vld [vmem:[%s8 + $0x300] sm:$0xf]
    %v1626 = vld [vmem:[%s8 + $0x304] sm:$0xf]
    %v1627 = vld [vmem:[%s8 + $0x308] sm:$0xf]
    %v1628 = vld [vmem:[%s8 + $0x30c] sm:$0xf]
    %v1629 = vld [vmem:[%s8 + $0x310] sm:$0xf]
    %v1630 = vld [vmem:[%s8 + $0x314] sm:$0xf]
    %v1631 = vld [vmem:[%s8 + $0x318] sm:$0xf]
    %v1632 = vld [vmem:[%s8 + $0x31c] sm:$0xf]
    %v1633 = vld [vmem:[%s8 + $0x320] sm:$0xf]
    %v1634 = vld [vmem:[%s8 + $0x324] sm:$0xf]
    %v1635 = vld [vmem:[%s8 + $0x328] sm:$0xf]
    %v1636 = vld [vmem:[%s8 + $0x32c] sm:$0xf]
    %v1637 = vld [vmem:[%s8 + $0x330] sm:$0xf]
    %v1638 = vld [vmem:[%s8 + $0x334] sm:$0xf]
    %v1639 = vld [vmem:[%s8 + $0x338] sm:$0xf]
    %v1640 = vld [vmem:[%s8 + $0x33c] sm:$0xf]
    %v1641 = vld [vmem:[%s8 + $0x340] sm:$0xf]
    %v1642 = vld [vmem:[%s8 + $0x344] sm:$0xf]
    %v1643 = vld [vmem:[%s8 + $0x348] sm:$0xf]
    %v1644 = vld [vmem:[%s8 + $0x34c] sm:$0xf]
    %v1645 = vld [vmem:[%s8 + $0x350] sm:$0xf]
    %v1646 = vld [vmem:[%s8 + $0x354] sm:$0xf]
    %v1647 = vld [vmem:[%s8 + $0x358] sm:$0xf]
    %v1648 = vld [vmem:[%s8 + $0x35c] sm:$0xf]
    %v1649 = vld [vmem:[%s8 + $0x360] sm:$0xf]
    %v1650 = vld [vmem:[%s8 + $0x364] sm:$0xf]
    %v1651 = vld [vmem:[%s8 + $0x368] sm:$0xf]
    %v1652 = vld [vmem:[%s8 + $0x36c] sm:$0xf]
    %v1653 = vld [vmem:[%s8 + $0x370] sm:$0xf]
    %v1654 = vld [vmem:[%s8 + $0x374] sm:$0xf]
    %v1655 = vld [vmem:[%s8 + $0x378] sm:$0xf]
    %v1656 = vld [vmem:[%s8 + $0x37c] sm:$0xf]
    %v1657 = vld [vmem:[%s8 + $0x380] sm:$0xf]
    %v1658 = vld [vmem:[%s8 + $0x384] sm:$0xf]
    %v1659 = vld [vmem:[%s8 + $0x388] sm:$0xf]
    %v1660 = vld [vmem:[%s8 + $0x38c] sm:$0xf]
    %v1661 = vld [vmem:[%s8 + $0x390] sm:$0xf]
    %v1662 = vld [vmem:[%s8 + $0x394] sm:$0xf]
    %v1663 = vld [vmem:[%s8 + $0x398] sm:$0xf]
    %v1664 = vld [vmem:[%s8 + $0x39c] sm:$0xf]
    %v1665 = vld [vmem:[%s8 + $0x3a0] sm:$0xf]
    %v1666 = vld [vmem:[%s8 + $0x3a4] sm:$0xf]
    %v1667 = vld [vmem:[%s8 + $0x3a8] sm:$0xf]
    %v1668 = vld [vmem:[%s8 + $0x3ac] sm:$0xf]
    %v1669 = vld [vmem:[%s8 + $0x3b0] sm:$0xf]
    %v1670 = vld [vmem:[%s8 + $0x3b4] sm:$0xf]
    %v1671 = vld [vmem:[%s8 + $0x3b8] sm:$0xf]
    %v1672 = vld [vmem:[%s8 + $0x3bc] sm:$0xf]
    %v1673 = vld [vmem:[%s8 + $0x3c0] sm:$0xf]
    %v1674 = vld [vmem:[%s8 + $0x3c4] sm:$0xf]
    %v1675 = vld [vmem:[%s8 + $0x3c8] sm:$0xf]
    %v1676 = vld [vmem:[%s8 + $0x3cc] sm:$0xf]
    %v1677 = vld [vmem:[%s8 + $0x3d0] sm:$0xf]
    %v1678 = vld [vmem:[%s8 + $0x3d4] sm:$0xf]
    %v1679 = vld [vmem:[%s8 + $0x3d8] sm:$0xf]
    %v1680 = vld [vmem:[%s8 + $0x3dc] sm:$0xf]
    %v1681 = vld [vmem:[%s8 + $0x3e0] sm:$0xf]
    %v1682 = vld [vmem:[%s8 + $0x3e4] sm:$0xf]
    %v1683 = vld [vmem:[%s8 + $0x3e8] sm:$0xf]
    %v1684 = vld [vmem:[%s8 + $0x3ec] sm:$0xf]
    %v1685 = vld [vmem:[%s8 + $0x3f0] sm:$0xf]
    %v1686 = vld [vmem:[%s8 + $0x3f4] sm:$0xf]
    %v1687 = vld [vmem:[%s8 + $0x3f8] sm:$0xf]
    %v1688 = vld [vmem:[%s8 + $0x3fc] sm:$0xf]
    %v1689 = vpack.c.bf16 %v1429, %v1429
    %v1690 = vpack.c.bf16 %v1431, %v1431
    %v1691 = vld [vmem:[%s9] sm:$0xff]
    %v1692 = vld [vmem:[%s9 + $0x8] sm:$0xff]
    %v1693 = vld [vmem:[%s9 + $0x10] sm:$0xff]
    %v1694 = vld [vmem:[%s9 + $0x18] sm:$0xff]
    %v1695 = vld [vmem:[%s9 + $0x20] sm:$0xff]
    %v1696 = vld [vmem:[%s9 + $0x28] sm:$0xff]
    %v1697 = vld [vmem:[%s9 + $0x30] sm:$0xff]
    %v1698 = vld [vmem:[%s9 + $0x38] sm:$0xff]
    %v1699 = vld [vmem:[%s9 + $0x40] sm:$0xff]
    %v1700 = vld [vmem:[%s9 + $0x48] sm:$0xff]
    %v1701 = vld [vmem:[%s9 + $0x50] sm:$0xff]
    %v1702 = vld [vmem:[%s9 + $0x58] sm:$0xff]
    %v1703 = vld [vmem:[%s9 + $0x60] sm:$0xff]
    %v1704 = vld [vmem:[%s9 + $0x68] sm:$0xff]
    %v1705 = vld [vmem:[%s9 + $0x70] sm:$0xff]
    %v1706 = vld [vmem:[%s9 + $0x78] sm:$0xff]
    %v1707 = vld [vmem:[%s9 + $0x80] sm:$0xff]
    %v1708 = vld [vmem:[%s9 + $0x88] sm:$0xff]
    %v1709 = vld [vmem:[%s9 + $0x90] sm:$0xff]
    %v1710 = vld [vmem:[%s9 + $0x98] sm:$0xff]
    %v1711 = vld [vmem:[%s9 + $0xa0] sm:$0xff]
    %v1712 = vld [vmem:[%s9 + $0xa8] sm:$0xff]
    %v1713 = vld [vmem:[%s9 + $0xb0] sm:$0xff]
    %v1714 = vld [vmem:[%s9 + $0xb8] sm:$0xff]
    %v1715 = vld [vmem:[%s9 + $0xc0] sm:$0xff]
    %v1716 = vld [vmem:[%s9 + $0xc8] sm:$0xff]
    %v1717 = vld [vmem:[%s9 + $0xd0] sm:$0xff]
    %v1718 = vld [vmem:[%s9 + $0xd8] sm:$0xff]
    %v1719 = vld [vmem:[%s9 + $0xe0] sm:$0xff]
    %v1720 = vld [vmem:[%s9 + $0xe8] sm:$0xff]
    %v1721 = vld [vmem:[%s9 + $0xf0] sm:$0xff]
    %v1722 = vld [vmem:[%s9 + $0xf8] sm:$0xff]
    %v1723 = vld [vmem:[%s9 + $0x100] sm:$0xff]
    %v1724 = vld [vmem:[%s9 + $0x108] sm:$0xff]
    %v1725 = vld [vmem:[%s9 + $0x110] sm:$0xff]
    %v1726 = vld [vmem:[%s9 + $0x118] sm:$0xff]
    %v1727 = vld [vmem:[%s9 + $0x120] sm:$0xff]
    %v1728 = vld [vmem:[%s9 + $0x128] sm:$0xff]
    %v1729 = vld [vmem:[%s9 + $0x130] sm:$0xff]
    %v1730 = vld [vmem:[%s9 + $0x138] sm:$0xff]
    %v1731 = vld [vmem:[%s9 + $0x140] sm:$0xff]
    %v1732 = vld [vmem:[%s9 + $0x148] sm:$0xff]
    %v1733 = vld [vmem:[%s9 + $0x150] sm:$0xff]
    %v1734 = vld [vmem:[%s9 + $0x158] sm:$0xff]
    %v1735 = vld [vmem:[%s9 + $0x160] sm:$0xff]
    %v1736 = vld [vmem:[%s9 + $0x168] sm:$0xff]
    %v1737 = vld [vmem:[%s9 + $0x170] sm:$0xff]
    %v1738 = vld [vmem:[%s9 + $0x178] sm:$0xff]
    %v1739 = vld [vmem:[%s9 + $0x180] sm:$0xff]
    %v1740 = vld [vmem:[%s9 + $0x188] sm:$0xff]
    %v1741 = vld [vmem:[%s9 + $0x190] sm:$0xff]
    %v1742 = vld [vmem:[%s9 + $0x198] sm:$0xff]
    %v1743 = vld [vmem:[%s9 + $0x1a0] sm:$0xff]
    %v1744 = vld [vmem:[%s9 + $0x1a8] sm:$0xff]
    %v1745 = vld [vmem:[%s9 + $0x1b0] sm:$0xff]
    %v1746 = vld [vmem:[%s9 + $0x1b8] sm:$0xff]
    %v1747 = vld [vmem:[%s9 + $0x1c0] sm:$0xff]
    %v1748 = vld [vmem:[%s9 + $0x1c8] sm:$0xff]
    %v1749 = vld [vmem:[%s9 + $0x1d0] sm:$0xff]
    %v1750 = vld [vmem:[%s9 + $0x1d8] sm:$0xff]
    %v1751 = vld [vmem:[%s9 + $0x1e0] sm:$0xff]
    %v1752 = vld [vmem:[%s9 + $0x1e8] sm:$0xff]
    %v1753 = vld [vmem:[%s9 + $0x1f0] sm:$0xff]
    %v1754 = vld [vmem:[%s9 + $0x1f8] sm:$0xff]
    %v1755 = vld [vmem:[%s9 + $0x200] sm:$0xff]
    %v1756 = vld [vmem:[%s9 + $0x208] sm:$0xff]
    %v1757 = vld [vmem:[%s9 + $0x210] sm:$0xff]
    %v1758 = vld [vmem:[%s9 + $0x218] sm:$0xff]
    %v1759 = vld [vmem:[%s9 + $0x220] sm:$0xff]
    %v1760 = vld [vmem:[%s9 + $0x228] sm:$0xff]
    %v1761 = vld [vmem:[%s9 + $0x230] sm:$0xff]
    %v1762 = vld [vmem:[%s9 + $0x238] sm:$0xff]
    %v1763 = vld [vmem:[%s9 + $0x240] sm:$0xff]
    %v1764 = vld [vmem:[%s9 + $0x248] sm:$0xff]
    %v1765 = vld [vmem:[%s9 + $0x250] sm:$0xff]
    %v1766 = vld [vmem:[%s9 + $0x258] sm:$0xff]
    %v1767 = vld [vmem:[%s9 + $0x260] sm:$0xff]
    %v1768 = vld [vmem:[%s9 + $0x268] sm:$0xff]
    %v1769 = vld [vmem:[%s9 + $0x270] sm:$0xff]
    %v1770 = vld [vmem:[%s9 + $0x278] sm:$0xff]
    %v1771 = vld [vmem:[%s9 + $0x280] sm:$0xff]
    %v1772 = vld [vmem:[%s9 + $0x288] sm:$0xff]
    %v1773 = vld [vmem:[%s9 + $0x290] sm:$0xff]
    %v1774 = vld [vmem:[%s9 + $0x298] sm:$0xff]
    %v1775 = vld [vmem:[%s9 + $0x2a0] sm:$0xff]
    %v1776 = vld [vmem:[%s9 + $0x2a8] sm:$0xff]
    %v1777 = vld [vmem:[%s9 + $0x2b0] sm:$0xff]
    %v1778 = vld [vmem:[%s9 + $0x2b8] sm:$0xff]
    %v1779 = vld [vmem:[%s9 + $0x2c0] sm:$0xff]
    %v1780 = vld [vmem:[%s9 + $0x2c8] sm:$0xff]
    %v1781 = vld [vmem:[%s9 + $0x2d0] sm:$0xff]
    %v1782 = vld [vmem:[%s9 + $0x2d8] sm:$0xff]
    %v1783 = vld [vmem:[%s9 + $0x2e0] sm:$0xff]
    %v1784 = vld [vmem:[%s9 + $0x2e8] sm:$0xff]
    %v1785 = vld [vmem:[%s9 + $0x2f0] sm:$0xff]
    %v1786 = vld [vmem:[%s9 + $0x2f8] sm:$0xff]
    %v1787 = vld [vmem:[%s9 + $0x300] sm:$0xff]
    %v1788 = vld [vmem:[%s9 + $0x308] sm:$0xff]
    %v1789 = vld [vmem:[%s9 + $0x310] sm:$0xff]
    %v1790 = vld [vmem:[%s9 + $0x318] sm:$0xff]
    %v1791 = vld [vmem:[%s9 + $0x320] sm:$0xff]
    %v1792 = vld [vmem:[%s9 + $0x328] sm:$0xff]
    %v1793 = vld [vmem:[%s9 + $0x330] sm:$0xff]
    %v1794 = vld [vmem:[%s9 + $0x338] sm:$0xff]
    %v1795 = vld [vmem:[%s9 + $0x340] sm:$0xff]
    %v1796 = vld [vmem:[%s9 + $0x348] sm:$0xff]
    %v1797 = vld [vmem:[%s9 + $0x350] sm:$0xff]
    %v1798 = vld [vmem:[%s9 + $0x358] sm:$0xff]
    %v1799 = vld [vmem:[%s9 + $0x360] sm:$0xff]
    %v1800 = vld [vmem:[%s9 + $0x368] sm:$0xff]
    %v1801 = vld [vmem:[%s9 + $0x370] sm:$0xff]
    %v1802 = vld [vmem:[%s9 + $0x378] sm:$0xff]
    %v1803 = vld [vmem:[%s9 + $0x380] sm:$0xff]
    %v1804 = vld [vmem:[%s9 + $0x388] sm:$0xff]
    %v1805 = vld [vmem:[%s9 + $0x390] sm:$0xff]
    %v1806 = vld [vmem:[%s9 + $0x398] sm:$0xff]
    %v1807 = vld [vmem:[%s9 + $0x3a0] sm:$0xff]
    %v1808 = vld [vmem:[%s9 + $0x3a8] sm:$0xff]
    %v1809 = vld [vmem:[%s9 + $0x3b0] sm:$0xff]
    %v1810 = vld [vmem:[%s9 + $0x3b8] sm:$0xff]
    %v1811 = vld [vmem:[%s9 + $0x3c0] sm:$0xff]
    %v1812 = vld [vmem:[%s9 + $0x3c8] sm:$0xff]
    %v1813 = vld [vmem:[%s9 + $0x3d0] sm:$0xff]
    %v1814 = vld [vmem:[%s9 + $0x3d8] sm:$0xff]
    %v1815 = vld [vmem:[%s9 + $0x3e0] sm:$0xff]
    %v1816 = vld [vmem:[%s9 + $0x3e8] sm:$0xff]
    %v1817 = vld [vmem:[%s9 + $0x3f0] sm:$0xff]
    %v1818 = vld [vmem:[%s9 + $0x3f8] sm:$0xff]
    %v1819 = vld [vmem:[%s9 + $0x400] sm:$0xff]
    %v1820 = vld [vmem:[%s9 + $0x408] sm:$0xff]
    %v1821 = vld [vmem:[%s9 + $0x410] sm:$0xff]
    %v1822 = vld [vmem:[%s9 + $0x418] sm:$0xff]
    %v1823 = vld [vmem:[%s9 + $0x420] sm:$0xff]
    %v1824 = vld [vmem:[%s9 + $0x428] sm:$0xff]
    %v1825 = vld [vmem:[%s9 + $0x430] sm:$0xff]
    %v1826 = vld [vmem:[%s9 + $0x438] sm:$0xff]
    %v1827 = vld [vmem:[%s9 + $0x440] sm:$0xff]
    %v1828 = vld [vmem:[%s9 + $0x448] sm:$0xff]
    %v1829 = vld [vmem:[%s9 + $0x450] sm:$0xff]
    %v1830 = vld [vmem:[%s9 + $0x458] sm:$0xff]
    %v1831 = vld [vmem:[%s9 + $0x460] sm:$0xff]
    %v1832 = vld [vmem:[%s9 + $0x468] sm:$0xff]
    %v1833 = vld [vmem:[%s9 + $0x470] sm:$0xff]
    %v1834 = vld [vmem:[%s9 + $0x478] sm:$0xff]
    %v1835 = vld [vmem:[%s9 + $0x480] sm:$0xff]
    %v1836 = vld [vmem:[%s9 + $0x488] sm:$0xff]
    %v1837 = vld [vmem:[%s9 + $0x490] sm:$0xff]
    %v1838 = vld [vmem:[%s9 + $0x498] sm:$0xff]
    %v1839 = vld [vmem:[%s9 + $0x4a0] sm:$0xff]
    %v1840 = vld [vmem:[%s9 + $0x4a8] sm:$0xff]
    %v1841 = vld [vmem:[%s9 + $0x4b0] sm:$0xff]
    %v1842 = vld [vmem:[%s9 + $0x4b8] sm:$0xff]
    %v1843 = vld [vmem:[%s9 + $0x4c0] sm:$0xff]
    %v1844 = vld [vmem:[%s9 + $0x4c8] sm:$0xff]
    %v1845 = vld [vmem:[%s9 + $0x4d0] sm:$0xff]
    %v1846 = vld [vmem:[%s9 + $0x4d8] sm:$0xff]
    %v1847 = vld [vmem:[%s9 + $0x4e0] sm:$0xff]
    %v1848 = vld [vmem:[%s9 + $0x4e8] sm:$0xff]
    %v1849 = vld [vmem:[%s9 + $0x4f0] sm:$0xff]
    %v1850 = vld [vmem:[%s9 + $0x4f8] sm:$0xff]
    %v1851 = vld [vmem:[%s9 + $0x500] sm:$0xff]
    %v1852 = vld [vmem:[%s9 + $0x508] sm:$0xff]
    %v1853 = vld [vmem:[%s9 + $0x510] sm:$0xff]
    %v1854 = vld [vmem:[%s9 + $0x518] sm:$0xff]
    %v1855 = vld [vmem:[%s9 + $0x520] sm:$0xff]
    %v1856 = vld [vmem:[%s9 + $0x528] sm:$0xff]
    %v1857 = vld [vmem:[%s9 + $0x530] sm:$0xff]
    %v1858 = vld [vmem:[%s9 + $0x538] sm:$0xff]
    %v1859 = vld [vmem:[%s9 + $0x540] sm:$0xff]
    %v1860 = vld [vmem:[%s9 + $0x548] sm:$0xff]
    %v1861 = vld [vmem:[%s9 + $0x550] sm:$0xff]
    %v1862 = vld [vmem:[%s9 + $0x558] sm:$0xff]
    %v1863 = vld [vmem:[%s9 + $0x560] sm:$0xff]
    %v1864 = vld [vmem:[%s9 + $0x568] sm:$0xff]
    %v1865 = vld [vmem:[%s9 + $0x570] sm:$0xff]
    %v1866 = vld [vmem:[%s9 + $0x578] sm:$0xff]
    %v1867 = vld [vmem:[%s9 + $0x580] sm:$0xff]
    %v1868 = vld [vmem:[%s9 + $0x588] sm:$0xff]
    %v1869 = vld [vmem:[%s9 + $0x590] sm:$0xff]
    %v1870 = vld [vmem:[%s9 + $0x598] sm:$0xff]
    %v1871 = vld [vmem:[%s9 + $0x5a0] sm:$0xff]
    %v1872 = vld [vmem:[%s9 + $0x5a8] sm:$0xff]
    %v1873 = vld [vmem:[%s9 + $0x5b0] sm:$0xff]
    %v1874 = vld [vmem:[%s9 + $0x5b8] sm:$0xff]
    %v1875 = vld [vmem:[%s9 + $0x5c0] sm:$0xff]
    %v1876 = vld [vmem:[%s9 + $0x5c8] sm:$0xff]
    %v1877 = vld [vmem:[%s9 + $0x5d0] sm:$0xff]
    %v1878 = vld [vmem:[%s9 + $0x5d8] sm:$0xff]
    %v1879 = vld [vmem:[%s9 + $0x5e0] sm:$0xff]
    %v1880 = vld [vmem:[%s9 + $0x5e8] sm:$0xff]
    %v1881 = vld [vmem:[%s9 + $0x5f0] sm:$0xff]
    %v1882 = vld [vmem:[%s9 + $0x5f8] sm:$0xff]
    %v1883 = vld [vmem:[%s9 + $0x600] sm:$0xff]
    %v1884 = vld [vmem:[%s9 + $0x608] sm:$0xff]
    %v1885 = vld [vmem:[%s9 + $0x610] sm:$0xff]
    %v1886 = vld [vmem:[%s9 + $0x618] sm:$0xff]
    %v1887 = vld [vmem:[%s9 + $0x620] sm:$0xff]
    %v1888 = vld [vmem:[%s9 + $0x628] sm:$0xff]
    %v1889 = vld [vmem:[%s9 + $0x630] sm:$0xff]
    %v1890 = vld [vmem:[%s9 + $0x638] sm:$0xff]
    %v1891 = vld [vmem:[%s9 + $0x640] sm:$0xff]
    %v1892 = vld [vmem:[%s9 + $0x648] sm:$0xff]
    %v1893 = vld [vmem:[%s9 + $0x650] sm:$0xff]
    %v1894 = vld [vmem:[%s9 + $0x658] sm:$0xff]
    %v1895 = vld [vmem:[%s9 + $0x660] sm:$0xff]
    %v1896 = vld [vmem:[%s9 + $0x668] sm:$0xff]
    %v1897 = vld [vmem:[%s9 + $0x670] sm:$0xff]
    %v1898 = vld [vmem:[%s9 + $0x678] sm:$0xff]
    %v1899 = vld [vmem:[%s9 + $0x680] sm:$0xff]
    %v1900 = vld [vmem:[%s9 + $0x688] sm:$0xff]
    %v1901 = vld [vmem:[%s9 + $0x690] sm:$0xff]
    %v1902 = vld [vmem:[%s9 + $0x698] sm:$0xff]
    %v1903 = vld [vmem:[%s9 + $0x6a0] sm:$0xff]
    %v1904 = vld [vmem:[%s9 + $0x6a8] sm:$0xff]
    %v1905 = vld [vmem:[%s9 + $0x6b0] sm:$0xff]
    %v1906 = vld [vmem:[%s9 + $0x6b8] sm:$0xff]
    %v1907 = vld [vmem:[%s9 + $0x6c0] sm:$0xff]
    %v1908 = vld [vmem:[%s9 + $0x6c8] sm:$0xff]
    %v1909 = vld [vmem:[%s9 + $0x6d0] sm:$0xff]
    %v1910 = vld [vmem:[%s9 + $0x6d8] sm:$0xff]
    %v1911 = vld [vmem:[%s9 + $0x6e0] sm:$0xff]
    %v1912 = vld [vmem:[%s9 + $0x6e8] sm:$0xff]
    %v1913 = vld [vmem:[%s9 + $0x6f0] sm:$0xff]
    %v1914 = vld [vmem:[%s9 + $0x6f8] sm:$0xff]
    %v1915 = vld [vmem:[%s9 + $0x700] sm:$0xff]
    %v1916 = vld [vmem:[%s9 + $0x708] sm:$0xff]
    %v1917 = vld [vmem:[%s9 + $0x710] sm:$0xff]
    %v1918 = vld [vmem:[%s9 + $0x718] sm:$0xff]
    %v1919 = vld [vmem:[%s9 + $0x720] sm:$0xff]
    %v1920 = vld [vmem:[%s9 + $0x728] sm:$0xff]
    %v1921 = vld [vmem:[%s9 + $0x730] sm:$0xff]
    %v1922 = vld [vmem:[%s9 + $0x738] sm:$0xff]
    %v1923 = vld [vmem:[%s9 + $0x740] sm:$0xff]
    %v1924 = vld [vmem:[%s9 + $0x748] sm:$0xff]
    %v1925 = vld [vmem:[%s9 + $0x750] sm:$0xff]
    %v1926 = vld [vmem:[%s9 + $0x758] sm:$0xff]
    %v1927 = vld [vmem:[%s9 + $0x760] sm:$0xff]
    %v1928 = vld [vmem:[%s9 + $0x768] sm:$0xff]
    %v1929 = vld [vmem:[%s9 + $0x770] sm:$0xff]
    %v1930 = vld [vmem:[%s9 + $0x778] sm:$0xff]
    %v1931 = vld [vmem:[%s9 + $0x780] sm:$0xff]
    %v1932 = vld [vmem:[%s9 + $0x788] sm:$0xff]
    %v1933 = vld [vmem:[%s9 + $0x790] sm:$0xff]
    %v1934 = vld [vmem:[%s9 + $0x798] sm:$0xff]
    %v1935 = vld [vmem:[%s9 + $0x7a0] sm:$0xff]
    %v1936 = vld [vmem:[%s9 + $0x7a8] sm:$0xff]
    %v1937 = vld [vmem:[%s9 + $0x7b0] sm:$0xff]
    %v1938 = vld [vmem:[%s9 + $0x7b8] sm:$0xff]
    %v1939 = vld [vmem:[%s9 + $0x7c0] sm:$0xff]
    %v1940 = vld [vmem:[%s9 + $0x7c8] sm:$0xff]
    %v1941 = vld [vmem:[%s9 + $0x7d0] sm:$0xff]
    %v1942 = vld [vmem:[%s9 + $0x7d8] sm:$0xff]
    %v1943 = vld [vmem:[%s9 + $0x7e0] sm:$0xff]
    %v1944 = vld [vmem:[%s9 + $0x7e8] sm:$0xff]
    %v1945 = vld [vmem:[%s9 + $0x7f0] sm:$0xff]
    %v1946 = vld [vmem:[%s9 + $0x7f8] sm:$0xff]
    %1948 = vset.pattern.permute.xlu0 0
    %1949 = vperm.xlu0 %1948, %v1691
    %v1950 = vpop.permute.xlu0 %1949
    %1953 = vset.pattern.permute.xlu0 0
    %1954 = vperm.xlu0 %1953, %v1692
    %v1955 = vpop.permute.xlu0 %1954
    %1958 = vset.pattern.permute.xlu0 0
    %1959 = vperm.xlu0 %1958, %v1693
    %v1960 = vpop.permute.xlu0 %1959
    %1963 = vset.pattern.permute.xlu0 0
    %1964 = vperm.xlu0 %1963, %v1694
    %v1965 = vpop.permute.xlu0 %1964
    %1968 = vset.pattern.permute.xlu0 0
    %1969 = vperm.xlu0 %1968, %v1695
    %v1970 = vpop.permute.xlu0 %1969
    %1973 = vset.pattern.permute.xlu0 0
    %1974 = vperm.xlu0 %1973, %v1696
    %v1975 = vpop.permute.xlu0 %1974
    %1978 = vset.pattern.permute.xlu0 0
    %1979 = vperm.xlu0 %1978, %v1697
    %v1980 = vpop.permute.xlu0 %1979
    %1983 = vset.pattern.permute.xlu0 0
    %1984 = vperm.xlu0 %1983, %v1698
    %v1985 = vpop.permute.xlu0 %1984
    %1988 = vset.pattern.permute.xlu0 0
    %1989 = vperm.xlu0 %1988, %v1699
    %v1990 = vpop.permute.xlu0 %1989
    %1993 = vset.pattern.permute.xlu0 0
    %1994 = vperm.xlu0 %1993, %v1700
    %v1995 = vpop.permute.xlu0 %1994
    %1998 = vset.pattern.permute.xlu0 0
    %1999 = vperm.xlu0 %1998, %v1701
    %v2000 = vpop.permute.xlu0 %1999
    %2003 = vset.pattern.permute.xlu0 0
    %2004 = vperm.xlu0 %2003, %v1702
    %v2005 = vpop.permute.xlu0 %2004
    %2008 = vset.pattern.permute.xlu0 0
    %2009 = vperm.xlu0 %2008, %v1703
    %v2010 = vpop.permute.xlu0 %2009
    %2013 = vset.pattern.permute.xlu0 0
    %2014 = vperm.xlu0 %2013, %v1704
    %v2015 = vpop.permute.xlu0 %2014
    %2018 = vset.pattern.permute.xlu0 0
    %2019 = vperm.xlu0 %2018, %v1705
    %v2020 = vpop.permute.xlu0 %2019
    %2023 = vset.pattern.permute.xlu0 0
    %2024 = vperm.xlu0 %2023, %v1706
    %v2025 = vpop.permute.xlu0 %2024
    %2028 = vset.pattern.permute.xlu0 0
    %2029 = vperm.xlu0 %2028, %v1707
    %v2030 = vpop.permute.xlu0 %2029
    %2033 = vset.pattern.permute.xlu0 0
    %2034 = vperm.xlu0 %2033, %v1708
    %v2035 = vpop.permute.xlu0 %2034
    %2038 = vset.pattern.permute.xlu0 0
    %2039 = vperm.xlu0 %2038, %v1709
    %v2040 = vpop.permute.xlu0 %2039
    %2043 = vset.pattern.permute.xlu0 0
    %2044 = vperm.xlu0 %2043, %v1710
    %v2045 = vpop.permute.xlu0 %2044
    %2048 = vset.pattern.permute.xlu0 0
    %2049 = vperm.xlu0 %2048, %v1711
    %v2050 = vpop.permute.xlu0 %2049
    %2053 = vset.pattern.permute.xlu0 0
    %2054 = vperm.xlu0 %2053, %v1712
    %v2055 = vpop.permute.xlu0 %2054
    %2058 = vset.pattern.permute.xlu0 0
    %2059 = vperm.xlu0 %2058, %v1713
    %v2060 = vpop.permute.xlu0 %2059
    %2063 = vset.pattern.permute.xlu0 0
    %2064 = vperm.xlu0 %2063, %v1714
    %v2065 = vpop.permute.xlu0 %2064
    %2068 = vset.pattern.permute.xlu0 0
    %2069 = vperm.xlu0 %2068, %v1715
    %v2070 = vpop.permute.xlu0 %2069
    %2073 = vset.pattern.permute.xlu0 0
    %2074 = vperm.xlu0 %2073, %v1716
    %v2075 = vpop.permute.xlu0 %2074
    %2078 = vset.pattern.permute.xlu0 0
    %2079 = vperm.xlu0 %2078, %v1717
    %v2080 = vpop.permute.xlu0 %2079
    %2083 = vset.pattern.permute.xlu0 0
    %2084 = vperm.xlu0 %2083, %v1718
    %v2085 = vpop.permute.xlu0 %2084
    %2088 = vset.pattern.permute.xlu0 0
    %2089 = vperm.xlu0 %2088, %v1719
    %v2090 = vpop.permute.xlu0 %2089
    %2093 = vset.pattern.permute.xlu0 0
    %2094 = vperm.xlu0 %2093, %v1720
    %v2095 = vpop.permute.xlu0 %2094
    %2098 = vset.pattern.permute.xlu0 0
    %2099 = vperm.xlu0 %2098, %v1721
    %v2100 = vpop.permute.xlu0 %2099
    %2103 = vset.pattern.permute.xlu0 0
    %2104 = vperm.xlu0 %2103, %v1722
    %v2105 = vpop.permute.xlu0 %2104
    %2108 = vset.pattern.permute.xlu0 0
    %2109 = vperm.xlu0 %2108, %v1723
    %v2110 = vpop.permute.xlu0 %2109
    %2113 = vset.pattern.permute.xlu0 0
    %2114 = vperm.xlu0 %2113, %v1724
    %v2115 = vpop.permute.xlu0 %2114
    %2118 = vset.pattern.permute.xlu0 0
    %2119 = vperm.xlu0 %2118, %v1725
    %v2120 = vpop.permute.xlu0 %2119
    %2123 = vset.pattern.permute.xlu0 0
    %2124 = vperm.xlu0 %2123, %v1726
    %v2125 = vpop.permute.xlu0 %2124
    %2128 = vset.pattern.permute.xlu0 0
    %2129 = vperm.xlu0 %2128, %v1727
    %v2130 = vpop.permute.xlu0 %2129
    %2133 = vset.pattern.permute.xlu0 0
    %2134 = vperm.xlu0 %2133, %v1728
    %v2135 = vpop.permute.xlu0 %2134
    %2138 = vset.pattern.permute.xlu0 0
    %2139 = vperm.xlu0 %2138, %v1729
    %v2140 = vpop.permute.xlu0 %2139
    %2143 = vset.pattern.permute.xlu0 0
    %2144 = vperm.xlu0 %2143, %v1730
    %v2145 = vpop.permute.xlu0 %2144
    %2148 = vset.pattern.permute.xlu0 0
    %2149 = vperm.xlu0 %2148, %v1731
    %v2150 = vpop.permute.xlu0 %2149
    %2153 = vset.pattern.permute.xlu0 0
    %2154 = vperm.xlu0 %2153, %v1732
    %v2155 = vpop.permute.xlu0 %2154
    %2158 = vset.pattern.permute.xlu0 0
    %2159 = vperm.xlu0 %2158, %v1733
    %v2160 = vpop.permute.xlu0 %2159
    %2163 = vset.pattern.permute.xlu0 0
    %2164 = vperm.xlu0 %2163, %v1734
    %v2165 = vpop.permute.xlu0 %2164
    %2168 = vset.pattern.permute.xlu0 0
    %2169 = vperm.xlu0 %2168, %v1735
    %v2170 = vpop.permute.xlu0 %2169
    %2173 = vset.pattern.permute.xlu0 0
    %2174 = vperm.xlu0 %2173, %v1736
    %v2175 = vpop.permute.xlu0 %2174
    %2178 = vset.pattern.permute.xlu0 0
    %2179 = vperm.xlu0 %2178, %v1737
    %v2180 = vpop.permute.xlu0 %2179
    %2183 = vset.pattern.permute.xlu0 0
    %2184 = vperm.xlu0 %2183, %v1738
    %v2185 = vpop.permute.xlu0 %2184
    %2188 = vset.pattern.permute.xlu0 0
    %2189 = vperm.xlu0 %2188, %v1739
    %v2190 = vpop.permute.xlu0 %2189
    %2193 = vset.pattern.permute.xlu0 0
    %2194 = vperm.xlu0 %2193, %v1740
    %v2195 = vpop.permute.xlu0 %2194
    %2198 = vset.pattern.permute.xlu0 0
    %2199 = vperm.xlu0 %2198, %v1741
    %v2200 = vpop.permute.xlu0 %2199
    %2203 = vset.pattern.permute.xlu0 0
    %2204 = vperm.xlu0 %2203, %v1742
    %v2205 = vpop.permute.xlu0 %2204
    %2208 = vset.pattern.permute.xlu0 0
    %2209 = vperm.xlu0 %2208, %v1743
    %v2210 = vpop.permute.xlu0 %2209
    %2213 = vset.pattern.permute.xlu0 0
    %2214 = vperm.xlu0 %2213, %v1744
    %v2215 = vpop.permute.xlu0 %2214
    %2218 = vset.pattern.permute.xlu0 0
    %2219 = vperm.xlu0 %2218, %v1745
    %v2220 = vpop.permute.xlu0 %2219
    %2223 = vset.pattern.permute.xlu0 0
    %2224 = vperm.xlu0 %2223, %v1746
    %v2225 = vpop.permute.xlu0 %2224
    %2228 = vset.pattern.permute.xlu0 0
    %2229 = vperm.xlu0 %2228, %v1747
    %v2230 = vpop.permute.xlu0 %2229
    %2233 = vset.pattern.permute.xlu0 0
    %2234 = vperm.xlu0 %2233, %v1748
    %v2235 = vpop.permute.xlu0 %2234
    %2238 = vset.pattern.permute.xlu0 0
    %2239 = vperm.xlu0 %2238, %v1749
    %v2240 = vpop.permute.xlu0 %2239
    %2243 = vset.pattern.permute.xlu0 0
    %2244 = vperm.xlu0 %2243, %v1750
    %v2245 = vpop.permute.xlu0 %2244
    %2248 = vset.pattern.permute.xlu0 0
    %2249 = vperm.xlu0 %2248, %v1751
    %v2250 = vpop.permute.xlu0 %2249
    %2253 = vset.pattern.permute.xlu0 0
    %2254 = vperm.xlu0 %2253, %v1752
    %v2255 = vpop.permute.xlu0 %2254
    %2258 = vset.pattern.permute.xlu0 0
    %2259 = vperm.xlu0 %2258, %v1753
    %v2260 = vpop.permute.xlu0 %2259
    %2263 = vset.pattern.permute.xlu0 0
    %2264 = vperm.xlu0 %2263, %v1754
    %v2265 = vpop.permute.xlu0 %2264
    %2268 = vset.pattern.permute.xlu0 0
    %2269 = vperm.xlu0 %2268, %v1755
    %v2270 = vpop.permute.xlu0 %2269
    %2273 = vset.pattern.permute.xlu0 0
    %2274 = vperm.xlu0 %2273, %v1756
    %v2275 = vpop.permute.xlu0 %2274
    %2278 = vset.pattern.permute.xlu0 0
    %2279 = vperm.xlu0 %2278, %v1757
    %v2280 = vpop.permute.xlu0 %2279
    %2283 = vset.pattern.permute.xlu0 0
    %2284 = vperm.xlu0 %2283, %v1758
    %v2285 = vpop.permute.xlu0 %2284
    %2288 = vset.pattern.permute.xlu0 0
    %2289 = vperm.xlu0 %2288, %v1759
    %v2290 = vpop.permute.xlu0 %2289
    %2293 = vset.pattern.permute.xlu0 0
    %2294 = vperm.xlu0 %2293, %v1760
    %v2295 = vpop.permute.xlu0 %2294
    %2298 = vset.pattern.permute.xlu0 0
    %2299 = vperm.xlu0 %2298, %v1761
    %v2300 = vpop.permute.xlu0 %2299
    %2303 = vset.pattern.permute.xlu0 0
    %2304 = vperm.xlu0 %2303, %v1762
    %v2305 = vpop.permute.xlu0 %2304
    %2308 = vset.pattern.permute.xlu0 0
    %2309 = vperm.xlu0 %2308, %v1763
    %v2310 = vpop.permute.xlu0 %2309
    %2313 = vset.pattern.permute.xlu0 0
    %2314 = vperm.xlu0 %2313, %v1764
    %v2315 = vpop.permute.xlu0 %2314
    %2318 = vset.pattern.permute.xlu0 0
    %2319 = vperm.xlu0 %2318, %v1765
    %v2320 = vpop.permute.xlu0 %2319
    %2323 = vset.pattern.permute.xlu0 0
    %2324 = vperm.xlu0 %2323, %v1766
    %v2325 = vpop.permute.xlu0 %2324
    %2328 = vset.pattern.permute.xlu0 0
    %2329 = vperm.xlu0 %2328, %v1767
    %v2330 = vpop.permute.xlu0 %2329
    %2333 = vset.pattern.permute.xlu0 0
    %2334 = vperm.xlu0 %2333, %v1768
    %v2335 = vpop.permute.xlu0 %2334
    %2338 = vset.pattern.permute.xlu0 0
    %2339 = vperm.xlu0 %2338, %v1769
    %v2340 = vpop.permute.xlu0 %2339
    %2343 = vset.pattern.permute.xlu0 0
    %2344 = vperm.xlu0 %2343, %v1770
    %v2345 = vpop.permute.xlu0 %2344
    %2348 = vset.pattern.permute.xlu0 0
    %2349 = vperm.xlu0 %2348, %v1771
    %v2350 = vpop.permute.xlu0 %2349
    %2353 = vset.pattern.permute.xlu0 0
    %2354 = vperm.xlu0 %2353, %v1772
    %v2355 = vpop.permute.xlu0 %2354
    %2358 = vset.pattern.permute.xlu0 0
    %2359 = vperm.xlu0 %2358, %v1773
    %v2360 = vpop.permute.xlu0 %2359
    %2363 = vset.pattern.permute.xlu0 0
    %2364 = vperm.xlu0 %2363, %v1774
    %v2365 = vpop.permute.xlu0 %2364
    %2368 = vset.pattern.permute.xlu0 0
    %2369 = vperm.xlu0 %2368, %v1775
    %v2370 = vpop.permute.xlu0 %2369
    %2373 = vset.pattern.permute.xlu0 0
    %2374 = vperm.xlu0 %2373, %v1776
    %v2375 = vpop.permute.xlu0 %2374
    %2378 = vset.pattern.permute.xlu0 0
    %2379 = vperm.xlu0 %2378, %v1777
    %v2380 = vpop.permute.xlu0 %2379
    %2383 = vset.pattern.permute.xlu0 0
    %2384 = vperm.xlu0 %2383, %v1778
    %v2385 = vpop.permute.xlu0 %2384
    %2388 = vset.pattern.permute.xlu0 0
    %2389 = vperm.xlu0 %2388, %v1779
    %v2390 = vpop.permute.xlu0 %2389
    %2393 = vset.pattern.permute.xlu0 0
    %2394 = vperm.xlu0 %2393, %v1780
    %v2395 = vpop.permute.xlu0 %2394
    %2398 = vset.pattern.permute.xlu0 0
    %2399 = vperm.xlu0 %2398, %v1781
    %v2400 = vpop.permute.xlu0 %2399
    %2403 = vset.pattern.permute.xlu0 0
    %2404 = vperm.xlu0 %2403, %v1782
    %v2405 = vpop.permute.xlu0 %2404
    %2408 = vset.pattern.permute.xlu0 0
    %2409 = vperm.xlu0 %2408, %v1783
    %v2410 = vpop.permute.xlu0 %2409
    %2413 = vset.pattern.permute.xlu0 0
    %2414 = vperm.xlu0 %2413, %v1784
    %v2415 = vpop.permute.xlu0 %2414
    %2418 = vset.pattern.permute.xlu0 0
    %2419 = vperm.xlu0 %2418, %v1785
    %v2420 = vpop.permute.xlu0 %2419
    %2423 = vset.pattern.permute.xlu0 0
    %2424 = vperm.xlu0 %2423, %v1786
    %v2425 = vpop.permute.xlu0 %2424
    %2428 = vset.pattern.permute.xlu0 0
    %2429 = vperm.xlu0 %2428, %v1787
    %v2430 = vpop.permute.xlu0 %2429
    %2433 = vset.pattern.permute.xlu0 0
    %2434 = vperm.xlu0 %2433, %v1788
    %v2435 = vpop.permute.xlu0 %2434
    %2438 = vset.pattern.permute.xlu0 0
    %2439 = vperm.xlu0 %2438, %v1789
    %v2440 = vpop.permute.xlu0 %2439
    %2443 = vset.pattern.permute.xlu0 0
    %2444 = vperm.xlu0 %2443, %v1790
    %v2445 = vpop.permute.xlu0 %2444
    %2448 = vset.pattern.permute.xlu0 0
    %2449 = vperm.xlu0 %2448, %v1791
    %v2450 = vpop.permute.xlu0 %2449
    %2453 = vset.pattern.permute.xlu0 0
    %2454 = vperm.xlu0 %2453, %v1792
    %v2455 = vpop.permute.xlu0 %2454
    %2458 = vset.pattern.permute.xlu0 0
    %2459 = vperm.xlu0 %2458, %v1793
    %v2460 = vpop.permute.xlu0 %2459
    %2463 = vset.pattern.permute.xlu0 0
    %2464 = vperm.xlu0 %2463, %v1794
    %v2465 = vpop.permute.xlu0 %2464
    %2468 = vset.pattern.permute.xlu0 0
    %2469 = vperm.xlu0 %2468, %v1795
    %v2470 = vpop.permute.xlu0 %2469
    %2473 = vset.pattern.permute.xlu0 0
    %2474 = vperm.xlu0 %2473, %v1796
    %v2475 = vpop.permute.xlu0 %2474
    %2478 = vset.pattern.permute.xlu0 0
    %2479 = vperm.xlu0 %2478, %v1797
    %v2480 = vpop.permute.xlu0 %2479
    %2483 = vset.pattern.permute.xlu0 0
    %2484 = vperm.xlu0 %2483, %v1798
    %v2485 = vpop.permute.xlu0 %2484
    %2488 = vset.pattern.permute.xlu0 0
    %2489 = vperm.xlu0 %2488, %v1799
    %v2490 = vpop.permute.xlu0 %2489
    %2493 = vset.pattern.permute.xlu0 0
    %2494 = vperm.xlu0 %2493, %v1800
    %v2495 = vpop.permute.xlu0 %2494
    %2498 = vset.pattern.permute.xlu0 0
    %2499 = vperm.xlu0 %2498, %v1801
    %v2500 = vpop.permute.xlu0 %2499
    %2503 = vset.pattern.permute.xlu0 0
    %2504 = vperm.xlu0 %2503, %v1802
    %v2505 = vpop.permute.xlu0 %2504
    %2508 = vset.pattern.permute.xlu0 0
    %2509 = vperm.xlu0 %2508, %v1803
    %v2510 = vpop.permute.xlu0 %2509
    %2513 = vset.pattern.permute.xlu0 0
    %2514 = vperm.xlu0 %2513, %v1804
    %v2515 = vpop.permute.xlu0 %2514
    %2518 = vset.pattern.permute.xlu0 0
    %2519 = vperm.xlu0 %2518, %v1805
    %v2520 = vpop.permute.xlu0 %2519
    %2523 = vset.pattern.permute.xlu0 0
    %2524 = vperm.xlu0 %2523, %v1806
    %v2525 = vpop.permute.xlu0 %2524
    %2528 = vset.pattern.permute.xlu0 0
    %2529 = vperm.xlu0 %2528, %v1807
    %v2530 = vpop.permute.xlu0 %2529
    %2533 = vset.pattern.permute.xlu0 0
    %2534 = vperm.xlu0 %2533, %v1808
    %v2535 = vpop.permute.xlu0 %2534
    %2538 = vset.pattern.permute.xlu0 0
    %2539 = vperm.xlu0 %2538, %v1809
    %v2540 = vpop.permute.xlu0 %2539
    %2543 = vset.pattern.permute.xlu0 0
    %2544 = vperm.xlu0 %2543, %v1810
    %v2545 = vpop.permute.xlu0 %2544
    %2548 = vset.pattern.permute.xlu0 0
    %2549 = vperm.xlu0 %2548, %v1811
    %v2550 = vpop.permute.xlu0 %2549
    %2553 = vset.pattern.permute.xlu0 0
    %2554 = vperm.xlu0 %2553, %v1812
    %v2555 = vpop.permute.xlu0 %2554
    %2558 = vset.pattern.permute.xlu0 0
    %2559 = vperm.xlu0 %2558, %v1813
    %v2560 = vpop.permute.xlu0 %2559
    %2563 = vset.pattern.permute.xlu0 0
    %2564 = vperm.xlu0 %2563, %v1814
    %v2565 = vpop.permute.xlu0 %2564
    %2568 = vset.pattern.permute.xlu0 0
    %2569 = vperm.xlu0 %2568, %v1815
    %v2570 = vpop.permute.xlu0 %2569
    %2573 = vset.pattern.permute.xlu0 0
    %2574 = vperm.xlu0 %2573, %v1816
    %v2575 = vpop.permute.xlu0 %2574
    %2578 = vset.pattern.permute.xlu0 0
    %2579 = vperm.xlu0 %2578, %v1817
    %v2580 = vpop.permute.xlu0 %2579
    %2583 = vset.pattern.permute.xlu0 0
    %2584 = vperm.xlu0 %2583, %v1818
    %v2585 = vpop.permute.xlu0 %2584
    %2588 = vset.pattern.permute.xlu0 0
    %2589 = vperm.xlu0 %2588, %v1819
    %v2590 = vpop.permute.xlu0 %2589
    %2593 = vset.pattern.permute.xlu0 0
    %2594 = vperm.xlu0 %2593, %v1820
    %v2595 = vpop.permute.xlu0 %2594
    %2598 = vset.pattern.permute.xlu0 0
    %2599 = vperm.xlu0 %2598, %v1821
    %v2600 = vpop.permute.xlu0 %2599
    %2603 = vset.pattern.permute.xlu0 0
    %2604 = vperm.xlu0 %2603, %v1822
    %v2605 = vpop.permute.xlu0 %2604
    %2608 = vset.pattern.permute.xlu0 0
    %2609 = vperm.xlu0 %2608, %v1823
    %v2610 = vpop.permute.xlu0 %2609
    %2613 = vset.pattern.permute.xlu0 0
    %2614 = vperm.xlu0 %2613, %v1824
    %v2615 = vpop.permute.xlu0 %2614
    %2618 = vset.pattern.permute.xlu0 0
    %2619 = vperm.xlu0 %2618, %v1825
    %v2620 = vpop.permute.xlu0 %2619
    %2623 = vset.pattern.permute.xlu0 0
    %2624 = vperm.xlu0 %2623, %v1826
    %v2625 = vpop.permute.xlu0 %2624
    %2628 = vset.pattern.permute.xlu0 0
    %2629 = vperm.xlu0 %2628, %v1827
    %v2630 = vpop.permute.xlu0 %2629
    %2633 = vset.pattern.permute.xlu0 0
    %2634 = vperm.xlu0 %2633, %v1828
    %v2635 = vpop.permute.xlu0 %2634
    %2638 = vset.pattern.permute.xlu0 0
    %2639 = vperm.xlu0 %2638, %v1829
    %v2640 = vpop.permute.xlu0 %2639
    %2643 = vset.pattern.permute.xlu0 0
    %2644 = vperm.xlu0 %2643, %v1830
    %v2645 = vpop.permute.xlu0 %2644
    %2648 = vset.pattern.permute.xlu0 0
    %2649 = vperm.xlu0 %2648, %v1831
    %v2650 = vpop.permute.xlu0 %2649
    %2653 = vset.pattern.permute.xlu0 0
    %2654 = vperm.xlu0 %2653, %v1832
    %v2655 = vpop.permute.xlu0 %2654
    %2658 = vset.pattern.permute.xlu0 0
    %2659 = vperm.xlu0 %2658, %v1833
    %v2660 = vpop.permute.xlu0 %2659
    %2663 = vset.pattern.permute.xlu0 0
    %2664 = vperm.xlu0 %2663, %v1834
    %v2665 = vpop.permute.xlu0 %2664
    %2668 = vset.pattern.permute.xlu0 0
    %2669 = vperm.xlu0 %2668, %v1835
    %v2670 = vpop.permute.xlu0 %2669
    %2673 = vset.pattern.permute.xlu0 0
    %2674 = vperm.xlu0 %2673, %v1836
    %v2675 = vpop.permute.xlu0 %2674
    %2678 = vset.pattern.permute.xlu0 0
    %2679 = vperm.xlu0 %2678, %v1837
    %v2680 = vpop.permute.xlu0 %2679
    %2683 = vset.pattern.permute.xlu0 0
    %2684 = vperm.xlu0 %2683, %v1838
    %v2685 = vpop.permute.xlu0 %2684
    %2688 = vset.pattern.permute.xlu0 0
    %2689 = vperm.xlu0 %2688, %v1839
    %v2690 = vpop.permute.xlu0 %2689
    %2693 = vset.pattern.permute.xlu0 0
    %2694 = vperm.xlu0 %2693, %v1840
    %v2695 = vpop.permute.xlu0 %2694
    %2698 = vset.pattern.permute.xlu0 0
    %2699 = vperm.xlu0 %2698, %v1841
    %v2700 = vpop.permute.xlu0 %2699
    %2703 = vset.pattern.permute.xlu0 0
    %2704 = vperm.xlu0 %2703, %v1842
    %v2705 = vpop.permute.xlu0 %2704
    %2708 = vset.pattern.permute.xlu0 0
    %2709 = vperm.xlu0 %2708, %v1843
    %v2710 = vpop.permute.xlu0 %2709
    %2713 = vset.pattern.permute.xlu0 0
    %2714 = vperm.xlu0 %2713, %v1844
    %v2715 = vpop.permute.xlu0 %2714
    %2718 = vset.pattern.permute.xlu0 0
    %2719 = vperm.xlu0 %2718, %v1845
    %v2720 = vpop.permute.xlu0 %2719
    %2723 = vset.pattern.permute.xlu0 0
    %2724 = vperm.xlu0 %2723, %v1846
    %v2725 = vpop.permute.xlu0 %2724
    %2728 = vset.pattern.permute.xlu0 0
    %2729 = vperm.xlu0 %2728, %v1847
    %v2730 = vpop.permute.xlu0 %2729
    %2733 = vset.pattern.permute.xlu0 0
    %2734 = vperm.xlu0 %2733, %v1848
    %v2735 = vpop.permute.xlu0 %2734
    %2738 = vset.pattern.permute.xlu0 0
    %2739 = vperm.xlu0 %2738, %v1849
    %v2740 = vpop.permute.xlu0 %2739
    %2743 = vset.pattern.permute.xlu0 0
    %2744 = vperm.xlu0 %2743, %v1850
    %v2745 = vpop.permute.xlu0 %2744
    %2748 = vset.pattern.permute.xlu0 0
    %2749 = vperm.xlu0 %2748, %v1851
    %v2750 = vpop.permute.xlu0 %2749
    %2753 = vset.pattern.permute.xlu0 0
    %2754 = vperm.xlu0 %2753, %v1852
    %v2755 = vpop.permute.xlu0 %2754
    %2758 = vset.pattern.permute.xlu0 0
    %2759 = vperm.xlu0 %2758, %v1853
    %v2760 = vpop.permute.xlu0 %2759
    %2763 = vset.pattern.permute.xlu0 0
    %2764 = vperm.xlu0 %2763, %v1854
    %v2765 = vpop.permute.xlu0 %2764
    %2768 = vset.pattern.permute.xlu0 0
    %2769 = vperm.xlu0 %2768, %v1855
    %v2770 = vpop.permute.xlu0 %2769
    %2773 = vset.pattern.permute.xlu0 0
    %2774 = vperm.xlu0 %2773, %v1856
    %v2775 = vpop.permute.xlu0 %2774
    %2778 = vset.pattern.permute.xlu0 0
    %2779 = vperm.xlu0 %2778, %v1857
    %v2780 = vpop.permute.xlu0 %2779
    %2783 = vset.pattern.permute.xlu0 0
    %2784 = vperm.xlu0 %2783, %v1858
    %v2785 = vpop.permute.xlu0 %2784
    %2788 = vset.pattern.permute.xlu0 0
    %2789 = vperm.xlu0 %2788, %v1859
    %v2790 = vpop.permute.xlu0 %2789
    %2793 = vset.pattern.permute.xlu0 0
    %2794 = vperm.xlu0 %2793, %v1860
    %v2795 = vpop.permute.xlu0 %2794
    %2798 = vset.pattern.permute.xlu0 0
    %2799 = vperm.xlu0 %2798, %v1861
    %v2800 = vpop.permute.xlu0 %2799
    %2803 = vset.pattern.permute.xlu0 0
    %2804 = vperm.xlu0 %2803, %v1862
    %v2805 = vpop.permute.xlu0 %2804
    %2808 = vset.pattern.permute.xlu0 0
    %2809 = vperm.xlu0 %2808, %v1863
    %v2810 = vpop.permute.xlu0 %2809
    %2813 = vset.pattern.permute.xlu0 0
    %2814 = vperm.xlu0 %2813, %v1864
    %v2815 = vpop.permute.xlu0 %2814
    %2818 = vset.pattern.permute.xlu0 0
    %2819 = vperm.xlu0 %2818, %v1865
    %v2820 = vpop.permute.xlu0 %2819
    %2823 = vset.pattern.permute.xlu0 0
    %2824 = vperm.xlu0 %2823, %v1866
    %v2825 = vpop.permute.xlu0 %2824
    %2828 = vset.pattern.permute.xlu0 0
    %2829 = vperm.xlu0 %2828, %v1867
    %v2830 = vpop.permute.xlu0 %2829
    %2833 = vset.pattern.permute.xlu0 0
    %2834 = vperm.xlu0 %2833, %v1868
    %v2835 = vpop.permute.xlu0 %2834
    %2838 = vset.pattern.permute.xlu0 0
    %2839 = vperm.xlu0 %2838, %v1869
    %v2840 = vpop.permute.xlu0 %2839
    %2843 = vset.pattern.permute.xlu0 0
    %2844 = vperm.xlu0 %2843, %v1870
    %v2845 = vpop.permute.xlu0 %2844
    %2848 = vset.pattern.permute.xlu0 0
    %2849 = vperm.xlu0 %2848, %v1871
    %v2850 = vpop.permute.xlu0 %2849
    %2853 = vset.pattern.permute.xlu0 0
    %2854 = vperm.xlu0 %2853, %v1872
    %v2855 = vpop.permute.xlu0 %2854
    %2858 = vset.pattern.permute.xlu0 0
    %2859 = vperm.xlu0 %2858, %v1873
    %v2860 = vpop.permute.xlu0 %2859
    %2863 = vset.pattern.permute.xlu0 0
    %2864 = vperm.xlu0 %2863, %v1874
    %v2865 = vpop.permute.xlu0 %2864
    %2868 = vset.pattern.permute.xlu0 0
    %2869 = vperm.xlu0 %2868, %v1875
    %v2870 = vpop.permute.xlu0 %2869
    %2873 = vset.pattern.permute.xlu0 0
    %2874 = vperm.xlu0 %2873, %v1876
    %v2875 = vpop.permute.xlu0 %2874
    %2878 = vset.pattern.permute.xlu0 0
    %2879 = vperm.xlu0 %2878, %v1877
    %v2880 = vpop.permute.xlu0 %2879
    %2883 = vset.pattern.permute.xlu0 0
    %2884 = vperm.xlu0 %2883, %v1878
    %v2885 = vpop.permute.xlu0 %2884
    %2888 = vset.pattern.permute.xlu0 0
    %2889 = vperm.xlu0 %2888, %v1879
    %v2890 = vpop.permute.xlu0 %2889
    %2893 = vset.pattern.permute.xlu0 0
    %2894 = vperm.xlu0 %2893, %v1880
    %v2895 = vpop.permute.xlu0 %2894
    %2898 = vset.pattern.permute.xlu0 0
    %2899 = vperm.xlu0 %2898, %v1881
    %v2900 = vpop.permute.xlu0 %2899
    %2903 = vset.pattern.permute.xlu0 0
    %2904 = vperm.xlu0 %2903, %v1882
    %v2905 = vpop.permute.xlu0 %2904
    %2908 = vset.pattern.permute.xlu0 0
    %2909 = vperm.xlu0 %2908, %v1883
    %v2910 = vpop.permute.xlu0 %2909
    %2913 = vset.pattern.permute.xlu0 0
    %2914 = vperm.xlu0 %2913, %v1884
    %v2915 = vpop.permute.xlu0 %2914
    %2918 = vset.pattern.permute.xlu0 0
    %2919 = vperm.xlu0 %2918, %v1885
    %v2920 = vpop.permute.xlu0 %2919
    %2923 = vset.pattern.permute.xlu0 0
    %2924 = vperm.xlu0 %2923, %v1886
    %v2925 = vpop.permute.xlu0 %2924
    %2928 = vset.pattern.permute.xlu0 0
    %2929 = vperm.xlu0 %2928, %v1887
    %v2930 = vpop.permute.xlu0 %2929
    %2933 = vset.pattern.permute.xlu0 0
    %2934 = vperm.xlu0 %2933, %v1888
    %v2935 = vpop.permute.xlu0 %2934
    %2938 = vset.pattern.permute.xlu0 0
    %2939 = vperm.xlu0 %2938, %v1889
    %v2940 = vpop.permute.xlu0 %2939
    %2943 = vset.pattern.permute.xlu0 0
    %2944 = vperm.xlu0 %2943, %v1890
    %v2945 = vpop.permute.xlu0 %2944
    %2948 = vset.pattern.permute.xlu0 0
    %2949 = vperm.xlu0 %2948, %v1891
    %v2950 = vpop.permute.xlu0 %2949
    %2953 = vset.pattern.permute.xlu0 0
    %2954 = vperm.xlu0 %2953, %v1892
    %v2955 = vpop.permute.xlu0 %2954
    %2958 = vset.pattern.permute.xlu0 0
    %2959 = vperm.xlu0 %2958, %v1893
    %v2960 = vpop.permute.xlu0 %2959
    %2963 = vset.pattern.permute.xlu0 0
    %2964 = vperm.xlu0 %2963, %v1894
    %v2965 = vpop.permute.xlu0 %2964
    %2968 = vset.pattern.permute.xlu0 0
    %2969 = vperm.xlu0 %2968, %v1895
    %v2970 = vpop.permute.xlu0 %2969
    %2973 = vset.pattern.permute.xlu0 0
    %2974 = vperm.xlu0 %2973, %v1896
    %v2975 = vpop.permute.xlu0 %2974
    %2978 = vset.pattern.permute.xlu0 0
    %2979 = vperm.xlu0 %2978, %v1897
    %v2980 = vpop.permute.xlu0 %2979
    %2983 = vset.pattern.permute.xlu0 0
    %2984 = vperm.xlu0 %2983, %v1898
    %v2985 = vpop.permute.xlu0 %2984
    %2988 = vset.pattern.permute.xlu0 0
    %2989 = vperm.xlu0 %2988, %v1899
    %v2990 = vpop.permute.xlu0 %2989
    %2993 = vset.pattern.permute.xlu0 0
    %2994 = vperm.xlu0 %2993, %v1900
    %v2995 = vpop.permute.xlu0 %2994
    %2998 = vset.pattern.permute.xlu0 0
    %2999 = vperm.xlu0 %2998, %v1901
    %v3000 = vpop.permute.xlu0 %2999
    %3003 = vset.pattern.permute.xlu0 0
    %3004 = vperm.xlu0 %3003, %v1902
    %v3005 = vpop.permute.xlu0 %3004
    %3008 = vset.pattern.permute.xlu0 0
    %3009 = vperm.xlu0 %3008, %v1903
    %v3010 = vpop.permute.xlu0 %3009
    %3013 = vset.pattern.permute.xlu0 0
    %3014 = vperm.xlu0 %3013, %v1904
    %v3015 = vpop.permute.xlu0 %3014
    %3018 = vset.pattern.permute.xlu0 0
    %3019 = vperm.xlu0 %3018, %v1905
    %v3020 = vpop.permute.xlu0 %3019
    %3023 = vset.pattern.permute.xlu0 0
    %3024 = vperm.xlu0 %3023, %v1906
    %v3025 = vpop.permute.xlu0 %3024
    %3028 = vset.pattern.permute.xlu0 0
    %3029 = vperm.xlu0 %3028, %v1907
    %v3030 = vpop.permute.xlu0 %3029
    %3033 = vset.pattern.permute.xlu0 0
    %3034 = vperm.xlu0 %3033, %v1908
    %v3035 = vpop.permute.xlu0 %3034
    %3038 = vset.pattern.permute.xlu0 0
    %3039 = vperm.xlu0 %3038, %v1909
    %v3040 = vpop.permute.xlu0 %3039
    %3043 = vset.pattern.permute.xlu0 0
    %3044 = vperm.xlu0 %3043, %v1910
    %v3045 = vpop.permute.xlu0 %3044
    %3048 = vset.pattern.permute.xlu0 0
    %3049 = vperm.xlu0 %3048, %v1911
    %v3050 = vpop.permute.xlu0 %3049
    %3053 = vset.pattern.permute.xlu0 0
    %3054 = vperm.xlu0 %3053, %v1912
    %v3055 = vpop.permute.xlu0 %3054
    %3058 = vset.pattern.permute.xlu0 0
    %3059 = vperm.xlu0 %3058, %v1913
    %v3060 = vpop.permute.xlu0 %3059
    %3063 = vset.pattern.permute.xlu0 0
    %3064 = vperm.xlu0 %3063, %v1914
    %v3065 = vpop.permute.xlu0 %3064
    %3068 = vset.pattern.permute.xlu0 0
    %3069 = vperm.xlu0 %3068, %v1915
    %v3070 = vpop.permute.xlu0 %3069
    %3073 = vset.pattern.permute.xlu0 0
    %3074 = vperm.xlu0 %3073, %v1916
    %v3075 = vpop.permute.xlu0 %3074
    %3078 = vset.pattern.permute.xlu0 0
    %3079 = vperm.xlu0 %3078, %v1917
    %v3080 = vpop.permute.xlu0 %3079
    %3083 = vset.pattern.permute.xlu0 0
    %3084 = vperm.xlu0 %3083, %v1918
    %v3085 = vpop.permute.xlu0 %3084
    %3088 = vset.pattern.permute.xlu0 0
    %3089 = vperm.xlu0 %3088, %v1919
    %v3090 = vpop.permute.xlu0 %3089
    %3093 = vset.pattern.permute.xlu0 0
    %3094 = vperm.xlu0 %3093, %v1920
    %v3095 = vpop.permute.xlu0 %3094
    %3098 = vset.pattern.permute.xlu0 0
    %3099 = vperm.xlu0 %3098, %v1921
    %v3100 = vpop.permute.xlu0 %3099
    %3103 = vset.pattern.permute.xlu0 0
    %3104 = vperm.xlu0 %3103, %v1922
    %v3105 = vpop.permute.xlu0 %3104
    %3108 = vset.pattern.permute.xlu0 0
    %3109 = vperm.xlu0 %3108, %v1923
    %v3110 = vpop.permute.xlu0 %3109
    %3113 = vset.pattern.permute.xlu0 0
    %3114 = vperm.xlu0 %3113, %v1924
    %v3115 = vpop.permute.xlu0 %3114
    %3118 = vset.pattern.permute.xlu0 0
    %3119 = vperm.xlu0 %3118, %v1925
    %v3120 = vpop.permute.xlu0 %3119
    %3123 = vset.pattern.permute.xlu0 0
    %3124 = vperm.xlu0 %3123, %v1926
    %v3125 = vpop.permute.xlu0 %3124
    %3128 = vset.pattern.permute.xlu0 0
    %3129 = vperm.xlu0 %3128, %v1927
    %v3130 = vpop.permute.xlu0 %3129
    %3133 = vset.pattern.permute.xlu0 0
    %3134 = vperm.xlu0 %3133, %v1928
    %v3135 = vpop.permute.xlu0 %3134
    %3138 = vset.pattern.permute.xlu0 0
    %3139 = vperm.xlu0 %3138, %v1929
    %v3140 = vpop.permute.xlu0 %3139
    %3143 = vset.pattern.permute.xlu0 0
    %3144 = vperm.xlu0 %3143, %v1930
    %v3145 = vpop.permute.xlu0 %3144
    %3148 = vset.pattern.permute.xlu0 0
    %3149 = vperm.xlu0 %3148, %v1931
    %v3150 = vpop.permute.xlu0 %3149
    %3153 = vset.pattern.permute.xlu0 0
    %3154 = vperm.xlu0 %3153, %v1932
    %v3155 = vpop.permute.xlu0 %3154
    %3158 = vset.pattern.permute.xlu0 0
    %3159 = vperm.xlu0 %3158, %v1933
    %v3160 = vpop.permute.xlu0 %3159
    %3163 = vset.pattern.permute.xlu0 0
    %3164 = vperm.xlu0 %3163, %v1934
    %v3165 = vpop.permute.xlu0 %3164
    %3168 = vset.pattern.permute.xlu0 0
    %3169 = vperm.xlu0 %3168, %v1935
    %v3170 = vpop.permute.xlu0 %3169
    %3173 = vset.pattern.permute.xlu0 0
    %3174 = vperm.xlu0 %3173, %v1936
    %v3175 = vpop.permute.xlu0 %3174
    %3178 = vset.pattern.permute.xlu0 0
    %3179 = vperm.xlu0 %3178, %v1937
    %v3180 = vpop.permute.xlu0 %3179
    %3183 = vset.pattern.permute.xlu0 0
    %3184 = vperm.xlu0 %3183, %v1938
    %v3185 = vpop.permute.xlu0 %3184
    %3188 = vset.pattern.permute.xlu0 0
    %3189 = vperm.xlu0 %3188, %v1939
    %v3190 = vpop.permute.xlu0 %3189
    %3193 = vset.pattern.permute.xlu0 0
    %3194 = vperm.xlu0 %3193, %v1940
    %v3195 = vpop.permute.xlu0 %3194
    %3198 = vset.pattern.permute.xlu0 0
    %3199 = vperm.xlu0 %3198, %v1941
    %v3200 = vpop.permute.xlu0 %3199
    %3203 = vset.pattern.permute.xlu0 0
    %3204 = vperm.xlu0 %3203, %v1942
    %v3205 = vpop.permute.xlu0 %3204
    %3208 = vset.pattern.permute.xlu0 0
    %3209 = vperm.xlu0 %3208, %v1943
    %v3210 = vpop.permute.xlu0 %3209
    %3213 = vset.pattern.permute.xlu0 0
    %3214 = vperm.xlu0 %3213, %v1944
    %v3215 = vpop.permute.xlu0 %3214
    %3218 = vset.pattern.permute.xlu0 0
    %3219 = vperm.xlu0 %3218, %v1945
    %v3220 = vpop.permute.xlu0 %3219
    %3223 = vset.pattern.permute.xlu0 0
    %3224 = vperm.xlu0 %3223, %v1946
    %v3225 = vpop.permute.xlu0 %3224
    %v3483 = vunpack.c.l.b16 %v1433
    %v3484 = vunpack.c.l.b16 %v1434
    %v3485 = vunpack.c.l.b16 %v1435
    %v3486 = vunpack.c.l.b16 %v1436
    %v3487 = vunpack.c.l.b16 %v1437
    %v3488 = vunpack.c.l.b16 %v1438
    %v3489 = vunpack.c.l.b16 %v1439
    %v3490 = vunpack.c.l.b16 %v1440
    %v3491 = vunpack.c.l.b16 %v1441
    %v3492 = vunpack.c.l.b16 %v1442
    %v3493 = vunpack.c.l.b16 %v1443
    %v3494 = vunpack.c.l.b16 %v1444
    %v3495 = vunpack.c.l.b16 %v1445
    %v3496 = vunpack.c.l.b16 %v1446
    %v3497 = vunpack.c.l.b16 %v1447
    %v3498 = vunpack.c.l.b16 %v1448
    %v3499 = vunpack.c.l.b16 %v1449
    %v3500 = vunpack.c.l.b16 %v1450
    %v3501 = vunpack.c.l.b16 %v1451
    %v3502 = vunpack.c.l.b16 %v1452
    %v3503 = vunpack.c.l.b16 %v1453
    %v3504 = vunpack.c.l.b16 %v1454
    %v3505 = vunpack.c.l.b16 %v1455
    %v3506 = vunpack.c.l.b16 %v1456
    %v3507 = vunpack.c.l.b16 %v1457
    %v3508 = vunpack.c.l.b16 %v1458
    %v3509 = vunpack.c.l.b16 %v1459
    %v3510 = vunpack.c.l.b16 %v1460
    %v3511 = vunpack.c.l.b16 %v1461
    %v3512 = vunpack.c.l.b16 %v1462
    %v3513 = vunpack.c.l.b16 %v1463
    %v3514 = vunpack.c.l.b16 %v1464
    %v3515 = vunpack.c.l.b16 %v1465
    %v3516 = vunpack.c.l.b16 %v1466
    %v3517 = vunpack.c.l.b16 %v1467
    %v3518 = vunpack.c.l.b16 %v1468
    %v3519 = vunpack.c.l.b16 %v1469
    %v3520 = vunpack.c.l.b16 %v1470
    %v3521 = vunpack.c.l.b16 %v1471
    %v3522 = vunpack.c.l.b16 %v1472
    %v3523 = vunpack.c.l.b16 %v1473
    %v3524 = vunpack.c.l.b16 %v1474
    %v3525 = vunpack.c.l.b16 %v1475
    %v3526 = vunpack.c.l.b16 %v1476
    %v3527 = vunpack.c.l.b16 %v1477
    %v3528 = vunpack.c.l.b16 %v1478
    %v3529 = vunpack.c.l.b16 %v1479
    %v3530 = vunpack.c.l.b16 %v1480
    %v3531 = vunpack.c.l.b16 %v1481
    %v3532 = vunpack.c.l.b16 %v1482
    %v3533 = vunpack.c.l.b16 %v1483
    %v3534 = vunpack.c.l.b16 %v1484
    %v3535 = vunpack.c.l.b16 %v1485
    %v3536 = vunpack.c.l.b16 %v1486
    %v3537 = vunpack.c.l.b16 %v1487
    %v3538 = vunpack.c.l.b16 %v1488
    %v3539 = vunpack.c.l.b16 %v1489
    %v3540 = vunpack.c.l.b16 %v1490
    %v3541 = vunpack.c.l.b16 %v1491
    %v3542 = vunpack.c.l.b16 %v1492
    %v3543 = vunpack.c.l.b16 %v1493
    %v3544 = vunpack.c.l.b16 %v1494
    %v3545 = vunpack.c.l.b16 %v1495
    %v3546 = vunpack.c.l.b16 %v1496
    %v3547 = vunpack.c.l.b16 %v1497
    %v3548 = vunpack.c.l.b16 %v1498
    %v3549 = vunpack.c.l.b16 %v1499
    %v3550 = vunpack.c.l.b16 %v1500
    %v3551 = vunpack.c.l.b16 %v1501
    %v3552 = vunpack.c.l.b16 %v1502
    %v3553 = vunpack.c.l.b16 %v1503
    %v3554 = vunpack.c.l.b16 %v1504
    %v3555 = vunpack.c.l.b16 %v1505
    %v3556 = vunpack.c.l.b16 %v1506
    %v3557 = vunpack.c.l.b16 %v1507
    %v3558 = vunpack.c.l.b16 %v1508
    %v3559 = vunpack.c.l.b16 %v1509
    %v3560 = vunpack.c.l.b16 %v1510
    %v3561 = vunpack.c.l.b16 %v1511
    %v3562 = vunpack.c.l.b16 %v1512
    %v3563 = vunpack.c.l.b16 %v1513
    %v3564 = vunpack.c.l.b16 %v1514
    %v3565 = vunpack.c.l.b16 %v1515
    %v3566 = vunpack.c.l.b16 %v1516
    %v3567 = vunpack.c.l.b16 %v1517
    %v3568 = vunpack.c.l.b16 %v1518
    %v3569 = vunpack.c.l.b16 %v1519
    %v3570 = vunpack.c.l.b16 %v1520
    %v3571 = vunpack.c.l.b16 %v1521
    %v3572 = vunpack.c.l.b16 %v1522
    %v3573 = vunpack.c.l.b16 %v1523
    %v3574 = vunpack.c.l.b16 %v1524
    %v3575 = vunpack.c.l.b16 %v1525
    %v3576 = vunpack.c.l.b16 %v1526
    %v3577 = vunpack.c.l.b16 %v1527
    %v3578 = vunpack.c.l.b16 %v1528
    %v3579 = vunpack.c.l.b16 %v1529
    %v3580 = vunpack.c.l.b16 %v1530
    %v3581 = vunpack.c.l.b16 %v1531
    %v3582 = vunpack.c.l.b16 %v1532
    %v3583 = vunpack.c.l.b16 %v1533
    %v3584 = vunpack.c.l.b16 %v1534
    %v3585 = vunpack.c.l.b16 %v1535
    %v3586 = vunpack.c.l.b16 %v1536
    %v3587 = vunpack.c.l.b16 %v1537
    %v3588 = vunpack.c.l.b16 %v1538
    %v3589 = vunpack.c.l.b16 %v1539
    %v3590 = vunpack.c.l.b16 %v1540
    %v3591 = vunpack.c.l.b16 %v1541
    %v3592 = vunpack.c.l.b16 %v1542
    %v3593 = vunpack.c.l.b16 %v1543
    %v3594 = vunpack.c.l.b16 %v1544
    %v3595 = vunpack.c.l.b16 %v1545
    %v3596 = vunpack.c.l.b16 %v1546
    %v3597 = vunpack.c.l.b16 %v1547
    %v3598 = vunpack.c.l.b16 %v1548
    %v3599 = vunpack.c.l.b16 %v1549
    %v3600 = vunpack.c.l.b16 %v1550
    %v3601 = vunpack.c.l.b16 %v1551
    %v3602 = vunpack.c.l.b16 %v1552
    %v3603 = vunpack.c.l.b16 %v1553
    %v3604 = vunpack.c.l.b16 %v1554
    %v3605 = vunpack.c.l.b16 %v1555
    %v3606 = vunpack.c.l.b16 %v1556
    %v3607 = vunpack.c.l.b16 %v1557
    %v3608 = vunpack.c.l.b16 %v1558
    %v3609 = vunpack.c.l.b16 %v1559
    %v3610 = vunpack.c.l.b16 %v1560
    %v3611 = vunpack.c.l.b16 %v1561
    %v3612 = vunpack.c.l.b16 %v1562
    %v3613 = vunpack.c.l.b16 %v1563
    %v3614 = vunpack.c.l.b16 %v1564
    %v3615 = vunpack.c.l.b16 %v1565
    %v3616 = vunpack.c.l.b16 %v1566
    %v3617 = vunpack.c.l.b16 %v1567
    %v3618 = vunpack.c.l.b16 %v1568
    %v3619 = vunpack.c.l.b16 %v1569
    %v3620 = vunpack.c.l.b16 %v1570
    %v3621 = vunpack.c.l.b16 %v1571
    %v3622 = vunpack.c.l.b16 %v1572
    %v3623 = vunpack.c.l.b16 %v1573
    %v3624 = vunpack.c.l.b16 %v1574
    %v3625 = vunpack.c.l.b16 %v1575
    %v3626 = vunpack.c.l.b16 %v1576
    %v3627 = vunpack.c.l.b16 %v1577
    %v3628 = vunpack.c.l.b16 %v1578
    %v3629 = vunpack.c.l.b16 %v1579
    %v3630 = vunpack.c.l.b16 %v1580
    %v3631 = vunpack.c.l.b16 %v1581
    %v3632 = vunpack.c.l.b16 %v1582
    %v3633 = vunpack.c.l.b16 %v1583
    %v3634 = vunpack.c.l.b16 %v1584
    %v3635 = vunpack.c.l.b16 %v1585
    %v3636 = vunpack.c.l.b16 %v1586
    %v3637 = vunpack.c.l.b16 %v1587
    %v3638 = vunpack.c.l.b16 %v1588
    %v3639 = vunpack.c.l.b16 %v1589
    %v3640 = vunpack.c.l.b16 %v1590
    %v3641 = vunpack.c.l.b16 %v1591
    %v3642 = vunpack.c.l.b16 %v1592
    %v3643 = vunpack.c.l.b16 %v1593
    %v3644 = vunpack.c.l.b16 %v1594
    %v3645 = vunpack.c.l.b16 %v1595
    %v3646 = vunpack.c.l.b16 %v1596
    %v3647 = vunpack.c.l.b16 %v1597
    %v3648 = vunpack.c.l.b16 %v1598
    %v3649 = vunpack.c.l.b16 %v1599
    %v3650 = vunpack.c.l.b16 %v1600
    %v3651 = vunpack.c.l.b16 %v1601
    %v3652 = vunpack.c.l.b16 %v1602
    %v3653 = vunpack.c.l.b16 %v1603
    %v3654 = vunpack.c.l.b16 %v1604
    %v3655 = vunpack.c.l.b16 %v1605
    %v3656 = vunpack.c.l.b16 %v1606
    %v3657 = vunpack.c.l.b16 %v1607
    %v3658 = vunpack.c.l.b16 %v1608
    %v3659 = vunpack.c.l.b16 %v1609
    %v3660 = vunpack.c.l.b16 %v1610
    %v3661 = vunpack.c.l.b16 %v1611
    %v3662 = vunpack.c.l.b16 %v1612
    %v3663 = vunpack.c.l.b16 %v1613
    %v3664 = vunpack.c.l.b16 %v1614
    %v3665 = vunpack.c.l.b16 %v1615
    %v3666 = vunpack.c.l.b16 %v1616
    %v3667 = vunpack.c.l.b16 %v1617
    %v3668 = vunpack.c.l.b16 %v1618
    %v3669 = vunpack.c.l.b16 %v1619
    %v3670 = vunpack.c.l.b16 %v1620
    %v3671 = vunpack.c.l.b16 %v1621
    %v3672 = vunpack.c.l.b16 %v1622
    %v3673 = vunpack.c.l.b16 %v1623
    %v3674 = vunpack.c.l.b16 %v1624
    %v3675 = vunpack.c.l.b16 %v1625
    %v3676 = vunpack.c.l.b16 %v1626
    %v3677 = vunpack.c.l.b16 %v1627
    %v3678 = vunpack.c.l.b16 %v1628
    %v3679 = vunpack.c.l.b16 %v1629
    %v3680 = vunpack.c.l.b16 %v1630
    %v3681 = vunpack.c.l.b16 %v1631
    %v3682 = vunpack.c.l.b16 %v1632
    %v3683 = vunpack.c.l.b16 %v1633
    %v3684 = vunpack.c.l.b16 %v1634
    %v3685 = vunpack.c.l.b16 %v1635
    %v3686 = vunpack.c.l.b16 %v1636
    %v3687 = vunpack.c.l.b16 %v1637
    %v3688 = vunpack.c.l.b16 %v1638
    %v3689 = vunpack.c.l.b16 %v1639
    %v3690 = vunpack.c.l.b16 %v1640
    %v3691 = vunpack.c.l.b16 %v1641
    %v3692 = vunpack.c.l.b16 %v1642
    %v3693 = vunpack.c.l.b16 %v1643
    %v3694 = vunpack.c.l.b16 %v1644
    %v3695 = vunpack.c.l.b16 %v1645
    %v3696 = vunpack.c.l.b16 %v1646
    %v3697 = vunpack.c.l.b16 %v1647
    %v3698 = vunpack.c.l.b16 %v1648
    %v3699 = vunpack.c.l.b16 %v1649
    %v3700 = vunpack.c.l.b16 %v1650
    %v3701 = vunpack.c.l.b16 %v1651
    %v3702 = vunpack.c.l.b16 %v1652
    %v3703 = vunpack.c.l.b16 %v1653
    %v3704 = vunpack.c.l.b16 %v1654
    %v3705 = vunpack.c.l.b16 %v1655
    %v3706 = vunpack.c.l.b16 %v1656
    %v3707 = vunpack.c.l.b16 %v1657
    %v3708 = vunpack.c.l.b16 %v1658
    %v3709 = vunpack.c.l.b16 %v1659
    %v3710 = vunpack.c.l.b16 %v1660
    %v3711 = vunpack.c.l.b16 %v1661
    %v3712 = vunpack.c.l.b16 %v1662
    %v3713 = vunpack.c.l.b16 %v1663
    %v3714 = vunpack.c.l.b16 %v1664
    %v3715 = vunpack.c.l.b16 %v1665
    %v3716 = vunpack.c.l.b16 %v1666
    %v3717 = vunpack.c.l.b16 %v1667
    %v3718 = vunpack.c.l.b16 %v1668
    %v3719 = vunpack.c.l.b16 %v1669
    %v3720 = vunpack.c.l.b16 %v1670
    %v3721 = vunpack.c.l.b16 %v1671
    %v3722 = vunpack.c.l.b16 %v1672
    %v3723 = vunpack.c.l.b16 %v1673
    %v3724 = vunpack.c.l.b16 %v1674
    %v3725 = vunpack.c.l.b16 %v1675
    %v3726 = vunpack.c.l.b16 %v1676
    %v3727 = vunpack.c.l.b16 %v1677
    %v3728 = vunpack.c.l.b16 %v1678
    %v3729 = vunpack.c.l.b16 %v1679
    %v3730 = vunpack.c.l.b16 %v1680
    %v3731 = vunpack.c.l.b16 %v1681
    %v3732 = vunpack.c.l.b16 %v1682
    %v3733 = vunpack.c.l.b16 %v1683
    %v3734 = vunpack.c.l.b16 %v1684
    %v3735 = vunpack.c.l.b16 %v1685
    %v3736 = vunpack.c.l.b16 %v1686
    %v3737 = vunpack.c.l.b16 %v1687
    %v3738 = vunpack.c.l.b16 %v1688
    %v3739 = vpack.c.b16 %v3484, %v3483
    %v3740 = vpack.c.b16 %v3486, %v3485
    %v3741 = vpack.c.b16 %v3488, %v3487
    %v3742 = vpack.c.b16 %v3490, %v3489
    %v3743 = vpack.c.b16 %v3492, %v3491
    %v3744 = vpack.c.b16 %v3494, %v3493
    %v3745 = vpack.c.b16 %v3496, %v3495
    %v3746 = vpack.c.b16 %v3498, %v3497
    %v3747 = vpack.c.b16 %v3500, %v3499
    %v3748 = vpack.c.b16 %v3502, %v3501
    %v3749 = vpack.c.b16 %v3504, %v3503
    %v3750 = vpack.c.b16 %v3506, %v3505
    %v3751 = vpack.c.b16 %v3508, %v3507
    %v3752 = vpack.c.b16 %v3510, %v3509
    %v3753 = vpack.c.b16 %v3512, %v3511
    %v3754 = vpack.c.b16 %v3514, %v3513
    %v3755 = vpack.c.b16 %v3516, %v3515
    %v3756 = vpack.c.b16 %v3518, %v3517
    %v3757 = vpack.c.b16 %v3520, %v3519
    %v3758 = vpack.c.b16 %v3522, %v3521
    %v3759 = vpack.c.b16 %v3524, %v3523
    %v3760 = vpack.c.b16 %v3526, %v3525
    %v3761 = vpack.c.b16 %v3528, %v3527
    %v3762 = vpack.c.b16 %v3530, %v3529
    %v3763 = vpack.c.b16 %v3532, %v3531
    %v3764 = vpack.c.b16 %v3534, %v3533
    %v3765 = vpack.c.b16 %v3536, %v3535
    %v3766 = vpack.c.b16 %v3538, %v3537
    %v3767 = vpack.c.b16 %v3540, %v3539
    %v3768 = vpack.c.b16 %v3542, %v3541
    %v3769 = vpack.c.b16 %v3544, %v3543
    %v3770 = vpack.c.b16 %v3546, %v3545
    %v3771 = vpack.c.b16 %v3548, %v3547
    %v3772 = vpack.c.b16 %v3550, %v3549
    %v3773 = vpack.c.b16 %v3552, %v3551
    %v3774 = vpack.c.b16 %v3554, %v3553
    %v3775 = vpack.c.b16 %v3556, %v3555
    %v3776 = vpack.c.b16 %v3558, %v3557
    %v3777 = vpack.c.b16 %v3560, %v3559
    %v3778 = vpack.c.b16 %v3562, %v3561
    %v3779 = vpack.c.b16 %v3564, %v3563
    %v3780 = vpack.c.b16 %v3566, %v3565
    %v3781 = vpack.c.b16 %v3568, %v3567
    %v3782 = vpack.c.b16 %v3570, %v3569
    %v3783 = vpack.c.b16 %v3572, %v3571
    %v3784 = vpack.c.b16 %v3574, %v3573
    %v3785 = vpack.c.b16 %v3576, %v3575
    %v3786 = vpack.c.b16 %v3578, %v3577
    %v3787 = vpack.c.b16 %v3580, %v3579
    %v3788 = vpack.c.b16 %v3582, %v3581
    %v3789 = vpack.c.b16 %v3584, %v3583
    %v3790 = vpack.c.b16 %v3586, %v3585
    %v3791 = vpack.c.b16 %v3588, %v3587
    %v3792 = vpack.c.b16 %v3590, %v3589
    %v3793 = vpack.c.b16 %v3592, %v3591
    %v3794 = vpack.c.b16 %v3594, %v3593
    %v3795 = vpack.c.b16 %v3596, %v3595
    %v3796 = vpack.c.b16 %v3598, %v3597
    %v3797 = vpack.c.b16 %v3600, %v3599
    %v3798 = vpack.c.b16 %v3602, %v3601
    %v3799 = vpack.c.b16 %v3604, %v3603
    %v3800 = vpack.c.b16 %v3606, %v3605
    %v3801 = vpack.c.b16 %v3608, %v3607
    %v3802 = vpack.c.b16 %v3610, %v3609
    %v3803 = vpack.c.b16 %v3612, %v3611
    %v3804 = vpack.c.b16 %v3614, %v3613
    %v3805 = vpack.c.b16 %v3616, %v3615
    %v3806 = vpack.c.b16 %v3618, %v3617
    %v3807 = vpack.c.b16 %v3620, %v3619
    %v3808 = vpack.c.b16 %v3622, %v3621
    %v3809 = vpack.c.b16 %v3624, %v3623
    %v3810 = vpack.c.b16 %v3626, %v3625
    %v3811 = vpack.c.b16 %v3628, %v3627
    %v3812 = vpack.c.b16 %v3630, %v3629
    %v3813 = vpack.c.b16 %v3632, %v3631
    %v3814 = vpack.c.b16 %v3634, %v3633
    %v3815 = vpack.c.b16 %v3636, %v3635
    %v3816 = vpack.c.b16 %v3638, %v3637
    %v3817 = vpack.c.b16 %v3640, %v3639
    %v3818 = vpack.c.b16 %v3642, %v3641
    %v3819 = vpack.c.b16 %v3644, %v3643
    %v3820 = vpack.c.b16 %v3646, %v3645
    %v3821 = vpack.c.b16 %v3648, %v3647
    %v3822 = vpack.c.b16 %v3650, %v3649
    %v3823 = vpack.c.b16 %v3652, %v3651
    %v3824 = vpack.c.b16 %v3654, %v3653
    %v3825 = vpack.c.b16 %v3656, %v3655
    %v3826 = vpack.c.b16 %v3658, %v3657
    %v3827 = vpack.c.b16 %v3660, %v3659
    %v3828 = vpack.c.b16 %v3662, %v3661
    %v3829 = vpack.c.b16 %v3664, %v3663
    %v3830 = vpack.c.b16 %v3666, %v3665
    %v3831 = vpack.c.b16 %v3668, %v3667
    %v3832 = vpack.c.b16 %v3670, %v3669
    %v3833 = vpack.c.b16 %v3672, %v3671
    %v3834 = vpack.c.b16 %v3674, %v3673
    %v3835 = vpack.c.b16 %v3676, %v3675
    %v3836 = vpack.c.b16 %v3678, %v3677
    %v3837 = vpack.c.b16 %v3680, %v3679
    %v3838 = vpack.c.b16 %v3682, %v3681
    %v3839 = vpack.c.b16 %v3684, %v3683
    %v3840 = vpack.c.b16 %v3686, %v3685
    %v3841 = vpack.c.b16 %v3688, %v3687
    %v3842 = vpack.c.b16 %v3690, %v3689
    %v3843 = vpack.c.b16 %v3692, %v3691
    %v3844 = vpack.c.b16 %v3694, %v3693
    %v3845 = vpack.c.b16 %v3696, %v3695
    %v3846 = vpack.c.b16 %v3698, %v3697
    %v3847 = vpack.c.b16 %v3700, %v3699
    %v3848 = vpack.c.b16 %v3702, %v3701
    %v3849 = vpack.c.b16 %v3704, %v3703
    %v3850 = vpack.c.b16 %v3706, %v3705
    %v3851 = vpack.c.b16 %v3708, %v3707
    %v3852 = vpack.c.b16 %v3710, %v3709
    %v3853 = vpack.c.b16 %v3712, %v3711
    %v3854 = vpack.c.b16 %v3714, %v3713
    %v3855 = vpack.c.b16 %v3716, %v3715
    %v3856 = vpack.c.b16 %v3718, %v3717
    %v3857 = vpack.c.b16 %v3720, %v3719
    %v3858 = vpack.c.b16 %v3722, %v3721
    %v3859 = vpack.c.b16 %v3724, %v3723
    %v3860 = vpack.c.b16 %v3726, %v3725
    %v3861 = vpack.c.b16 %v3728, %v3727
    %v3862 = vpack.c.b16 %v3730, %v3729
    %v3863 = vpack.c.b16 %v3732, %v3731
    %v3864 = vpack.c.b16 %v3734, %v3733
    %v3865 = vpack.c.b16 %v3736, %v3735
    %v3866 = vpack.c.b16 %v3738, %v3737
    %vm3867 = vcmask 64512
    %v3869 = vsel %vm3867, %v3739, 0
    %v3872 = vsel %vm3867, %v3740, 0
    %v3875 = vsel %vm3867, %v3741, 0
    %v3878 = vsel %vm3867, %v3742, 0
    %v3881 = vsel %vm3867, %v3743, 0
    %v3884 = vsel %vm3867, %v3744, 0
    %v3887 = vsel %vm3867, %v3745, 0
    %v3890 = vsel %vm3867, %v3746, 0
    %v3893 = vsel %vm3867, %v3747, 0
    %v3896 = vsel %vm3867, %v3748, 0
    %v3899 = vsel %vm3867, %v3749, 0
    %v3902 = vsel %vm3867, %v3750, 0
    %v3905 = vsel %vm3867, %v3751, 0
    %v3908 = vsel %vm3867, %v3752, 0
    %v3911 = vsel %vm3867, %v3753, 0
    %v3914 = vsel %vm3867, %v3754, 0
    %v3917 = vsel %vm3867, %v3755, 0
    %v3920 = vsel %vm3867, %v3756, 0
    %v3923 = vsel %vm3867, %v3757, 0
    %v3926 = vsel %vm3867, %v3758, 0
    %v3929 = vsel %vm3867, %v3759, 0
    %v3932 = vsel %vm3867, %v3760, 0
    %v3935 = vsel %vm3867, %v3761, 0
    %v3938 = vsel %vm3867, %v3762, 0
    %v3941 = vsel %vm3867, %v3763, 0
    %v3944 = vsel %vm3867, %v3764, 0
    %v3947 = vsel %vm3867, %v3765, 0
    %v3950 = vsel %vm3867, %v3766, 0
    %v3953 = vsel %vm3867, %v3767, 0
    %v3956 = vsel %vm3867, %v3768, 0
    %v3959 = vsel %vm3867, %v3769, 0
    %v3962 = vsel %vm3867, %v3770, 0
    %v3965 = vsel %vm3867, %v3771, 0
    %v3968 = vsel %vm3867, %v3772, 0
    %v3971 = vsel %vm3867, %v3773, 0
    %v3974 = vsel %vm3867, %v3774, 0
    %v3977 = vsel %vm3867, %v3775, 0
    %v3980 = vsel %vm3867, %v3776, 0
    %v3983 = vsel %vm3867, %v3777, 0
    %v3986 = vsel %vm3867, %v3778, 0
    %v3989 = vsel %vm3867, %v3779, 0
    %v3992 = vsel %vm3867, %v3780, 0
    %v3995 = vsel %vm3867, %v3781, 0
    %v3998 = vsel %vm3867, %v3782, 0
    %v4001 = vsel %vm3867, %v3783, 0
    %v4004 = vsel %vm3867, %v3784, 0
    %v4007 = vsel %vm3867, %v3785, 0
    %v4010 = vsel %vm3867, %v3786, 0
    %v4013 = vsel %vm3867, %v3787, 0
    %v4016 = vsel %vm3867, %v3788, 0
    %v4019 = vsel %vm3867, %v3789, 0
    %v4022 = vsel %vm3867, %v3790, 0
    %v4025 = vsel %vm3867, %v3791, 0
    %v4028 = vsel %vm3867, %v3792, 0
    %v4031 = vsel %vm3867, %v3793, 0
    %v4034 = vsel %vm3867, %v3794, 0
    %v4037 = vsel %vm3867, %v3795, 0
    %v4040 = vsel %vm3867, %v3796, 0
    %v4043 = vsel %vm3867, %v3797, 0
    %v4046 = vsel %vm3867, %v3798, 0
    %v4049 = vsel %vm3867, %v3799, 0
    %v4052 = vsel %vm3867, %v3800, 0
    %v4055 = vsel %vm3867, %v3801, 0
    %v4058 = vsel %vm3867, %v3802, 0
    %v4061 = vsel %vm3867, %v3803, 0
    %v4064 = vsel %vm3867, %v3804, 0
    %v4067 = vsel %vm3867, %v3805, 0
    %v4070 = vsel %vm3867, %v3806, 0
    %v4073 = vsel %vm3867, %v3807, 0
    %v4076 = vsel %vm3867, %v3808, 0
    %v4079 = vsel %vm3867, %v3809, 0
    %v4082 = vsel %vm3867, %v3810, 0
    %v4085 = vsel %vm3867, %v3811, 0
    %v4088 = vsel %vm3867, %v3812, 0
    %v4091 = vsel %vm3867, %v3813, 0
    %v4094 = vsel %vm3867, %v3814, 0
    %v4097 = vsel %vm3867, %v3815, 0
    %v4100 = vsel %vm3867, %v3816, 0
    %v4103 = vsel %vm3867, %v3817, 0
    %v4106 = vsel %vm3867, %v3818, 0
    %v4109 = vsel %vm3867, %v3819, 0
    %v4112 = vsel %vm3867, %v3820, 0
    %v4115 = vsel %vm3867, %v3821, 0
    %v4118 = vsel %vm3867, %v3822, 0
    %v4121 = vsel %vm3867, %v3823, 0
    %v4124 = vsel %vm3867, %v3824, 0
    %v4127 = vsel %vm3867, %v3825, 0
    %v4130 = vsel %vm3867, %v3826, 0
    %v4133 = vsel %vm3867, %v3827, 0
    %v4136 = vsel %vm3867, %v3828, 0
    %v4139 = vsel %vm3867, %v3829, 0
    %v4142 = vsel %vm3867, %v3830, 0
    %v4145 = vsel %vm3867, %v3831, 0
    %v4148 = vsel %vm3867, %v3832, 0
    %v4151 = vsel %vm3867, %v3833, 0
    %v4154 = vsel %vm3867, %v3834, 0
    %v4157 = vsel %vm3867, %v3835, 0
    %v4160 = vsel %vm3867, %v3836, 0
    %v4163 = vsel %vm3867, %v3837, 0
    %v4166 = vsel %vm3867, %v3838, 0
    %v4169 = vsel %vm3867, %v3839, 0
    %v4172 = vsel %vm3867, %v3840, 0
    %v4175 = vsel %vm3867, %v3841, 0
    %v4178 = vsel %vm3867, %v3842, 0
    %v4181 = vsel %vm3867, %v3843, 0
    %v4184 = vsel %vm3867, %v3844, 0
    %v4187 = vsel %vm3867, %v3845, 0
    %v4190 = vsel %vm3867, %v3846, 0
    %v4193 = vsel %vm3867, %v3847, 0
    %v4196 = vsel %vm3867, %v3848, 0
    %v4199 = vsel %vm3867, %v3849, 0
    %v4202 = vsel %vm3867, %v3850, 0
    %v4205 = vsel %vm3867, %v3851, 0
    %v4208 = vsel %vm3867, %v3852, 0
    %v4211 = vsel %vm3867, %v3853, 0
    %v4214 = vsel %vm3867, %v3854, 0
    %v4217 = vsel %vm3867, %v3855, 0
    %v4220 = vsel %vm3867, %v3856, 0
    %v4223 = vsel %vm3867, %v3857, 0
    %v4226 = vsel %vm3867, %v3858, 0
    %v4229 = vsel %vm3867, %v3859, 0
    %v4232 = vsel %vm3867, %v3860, 0
    %v4235 = vsel %vm3867, %v3861, 0
    %v4238 = vsel %vm3867, %v3862, 0
    %v4241 = vsel %vm3867, %v3863, 0
    %v4244 = vsel %vm3867, %v3864, 0
    %v4247 = vsel %vm3867, %v3865, 0
    %v4250 = vsel %vm3867, %v3866, 0
    %vm4252 = vcmask 1043456
    %v4254 = vsel %vm4252, %v1689, 0
    %v4257 = vsel %vm4252, %v1690, 0
    %4259 = vmatprep.subr.bf16.mxu0 0
    %4260 = vmatpush1.bf16.msra.mxu0 0
    %4261 = vmatprep.subr.bf16.mxu0 0
    %4262 = vmatpush1.bf16.msra.mxu0 0
    %4263 = vmatprep.subr.bf16.mxu0 0
    %4264 = vmatpush1.bf16.msra.mxu0 0
    %4265 = vmatprep.subr.bf16.mxu0 0
    %4266 = vmatpush1.bf16.msra.mxu0 0
    %4267 = vmatprep.subr.bf16.mxu0 0
    %4268 = vmatpush1.bf16.msra.mxu0 0
    %4269 = vmatprep.subr.bf16.mxu0 0
    %4270 = vmatpush1.bf16.msra.mxu0 0
    %4271 = vmatprep.subr.bf16.mxu0 0
    %4272 = vmatpush1.bf16.msra.mxu0 0
    %4273 = vmatprep.subr.bf16.mxu0 %v4257
    %4274 = vmatpush1.bf16.msra.mxu0 %v4254
    %4275 = vmatprep.subr.bf16.mxu0 0
    %4276 = vmatpush2.bf16.msra.mxu0 0
    %4277 = vmatprep.subr.bf16.mxu0 0
    %4278 = vmatpush2.bf16.msra.mxu0 0
    %4279 = vmatprep.subr.bf16.mxu0 0
    %4280 = vmatpush2.bf16.msra.mxu0 0
    %4281 = vmatprep.subr.bf16.mxu0 0
    %4282 = vmatpush2.bf16.msra.mxu0 0
    %4283 = vmatprep.subr.bf16.mxu0 0
    %4284 = vmatpush2.bf16.msra.mxu0 0
    %4285 = vmatprep.subr.bf16.mxu0 0
    %4286 = vmatpush2.bf16.msra.mxu0 0
    %4287 = vmatprep.subr.bf16.mxu0 0
    %4288 = vmatpush2.bf16.msra.mxu0 0
    %4289 = vmatprep.subr.bf16.mxu0 0
    %4290 = vmatpush2.bf16.msra.mxu0 0
    %4291 = vmatprep.mubr.bf16.mxu0 0
    %4292 = vmatmul.mubr.bf16.gmra.mxu0 %v3869
    %v4293 = vpop.f32.mrf.mxu0
    %v4294 = vadd.f32 %v1950, %v4293
    %v4295 = vpop.f32.mrf.mxu0
    %v4296 = vadd.f32 %v1950, %v4295
    %v4297 = vpop.f32.mrf.mxu0
    %v4298 = vadd.f32 %v1955, %v4297
    %v4299 = vpop.f32.mrf.mxu0
    %v4300 = vadd.f32 %v1955, %v4299
    %4301 = vmatprep.mubr.bf16.mxu0 0
    %4302 = vmatmul.mubr.bf16.gmra.mxu0 %v3872
    %v4303 = vpop.f32.mrf.mxu0
    %v4304 = vadd.f32 %v1960, %v4303
    %v4305 = vpop.f32.mrf.mxu0
    %v4306 = vadd.f32 %v1960, %v4305
    %v4307 = vpop.f32.mrf.mxu0
    %v4308 = vadd.f32 %v1965, %v4307
    %v4309 = vpop.f32.mrf.mxu0
    %v4310 = vadd.f32 %v1965, %v4309
    %4311 = vmatprep.mubr.bf16.mxu0 0
    %4312 = vmatmul.mubr.bf16.gmra.mxu0 %v3875
    %v4313 = vpop.f32.mrf.mxu0
    %v4314 = vadd.f32 %v1970, %v4313
    %v4315 = vpop.f32.mrf.mxu0
    %v4316 = vadd.f32 %v1970, %v4315
    %v4317 = vpop.f32.mrf.mxu0
    %v4318 = vadd.f32 %v1975, %v4317
    %v4319 = vpop.f32.mrf.mxu0
    %v4320 = vadd.f32 %v1975, %v4319
    %4321 = vmatprep.mubr.bf16.mxu0 0
    %4322 = vmatmul.mubr.bf16.gmra.mxu0 %v3878
    %v4323 = vpop.f32.mrf.mxu0
    %v4324 = vadd.f32 %v1980, %v4323
    %v4325 = vpop.f32.mrf.mxu0
    %v4326 = vadd.f32 %v1980, %v4325
    %v4327 = vpop.f32.mrf.mxu0
    %v4328 = vadd.f32 %v1985, %v4327
    %v4329 = vpop.f32.mrf.mxu0
    %v4330 = vadd.f32 %v1985, %v4329
    %4331 = vmatprep.mubr.bf16.mxu0 0
    %4332 = vmatmul.mubr.bf16.gmra.mxu0 %v3881
    %v4333 = vpop.f32.mrf.mxu0
    %v4334 = vadd.f32 %v1990, %v4333
    %v4335 = vpop.f32.mrf.mxu0
    %v4336 = vadd.f32 %v1990, %v4335
    %v4337 = vpop.f32.mrf.mxu0
    %v4338 = vadd.f32 %v1995, %v4337
    %v4339 = vpop.f32.mrf.mxu0
    %v4340 = vadd.f32 %v1995, %v4339
    %4341 = vmatprep.mubr.bf16.mxu0 0
    %4342 = vmatmul.mubr.bf16.gmra.mxu0 %v3884
    %v4343 = vpop.f32.mrf.mxu0
    %v4344 = vadd.f32 %v2000, %v4343
    %v4345 = vpop.f32.mrf.mxu0
    %v4346 = vadd.f32 %v2000, %v4345
    %v4347 = vpop.f32.mrf.mxu0
    %v4348 = vadd.f32 %v2005, %v4347
    %v4349 = vpop.f32.mrf.mxu0
    %v4350 = vadd.f32 %v2005, %v4349
    %4351 = vmatprep.mubr.bf16.mxu0 0
    %4352 = vmatmul.mubr.bf16.gmra.mxu0 %v3887
    %v4353 = vpop.f32.mrf.mxu0
    %v4354 = vadd.f32 %v2010, %v4353
    %v4355 = vpop.f32.mrf.mxu0
    %v4356 = vadd.f32 %v2010, %v4355
    %v4357 = vpop.f32.mrf.mxu0
    %v4358 = vadd.f32 %v2015, %v4357
    %v4359 = vpop.f32.mrf.mxu0
    %v4360 = vadd.f32 %v2015, %v4359
    %4361 = vmatprep.mubr.bf16.mxu0 0
    %4362 = vmatmul.mubr.bf16.gmra.mxu0 %v3890
    %v4363 = vpop.f32.mrf.mxu0
    %v4364 = vadd.f32 %v2020, %v4363
    %v4365 = vpop.f32.mrf.mxu0
    %v4366 = vadd.f32 %v2020, %v4365
    %v4367 = vpop.f32.mrf.mxu0
    %v4368 = vadd.f32 %v2025, %v4367
    %v4369 = vpop.f32.mrf.mxu0
    %v4370 = vadd.f32 %v2025, %v4369
    %4371 = vmatprep.mubr.bf16.mxu0 0
    %4372 = vmatmul.mubr.bf16.gmra.mxu0 %v3893
    %v4373 = vpop.f32.mrf.mxu0
    %v4374 = vadd.f32 %v2030, %v4373
    %v4375 = vpop.f32.mrf.mxu0
    %v4376 = vadd.f32 %v2030, %v4375
    %v4377 = vpop.f32.mrf.mxu0
    %v4378 = vadd.f32 %v2035, %v4377
    %v4379 = vpop.f32.mrf.mxu0
    %v4380 = vadd.f32 %v2035, %v4379
    %4381 = vmatprep.mubr.bf16.mxu0 0
    %4382 = vmatmul.mubr.bf16.gmra.mxu0 %v3896
    %v4383 = vpop.f32.mrf.mxu0
    %v4384 = vadd.f32 %v2040, %v4383
    %v4385 = vpop.f32.mrf.mxu0
    %v4386 = vadd.f32 %v2040, %v4385
    %v4387 = vpop.f32.mrf.mxu0
    %v4388 = vadd.f32 %v2045, %v4387
    %v4389 = vpop.f32.mrf.mxu0
    %v4390 = vadd.f32 %v2045, %v4389
    %4391 = vmatprep.mubr.bf16.mxu0 0
    %4392 = vmatmul.mubr.bf16.gmra.mxu0 %v3899
    %v4393 = vpop.f32.mrf.mxu0
    %v4394 = vadd.f32 %v2050, %v4393
    %v4395 = vpop.f32.mrf.mxu0
    %v4396 = vadd.f32 %v2050, %v4395
    %v4397 = vpop.f32.mrf.mxu0
    %v4398 = vadd.f32 %v2055, %v4397
    %v4399 = vpop.f32.mrf.mxu0
    %v4400 = vadd.f32 %v2055, %v4399
    %4401 = vmatprep.mubr.bf16.mxu0 0
    %4402 = vmatmul.mubr.bf16.gmra.mxu0 %v3902
    %v4403 = vpop.f32.mrf.mxu0
    %v4404 = vadd.f32 %v2060, %v4403
    %v4405 = vpop.f32.mrf.mxu0
    %v4406 = vadd.f32 %v2060, %v4405
    %v4407 = vpop.f32.mrf.mxu0
    %v4408 = vadd.f32 %v2065, %v4407
    %v4409 = vpop.f32.mrf.mxu0
    %v4410 = vadd.f32 %v2065, %v4409
    %4411 = vmatprep.mubr.bf16.mxu0 0
    %4412 = vmatmul.mubr.bf16.gmra.mxu0 %v3905
    %v4413 = vpop.f32.mrf.mxu0
    %v4414 = vadd.f32 %v2070, %v4413
    %v4415 = vpop.f32.mrf.mxu0
    %v4416 = vadd.f32 %v2070, %v4415
    %v4417 = vpop.f32.mrf.mxu0
    %v4418 = vadd.f32 %v2075, %v4417
    %v4419 = vpop.f32.mrf.mxu0
    %v4420 = vadd.f32 %v2075, %v4419
    %4421 = vmatprep.mubr.bf16.mxu0 0
    %4422 = vmatmul.mubr.bf16.gmra.mxu0 %v3908
    %v4423 = vpop.f32.mrf.mxu0
    %v4424 = vadd.f32 %v2080, %v4423
    %v4425 = vpop.f32.mrf.mxu0
    %v4426 = vadd.f32 %v2080, %v4425
    %v4427 = vpop.f32.mrf.mxu0
    %v4428 = vadd.f32 %v2085, %v4427
    %v4429 = vpop.f32.mrf.mxu0
    %v4430 = vadd.f32 %v2085, %v4429
    %4431 = vmatprep.mubr.bf16.mxu0 0
    %4432 = vmatmul.mubr.bf16.gmra.mxu0 %v3911
    %v4433 = vpop.f32.mrf.mxu0
    %v4434 = vadd.f32 %v2090, %v4433
    %v4435 = vpop.f32.mrf.mxu0
    %v4436 = vadd.f32 %v2090, %v4435
    %v4437 = vpop.f32.mrf.mxu0
    %v4438 = vadd.f32 %v2095, %v4437
    %v4439 = vpop.f32.mrf.mxu0
    %v4440 = vadd.f32 %v2095, %v4439
    %4441 = vmatprep.mubr.bf16.mxu0 0
    %4442 = vmatmul.mubr.bf16.gmra.mxu0 %v3914
    %v4443 = vpop.f32.mrf.mxu0
    %v4444 = vadd.f32 %v2100, %v4443
    %v4445 = vpop.f32.mrf.mxu0
    %v4446 = vadd.f32 %v2100, %v4445
    %v4447 = vpop.f32.mrf.mxu0
    %v4448 = vadd.f32 %v2105, %v4447
    %v4449 = vpop.f32.mrf.mxu0
    %v4450 = vadd.f32 %v2105, %v4449
    %4451 = vmatprep.mubr.bf16.mxu0 0
    %4452 = vmatmul.mubr.bf16.gmra.mxu0 %v3917
    %v4453 = vpop.f32.mrf.mxu0
    %v4454 = vadd.f32 %v2110, %v4453
    %v4455 = vpop.f32.mrf.mxu0
    %v4456 = vadd.f32 %v2110, %v4455
    %v4457 = vpop.f32.mrf.mxu0
    %v4458 = vadd.f32 %v2115, %v4457
    %v4459 = vpop.f32.mrf.mxu0
    %v4460 = vadd.f32 %v2115, %v4459
    %4461 = vmatprep.mubr.bf16.mxu0 0
    %4462 = vmatmul.mubr.bf16.gmra.mxu0 %v3920
    %v4463 = vpop.f32.mrf.mxu0
    %v4464 = vadd.f32 %v2120, %v4463
    %v4465 = vpop.f32.mrf.mxu0
    %v4466 = vadd.f32 %v2120, %v4465
    %v4467 = vpop.f32.mrf.mxu0
    %v4468 = vadd.f32 %v2125, %v4467
    %v4469 = vpop.f32.mrf.mxu0
    %v4470 = vadd.f32 %v2125, %v4469
    %4471 = vmatprep.mubr.bf16.mxu0 0
    %4472 = vmatmul.mubr.bf16.gmra.mxu0 %v3923
    %v4473 = vpop.f32.mrf.mxu0
    %v4474 = vadd.f32 %v2130, %v4473
    %v4475 = vpop.f32.mrf.mxu0
    %v4476 = vadd.f32 %v2130, %v4475
    %v4477 = vpop.f32.mrf.mxu0
    %v4478 = vadd.f32 %v2135, %v4477
    %v4479 = vpop.f32.mrf.mxu0
    %v4480 = vadd.f32 %v2135, %v4479
    %4481 = vmatprep.mubr.bf16.mxu0 0
    %4482 = vmatmul.mubr.bf16.gmra.mxu0 %v3926
    %v4483 = vpop.f32.mrf.mxu0
    %v4484 = vadd.f32 %v2140, %v4483
    %v4485 = vpop.f32.mrf.mxu0
    %v4486 = vadd.f32 %v2140, %v4485
    %v4487 = vpop.f32.mrf.mxu0
    %v4488 = vadd.f32 %v2145, %v4487
    %v4489 = vpop.f32.mrf.mxu0
    %v4490 = vadd.f32 %v2145, %v4489
    %4491 = vmatprep.mubr.bf16.mxu0 0
    %4492 = vmatmul.mubr.bf16.gmra.mxu0 %v3929
    %v4493 = vpop.f32.mrf.mxu0
    %v4494 = vadd.f32 %v2150, %v4493
    %v4495 = vpop.f32.mrf.mxu0
    %v4496 = vadd.f32 %v2150, %v4495
    %v4497 = vpop.f32.mrf.mxu0
    %v4498 = vadd.f32 %v2155, %v4497
    %v4499 = vpop.f32.mrf.mxu0
    %v4500 = vadd.f32 %v2155, %v4499
    %4501 = vmatprep.mubr.bf16.mxu0 0
    %4502 = vmatmul.mubr.bf16.gmra.mxu0 %v3932
    %v4503 = vpop.f32.mrf.mxu0
    %v4504 = vadd.f32 %v2160, %v4503
    %v4505 = vpop.f32.mrf.mxu0
    %v4506 = vadd.f32 %v2160, %v4505
    %v4507 = vpop.f32.mrf.mxu0
    %v4508 = vadd.f32 %v2165, %v4507
    %v4509 = vpop.f32.mrf.mxu0
    %v4510 = vadd.f32 %v2165, %v4509
    %4511 = vmatprep.mubr.bf16.mxu0 0
    %4512 = vmatmul.mubr.bf16.gmra.mxu0 %v3935
    %v4513 = vpop.f32.mrf.mxu0
    %v4514 = vadd.f32 %v2170, %v4513
    %v4515 = vpop.f32.mrf.mxu0
    %v4516 = vadd.f32 %v2170, %v4515
    %v4517 = vpop.f32.mrf.mxu0
    %v4518 = vadd.f32 %v2175, %v4517
    %v4519 = vpop.f32.mrf.mxu0
    %v4520 = vadd.f32 %v2175, %v4519
    %4521 = vmatprep.mubr.bf16.mxu0 0
    %4522 = vmatmul.mubr.bf16.gmra.mxu0 %v3938
    %v4523 = vpop.f32.mrf.mxu0
    %v4524 = vadd.f32 %v2180, %v4523
    %v4525 = vpop.f32.mrf.mxu0
    %v4526 = vadd.f32 %v2180, %v4525
    %v4527 = vpop.f32.mrf.mxu0
    %v4528 = vadd.f32 %v2185, %v4527
    %v4529 = vpop.f32.mrf.mxu0
    %v4530 = vadd.f32 %v2185, %v4529
    %4531 = vmatprep.mubr.bf16.mxu0 0
    %4532 = vmatmul.mubr.bf16.gmra.mxu0 %v3941
    %v4533 = vpop.f32.mrf.mxu0
    %v4534 = vadd.f32 %v2190, %v4533
    %v4535 = vpop.f32.mrf.mxu0
    %v4536 = vadd.f32 %v2190, %v4535
    %v4537 = vpop.f32.mrf.mxu0
    %v4538 = vadd.f32 %v2195, %v4537
    %v4539 = vpop.f32.mrf.mxu0
    %v4540 = vadd.f32 %v2195, %v4539
    %4541 = vmatprep.mubr.bf16.mxu0 0
    %4542 = vmatmul.mubr.bf16.gmra.mxu0 %v3944
    %v4543 = vpop.f32.mrf.mxu0
    %v4544 = vadd.f32 %v2200, %v4543
    %v4545 = vpop.f32.mrf.mxu0
    %v4546 = vadd.f32 %v2200, %v4545
    %v4547 = vpop.f32.mrf.mxu0
    %v4548 = vadd.f32 %v2205, %v4547
    %v4549 = vpop.f32.mrf.mxu0
    %v4550 = vadd.f32 %v2205, %v4549
    %4551 = vmatprep.mubr.bf16.mxu0 0
    %4552 = vmatmul.mubr.bf16.gmra.mxu0 %v3947
    %v4553 = vpop.f32.mrf.mxu0
    %v4554 = vadd.f32 %v2210, %v4553
    %v4555 = vpop.f32.mrf.mxu0
    %v4556 = vadd.f32 %v2210, %v4555
    %v4557 = vpop.f32.mrf.mxu0
    %v4558 = vadd.f32 %v2215, %v4557
    %v4559 = vpop.f32.mrf.mxu0
    %v4560 = vadd.f32 %v2215, %v4559
    %4561 = vmatprep.mubr.bf16.mxu0 0
    %4562 = vmatmul.mubr.bf16.gmra.mxu0 %v3950
    %v4563 = vpop.f32.mrf.mxu0
    %v4564 = vadd.f32 %v2220, %v4563
    %v4565 = vpop.f32.mrf.mxu0
    %v4566 = vadd.f32 %v2220, %v4565
    %v4567 = vpop.f32.mrf.mxu0
    %v4568 = vadd.f32 %v2225, %v4567
    %v4569 = vpop.f32.mrf.mxu0
    %v4570 = vadd.f32 %v2225, %v4569
    %4571 = vmatprep.mubr.bf16.mxu0 0
    %4572 = vmatmul.mubr.bf16.gmra.mxu0 %v3953
    %v4573 = vpop.f32.mrf.mxu0
    %v4574 = vadd.f32 %v2230, %v4573
    %v4575 = vpop.f32.mrf.mxu0
    %v4576 = vadd.f32 %v2230, %v4575
    %v4577 = vpop.f32.mrf.mxu0
    %v4578 = vadd.f32 %v2235, %v4577
    %v4579 = vpop.f32.mrf.mxu0
    %v4580 = vadd.f32 %v2235, %v4579
    %4581 = vmatprep.mubr.bf16.mxu0 0
    %4582 = vmatmul.mubr.bf16.gmra.mxu0 %v3956
    %v4583 = vpop.f32.mrf.mxu0
    %v4584 = vadd.f32 %v2240, %v4583
    %v4585 = vpop.f32.mrf.mxu0
    %v4586 = vadd.f32 %v2240, %v4585
    %v4587 = vpop.f32.mrf.mxu0
    %v4588 = vadd.f32 %v2245, %v4587
    %v4589 = vpop.f32.mrf.mxu0
    %v4590 = vadd.f32 %v2245, %v4589
    %4591 = vmatprep.mubr.bf16.mxu0 0
    %4592 = vmatmul.mubr.bf16.gmra.mxu0 %v3959
    %v4593 = vpop.f32.mrf.mxu0
    %v4594 = vadd.f32 %v2250, %v4593
    %v4595 = vpop.f32.mrf.mxu0
    %v4596 = vadd.f32 %v2250, %v4595
    %v4597 = vpop.f32.mrf.mxu0
    %v4598 = vadd.f32 %v2255, %v4597
    %v4599 = vpop.f32.mrf.mxu0
    %v4600 = vadd.f32 %v2255, %v4599
    %4601 = vmatprep.mubr.bf16.mxu0 0
    %4602 = vmatmul.mubr.bf16.gmra.mxu0 %v3962
    %v4603 = vpop.f32.mrf.mxu0
    %v4604 = vadd.f32 %v2260, %v4603
    %v4605 = vpop.f32.mrf.mxu0
    %v4606 = vadd.f32 %v2260, %v4605
    %v4607 = vpop.f32.mrf.mxu0
    %v4608 = vadd.f32 %v2265, %v4607
    %v4609 = vpop.f32.mrf.mxu0
    %v4610 = vadd.f32 %v2265, %v4609
    %4611 = vmatprep.mubr.bf16.mxu0 0
    %4612 = vmatmul.mubr.bf16.gmra.mxu0 %v3965
    %v4613 = vpop.f32.mrf.mxu0
    %v4614 = vadd.f32 %v2270, %v4613
    %v4615 = vpop.f32.mrf.mxu0
    %v4616 = vadd.f32 %v2270, %v4615
    %v4617 = vpop.f32.mrf.mxu0
    %v4618 = vadd.f32 %v2275, %v4617
    %v4619 = vpop.f32.mrf.mxu0
    %v4620 = vadd.f32 %v2275, %v4619
    %4621 = vmatprep.mubr.bf16.mxu0 0
    %4622 = vmatmul.mubr.bf16.gmra.mxu0 %v3968
    %v4623 = vpop.f32.mrf.mxu0
    %v4624 = vadd.f32 %v2280, %v4623
    %v4625 = vpop.f32.mrf.mxu0
    %v4626 = vadd.f32 %v2280, %v4625
    %v4627 = vpop.f32.mrf.mxu0
    %v4628 = vadd.f32 %v2285, %v4627
    %v4629 = vpop.f32.mrf.mxu0
    %v4630 = vadd.f32 %v2285, %v4629
    %4631 = vmatprep.mubr.bf16.mxu0 0
    %4632 = vmatmul.mubr.bf16.gmra.mxu0 %v3971
    %v4633 = vpop.f32.mrf.mxu0
    %v4634 = vadd.f32 %v2290, %v4633
    %v4635 = vpop.f32.mrf.mxu0
    %v4636 = vadd.f32 %v2290, %v4635
    %v4637 = vpop.f32.mrf.mxu0
    %v4638 = vadd.f32 %v2295, %v4637
    %v4639 = vpop.f32.mrf.mxu0
    %v4640 = vadd.f32 %v2295, %v4639
    %4641 = vmatprep.mubr.bf16.mxu0 0
    %4642 = vmatmul.mubr.bf16.gmra.mxu0 %v3974
    %v4643 = vpop.f32.mrf.mxu0
    %v4644 = vadd.f32 %v2300, %v4643
    %v4645 = vpop.f32.mrf.mxu0
    %v4646 = vadd.f32 %v2300, %v4645
    %v4647 = vpop.f32.mrf.mxu0
    %v4648 = vadd.f32 %v2305, %v4647
    %v4649 = vpop.f32.mrf.mxu0
    %v4650 = vadd.f32 %v2305, %v4649
    %4651 = vmatprep.mubr.bf16.mxu0 0
    %4652 = vmatmul.mubr.bf16.gmra.mxu0 %v3977
    %v4653 = vpop.f32.mrf.mxu0
    %v4654 = vadd.f32 %v2310, %v4653
    %v4655 = vpop.f32.mrf.mxu0
    %v4656 = vadd.f32 %v2310, %v4655
    %v4657 = vpop.f32.mrf.mxu0
    %v4658 = vadd.f32 %v2315, %v4657
    %v4659 = vpop.f32.mrf.mxu0
    %v4660 = vadd.f32 %v2315, %v4659
    %4661 = vmatprep.mubr.bf16.mxu0 0
    %4662 = vmatmul.mubr.bf16.gmra.mxu0 %v3980
    %v4663 = vpop.f32.mrf.mxu0
    %v4664 = vadd.f32 %v2320, %v4663
    %v4665 = vpop.f32.mrf.mxu0
    %v4666 = vadd.f32 %v2320, %v4665
    %v4667 = vpop.f32.mrf.mxu0
    %v4668 = vadd.f32 %v2325, %v4667
    %v4669 = vpop.f32.mrf.mxu0
    %v4670 = vadd.f32 %v2325, %v4669
    %4671 = vmatprep.mubr.bf16.mxu0 0
    %4672 = vmatmul.mubr.bf16.gmra.mxu0 %v3983
    %v4673 = vpop.f32.mrf.mxu0
    %v4674 = vadd.f32 %v2330, %v4673
    %v4675 = vpop.f32.mrf.mxu0
    %v4676 = vadd.f32 %v2330, %v4675
    %v4677 = vpop.f32.mrf.mxu0
    %v4678 = vadd.f32 %v2335, %v4677
    %v4679 = vpop.f32.mrf.mxu0
    %v4680 = vadd.f32 %v2335, %v4679
    %4681 = vmatprep.mubr.bf16.mxu0 0
    %4682 = vmatmul.mubr.bf16.gmra.mxu0 %v3986
    %v4683 = vpop.f32.mrf.mxu0
    %v4684 = vadd.f32 %v2340, %v4683
    %v4685 = vpop.f32.mrf.mxu0
    %v4686 = vadd.f32 %v2340, %v4685
    %v4687 = vpop.f32.mrf.mxu0
    %v4688 = vadd.f32 %v2345, %v4687
    %v4689 = vpop.f32.mrf.mxu0
    %v4690 = vadd.f32 %v2345, %v4689
    %4691 = vmatprep.mubr.bf16.mxu0 0
    %4692 = vmatmul.mubr.bf16.gmra.mxu0 %v3989
    %v4693 = vpop.f32.mrf.mxu0
    %v4694 = vadd.f32 %v2350, %v4693
    %v4695 = vpop.f32.mrf.mxu0
    %v4696 = vadd.f32 %v2350, %v4695
    %v4697 = vpop.f32.mrf.mxu0
    %v4698 = vadd.f32 %v2355, %v4697
    %v4699 = vpop.f32.mrf.mxu0
    %v4700 = vadd.f32 %v2355, %v4699
    %4701 = vmatprep.mubr.bf16.mxu0 0
    %4702 = vmatmul.mubr.bf16.gmra.mxu0 %v3992
    %v4703 = vpop.f32.mrf.mxu0
    %v4704 = vadd.f32 %v2360, %v4703
    %v4705 = vpop.f32.mrf.mxu0
    %v4706 = vadd.f32 %v2360, %v4705
    %v4707 = vpop.f32.mrf.mxu0
    %v4708 = vadd.f32 %v2365, %v4707
    %v4709 = vpop.f32.mrf.mxu0
    %v4710 = vadd.f32 %v2365, %v4709
    %4711 = vmatprep.mubr.bf16.mxu0 0
    %4712 = vmatmul.mubr.bf16.gmra.mxu0 %v3995
    %v4713 = vpop.f32.mrf.mxu0
    %v4714 = vadd.f32 %v2370, %v4713
    %v4715 = vpop.f32.mrf.mxu0
    %v4716 = vadd.f32 %v2370, %v4715
    %v4717 = vpop.f32.mrf.mxu0
    %v4718 = vadd.f32 %v2375, %v4717
    %v4719 = vpop.f32.mrf.mxu0
    %v4720 = vadd.f32 %v2375, %v4719
    %4721 = vmatprep.mubr.bf16.mxu0 0
    %4722 = vmatmul.mubr.bf16.gmra.mxu0 %v3998
    %v4723 = vpop.f32.mrf.mxu0
    %v4724 = vadd.f32 %v2380, %v4723
    %v4725 = vpop.f32.mrf.mxu0
    %v4726 = vadd.f32 %v2380, %v4725
    %v4727 = vpop.f32.mrf.mxu0
    %v4728 = vadd.f32 %v2385, %v4727
    %v4729 = vpop.f32.mrf.mxu0
    %v4730 = vadd.f32 %v2385, %v4729
    %4731 = vmatprep.mubr.bf16.mxu0 0
    %4732 = vmatmul.mubr.bf16.gmra.mxu0 %v4001
    %v4733 = vpop.f32.mrf.mxu0
    %v4734 = vadd.f32 %v2390, %v4733
    %v4735 = vpop.f32.mrf.mxu0
    %v4736 = vadd.f32 %v2390, %v4735
    %v4737 = vpop.f32.mrf.mxu0
    %v4738 = vadd.f32 %v2395, %v4737
    %v4739 = vpop.f32.mrf.mxu0
    %v4740 = vadd.f32 %v2395, %v4739
    %4741 = vmatprep.mubr.bf16.mxu0 0
    %4742 = vmatmul.mubr.bf16.gmra.mxu0 %v4004
    %v4743 = vpop.f32.mrf.mxu0
    %v4744 = vadd.f32 %v2400, %v4743
    %v4745 = vpop.f32.mrf.mxu0
    %v4746 = vadd.f32 %v2400, %v4745
    %v4747 = vpop.f32.mrf.mxu0
    %v4748 = vadd.f32 %v2405, %v4747
    %v4749 = vpop.f32.mrf.mxu0
    %v4750 = vadd.f32 %v2405, %v4749
    %4751 = vmatprep.mubr.bf16.mxu0 0
    %4752 = vmatmul.mubr.bf16.gmra.mxu0 %v4007
    %v4753 = vpop.f32.mrf.mxu0
    %v4754 = vadd.f32 %v2410, %v4753
    %v4755 = vpop.f32.mrf.mxu0
    %v4756 = vadd.f32 %v2410, %v4755
    %v4757 = vpop.f32.mrf.mxu0
    %v4758 = vadd.f32 %v2415, %v4757
    %v4759 = vpop.f32.mrf.mxu0
    %v4760 = vadd.f32 %v2415, %v4759
    %4761 = vmatprep.mubr.bf16.mxu0 0
    %4762 = vmatmul.mubr.bf16.gmra.mxu0 %v4010
    %v4763 = vpop.f32.mrf.mxu0
    %v4764 = vadd.f32 %v2420, %v4763
    %v4765 = vpop.f32.mrf.mxu0
    %v4766 = vadd.f32 %v2420, %v4765
    %v4767 = vpop.f32.mrf.mxu0
    %v4768 = vadd.f32 %v2425, %v4767
    %v4769 = vpop.f32.mrf.mxu0
    %v4770 = vadd.f32 %v2425, %v4769
    %4771 = vmatprep.mubr.bf16.mxu0 0
    %4772 = vmatmul.mubr.bf16.gmra.mxu0 %v4013
    %v4773 = vpop.f32.mrf.mxu0
    %v4774 = vadd.f32 %v2430, %v4773
    %v4775 = vpop.f32.mrf.mxu0
    %v4776 = vadd.f32 %v2430, %v4775
    %v4777 = vpop.f32.mrf.mxu0
    %v4778 = vadd.f32 %v2435, %v4777
    %v4779 = vpop.f32.mrf.mxu0
    %v4780 = vadd.f32 %v2435, %v4779
    %4781 = vmatprep.mubr.bf16.mxu0 0
    %4782 = vmatmul.mubr.bf16.gmra.mxu0 %v4016
    %v4783 = vpop.f32.mrf.mxu0
    %v4784 = vadd.f32 %v2440, %v4783
    %v4785 = vpop.f32.mrf.mxu0
    %v4786 = vadd.f32 %v2440, %v4785
    %v4787 = vpop.f32.mrf.mxu0
    %v4788 = vadd.f32 %v2445, %v4787
    %v4789 = vpop.f32.mrf.mxu0
    %v4790 = vadd.f32 %v2445, %v4789
    %4791 = vmatprep.mubr.bf16.mxu0 0
    %4792 = vmatmul.mubr.bf16.gmra.mxu0 %v4019
    %v4793 = vpop.f32.mrf.mxu0
    %v4794 = vadd.f32 %v2450, %v4793
    %v4795 = vpop.f32.mrf.mxu0
    %v4796 = vadd.f32 %v2450, %v4795
    %v4797 = vpop.f32.mrf.mxu0
    %v4798 = vadd.f32 %v2455, %v4797
    %v4799 = vpop.f32.mrf.mxu0
    %v4800 = vadd.f32 %v2455, %v4799
    %4801 = vmatprep.mubr.bf16.mxu0 0
    %4802 = vmatmul.mubr.bf16.gmra.mxu0 %v4022
    %v4803 = vpop.f32.mrf.mxu0
    %v4804 = vadd.f32 %v2460, %v4803
    %v4805 = vpop.f32.mrf.mxu0
    %v4806 = vadd.f32 %v2460, %v4805
    %v4807 = vpop.f32.mrf.mxu0
    %v4808 = vadd.f32 %v2465, %v4807
    %v4809 = vpop.f32.mrf.mxu0
    %v4810 = vadd.f32 %v2465, %v4809
    %4811 = vmatprep.mubr.bf16.mxu0 0
    %4812 = vmatmul.mubr.bf16.gmra.mxu0 %v4025
    %v4813 = vpop.f32.mrf.mxu0
    %v4814 = vadd.f32 %v2470, %v4813
    %v4815 = vpop.f32.mrf.mxu0
    %v4816 = vadd.f32 %v2470, %v4815
    %v4817 = vpop.f32.mrf.mxu0
    %v4818 = vadd.f32 %v2475, %v4817
    %v4819 = vpop.f32.mrf.mxu0
    %v4820 = vadd.f32 %v2475, %v4819
    %4821 = vmatprep.mubr.bf16.mxu0 0
    %4822 = vmatmul.mubr.bf16.gmra.mxu0 %v4028
    %v4823 = vpop.f32.mrf.mxu0
    %v4824 = vadd.f32 %v2480, %v4823
    %v4825 = vpop.f32.mrf.mxu0
    %v4826 = vadd.f32 %v2480, %v4825
    %v4827 = vpop.f32.mrf.mxu0
    %v4828 = vadd.f32 %v2485, %v4827
    %v4829 = vpop.f32.mrf.mxu0
    %v4830 = vadd.f32 %v2485, %v4829
    %4831 = vmatprep.mubr.bf16.mxu0 0
    %4832 = vmatmul.mubr.bf16.gmra.mxu0 %v4031
    %v4833 = vpop.f32.mrf.mxu0
    %v4834 = vadd.f32 %v2490, %v4833
    %v4835 = vpop.f32.mrf.mxu0
    %v4836 = vadd.f32 %v2490, %v4835
    %v4837 = vpop.f32.mrf.mxu0
    %v4838 = vadd.f32 %v2495, %v4837
    %v4839 = vpop.f32.mrf.mxu0
    %v4840 = vadd.f32 %v2495, %v4839
    %4841 = vmatprep.mubr.bf16.mxu0 0
    %4842 = vmatmul.mubr.bf16.gmra.mxu0 %v4034
    %v4843 = vpop.f32.mrf.mxu0
    %v4844 = vadd.f32 %v2500, %v4843
    %v4845 = vpop.f32.mrf.mxu0
    %v4846 = vadd.f32 %v2500, %v4845
    %v4847 = vpop.f32.mrf.mxu0
    %v4848 = vadd.f32 %v2505, %v4847
    %v4849 = vpop.f32.mrf.mxu0
    %v4850 = vadd.f32 %v2505, %v4849
    %4851 = vmatprep.mubr.bf16.mxu0 0
    %4852 = vmatmul.mubr.bf16.gmra.mxu0 %v4037
    %v4853 = vpop.f32.mrf.mxu0
    %v4854 = vadd.f32 %v2510, %v4853
    %v4855 = vpop.f32.mrf.mxu0
    %v4856 = vadd.f32 %v2510, %v4855
    %v4857 = vpop.f32.mrf.mxu0
    %v4858 = vadd.f32 %v2515, %v4857
    %v4859 = vpop.f32.mrf.mxu0
    %v4860 = vadd.f32 %v2515, %v4859
    %4861 = vmatprep.mubr.bf16.mxu0 0
    %4862 = vmatmul.mubr.bf16.gmra.mxu0 %v4040
    %v4863 = vpop.f32.mrf.mxu0
    %v4864 = vadd.f32 %v2520, %v4863
    %v4865 = vpop.f32.mrf.mxu0
    %v4866 = vadd.f32 %v2520, %v4865
    %v4867 = vpop.f32.mrf.mxu0
    %v4868 = vadd.f32 %v2525, %v4867
    %v4869 = vpop.f32.mrf.mxu0
    %v4870 = vadd.f32 %v2525, %v4869
    %4871 = vmatprep.mubr.bf16.mxu0 0
    %4872 = vmatmul.mubr.bf16.gmra.mxu0 %v4043
    %v4873 = vpop.f32.mrf.mxu0
    %v4874 = vadd.f32 %v2530, %v4873
    %v4875 = vpop.f32.mrf.mxu0
    %v4876 = vadd.f32 %v2530, %v4875
    %v4877 = vpop.f32.mrf.mxu0
    %v4878 = vadd.f32 %v2535, %v4877
    %v4879 = vpop.f32.mrf.mxu0
    %v4880 = vadd.f32 %v2535, %v4879
    %4881 = vmatprep.mubr.bf16.mxu0 0
    %4882 = vmatmul.mubr.bf16.gmra.mxu0 %v4046
    %v4883 = vpop.f32.mrf.mxu0
    %v4884 = vadd.f32 %v2540, %v4883
    %v4885 = vpop.f32.mrf.mxu0
    %v4886 = vadd.f32 %v2540, %v4885
    %v4887 = vpop.f32.mrf.mxu0
    %v4888 = vadd.f32 %v2545, %v4887
    %v4889 = vpop.f32.mrf.mxu0
    %v4890 = vadd.f32 %v2545, %v4889
    %4891 = vmatprep.mubr.bf16.mxu0 0
    %4892 = vmatmul.mubr.bf16.gmra.mxu0 %v4049
    %v4893 = vpop.f32.mrf.mxu0
    %v4894 = vadd.f32 %v2550, %v4893
    %v4895 = vpop.f32.mrf.mxu0
    %v4896 = vadd.f32 %v2550, %v4895
    %v4897 = vpop.f32.mrf.mxu0
    %v4898 = vadd.f32 %v2555, %v4897
    %v4899 = vpop.f32.mrf.mxu0
    %v4900 = vadd.f32 %v2555, %v4899
    %4901 = vmatprep.mubr.bf16.mxu0 0
    %4902 = vmatmul.mubr.bf16.gmra.mxu0 %v4052
    %v4903 = vpop.f32.mrf.mxu0
    %v4904 = vadd.f32 %v2560, %v4903
    %v4905 = vpop.f32.mrf.mxu0
    %v4906 = vadd.f32 %v2560, %v4905
    %v4907 = vpop.f32.mrf.mxu0
    %v4908 = vadd.f32 %v2565, %v4907
    %v4909 = vpop.f32.mrf.mxu0
    %v4910 = vadd.f32 %v2565, %v4909
    %4911 = vmatprep.mubr.bf16.mxu0 0
    %4912 = vmatmul.mubr.bf16.gmra.mxu0 %v4055
    %v4913 = vpop.f32.mrf.mxu0
    %v4914 = vadd.f32 %v2570, %v4913
    %v4915 = vpop.f32.mrf.mxu0
    %v4916 = vadd.f32 %v2570, %v4915
    %v4917 = vpop.f32.mrf.mxu0
    %v4918 = vadd.f32 %v2575, %v4917
    %v4919 = vpop.f32.mrf.mxu0
    %v4920 = vadd.f32 %v2575, %v4919
    %4921 = vmatprep.mubr.bf16.mxu0 0
    %4922 = vmatmul.mubr.bf16.gmra.mxu0 %v4058
    %v4923 = vpop.f32.mrf.mxu0
    %v4924 = vadd.f32 %v2580, %v4923
    %v4925 = vpop.f32.mrf.mxu0
    %v4926 = vadd.f32 %v2580, %v4925
    %v4927 = vpop.f32.mrf.mxu0
    %v4928 = vadd.f32 %v2585, %v4927
    %v4929 = vpop.f32.mrf.mxu0
    %v4930 = vadd.f32 %v2585, %v4929
    %4931 = vmatprep.mubr.bf16.mxu0 0
    %4932 = vmatmul.mubr.bf16.gmra.mxu0 %v4061
    %v4933 = vpop.f32.mrf.mxu0
    %v4934 = vadd.f32 %v2590, %v4933
    %v4935 = vpop.f32.mrf.mxu0
    %v4936 = vadd.f32 %v2590, %v4935
    %v4937 = vpop.f32.mrf.mxu0
    %v4938 = vadd.f32 %v2595, %v4937
    %v4939 = vpop.f32.mrf.mxu0
    %v4940 = vadd.f32 %v2595, %v4939
    %4941 = vmatprep.mubr.bf16.mxu0 0
    %4942 = vmatmul.mubr.bf16.gmra.mxu0 %v4064
    %v4943 = vpop.f32.mrf.mxu0
    %v4944 = vadd.f32 %v2600, %v4943
    %v4945 = vpop.f32.mrf.mxu0
    %v4946 = vadd.f32 %v2600, %v4945
    %v4947 = vpop.f32.mrf.mxu0
    %v4948 = vadd.f32 %v2605, %v4947
    %v4949 = vpop.f32.mrf.mxu0
    %v4950 = vadd.f32 %v2605, %v4949
    %4951 = vmatprep.mubr.bf16.mxu0 0
    %4952 = vmatmul.mubr.bf16.gmra.mxu0 %v4067
    %v4953 = vpop.f32.mrf.mxu0
    %v4954 = vadd.f32 %v2610, %v4953
    %v4955 = vpop.f32.mrf.mxu0
    %v4956 = vadd.f32 %v2610, %v4955
    %v4957 = vpop.f32.mrf.mxu0
    %v4958 = vadd.f32 %v2615, %v4957
    %v4959 = vpop.f32.mrf.mxu0
    %v4960 = vadd.f32 %v2615, %v4959
    %4961 = vmatprep.mubr.bf16.mxu0 0
    %4962 = vmatmul.mubr.bf16.gmra.mxu0 %v4070
    %v4963 = vpop.f32.mrf.mxu0
    %v4964 = vadd.f32 %v2620, %v4963
    %v4965 = vpop.f32.mrf.mxu0
    %v4966 = vadd.f32 %v2620, %v4965
    %v4967 = vpop.f32.mrf.mxu0
    %v4968 = vadd.f32 %v2625, %v4967
    %v4969 = vpop.f32.mrf.mxu0
    %v4970 = vadd.f32 %v2625, %v4969
    %4971 = vmatprep.mubr.bf16.mxu0 0
    %4972 = vmatmul.mubr.bf16.gmra.mxu0 %v4073
    %v4973 = vpop.f32.mrf.mxu0
    %v4974 = vadd.f32 %v2630, %v4973
    %v4975 = vpop.f32.mrf.mxu0
    %v4976 = vadd.f32 %v2630, %v4975
    %v4977 = vpop.f32.mrf.mxu0
    %v4978 = vadd.f32 %v2635, %v4977
    %v4979 = vpop.f32.mrf.mxu0
    %v4980 = vadd.f32 %v2635, %v4979
    %4981 = vmatprep.mubr.bf16.mxu0 0
    %4982 = vmatmul.mubr.bf16.gmra.mxu0 %v4076
    %v4983 = vpop.f32.mrf.mxu0
    %v4984 = vadd.f32 %v2640, %v4983
    %v4985 = vpop.f32.mrf.mxu0
    %v4986 = vadd.f32 %v2640, %v4985
    %v4987 = vpop.f32.mrf.mxu0
    %v4988 = vadd.f32 %v2645, %v4987
    %v4989 = vpop.f32.mrf.mxu0
    %v4990 = vadd.f32 %v2645, %v4989
    %4991 = vmatprep.mubr.bf16.mxu0 0
    %4992 = vmatmul.mubr.bf16.gmra.mxu0 %v4079
    %v4993 = vpop.f32.mrf.mxu0
    %v4994 = vadd.f32 %v2650, %v4993
    %v4995 = vpop.f32.mrf.mxu0
    %v4996 = vadd.f32 %v2650, %v4995
    %v4997 = vpop.f32.mrf.mxu0
    %v4998 = vadd.f32 %v2655, %v4997
    %v4999 = vpop.f32.mrf.mxu0
    %v5000 = vadd.f32 %v2655, %v4999
    %5001 = vmatprep.mubr.bf16.mxu0 0
    %5002 = vmatmul.mubr.bf16.gmra.mxu0 %v4082
    %v5003 = vpop.f32.mrf.mxu0
    %v5004 = vadd.f32 %v2660, %v5003
    %v5005 = vpop.f32.mrf.mxu0
    %v5006 = vadd.f32 %v2660, %v5005
    %v5007 = vpop.f32.mrf.mxu0
    %v5008 = vadd.f32 %v2665, %v5007
    %v5009 = vpop.f32.mrf.mxu0
    %v5010 = vadd.f32 %v2665, %v5009
    %5011 = vmatprep.mubr.bf16.mxu0 0
    %5012 = vmatmul.mubr.bf16.gmra.mxu0 %v4085
    %v5013 = vpop.f32.mrf.mxu0
    %v5014 = vadd.f32 %v2670, %v5013
    %v5015 = vpop.f32.mrf.mxu0
    %v5016 = vadd.f32 %v2670, %v5015
    %v5017 = vpop.f32.mrf.mxu0
    %v5018 = vadd.f32 %v2675, %v5017
    %v5019 = vpop.f32.mrf.mxu0
    %v5020 = vadd.f32 %v2675, %v5019
    %5021 = vmatprep.mubr.bf16.mxu0 0
    %5022 = vmatmul.mubr.bf16.gmra.mxu0 %v4088
    %v5023 = vpop.f32.mrf.mxu0
    %v5024 = vadd.f32 %v2680, %v5023
    %v5025 = vpop.f32.mrf.mxu0
    %v5026 = vadd.f32 %v2680, %v5025
    %v5027 = vpop.f32.mrf.mxu0
    %v5028 = vadd.f32 %v2685, %v5027
    %v5029 = vpop.f32.mrf.mxu0
    %v5030 = vadd.f32 %v2685, %v5029
    %5031 = vmatprep.mubr.bf16.mxu0 0
    %5032 = vmatmul.mubr.bf16.gmra.mxu0 %v4091
    %v5033 = vpop.f32.mrf.mxu0
    %v5034 = vadd.f32 %v2690, %v5033
    %v5035 = vpop.f32.mrf.mxu0
    %v5036 = vadd.f32 %v2690, %v5035
    %v5037 = vpop.f32.mrf.mxu0
    %v5038 = vadd.f32 %v2695, %v5037
    %v5039 = vpop.f32.mrf.mxu0
    %v5040 = vadd.f32 %v2695, %v5039
    %5041 = vmatprep.mubr.bf16.mxu0 0
    %5042 = vmatmul.mubr.bf16.gmra.mxu0 %v4094
    %v5043 = vpop.f32.mrf.mxu0
    %v5044 = vadd.f32 %v2700, %v5043
    %v5045 = vpop.f32.mrf.mxu0
    %v5046 = vadd.f32 %v2700, %v5045
    %v5047 = vpop.f32.mrf.mxu0
    %v5048 = vadd.f32 %v2705, %v5047
    %v5049 = vpop.f32.mrf.mxu0
    %v5050 = vadd.f32 %v2705, %v5049
    %5051 = vmatprep.mubr.bf16.mxu0 0
    %5052 = vmatmul.mubr.bf16.gmra.mxu0 %v4097
    %v5053 = vpop.f32.mrf.mxu0
    %v5054 = vadd.f32 %v2710, %v5053
    %v5055 = vpop.f32.mrf.mxu0
    %v5056 = vadd.f32 %v2710, %v5055
    %v5057 = vpop.f32.mrf.mxu0
    %v5058 = vadd.f32 %v2715, %v5057
    %v5059 = vpop.f32.mrf.mxu0
    %v5060 = vadd.f32 %v2715, %v5059
    %5061 = vmatprep.mubr.bf16.mxu0 0
    %5062 = vmatmul.mubr.bf16.gmra.mxu0 %v4100
    %v5063 = vpop.f32.mrf.mxu0
    %v5064 = vadd.f32 %v2720, %v5063
    %v5065 = vpop.f32.mrf.mxu0
    %v5066 = vadd.f32 %v2720, %v5065
    %v5067 = vpop.f32.mrf.mxu0
    %v5068 = vadd.f32 %v2725, %v5067
    %v5069 = vpop.f32.mrf.mxu0
    %v5070 = vadd.f32 %v2725, %v5069
    %5071 = vmatprep.mubr.bf16.mxu0 0
    %5072 = vmatmul.mubr.bf16.gmra.mxu0 %v4103
    %v5073 = vpop.f32.mrf.mxu0
    %v5074 = vadd.f32 %v2730, %v5073
    %v5075 = vpop.f32.mrf.mxu0
    %v5076 = vadd.f32 %v2730, %v5075
    %v5077 = vpop.f32.mrf.mxu0
    %v5078 = vadd.f32 %v2735, %v5077
    %v5079 = vpop.f32.mrf.mxu0
    %v5080 = vadd.f32 %v2735, %v5079
    %5081 = vmatprep.mubr.bf16.mxu0 0
    %5082 = vmatmul.mubr.bf16.gmra.mxu0 %v4106
    %v5083 = vpop.f32.mrf.mxu0
    %v5084 = vadd.f32 %v2740, %v5083
    %v5085 = vpop.f32.mrf.mxu0
    %v5086 = vadd.f32 %v2740, %v5085
    %v5087 = vpop.f32.mrf.mxu0
    %v5088 = vadd.f32 %v2745, %v5087
    %v5089 = vpop.f32.mrf.mxu0
    %v5090 = vadd.f32 %v2745, %v5089
    %5091 = vmatprep.mubr.bf16.mxu0 0
    %5092 = vmatmul.mubr.bf16.gmra.mxu0 %v4109
    %v5093 = vpop.f32.mrf.mxu0
    %v5094 = vadd.f32 %v2750, %v5093
    %v5095 = vpop.f32.mrf.mxu0
    %v5096 = vadd.f32 %v2750, %v5095
    %v5097 = vpop.f32.mrf.mxu0
    %v5098 = vadd.f32 %v2755, %v5097
    %v5099 = vpop.f32.mrf.mxu0
    %v5100 = vadd.f32 %v2755, %v5099
    %5101 = vmatprep.mubr.bf16.mxu0 0
    %5102 = vmatmul.mubr.bf16.gmra.mxu0 %v4112
    %v5103 = vpop.f32.mrf.mxu0
    %v5104 = vadd.f32 %v2760, %v5103
    %v5105 = vpop.f32.mrf.mxu0
    %v5106 = vadd.f32 %v2760, %v5105
    %v5107 = vpop.f32.mrf.mxu0
    %v5108 = vadd.f32 %v2765, %v5107
    %v5109 = vpop.f32.mrf.mxu0
    %v5110 = vadd.f32 %v2765, %v5109
    %5111 = vmatprep.mubr.bf16.mxu0 0
    %5112 = vmatmul.mubr.bf16.gmra.mxu0 %v4115
    %v5113 = vpop.f32.mrf.mxu0
    %v5114 = vadd.f32 %v2770, %v5113
    %v5115 = vpop.f32.mrf.mxu0
    %v5116 = vadd.f32 %v2770, %v5115
    %v5117 = vpop.f32.mrf.mxu0
    %v5118 = vadd.f32 %v2775, %v5117
    %v5119 = vpop.f32.mrf.mxu0
    %v5120 = vadd.f32 %v2775, %v5119
    %5121 = vmatprep.mubr.bf16.mxu0 0
    %5122 = vmatmul.mubr.bf16.gmra.mxu0 %v4118
    %v5123 = vpop.f32.mrf.mxu0
    %v5124 = vadd.f32 %v2780, %v5123
    %v5125 = vpop.f32.mrf.mxu0
    %v5126 = vadd.f32 %v2780, %v5125
    %v5127 = vpop.f32.mrf.mxu0
    %v5128 = vadd.f32 %v2785, %v5127
    %v5129 = vpop.f32.mrf.mxu0
    %v5130 = vadd.f32 %v2785, %v5129
    %5131 = vmatprep.mubr.bf16.mxu0 0
    %5132 = vmatmul.mubr.bf16.gmra.mxu0 %v4121
    %v5133 = vpop.f32.mrf.mxu0
    %v5134 = vadd.f32 %v2790, %v5133
    %v5135 = vpop.f32.mrf.mxu0
    %v5136 = vadd.f32 %v2790, %v5135
    %v5137 = vpop.f32.mrf.mxu0
    %v5138 = vadd.f32 %v2795, %v5137
    %v5139 = vpop.f32.mrf.mxu0
    %v5140 = vadd.f32 %v2795, %v5139
    %5141 = vmatprep.mubr.bf16.mxu0 0
    %5142 = vmatmul.mubr.bf16.gmra.mxu0 %v4124
    %v5143 = vpop.f32.mrf.mxu0
    %v5144 = vadd.f32 %v2800, %v5143
    %v5145 = vpop.f32.mrf.mxu0
    %v5146 = vadd.f32 %v2800, %v5145
    %v5147 = vpop.f32.mrf.mxu0
    %v5148 = vadd.f32 %v2805, %v5147
    %v5149 = vpop.f32.mrf.mxu0
    %v5150 = vadd.f32 %v2805, %v5149
    %5151 = vmatprep.mubr.bf16.mxu0 0
    %5152 = vmatmul.mubr.bf16.gmra.mxu0 %v4127
    %v5153 = vpop.f32.mrf.mxu0
    %v5154 = vadd.f32 %v2810, %v5153
    %v5155 = vpop.f32.mrf.mxu0
    %v5156 = vadd.f32 %v2810, %v5155
    %v5157 = vpop.f32.mrf.mxu0
    %v5158 = vadd.f32 %v2815, %v5157
    %v5159 = vpop.f32.mrf.mxu0
    %v5160 = vadd.f32 %v2815, %v5159
    %5161 = vmatprep.mubr.bf16.mxu0 0
    %5162 = vmatmul.mubr.bf16.gmra.mxu0 %v4130
    %v5163 = vpop.f32.mrf.mxu0
    %v5164 = vadd.f32 %v2820, %v5163
    %v5165 = vpop.f32.mrf.mxu0
    %v5166 = vadd.f32 %v2820, %v5165
    %v5167 = vpop.f32.mrf.mxu0
    %v5168 = vadd.f32 %v2825, %v5167
    %v5169 = vpop.f32.mrf.mxu0
    %v5170 = vadd.f32 %v2825, %v5169
    %5171 = vmatprep.mubr.bf16.mxu0 0
    %5172 = vmatmul.mubr.bf16.gmra.mxu0 %v4133
    %v5173 = vpop.f32.mrf.mxu0
    %v5174 = vadd.f32 %v2830, %v5173
    %v5175 = vpop.f32.mrf.mxu0
    %v5176 = vadd.f32 %v2830, %v5175
    %v5177 = vpop.f32.mrf.mxu0
    %v5178 = vadd.f32 %v2835, %v5177
    %v5179 = vpop.f32.mrf.mxu0
    %v5180 = vadd.f32 %v2835, %v5179
    %5181 = vmatprep.mubr.bf16.mxu0 0
    %5182 = vmatmul.mubr.bf16.gmra.mxu0 %v4136
    %v5183 = vpop.f32.mrf.mxu0
    %v5184 = vadd.f32 %v2840, %v5183
    %v5185 = vpop.f32.mrf.mxu0
    %v5186 = vadd.f32 %v2840, %v5185
    %v5187 = vpop.f32.mrf.mxu0
    %v5188 = vadd.f32 %v2845, %v5187
    %v5189 = vpop.f32.mrf.mxu0
    %v5190 = vadd.f32 %v2845, %v5189
    %5191 = vmatprep.mubr.bf16.mxu0 0
    %5192 = vmatmul.mubr.bf16.gmra.mxu0 %v4139
    %v5193 = vpop.f32.mrf.mxu0
    %v5194 = vadd.f32 %v2850, %v5193
    %v5195 = vpop.f32.mrf.mxu0
    %v5196 = vadd.f32 %v2850, %v5195
    %v5197 = vpop.f32.mrf.mxu0
    %v5198 = vadd.f32 %v2855, %v5197
    %v5199 = vpop.f32.mrf.mxu0
    %v5200 = vadd.f32 %v2855, %v5199
    %5201 = vmatprep.mubr.bf16.mxu0 0
    %5202 = vmatmul.mubr.bf16.gmra.mxu0 %v4142
    %v5203 = vpop.f32.mrf.mxu0
    %v5204 = vadd.f32 %v2860, %v5203
    %v5205 = vpop.f32.mrf.mxu0
    %v5206 = vadd.f32 %v2860, %v5205
    %v5207 = vpop.f32.mrf.mxu0
    %v5208 = vadd.f32 %v2865, %v5207
    %v5209 = vpop.f32.mrf.mxu0
    %v5210 = vadd.f32 %v2865, %v5209
    %5211 = vmatprep.mubr.bf16.mxu0 0
    %5212 = vmatmul.mubr.bf16.gmra.mxu0 %v4145
    %v5213 = vpop.f32.mrf.mxu0
    %v5214 = vadd.f32 %v2870, %v5213
    %v5215 = vpop.f32.mrf.mxu0
    %v5216 = vadd.f32 %v2870, %v5215
    %v5217 = vpop.f32.mrf.mxu0
    %v5218 = vadd.f32 %v2875, %v5217
    %v5219 = vpop.f32.mrf.mxu0
    %v5220 = vadd.f32 %v2875, %v5219
    %5221 = vmatprep.mubr.bf16.mxu0 0
    %5222 = vmatmul.mubr.bf16.gmra.mxu0 %v4148
    %v5223 = vpop.f32.mrf.mxu0
    %v5224 = vadd.f32 %v2880, %v5223
    %v5225 = vpop.f32.mrf.mxu0
    %v5226 = vadd.f32 %v2880, %v5225
    %v5227 = vpop.f32.mrf.mxu0
    %v5228 = vadd.f32 %v2885, %v5227
    %v5229 = vpop.f32.mrf.mxu0
    %v5230 = vadd.f32 %v2885, %v5229
    %5231 = vmatprep.mubr.bf16.mxu0 0
    %5232 = vmatmul.mubr.bf16.gmra.mxu0 %v4151
    %v5233 = vpop.f32.mrf.mxu0
    %v5234 = vadd.f32 %v2890, %v5233
    %v5235 = vpop.f32.mrf.mxu0
    %v5236 = vadd.f32 %v2890, %v5235
    %v5237 = vpop.f32.mrf.mxu0
    %v5238 = vadd.f32 %v2895, %v5237
    %v5239 = vpop.f32.mrf.mxu0
    %v5240 = vadd.f32 %v2895, %v5239
    %5241 = vmatprep.mubr.bf16.mxu0 0
    %5242 = vmatmul.mubr.bf16.gmra.mxu0 %v4154
    %v5243 = vpop.f32.mrf.mxu0
    %v5244 = vadd.f32 %v2900, %v5243
    %v5245 = vpop.f32.mrf.mxu0
    %v5246 = vadd.f32 %v2900, %v5245
    %v5247 = vpop.f32.mrf.mxu0
    %v5248 = vadd.f32 %v2905, %v5247
    %v5249 = vpop.f32.mrf.mxu0
    %v5250 = vadd.f32 %v2905, %v5249
    %5251 = vmatprep.mubr.bf16.mxu0 0
    %5252 = vmatmul.mubr.bf16.gmra.mxu0 %v4157
    %v5253 = vpop.f32.mrf.mxu0
    %v5254 = vadd.f32 %v2910, %v5253
    %v5255 = vpop.f32.mrf.mxu0
    %v5256 = vadd.f32 %v2910, %v5255
    %v5257 = vpop.f32.mrf.mxu0
    %v5258 = vadd.f32 %v2915, %v5257
    %v5259 = vpop.f32.mrf.mxu0
    %v5260 = vadd.f32 %v2915, %v5259
    %5261 = vmatprep.mubr.bf16.mxu0 0
    %5262 = vmatmul.mubr.bf16.gmra.mxu0 %v4160
    %v5263 = vpop.f32.mrf.mxu0
    %v5264 = vadd.f32 %v2920, %v5263
    %v5265 = vpop.f32.mrf.mxu0
    %v5266 = vadd.f32 %v2920, %v5265
    %v5267 = vpop.f32.mrf.mxu0
    %v5268 = vadd.f32 %v2925, %v5267
    %v5269 = vpop.f32.mrf.mxu0
    %v5270 = vadd.f32 %v2925, %v5269
    %5271 = vmatprep.mubr.bf16.mxu0 0
    %5272 = vmatmul.mubr.bf16.gmra.mxu0 %v4163
    %v5273 = vpop.f32.mrf.mxu0
    %v5274 = vadd.f32 %v2930, %v5273
    %v5275 = vpop.f32.mrf.mxu0
    %v5276 = vadd.f32 %v2930, %v5275
    %v5277 = vpop.f32.mrf.mxu0
    %v5278 = vadd.f32 %v2935, %v5277
    %v5279 = vpop.f32.mrf.mxu0
    %v5280 = vadd.f32 %v2935, %v5279
    %5281 = vmatprep.mubr.bf16.mxu0 0
    %5282 = vmatmul.mubr.bf16.gmra.mxu0 %v4166
    %v5283 = vpop.f32.mrf.mxu0
    %v5284 = vadd.f32 %v2940, %v5283
    %v5285 = vpop.f32.mrf.mxu0
    %v5286 = vadd.f32 %v2940, %v5285
    %v5287 = vpop.f32.mrf.mxu0
    %v5288 = vadd.f32 %v2945, %v5287
    %v5289 = vpop.f32.mrf.mxu0
    %v5290 = vadd.f32 %v2945, %v5289
    %5291 = vmatprep.mubr.bf16.mxu0 0
    %5292 = vmatmul.mubr.bf16.gmra.mxu0 %v4169
    %v5293 = vpop.f32.mrf.mxu0
    %v5294 = vadd.f32 %v2950, %v5293
    %v5295 = vpop.f32.mrf.mxu0
    %v5296 = vadd.f32 %v2950, %v5295
    %v5297 = vpop.f32.mrf.mxu0
    %v5298 = vadd.f32 %v2955, %v5297
    %v5299 = vpop.f32.mrf.mxu0
    %v5300 = vadd.f32 %v2955, %v5299
    %5301 = vmatprep.mubr.bf16.mxu0 0
    %5302 = vmatmul.mubr.bf16.gmra.mxu0 %v4172
    %v5303 = vpop.f32.mrf.mxu0
    %v5304 = vadd.f32 %v2960, %v5303
    %v5305 = vpop.f32.mrf.mxu0
    %v5306 = vadd.f32 %v2960, %v5305
    %v5307 = vpop.f32.mrf.mxu0
    %v5308 = vadd.f32 %v2965, %v5307
    %v5309 = vpop.f32.mrf.mxu0
    %v5310 = vadd.f32 %v2965, %v5309
    %5311 = vmatprep.mubr.bf16.mxu0 0
    %5312 = vmatmul.mubr.bf16.gmra.mxu0 %v4175
    %v5313 = vpop.f32.mrf.mxu0
    %v5314 = vadd.f32 %v2970, %v5313
    %v5315 = vpop.f32.mrf.mxu0
    %v5316 = vadd.f32 %v2970, %v5315
    %v5317 = vpop.f32.mrf.mxu0
    %v5318 = vadd.f32 %v2975, %v5317
    %v5319 = vpop.f32.mrf.mxu0
    %v5320 = vadd.f32 %v2975, %v5319
    %5321 = vmatprep.mubr.bf16.mxu0 0
    %5322 = vmatmul.mubr.bf16.gmra.mxu0 %v4178
    %v5323 = vpop.f32.mrf.mxu0
    %v5324 = vadd.f32 %v2980, %v5323
    %v5325 = vpop.f32.mrf.mxu0
    %v5326 = vadd.f32 %v2980, %v5325
    %v5327 = vpop.f32.mrf.mxu0
    %v5328 = vadd.f32 %v2985, %v5327
    %v5329 = vpop.f32.mrf.mxu0
    %v5330 = vadd.f32 %v2985, %v5329
    %5331 = vmatprep.mubr.bf16.mxu0 0
    %5332 = vmatmul.mubr.bf16.gmra.mxu0 %v4181
    %v5333 = vpop.f32.mrf.mxu0
    %v5334 = vadd.f32 %v2990, %v5333
    %v5335 = vpop.f32.mrf.mxu0
    %v5336 = vadd.f32 %v2990, %v5335
    %v5337 = vpop.f32.mrf.mxu0
    %v5338 = vadd.f32 %v2995, %v5337
    %v5339 = vpop.f32.mrf.mxu0
    %v5340 = vadd.f32 %v2995, %v5339
    %5341 = vmatprep.mubr.bf16.mxu0 0
    %5342 = vmatmul.mubr.bf16.gmra.mxu0 %v4184
    %v5343 = vpop.f32.mrf.mxu0
    %v5344 = vadd.f32 %v3000, %v5343
    %v5345 = vpop.f32.mrf.mxu0
    %v5346 = vadd.f32 %v3000, %v5345
    %v5347 = vpop.f32.mrf.mxu0
    %v5348 = vadd.f32 %v3005, %v5347
    %v5349 = vpop.f32.mrf.mxu0
    %v5350 = vadd.f32 %v3005, %v5349
    %5351 = vmatprep.mubr.bf16.mxu0 0
    %5352 = vmatmul.mubr.bf16.gmra.mxu0 %v4187
    %v5353 = vpop.f32.mrf.mxu0
    %v5354 = vadd.f32 %v3010, %v5353
    %v5355 = vpop.f32.mrf.mxu0
    %v5356 = vadd.f32 %v3010, %v5355
    %v5357 = vpop.f32.mrf.mxu0
    %v5358 = vadd.f32 %v3015, %v5357
    %v5359 = vpop.f32.mrf.mxu0
    %v5360 = vadd.f32 %v3015, %v5359
    %5361 = vmatprep.mubr.bf16.mxu0 0
    %5362 = vmatmul.mubr.bf16.gmra.mxu0 %v4190
    %v5363 = vpop.f32.mrf.mxu0
    %v5364 = vadd.f32 %v3020, %v5363
    %v5365 = vpop.f32.mrf.mxu0
    %v5366 = vadd.f32 %v3020, %v5365
    %v5367 = vpop.f32.mrf.mxu0
    %v5368 = vadd.f32 %v3025, %v5367
    %v5369 = vpop.f32.mrf.mxu0
    %v5370 = vadd.f32 %v3025, %v5369
    %5371 = vmatprep.mubr.bf16.mxu0 0
    %5372 = vmatmul.mubr.bf16.gmra.mxu0 %v4193
    %v5373 = vpop.f32.mrf.mxu0
    %v5374 = vadd.f32 %v3030, %v5373
    %v5375 = vpop.f32.mrf.mxu0
    %v5376 = vadd.f32 %v3030, %v5375
    %v5377 = vpop.f32.mrf.mxu0
    %v5378 = vadd.f32 %v3035, %v5377
    %v5379 = vpop.f32.mrf.mxu0
    %v5380 = vadd.f32 %v3035, %v5379
    %5381 = vmatprep.mubr.bf16.mxu0 0
    %5382 = vmatmul.mubr.bf16.gmra.mxu0 %v4196
    %v5383 = vpop.f32.mrf.mxu0
    %v5384 = vadd.f32 %v3040, %v5383
    %v5385 = vpop.f32.mrf.mxu0
    %v5386 = vadd.f32 %v3040, %v5385
    %v5387 = vpop.f32.mrf.mxu0
    %v5388 = vadd.f32 %v3045, %v5387
    %v5389 = vpop.f32.mrf.mxu0
    %v5390 = vadd.f32 %v3045, %v5389
    %5391 = vmatprep.mubr.bf16.mxu0 0
    %5392 = vmatmul.mubr.bf16.gmra.mxu0 %v4199
    %v5393 = vpop.f32.mrf.mxu0
    %v5394 = vadd.f32 %v3050, %v5393
    %v5395 = vpop.f32.mrf.mxu0
    %v5396 = vadd.f32 %v3050, %v5395
    %v5397 = vpop.f32.mrf.mxu0
    %v5398 = vadd.f32 %v3055, %v5397
    %v5399 = vpop.f32.mrf.mxu0
    %v5400 = vadd.f32 %v3055, %v5399
    %5401 = vmatprep.mubr.bf16.mxu0 0
    %5402 = vmatmul.mubr.bf16.gmra.mxu0 %v4202
    %v5403 = vpop.f32.mrf.mxu0
    %v5404 = vadd.f32 %v3060, %v5403
    %v5405 = vpop.f32.mrf.mxu0
    %v5406 = vadd.f32 %v3060, %v5405
    %v5407 = vpop.f32.mrf.mxu0
    %v5408 = vadd.f32 %v3065, %v5407
    %v5409 = vpop.f32.mrf.mxu0
    %v5410 = vadd.f32 %v3065, %v5409
    %5411 = vmatprep.mubr.bf16.mxu0 0
    %5412 = vmatmul.mubr.bf16.gmra.mxu0 %v4205
    %v5413 = vpop.f32.mrf.mxu0
    %v5414 = vadd.f32 %v3070, %v5413
    %v5415 = vpop.f32.mrf.mxu0
    %v5416 = vadd.f32 %v3070, %v5415
    %v5417 = vpop.f32.mrf.mxu0
    %v5418 = vadd.f32 %v3075, %v5417
    %v5419 = vpop.f32.mrf.mxu0
    %v5420 = vadd.f32 %v3075, %v5419
    %5421 = vmatprep.mubr.bf16.mxu0 0
    %5422 = vmatmul.mubr.bf16.gmra.mxu0 %v4208
    %v5423 = vpop.f32.mrf.mxu0
    %v5424 = vadd.f32 %v3080, %v5423
    %v5425 = vpop.f32.mrf.mxu0
    %v5426 = vadd.f32 %v3080, %v5425
    %v5427 = vpop.f32.mrf.mxu0
    %v5428 = vadd.f32 %v3085, %v5427
    %v5429 = vpop.f32.mrf.mxu0
    %v5430 = vadd.f32 %v3085, %v5429
    %5431 = vmatprep.mubr.bf16.mxu0 0
    %5432 = vmatmul.mubr.bf16.gmra.mxu0 %v4211
    %v5433 = vpop.f32.mrf.mxu0
    %v5434 = vadd.f32 %v3090, %v5433
    %v5435 = vpop.f32.mrf.mxu0
    %v5436 = vadd.f32 %v3090, %v5435
    %v5437 = vpop.f32.mrf.mxu0
    %v5438 = vadd.f32 %v3095, %v5437
    %v5439 = vpop.f32.mrf.mxu0
    %v5440 = vadd.f32 %v3095, %v5439
    %5441 = vmatprep.mubr.bf16.mxu0 0
    %5442 = vmatmul.mubr.bf16.gmra.mxu0 %v4214
    %v5443 = vpop.f32.mrf.mxu0
    %v5444 = vadd.f32 %v3100, %v5443
    %v5445 = vpop.f32.mrf.mxu0
    %v5446 = vadd.f32 %v3100, %v5445
    %v5447 = vpop.f32.mrf.mxu0
    %v5448 = vadd.f32 %v3105, %v5447
    %v5449 = vpop.f32.mrf.mxu0
    %v5450 = vadd.f32 %v3105, %v5449
    %5451 = vmatprep.mubr.bf16.mxu0 0
    %5452 = vmatmul.mubr.bf16.gmra.mxu0 %v4217
    %v5453 = vpop.f32.mrf.mxu0
    %v5454 = vadd.f32 %v3110, %v5453
    %v5455 = vpop.f32.mrf.mxu0
    %v5456 = vadd.f32 %v3110, %v5455
    %v5457 = vpop.f32.mrf.mxu0
    %v5458 = vadd.f32 %v3115, %v5457
    %v5459 = vpop.f32.mrf.mxu0
    %v5460 = vadd.f32 %v3115, %v5459
    %5461 = vmatprep.mubr.bf16.mxu0 0
    %5462 = vmatmul.mubr.bf16.gmra.mxu0 %v4220
    %v5463 = vpop.f32.mrf.mxu0
    %v5464 = vadd.f32 %v3120, %v5463
    %v5465 = vpop.f32.mrf.mxu0
    %v5466 = vadd.f32 %v3120, %v5465
    %v5467 = vpop.f32.mrf.mxu0
    %v5468 = vadd.f32 %v3125, %v5467
    %v5469 = vpop.f32.mrf.mxu0
    %v5470 = vadd.f32 %v3125, %v5469
    %5471 = vmatprep.mubr.bf16.mxu0 0
    %5472 = vmatmul.mubr.bf16.gmra.mxu0 %v4223
    %v5473 = vpop.f32.mrf.mxu0
    %v5474 = vadd.f32 %v3130, %v5473
    %v5475 = vpop.f32.mrf.mxu0
    %v5476 = vadd.f32 %v3130, %v5475
    %v5477 = vpop.f32.mrf.mxu0
    %v5478 = vadd.f32 %v3135, %v5477
    %v5479 = vpop.f32.mrf.mxu0
    %v5480 = vadd.f32 %v3135, %v5479
    %5481 = vmatprep.mubr.bf16.mxu0 0
    %5482 = vmatmul.mubr.bf16.gmra.mxu0 %v4226
    %v5483 = vpop.f32.mrf.mxu0
    %v5484 = vadd.f32 %v3140, %v5483
    %v5485 = vpop.f32.mrf.mxu0
    %v5486 = vadd.f32 %v3140, %v5485
    %v5487 = vpop.f32.mrf.mxu0
    %v5488 = vadd.f32 %v3145, %v5487
    %v5489 = vpop.f32.mrf.mxu0
    %v5490 = vadd.f32 %v3145, %v5489
    %5491 = vmatprep.mubr.bf16.mxu0 0
    %5492 = vmatmul.mubr.bf16.gmra.mxu0 %v4229
    %v5493 = vpop.f32.mrf.mxu0
    %v5494 = vadd.f32 %v3150, %v5493
    %v5495 = vpop.f32.mrf.mxu0
    %v5496 = vadd.f32 %v3150, %v5495
    %v5497 = vpop.f32.mrf.mxu0
    %v5498 = vadd.f32 %v3155, %v5497
    %v5499 = vpop.f32.mrf.mxu0
    %v5500 = vadd.f32 %v3155, %v5499
    %5501 = vmatprep.mubr.bf16.mxu0 0
    %5502 = vmatmul.mubr.bf16.gmra.mxu0 %v4232
    %v5503 = vpop.f32.mrf.mxu0
    %v5504 = vadd.f32 %v3160, %v5503
    %v5505 = vpop.f32.mrf.mxu0
    %v5506 = vadd.f32 %v3160, %v5505
    %v5507 = vpop.f32.mrf.mxu0
    %v5508 = vadd.f32 %v3165, %v5507
    %v5509 = vpop.f32.mrf.mxu0
    %v5510 = vadd.f32 %v3165, %v5509
    %5511 = vmatprep.mubr.bf16.mxu0 0
    %5512 = vmatmul.mubr.bf16.gmra.mxu0 %v4235
    %v5513 = vpop.f32.mrf.mxu0
    %v5514 = vadd.f32 %v3170, %v5513
    %v5515 = vpop.f32.mrf.mxu0
    %v5516 = vadd.f32 %v3170, %v5515
    %v5517 = vpop.f32.mrf.mxu0
    %v5518 = vadd.f32 %v3175, %v5517
    %v5519 = vpop.f32.mrf.mxu0
    %v5520 = vadd.f32 %v3175, %v5519
    %5521 = vmatprep.mubr.bf16.mxu0 0
    %5522 = vmatmul.mubr.bf16.gmra.mxu0 %v4238
    %v5523 = vpop.f32.mrf.mxu0
    %v5524 = vadd.f32 %v3180, %v5523
    %v5525 = vpop.f32.mrf.mxu0
    %v5526 = vadd.f32 %v3180, %v5525
    %v5527 = vpop.f32.mrf.mxu0
    %v5528 = vadd.f32 %v3185, %v5527
    %v5529 = vpop.f32.mrf.mxu0
    %v5530 = vadd.f32 %v3185, %v5529
    %5531 = vmatprep.mubr.bf16.mxu0 0
    %5532 = vmatmul.mubr.bf16.gmra.mxu0 %v4241
    %v5533 = vpop.f32.mrf.mxu0
    %v5534 = vadd.f32 %v3190, %v5533
    %v5535 = vpop.f32.mrf.mxu0
    %v5536 = vadd.f32 %v3190, %v5535
    %v5537 = vpop.f32.mrf.mxu0
    %v5538 = vadd.f32 %v3195, %v5537
    %v5539 = vpop.f32.mrf.mxu0
    %v5540 = vadd.f32 %v3195, %v5539
    %5541 = vmatprep.mubr.bf16.mxu0 0
    %5542 = vmatmul.mubr.bf16.gmra.mxu0 %v4244
    %v5543 = vpop.f32.mrf.mxu0
    %v5544 = vadd.f32 %v3200, %v5543
    %v5545 = vpop.f32.mrf.mxu0
    %v5546 = vadd.f32 %v3200, %v5545
    %v5547 = vpop.f32.mrf.mxu0
    %v5548 = vadd.f32 %v3205, %v5547
    %v5549 = vpop.f32.mrf.mxu0
    %v5550 = vadd.f32 %v3205, %v5549
    %5551 = vmatprep.mubr.bf16.mxu0 0
    %5552 = vmatmul.mubr.bf16.gmra.mxu0 %v4247
    %v5553 = vpop.f32.mrf.mxu0
    %v5554 = vadd.f32 %v3210, %v5553
    %v5555 = vpop.f32.mrf.mxu0
    %v5556 = vadd.f32 %v3210, %v5555
    %v5557 = vpop.f32.mrf.mxu0
    %v5558 = vadd.f32 %v3215, %v5557
    %v5559 = vpop.f32.mrf.mxu0
    %v5560 = vadd.f32 %v3215, %v5559
    %5561 = vmatprep.mubr.bf16.mxu0 0
    %5562 = vmatmul.mubr.bf16.gmra.mxu0 %v4250
    %v5563 = vpop.f32.mrf.mxu0
    %v5564 = vadd.f32 %v3220, %v5563
    %v5565 = vpop.f32.mrf.mxu0
    %v5566 = vadd.f32 %v3220, %v5565
    %v5567 = vpop.f32.mrf.mxu0
    %v5568 = vadd.f32 %v3225, %v5567
    %v5569 = vpop.f32.mrf.mxu0
    %v5570 = vadd.f32 %v3225, %v5569
    %5571 = vdwg.mxu0
    %v5572 = vmax.f32 %v4294, 0.0
    %v5573 = vmax.f32 %v4296, 0.0
    %v5574 = vmax.f32 %v4298, 0.0
    %v5575 = vmax.f32 %v4300, 0.0
    %v5576 = vmax.f32 %v4304, 0.0
    %v5577 = vmax.f32 %v4306, 0.0
    %v5578 = vmax.f32 %v4308, 0.0
    %v5579 = vmax.f32 %v4310, 0.0
    %v5580 = vmax.f32 %v4314, 0.0
    %v5581 = vmax.f32 %v4316, 0.0
    %v5582 = vmax.f32 %v4318, 0.0
    %v5583 = vmax.f32 %v4320, 0.0
    %v5584 = vmax.f32 %v4324, 0.0
    %v5585 = vmax.f32 %v4326, 0.0
    %v5586 = vmax.f32 %v4328, 0.0
    %v5587 = vmax.f32 %v4330, 0.0
    %v5588 = vmax.f32 %v4334, 0.0
    %v5589 = vmax.f32 %v4336, 0.0
    %v5590 = vmax.f32 %v4338, 0.0
    %v5591 = vmax.f32 %v4340, 0.0
    %v5592 = vmax.f32 %v4344, 0.0
    %v5593 = vmax.f32 %v4346, 0.0
    %v5594 = vmax.f32 %v4348, 0.0
    %v5595 = vmax.f32 %v4350, 0.0
    %v5596 = vmax.f32 %v4354, 0.0
    %v5597 = vmax.f32 %v4356, 0.0
    %v5598 = vmax.f32 %v4358, 0.0
    %v5599 = vmax.f32 %v4360, 0.0
    %v5600 = vmax.f32 %v4364, 0.0
    %v5601 = vmax.f32 %v4366, 0.0
    %v5602 = vmax.f32 %v4368, 0.0
    %v5603 = vmax.f32 %v4370, 0.0
    %v5604 = vmax.f32 %v4374, 0.0
    %v5605 = vmax.f32 %v4376, 0.0
    %v5606 = vmax.f32 %v4378, 0.0
    %v5607 = vmax.f32 %v4380, 0.0
    %v5608 = vmax.f32 %v4384, 0.0
    %v5609 = vmax.f32 %v4386, 0.0
    %v5610 = vmax.f32 %v4388, 0.0
    %v5611 = vmax.f32 %v4390, 0.0
    %v5612 = vmax.f32 %v4394, 0.0
    %v5613 = vmax.f32 %v4396, 0.0
    %v5614 = vmax.f32 %v4398, 0.0
    %v5615 = vmax.f32 %v4400, 0.0
    %v5616 = vmax.f32 %v4404, 0.0
    %v5617 = vmax.f32 %v4406, 0.0
    %v5618 = vmax.f32 %v4408, 0.0
    %v5619 = vmax.f32 %v4410, 0.0
    %v5620 = vmax.f32 %v4414, 0.0
    %v5621 = vmax.f32 %v4416, 0.0
    %v5622 = vmax.f32 %v4418, 0.0
    %v5623 = vmax.f32 %v4420, 0.0
    %v5624 = vmax.f32 %v4424, 0.0
    %v5625 = vmax.f32 %v4426, 0.0
    %v5626 = vmax.f32 %v4428, 0.0
    %v5627 = vmax.f32 %v4430, 0.0
    %v5628 = vmax.f32 %v4434, 0.0
    %v5629 = vmax.f32 %v4436, 0.0
    %v5630 = vmax.f32 %v4438, 0.0
    %v5631 = vmax.f32 %v4440, 0.0
    %v5632 = vmax.f32 %v4444, 0.0
    %v5633 = vmax.f32 %v4446, 0.0
    %v5634 = vmax.f32 %v4448, 0.0
    %v5635 = vmax.f32 %v4450, 0.0
    %v5636 = vmax.f32 %v4454, 0.0
    %v5637 = vmax.f32 %v4456, 0.0
    %v5638 = vmax.f32 %v4458, 0.0
    %v5639 = vmax.f32 %v4460, 0.0
    %v5640 = vmax.f32 %v4464, 0.0
    %v5641 = vmax.f32 %v4466, 0.0
    %v5642 = vmax.f32 %v4468, 0.0
    %v5643 = vmax.f32 %v4470, 0.0
    %v5644 = vmax.f32 %v4474, 0.0
    %v5645 = vmax.f32 %v4476, 0.0
    %v5646 = vmax.f32 %v4478, 0.0
    %v5647 = vmax.f32 %v4480, 0.0
    %v5648 = vmax.f32 %v4484, 0.0
    %v5649 = vmax.f32 %v4486, 0.0
    %v5650 = vmax.f32 %v4488, 0.0
    %v5651 = vmax.f32 %v4490, 0.0
    %v5652 = vmax.f32 %v4494, 0.0
    %v5653 = vmax.f32 %v4496, 0.0
    %v5654 = vmax.f32 %v4498, 0.0
    %v5655 = vmax.f32 %v4500, 0.0
    %v5656 = vmax.f32 %v4504, 0.0
    %v5657 = vmax.f32 %v4506, 0.0
    %v5658 = vmax.f32 %v4508, 0.0
    %v5659 = vmax.f32 %v4510, 0.0
    %v5660 = vmax.f32 %v4514, 0.0
    %v5661 = vmax.f32 %v4516, 0.0
    %v5662 = vmax.f32 %v4518, 0.0
    %v5663 = vmax.f32 %v4520, 0.0
    %v5664 = vmax.f32 %v4524, 0.0
    %v5665 = vmax.f32 %v4526, 0.0
    %v5666 = vmax.f32 %v4528, 0.0
    %v5667 = vmax.f32 %v4530, 0.0
    %v5668 = vmax.f32 %v4534, 0.0
    %v5669 = vmax.f32 %v4536, 0.0
    %v5670 = vmax.f32 %v4538, 0.0
    %v5671 = vmax.f32 %v4540, 0.0
    %v5672 = vmax.f32 %v4544, 0.0
    %v5673 = vmax.f32 %v4546, 0.0
    %v5674 = vmax.f32 %v4548, 0.0
    %v5675 = vmax.f32 %v4550, 0.0
    %v5676 = vmax.f32 %v4554, 0.0
    %v5677 = vmax.f32 %v4556, 0.0
    %v5678 = vmax.f32 %v4558, 0.0
    %v5679 = vmax.f32 %v4560, 0.0
    %v5680 = vmax.f32 %v4564, 0.0
    %v5681 = vmax.f32 %v4566, 0.0
    %v5682 = vmax.f32 %v4568, 0.0
    %v5683 = vmax.f32 %v4570, 0.0
    %v5684 = vmax.f32 %v4574, 0.0
    %v5685 = vmax.f32 %v4576, 0.0
    %v5686 = vmax.f32 %v4578, 0.0
    %v5687 = vmax.f32 %v4580, 0.0
    %v5688 = vmax.f32 %v4584, 0.0
    %v5689 = vmax.f32 %v4586, 0.0
    %v5690 = vmax.f32 %v4588, 0.0
    %v5691 = vmax.f32 %v4590, 0.0
    %v5692 = vmax.f32 %v4594, 0.0
    %v5693 = vmax.f32 %v4596, 0.0
    %v5694 = vmax.f32 %v4598, 0.0
    %v5695 = vmax.f32 %v4600, 0.0
    %v5696 = vmax.f32 %v4604, 0.0
    %v5697 = vmax.f32 %v4606, 0.0
    %v5698 = vmax.f32 %v4608, 0.0
    %v5699 = vmax.f32 %v4610, 0.0
    %v5700 = vmax.f32 %v4614, 0.0
    %v5701 = vmax.f32 %v4616, 0.0
    %v5702 = vmax.f32 %v4618, 0.0
    %v5703 = vmax.f32 %v4620, 0.0
    %v5704 = vmax.f32 %v4624, 0.0
    %v5705 = vmax.f32 %v4626, 0.0
    %v5706 = vmax.f32 %v4628, 0.0
    %v5707 = vmax.f32 %v4630, 0.0
    %v5708 = vmax.f32 %v4634, 0.0
    %v5709 = vmax.f32 %v4636, 0.0
    %v5710 = vmax.f32 %v4638, 0.0
    %v5711 = vmax.f32 %v4640, 0.0
    %v5712 = vmax.f32 %v4644, 0.0
    %v5713 = vmax.f32 %v4646, 0.0
    %v5714 = vmax.f32 %v4648, 0.0
    %v5715 = vmax.f32 %v4650, 0.0
    %v5716 = vmax.f32 %v4654, 0.0
    %v5717 = vmax.f32 %v4656, 0.0
    %v5718 = vmax.f32 %v4658, 0.0
    %v5719 = vmax.f32 %v4660, 0.0
    %v5720 = vmax.f32 %v4664, 0.0
    %v5721 = vmax.f32 %v4666, 0.0
    %v5722 = vmax.f32 %v4668, 0.0
    %v5723 = vmax.f32 %v4670, 0.0
    %v5724 = vmax.f32 %v4674, 0.0
    %v5725 = vmax.f32 %v4676, 0.0
    %v5726 = vmax.f32 %v4678, 0.0
    %v5727 = vmax.f32 %v4680, 0.0
    %v5728 = vmax.f32 %v4684, 0.0
    %v5729 = vmax.f32 %v4686, 0.0
    %v5730 = vmax.f32 %v4688, 0.0
    %v5731 = vmax.f32 %v4690, 0.0
    %v5732 = vmax.f32 %v4694, 0.0
    %v5733 = vmax.f32 %v4696, 0.0
    %v5734 = vmax.f32 %v4698, 0.0
    %v5735 = vmax.f32 %v4700, 0.0
    %v5736 = vmax.f32 %v4704, 0.0
    %v5737 = vmax.f32 %v4706, 0.0
    %v5738 = vmax.f32 %v4708, 0.0
    %v5739 = vmax.f32 %v4710, 0.0
    %v5740 = vmax.f32 %v4714, 0.0
    %v5741 = vmax.f32 %v4716, 0.0
    %v5742 = vmax.f32 %v4718, 0.0
    %v5743 = vmax.f32 %v4720, 0.0
    %v5744 = vmax.f32 %v4724, 0.0
    %v5745 = vmax.f32 %v4726, 0.0
    %v5746 = vmax.f32 %v4728, 0.0
    %v5747 = vmax.f32 %v4730, 0.0
    %v5748 = vmax.f32 %v4734, 0.0
    %v5749 = vmax.f32 %v4736, 0.0
    %v5750 = vmax.f32 %v4738, 0.0
    %v5751 = vmax.f32 %v4740, 0.0
    %v5752 = vmax.f32 %v4744, 0.0
    %v5753 = vmax.f32 %v4746, 0.0
    %v5754 = vmax.f32 %v4748, 0.0
    %v5755 = vmax.f32 %v4750, 0.0
    %v5756 = vmax.f32 %v4754, 0.0
    %v5757 = vmax.f32 %v4756, 0.0
    %v5758 = vmax.f32 %v4758, 0.0
    %v5759 = vmax.f32 %v4760, 0.0
    %v5760 = vmax.f32 %v4764, 0.0
    %v5761 = vmax.f32 %v4766, 0.0
    %v5762 = vmax.f32 %v4768, 0.0
    %v5763 = vmax.f32 %v4770, 0.0
    %v5764 = vmax.f32 %v4774, 0.0
    %v5765 = vmax.f32 %v4776, 0.0
    %v5766 = vmax.f32 %v4778, 0.0
    %v5767 = vmax.f32 %v4780, 0.0
    %v5768 = vmax.f32 %v4784, 0.0
    %v5769 = vmax.f32 %v4786, 0.0
    %v5770 = vmax.f32 %v4788, 0.0
    %v5771 = vmax.f32 %v4790, 0.0
    %v5772 = vmax.f32 %v4794, 0.0
    %v5773 = vmax.f32 %v4796, 0.0
    %v5774 = vmax.f32 %v4798, 0.0
    %v5775 = vmax.f32 %v4800, 0.0
    %v5776 = vmax.f32 %v4804, 0.0
    %v5777 = vmax.f32 %v4806, 0.0
    %v5778 = vmax.f32 %v4808, 0.0
    %v5779 = vmax.f32 %v4810, 0.0
    %v5780 = vmax.f32 %v4814, 0.0
    %v5781 = vmax.f32 %v4816, 0.0
    %v5782 = vmax.f32 %v4818, 0.0
    %v5783 = vmax.f32 %v4820, 0.0
    %v5784 = vmax.f32 %v4824, 0.0
    %v5785 = vmax.f32 %v4826, 0.0
    %v5786 = vmax.f32 %v4828, 0.0
    %v5787 = vmax.f32 %v4830, 0.0
    %v5788 = vmax.f32 %v4834, 0.0
    %v5789 = vmax.f32 %v4836, 0.0
    %v5790 = vmax.f32 %v4838, 0.0
    %v5791 = vmax.f32 %v4840, 0.0
    %v5792 = vmax.f32 %v4844, 0.0
    %v5793 = vmax.f32 %v4846, 0.0
    %v5794 = vmax.f32 %v4848, 0.0
    %v5795 = vmax.f32 %v4850, 0.0
    %v5796 = vmax.f32 %v4854, 0.0
    %v5797 = vmax.f32 %v4856, 0.0
    %v5798 = vmax.f32 %v4858, 0.0
    %v5799 = vmax.f32 %v4860, 0.0
    %v5800 = vmax.f32 %v4864, 0.0
    %v5801 = vmax.f32 %v4866, 0.0
    %v5802 = vmax.f32 %v4868, 0.0
    %v5803 = vmax.f32 %v4870, 0.0
    %v5804 = vmax.f32 %v4874, 0.0
    %v5805 = vmax.f32 %v4876, 0.0
    %v5806 = vmax.f32 %v4878, 0.0
    %v5807 = vmax.f32 %v4880, 0.0
    %v5808 = vmax.f32 %v4884, 0.0
    %v5809 = vmax.f32 %v4886, 0.0
    %v5810 = vmax.f32 %v4888, 0.0
    %v5811 = vmax.f32 %v4890, 0.0
    %v5812 = vmax.f32 %v4894, 0.0
    %v5813 = vmax.f32 %v4896, 0.0
    %v5814 = vmax.f32 %v4898, 0.0
    %v5815 = vmax.f32 %v4900, 0.0
    %v5816 = vmax.f32 %v4904, 0.0
    %v5817 = vmax.f32 %v4906, 0.0
    %v5818 = vmax.f32 %v4908, 0.0
    %v5819 = vmax.f32 %v4910, 0.0
    %v5820 = vmax.f32 %v4914, 0.0
    %v5821 = vmax.f32 %v4916, 0.0
    %v5822 = vmax.f32 %v4918, 0.0
    %v5823 = vmax.f32 %v4920, 0.0
    %v5824 = vmax.f32 %v4924, 0.0
    %v5825 = vmax.f32 %v4926, 0.0
    %v5826 = vmax.f32 %v4928, 0.0
    %v5827 = vmax.f32 %v4930, 0.0
    %v5828 = vmax.f32 %v4934, 0.0
    %v5829 = vmax.f32 %v4936, 0.0
    %v5830 = vmax.f32 %v4938, 0.0
    %v5831 = vmax.f32 %v4940, 0.0
    %v5832 = vmax.f32 %v4944, 0.0
    %v5833 = vmax.f32 %v4946, 0.0
    %v5834 = vmax.f32 %v4948, 0.0
    %v5835 = vmax.f32 %v4950, 0.0
    %v5836 = vmax.f32 %v4954, 0.0
    %v5837 = vmax.f32 %v4956, 0.0
    %v5838 = vmax.f32 %v4958, 0.0
    %v5839 = vmax.f32 %v4960, 0.0
    %v5840 = vmax.f32 %v4964, 0.0
    %v5841 = vmax.f32 %v4966, 0.0
    %v5842 = vmax.f32 %v4968, 0.0
    %v5843 = vmax.f32 %v4970, 0.0
    %v5844 = vmax.f32 %v4974, 0.0
    %v5845 = vmax.f32 %v4976, 0.0
    %v5846 = vmax.f32 %v4978, 0.0
    %v5847 = vmax.f32 %v4980, 0.0
    %v5848 = vmax.f32 %v4984, 0.0
    %v5849 = vmax.f32 %v4986, 0.0
    %v5850 = vmax.f32 %v4988, 0.0
    %v5851 = vmax.f32 %v4990, 0.0
    %v5852 = vmax.f32 %v4994, 0.0
    %v5853 = vmax.f32 %v4996, 0.0
    %v5854 = vmax.f32 %v4998, 0.0
    %v5855 = vmax.f32 %v5000, 0.0
    %v5856 = vmax.f32 %v5004, 0.0
    %v5857 = vmax.f32 %v5006, 0.0
    %v5858 = vmax.f32 %v5008, 0.0
    %v5859 = vmax.f32 %v5010, 0.0
    %v5860 = vmax.f32 %v5014, 0.0
    %v5861 = vmax.f32 %v5016, 0.0
    %v5862 = vmax.f32 %v5018, 0.0
    %v5863 = vmax.f32 %v5020, 0.0
    %v5864 = vmax.f32 %v5024, 0.0
    %v5865 = vmax.f32 %v5026, 0.0
    %v5866 = vmax.f32 %v5028, 0.0
    %v5867 = vmax.f32 %v5030, 0.0
    %v5868 = vmax.f32 %v5034, 0.0
    %v5869 = vmax.f32 %v5036, 0.0
    %v5870 = vmax.f32 %v5038, 0.0
    %v5871 = vmax.f32 %v5040, 0.0
    %v5872 = vmax.f32 %v5044, 0.0
    %v5873 = vmax.f32 %v5046, 0.0
    %v5874 = vmax.f32 %v5048, 0.0
    %v5875 = vmax.f32 %v5050, 0.0
    %v5876 = vmax.f32 %v5054, 0.0
    %v5877 = vmax.f32 %v5056, 0.0
    %v5878 = vmax.f32 %v5058, 0.0
    %v5879 = vmax.f32 %v5060, 0.0
    %v5880 = vmax.f32 %v5064, 0.0
    %v5881 = vmax.f32 %v5066, 0.0
    %v5882 = vmax.f32 %v5068, 0.0
    %v5883 = vmax.f32 %v5070, 0.0
    %v5884 = vmax.f32 %v5074, 0.0
    %v5885 = vmax.f32 %v5076, 0.0
    %v5886 = vmax.f32 %v5078, 0.0
    %v5887 = vmax.f32 %v5080, 0.0
    %v5888 = vmax.f32 %v5084, 0.0
    %v5889 = vmax.f32 %v5086, 0.0
    %v5890 = vmax.f32 %v5088, 0.0
    %v5891 = vmax.f32 %v5090, 0.0
    %v5892 = vmax.f32 %v5094, 0.0
    %v5893 = vmax.f32 %v5096, 0.0
    %v5894 = vmax.f32 %v5098, 0.0
    %v5895 = vmax.f32 %v5100, 0.0
    %v5896 = vmax.f32 %v5104, 0.0
    %v5897 = vmax.f32 %v5106, 0.0
    %v5898 = vmax.f32 %v5108, 0.0
    %v5899 = vmax.f32 %v5110, 0.0
    %v5900 = vmax.f32 %v5114, 0.0
    %v5901 = vmax.f32 %v5116, 0.0
    %v5902 = vmax.f32 %v5118, 0.0
    %v5903 = vmax.f32 %v5120, 0.0
    %v5904 = vmax.f32 %v5124, 0.0
    %v5905 = vmax.f32 %v5126, 0.0
    %v5906 = vmax.f32 %v5128, 0.0
    %v5907 = vmax.f32 %v5130, 0.0
    %v5908 = vmax.f32 %v5134, 0.0
    %v5909 = vmax.f32 %v5136, 0.0
    %v5910 = vmax.f32 %v5138, 0.0
    %v5911 = vmax.f32 %v5140, 0.0
    %v5912 = vmax.f32 %v5144, 0.0
    %v5913 = vmax.f32 %v5146, 0.0
    %v5914 = vmax.f32 %v5148, 0.0
    %v5915 = vmax.f32 %v5150, 0.0
    %v5916 = vmax.f32 %v5154, 0.0
    %v5917 = vmax.f32 %v5156, 0.0
    %v5918 = vmax.f32 %v5158, 0.0
    %v5919 = vmax.f32 %v5160, 0.0
    %v5920 = vmax.f32 %v5164, 0.0
    %v5921 = vmax.f32 %v5166, 0.0
    %v5922 = vmax.f32 %v5168, 0.0
    %v5923 = vmax.f32 %v5170, 0.0
    %v5924 = vmax.f32 %v5174, 0.0
    %v5925 = vmax.f32 %v5176, 0.0
    %v5926 = vmax.f32 %v5178, 0.0
    %v5927 = vmax.f32 %v5180, 0.0
    %v5928 = vmax.f32 %v5184, 0.0
    %v5929 = vmax.f32 %v5186, 0.0
    %v5930 = vmax.f32 %v5188, 0.0
    %v5931 = vmax.f32 %v5190, 0.0
    %v5932 = vmax.f32 %v5194, 0.0
    %v5933 = vmax.f32 %v5196, 0.0
    %v5934 = vmax.f32 %v5198, 0.0
    %v5935 = vmax.f32 %v5200, 0.0
    %v5936 = vmax.f32 %v5204, 0.0
    %v5937 = vmax.f32 %v5206, 0.0
    %v5938 = vmax.f32 %v5208, 0.0
    %v5939 = vmax.f32 %v5210, 0.0
    %v5940 = vmax.f32 %v5214, 0.0
    %v5941 = vmax.f32 %v5216, 0.0
    %v5942 = vmax.f32 %v5218, 0.0
    %v5943 = vmax.f32 %v5220, 0.0
    %v5944 = vmax.f32 %v5224, 0.0
    %v5945 = vmax.f32 %v5226, 0.0
    %v5946 = vmax.f32 %v5228, 0.0
    %v5947 = vmax.f32 %v5230, 0.0
    %v5948 = vmax.f32 %v5234, 0.0
    %v5949 = vmax.f32 %v5236, 0.0
    %v5950 = vmax.f32 %v5238, 0.0
    %v5951 = vmax.f32 %v5240, 0.0
    %v5952 = vmax.f32 %v5244, 0.0
    %v5953 = vmax.f32 %v5246, 0.0
    %v5954 = vmax.f32 %v5248, 0.0
    %v5955 = vmax.f32 %v5250, 0.0
    %v5956 = vmax.f32 %v5254, 0.0
    %v5957 = vmax.f32 %v5256, 0.0
    %v5958 = vmax.f32 %v5258, 0.0
    %v5959 = vmax.f32 %v5260, 0.0
    %v5960 = vmax.f32 %v5264, 0.0
    %v5961 = vmax.f32 %v5266, 0.0
    %v5962 = vmax.f32 %v5268, 0.0
    %v5963 = vmax.f32 %v5270, 0.0
    %v5964 = vmax.f32 %v5274, 0.0
    %v5965 = vmax.f32 %v5276, 0.0
    %v5966 = vmax.f32 %v5278, 0.0
    %v5967 = vmax.f32 %v5280, 0.0
    %v5968 = vmax.f32 %v5284, 0.0
    %v5969 = vmax.f32 %v5286, 0.0
    %v5970 = vmax.f32 %v5288, 0.0
    %v5971 = vmax.f32 %v5290, 0.0
    %v5972 = vmax.f32 %v5294, 0.0
    %v5973 = vmax.f32 %v5296, 0.0
    %v5974 = vmax.f32 %v5298, 0.0
    %v5975 = vmax.f32 %v5300, 0.0
    %v5976 = vmax.f32 %v5304, 0.0
    %v5977 = vmax.f32 %v5306, 0.0
    %v5978 = vmax.f32 %v5308, 0.0
    %v5979 = vmax.f32 %v5310, 0.0
    %v5980 = vmax.f32 %v5314, 0.0
    %v5981 = vmax.f32 %v5316, 0.0
    %v5982 = vmax.f32 %v5318, 0.0
    %v5983 = vmax.f32 %v5320, 0.0
    %v5984 = vmax.f32 %v5324, 0.0
    %v5985 = vmax.f32 %v5326, 0.0
    %v5986 = vmax.f32 %v5328, 0.0
    %v5987 = vmax.f32 %v5330, 0.0
    %v5988 = vmax.f32 %v5334, 0.0
    %v5989 = vmax.f32 %v5336, 0.0
    %v5990 = vmax.f32 %v5338, 0.0
    %v5991 = vmax.f32 %v5340, 0.0
    %v5992 = vmax.f32 %v5344, 0.0
    %v5993 = vmax.f32 %v5346, 0.0
    %v5994 = vmax.f32 %v5348, 0.0
    %v5995 = vmax.f32 %v5350, 0.0
    %v5996 = vmax.f32 %v5354, 0.0
    %v5997 = vmax.f32 %v5356, 0.0
    %v5998 = vmax.f32 %v5358, 0.0
    %v5999 = vmax.f32 %v5360, 0.0
    %v6000 = vmax.f32 %v5364, 0.0
    %v6001 = vmax.f32 %v5366, 0.0
    %v6002 = vmax.f32 %v5368, 0.0
    %v6003 = vmax.f32 %v5370, 0.0
    %v6004 = vmax.f32 %v5374, 0.0
    %v6005 = vmax.f32 %v5376, 0.0
    %v6006 = vmax.f32 %v5378, 0.0
    %v6007 = vmax.f32 %v5380, 0.0
    %v6008 = vmax.f32 %v5384, 0.0
    %v6009 = vmax.f32 %v5386, 0.0
    %v6010 = vmax.f32 %v5388, 0.0
    %v6011 = vmax.f32 %v5390, 0.0
    %v6012 = vmax.f32 %v5394, 0.0
    %v6013 = vmax.f32 %v5396, 0.0
    %v6014 = vmax.f32 %v5398, 0.0
    %v6015 = vmax.f32 %v5400, 0.0
    %v6016 = vmax.f32 %v5404, 0.0
    %v6017 = vmax.f32 %v5406, 0.0
    %v6018 = vmax.f32 %v5408, 0.0
    %v6019 = vmax.f32 %v5410, 0.0
    %v6020 = vmax.f32 %v5414, 0.0
    %v6021 = vmax.f32 %v5416, 0.0
    %v6022 = vmax.f32 %v5418, 0.0
    %v6023 = vmax.f32 %v5420, 0.0
    %v6024 = vmax.f32 %v5424, 0.0
    %v6025 = vmax.f32 %v5426, 0.0
    %v6026 = vmax.f32 %v5428, 0.0
    %v6027 = vmax.f32 %v5430, 0.0
    %v6028 = vmax.f32 %v5434, 0.0
    %v6029 = vmax.f32 %v5436, 0.0
    %v6030 = vmax.f32 %v5438, 0.0
    %v6031 = vmax.f32 %v5440, 0.0
    %v6032 = vmax.f32 %v5444, 0.0
    %v6033 = vmax.f32 %v5446, 0.0
    %v6034 = vmax.f32 %v5448, 0.0
    %v6035 = vmax.f32 %v5450, 0.0
    %v6036 = vmax.f32 %v5454, 0.0
    %v6037 = vmax.f32 %v5456, 0.0
    %v6038 = vmax.f32 %v5458, 0.0
    %v6039 = vmax.f32 %v5460, 0.0
    %v6040 = vmax.f32 %v5464, 0.0
    %v6041 = vmax.f32 %v5466, 0.0
    %v6042 = vmax.f32 %v5468, 0.0
    %v6043 = vmax.f32 %v5470, 0.0
    %v6044 = vmax.f32 %v5474, 0.0
    %v6045 = vmax.f32 %v5476, 0.0
    %v6046 = vmax.f32 %v5478, 0.0
    %v6047 = vmax.f32 %v5480, 0.0
    %v6048 = vmax.f32 %v5484, 0.0
    %v6049 = vmax.f32 %v5486, 0.0
    %v6050 = vmax.f32 %v5488, 0.0
    %v6051 = vmax.f32 %v5490, 0.0
    %v6052 = vmax.f32 %v5494, 0.0
    %v6053 = vmax.f32 %v5496, 0.0
    %v6054 = vmax.f32 %v5498, 0.0
    %v6055 = vmax.f32 %v5500, 0.0
    %v6056 = vmax.f32 %v5504, 0.0
    %v6057 = vmax.f32 %v5506, 0.0
    %v6058 = vmax.f32 %v5508, 0.0
    %v6059 = vmax.f32 %v5510, 0.0
    %v6060 = vmax.f32 %v5514, 0.0
    %v6061 = vmax.f32 %v5516, 0.0
    %v6062 = vmax.f32 %v5518, 0.0
    %v6063 = vmax.f32 %v5520, 0.0
    %v6064 = vmax.f32 %v5524, 0.0
    %v6065 = vmax.f32 %v5526, 0.0
    %v6066 = vmax.f32 %v5528, 0.0
    %v6067 = vmax.f32 %v5530, 0.0
    %v6068 = vmax.f32 %v5534, 0.0
    %v6069 = vmax.f32 %v5536, 0.0
    %v6070 = vmax.f32 %v5538, 0.0
    %v6071 = vmax.f32 %v5540, 0.0
    %v6072 = vmax.f32 %v5544, 0.0
    %v6073 = vmax.f32 %v5546, 0.0
    %v6074 = vmax.f32 %v5548, 0.0
    %v6075 = vmax.f32 %v5550, 0.0
    %v6076 = vmax.f32 %v5554, 0.0
    %v6077 = vmax.f32 %v5556, 0.0
    %v6078 = vmax.f32 %v5558, 0.0
    %v6079 = vmax.f32 %v5560, 0.0
    %v6080 = vmax.f32 %v5564, 0.0
    %v6081 = vmax.f32 %v5566, 0.0
    %v6082 = vmax.f32 %v5568, 0.0
    %v6083 = vmax.f32 %v5570, 0.0
    %s6084 = smul.u32 4, 64
    %s6085 = smul.u32 %s6084, 16
    %s6086 = sshll.u32 %s6085, 4
    %6087 = dma.done [#allocation4], %s6086
    %v6088 = vld [vmem:[#allocation3] sm:$0xff]
    %v6089 = vld [vmem:[#allocation3 + $0x8] sm:$0xff]
    %v6090 = vld [vmem:[#allocation3 + $0x10] sm:$0xff]
    %v6091 = vld [vmem:[#allocation3 + $0x18] sm:$0xff]
    %v6092 = vld [vmem:[#allocation3 + $0x20] sm:$0xff]
    %v6093 = vld [vmem:[#allocation3 + $0x28] sm:$0xff]
    %v6094 = vld [vmem:[#allocation3 + $0x30] sm:$0xff]
    %v6095 = vld [vmem:[#allocation3 + $0x38] sm:$0xff]
    %v6096 = vld [vmem:[#allocation3 + $0x40] sm:$0xff]
    %v6097 = vld [vmem:[#allocation3 + $0x48] sm:$0xff]
    %v6098 = vld [vmem:[#allocation3 + $0x50] sm:$0xff]
    %v6099 = vld [vmem:[#allocation3 + $0x58] sm:$0xff]
    %v6100 = vld [vmem:[#allocation3 + $0x60] sm:$0xff]
    %v6101 = vld [vmem:[#allocation3 + $0x68] sm:$0xff]
    %v6102 = vld [vmem:[#allocation3 + $0x70] sm:$0xff]
    %v6103 = vld [vmem:[#allocation3 + $0x78] sm:$0xff]
    %v6104 = vld [vmem:[#allocation3 + $0x80] sm:$0xff]
    %v6105 = vld [vmem:[#allocation3 + $0x88] sm:$0xff]
    %v6106 = vld [vmem:[#allocation3 + $0x90] sm:$0xff]
    %v6107 = vld [vmem:[#allocation3 + $0x98] sm:$0xff]
    %v6108 = vld [vmem:[#allocation3 + $0xa0] sm:$0xff]
    %v6109 = vld [vmem:[#allocation3 + $0xa8] sm:$0xff]
    %v6110 = vld [vmem:[#allocation3 + $0xb0] sm:$0xff]
    %v6111 = vld [vmem:[#allocation3 + $0xb8] sm:$0xff]
    %v6112 = vld [vmem:[#allocation3 + $0xc0] sm:$0xff]
    %v6113 = vld [vmem:[#allocation3 + $0xc8] sm:$0xff]
    %v6114 = vld [vmem:[#allocation3 + $0xd0] sm:$0xff]
    %v6115 = vld [vmem:[#allocation3 + $0xd8] sm:$0xff]
    %v6116 = vld [vmem:[#allocation3 + $0xe0] sm:$0xff]
    %v6117 = vld [vmem:[#allocation3 + $0xe8] sm:$0xff]
    %v6118 = vld [vmem:[#allocation3 + $0xf0] sm:$0xff]
    %v6119 = vld [vmem:[#allocation3 + $0xf8] sm:$0xff]
    %v6120 = vld [vmem:[#allocation3 + $0x100] sm:$0xff]
    %v6121 = vld [vmem:[#allocation3 + $0x108] sm:$0xff]
    %v6122 = vld [vmem:[#allocation3 + $0x110] sm:$0xff]
    %v6123 = vld [vmem:[#allocation3 + $0x118] sm:$0xff]
    %v6124 = vld [vmem:[#allocation3 + $0x120] sm:$0xff]
    %v6125 = vld [vmem:[#allocation3 + $0x128] sm:$0xff]
    %v6126 = vld [vmem:[#allocation3 + $0x130] sm:$0xff]
    %v6127 = vld [vmem:[#allocation3 + $0x138] sm:$0xff]
    %v6128 = vld [vmem:[#allocation3 + $0x140] sm:$0xff]
    %v6129 = vld [vmem:[#allocation3 + $0x148] sm:$0xff]
    %v6130 = vld [vmem:[#allocation3 + $0x150] sm:$0xff]
    %v6131 = vld [vmem:[#allocation3 + $0x158] sm:$0xff]
    %v6132 = vld [vmem:[#allocation3 + $0x160] sm:$0xff]
    %v6133 = vld [vmem:[#allocation3 + $0x168] sm:$0xff]
    %v6134 = vld [vmem:[#allocation3 + $0x170] sm:$0xff]
    %v6135 = vld [vmem:[#allocation3 + $0x178] sm:$0xff]
    %v6136 = vld [vmem:[#allocation3 + $0x180] sm:$0xff]
    %v6137 = vld [vmem:[#allocation3 + $0x188] sm:$0xff]
    %v6138 = vld [vmem:[#allocation3 + $0x190] sm:$0xff]
    %v6139 = vld [vmem:[#allocation3 + $0x198] sm:$0xff]
    %v6140 = vld [vmem:[#allocation3 + $0x1a0] sm:$0xff]
    %v6141 = vld [vmem:[#allocation3 + $0x1a8] sm:$0xff]
    %v6142 = vld [vmem:[#allocation3 + $0x1b0] sm:$0xff]
    %v6143 = vld [vmem:[#allocation3 + $0x1b8] sm:$0xff]
    %v6144 = vld [vmem:[#allocation3 + $0x1c0] sm:$0xff]
    %v6145 = vld [vmem:[#allocation3 + $0x1c8] sm:$0xff]
    %v6146 = vld [vmem:[#allocation3 + $0x1d0] sm:$0xff]
    %v6147 = vld [vmem:[#allocation3 + $0x1d8] sm:$0xff]
    %v6148 = vld [vmem:[#allocation3 + $0x1e0] sm:$0xff]
    %v6149 = vld [vmem:[#allocation3 + $0x1e8] sm:$0xff]
    %v6150 = vld [vmem:[#allocation3 + $0x1f0] sm:$0xff]
    %v6151 = vld [vmem:[#allocation3 + $0x1f8] sm:$0xff]
    %v6152 = vld [vmem:[#allocation3 + $0x200] sm:$0xff]
    %v6153 = vld [vmem:[#allocation3 + $0x208] sm:$0xff]
    %v6154 = vld [vmem:[#allocation3 + $0x210] sm:$0xff]
    %v6155 = vld [vmem:[#allocation3 + $0x218] sm:$0xff]
    %v6156 = vld [vmem:[#allocation3 + $0x220] sm:$0xff]
    %v6157 = vld [vmem:[#allocation3 + $0x228] sm:$0xff]
    %v6158 = vld [vmem:[#allocation3 + $0x230] sm:$0xff]
    %v6159 = vld [vmem:[#allocation3 + $0x238] sm:$0xff]
    %v6160 = vld [vmem:[#allocation3 + $0x240] sm:$0xff]
    %v6161 = vld [vmem:[#allocation3 + $0x248] sm:$0xff]
    %v6162 = vld [vmem:[#allocation3 + $0x250] sm:$0xff]
    %v6163 = vld [vmem:[#allocation3 + $0x258] sm:$0xff]
    %v6164 = vld [vmem:[#allocation3 + $0x260] sm:$0xff]
    %v6165 = vld [vmem:[#allocation3 + $0x268] sm:$0xff]
    %v6166 = vld [vmem:[#allocation3 + $0x270] sm:$0xff]
    %v6167 = vld [vmem:[#allocation3 + $0x278] sm:$0xff]
    %v6168 = vld [vmem:[#allocation3 + $0x280] sm:$0xff]
    %v6169 = vld [vmem:[#allocation3 + $0x288] sm:$0xff]
    %v6170 = vld [vmem:[#allocation3 + $0x290] sm:$0xff]
    %v6171 = vld [vmem:[#allocation3 + $0x298] sm:$0xff]
    %v6172 = vld [vmem:[#allocation3 + $0x2a0] sm:$0xff]
    %v6173 = vld [vmem:[#allocation3 + $0x2a8] sm:$0xff]
    %v6174 = vld [vmem:[#allocation3 + $0x2b0] sm:$0xff]
    %v6175 = vld [vmem:[#allocation3 + $0x2b8] sm:$0xff]
    %v6176 = vld [vmem:[#allocation3 + $0x2c0] sm:$0xff]
    %v6177 = vld [vmem:[#allocation3 + $0x2c8] sm:$0xff]
    %v6178 = vld [vmem:[#allocation3 + $0x2d0] sm:$0xff]
    %v6179 = vld [vmem:[#allocation3 + $0x2d8] sm:$0xff]
    %v6180 = vld [vmem:[#allocation3 + $0x2e0] sm:$0xff]
    %v6181 = vld [vmem:[#allocation3 + $0x2e8] sm:$0xff]
    %v6182 = vld [vmem:[#allocation3 + $0x2f0] sm:$0xff]
    %v6183 = vld [vmem:[#allocation3 + $0x2f8] sm:$0xff]
    %v6184 = vld [vmem:[#allocation3 + $0x300] sm:$0xff]
    %v6185 = vld [vmem:[#allocation3 + $0x308] sm:$0xff]
    %v6186 = vld [vmem:[#allocation3 + $0x310] sm:$0xff]
    %v6187 = vld [vmem:[#allocation3 + $0x318] sm:$0xff]
    %v6188 = vld [vmem:[#allocation3 + $0x320] sm:$0xff]
    %v6189 = vld [vmem:[#allocation3 + $0x328] sm:$0xff]
    %v6190 = vld [vmem:[#allocation3 + $0x330] sm:$0xff]
    %v6191 = vld [vmem:[#allocation3 + $0x338] sm:$0xff]
    %v6192 = vld [vmem:[#allocation3 + $0x340] sm:$0xff]
    %v6193 = vld [vmem:[#allocation3 + $0x348] sm:$0xff]
    %v6194 = vld [vmem:[#allocation3 + $0x350] sm:$0xff]
    %v6195 = vld [vmem:[#allocation3 + $0x358] sm:$0xff]
    %v6196 = vld [vmem:[#allocation3 + $0x360] sm:$0xff]
    %v6197 = vld [vmem:[#allocation3 + $0x368] sm:$0xff]
    %v6198 = vld [vmem:[#allocation3 + $0x370] sm:$0xff]
    %v6199 = vld [vmem:[#allocation3 + $0x378] sm:$0xff]
    %v6200 = vld [vmem:[#allocation3 + $0x380] sm:$0xff]
    %v6201 = vld [vmem:[#allocation3 + $0x388] sm:$0xff]
    %v6202 = vld [vmem:[#allocation3 + $0x390] sm:$0xff]
    %v6203 = vld [vmem:[#allocation3 + $0x398] sm:$0xff]
    %v6204 = vld [vmem:[#allocation3 + $0x3a0] sm:$0xff]
    %v6205 = vld [vmem:[#allocation3 + $0x3a8] sm:$0xff]
    %v6206 = vld [vmem:[#allocation3 + $0x3b0] sm:$0xff]
    %v6207 = vld [vmem:[#allocation3 + $0x3b8] sm:$0xff]
    %v6208 = vld [vmem:[#allocation3 + $0x3c0] sm:$0xff]
    %v6209 = vld [vmem:[#allocation3 + $0x3c8] sm:$0xff]
    %v6210 = vld [vmem:[#allocation3 + $0x3d0] sm:$0xff]
    %v6211 = vld [vmem:[#allocation3 + $0x3d8] sm:$0xff]
    %v6212 = vld [vmem:[#allocation3 + $0x3e0] sm:$0xff]
    %v6213 = vld [vmem:[#allocation3 + $0x3e8] sm:$0xff]
    %v6214 = vld [vmem:[#allocation3 + $0x3f0] sm:$0xff]
    %v6215 = vld [vmem:[#allocation3 + $0x3f8] sm:$0xff]
    %v6216 = vld [vmem:[#allocation3 + $0x400] sm:$0xff]
    %v6217 = vld [vmem:[#allocation3 + $0x408] sm:$0xff]
    %v6218 = vld [vmem:[#allocation3 + $0x410] sm:$0xff]
    %v6219 = vld [vmem:[#allocation3 + $0x418] sm:$0xff]
    %v6220 = vld [vmem:[#allocation3 + $0x420] sm:$0xff]
    %v6221 = vld [vmem:[#allocation3 + $0x428] sm:$0xff]
    %v6222 = vld [vmem:[#allocation3 + $0x430] sm:$0xff]
    %v6223 = vld [vmem:[#allocation3 + $0x438] sm:$0xff]
    %v6224 = vld [vmem:[#allocation3 + $0x440] sm:$0xff]
    %v6225 = vld [vmem:[#allocation3 + $0x448] sm:$0xff]
    %v6226 = vld [vmem:[#allocation3 + $0x450] sm:$0xff]
    %v6227 = vld [vmem:[#allocation3 + $0x458] sm:$0xff]
    %v6228 = vld [vmem:[#allocation3 + $0x460] sm:$0xff]
    %v6229 = vld [vmem:[#allocation3 + $0x468] sm:$0xff]
    %v6230 = vld [vmem:[#allocation3 + $0x470] sm:$0xff]
    %v6231 = vld [vmem:[#allocation3 + $0x478] sm:$0xff]
    %v6232 = vld [vmem:[#allocation3 + $0x480] sm:$0xff]
    %v6233 = vld [vmem:[#allocation3 + $0x488] sm:$0xff]
    %v6234 = vld [vmem:[#allocation3 + $0x490] sm:$0xff]
    %v6235 = vld [vmem:[#allocation3 + $0x498] sm:$0xff]
    %v6236 = vld [vmem:[#allocation3 + $0x4a0] sm:$0xff]
    %v6237 = vld [vmem:[#allocation3 + $0x4a8] sm:$0xff]
    %v6238 = vld [vmem:[#allocation3 + $0x4b0] sm:$0xff]
    %v6239 = vld [vmem:[#allocation3 + $0x4b8] sm:$0xff]
    %v6240 = vld [vmem:[#allocation3 + $0x4c0] sm:$0xff]
    %v6241 = vld [vmem:[#allocation3 + $0x4c8] sm:$0xff]
    %v6242 = vld [vmem:[#allocation3 + $0x4d0] sm:$0xff]
    %v6243 = vld [vmem:[#allocation3 + $0x4d8] sm:$0xff]
    %v6244 = vld [vmem:[#allocation3 + $0x4e0] sm:$0xff]
    %v6245 = vld [vmem:[#allocation3 + $0x4e8] sm:$0xff]
    %v6246 = vld [vmem:[#allocation3 + $0x4f0] sm:$0xff]
    %v6247 = vld [vmem:[#allocation3 + $0x4f8] sm:$0xff]
    %v6248 = vld [vmem:[#allocation3 + $0x500] sm:$0xff]
    %v6249 = vld [vmem:[#allocation3 + $0x508] sm:$0xff]
    %v6250 = vld [vmem:[#allocation3 + $0x510] sm:$0xff]
    %v6251 = vld [vmem:[#allocation3 + $0x518] sm:$0xff]
    %v6252 = vld [vmem:[#allocation3 + $0x520] sm:$0xff]
    %v6253 = vld [vmem:[#allocation3 + $0x528] sm:$0xff]
    %v6254 = vld [vmem:[#allocation3 + $0x530] sm:$0xff]
    %v6255 = vld [vmem:[#allocation3 + $0x538] sm:$0xff]
    %v6256 = vld [vmem:[#allocation3 + $0x540] sm:$0xff]
    %v6257 = vld [vmem:[#allocation3 + $0x548] sm:$0xff]
    %v6258 = vld [vmem:[#allocation3 + $0x550] sm:$0xff]
    %v6259 = vld [vmem:[#allocation3 + $0x558] sm:$0xff]
    %v6260 = vld [vmem:[#allocation3 + $0x560] sm:$0xff]
    %v6261 = vld [vmem:[#allocation3 + $0x568] sm:$0xff]
    %v6262 = vld [vmem:[#allocation3 + $0x570] sm:$0xff]
    %v6263 = vld [vmem:[#allocation3 + $0x578] sm:$0xff]
    %v6264 = vld [vmem:[#allocation3 + $0x580] sm:$0xff]
    %v6265 = vld [vmem:[#allocation3 + $0x588] sm:$0xff]
    %v6266 = vld [vmem:[#allocation3 + $0x590] sm:$0xff]
    %v6267 = vld [vmem:[#allocation3 + $0x598] sm:$0xff]
    %v6268 = vld [vmem:[#allocation3 + $0x5a0] sm:$0xff]
    %v6269 = vld [vmem:[#allocation3 + $0x5a8] sm:$0xff]
    %v6270 = vld [vmem:[#allocation3 + $0x5b0] sm:$0xff]
    %v6271 = vld [vmem:[#allocation3 + $0x5b8] sm:$0xff]
    %v6272 = vld [vmem:[#allocation3 + $0x5c0] sm:$0xff]
    %v6273 = vld [vmem:[#allocation3 + $0x5c8] sm:$0xff]
    %v6274 = vld [vmem:[#allocation3 + $0x5d0] sm:$0xff]
    %v6275 = vld [vmem:[#allocation3 + $0x5d8] sm:$0xff]
    %v6276 = vld [vmem:[#allocation3 + $0x5e0] sm:$0xff]
    %v6277 = vld [vmem:[#allocation3 + $0x5e8] sm:$0xff]
    %v6278 = vld [vmem:[#allocation3 + $0x5f0] sm:$0xff]
    %v6279 = vld [vmem:[#allocation3 + $0x5f8] sm:$0xff]
    %v6280 = vld [vmem:[#allocation3 + $0x600] sm:$0xff]
    %v6281 = vld [vmem:[#allocation3 + $0x608] sm:$0xff]
    %v6282 = vld [vmem:[#allocation3 + $0x610] sm:$0xff]
    %v6283 = vld [vmem:[#allocation3 + $0x618] sm:$0xff]
    %v6284 = vld [vmem:[#allocation3 + $0x620] sm:$0xff]
    %v6285 = vld [vmem:[#allocation3 + $0x628] sm:$0xff]
    %v6286 = vld [vmem:[#allocation3 + $0x630] sm:$0xff]
    %v6287 = vld [vmem:[#allocation3 + $0x638] sm:$0xff]
    %v6288 = vld [vmem:[#allocation3 + $0x640] sm:$0xff]
    %v6289 = vld [vmem:[#allocation3 + $0x648] sm:$0xff]
    %v6290 = vld [vmem:[#allocation3 + $0x650] sm:$0xff]
    %v6291 = vld [vmem:[#allocation3 + $0x658] sm:$0xff]
    %v6292 = vld [vmem:[#allocation3 + $0x660] sm:$0xff]
    %v6293 = vld [vmem:[#allocation3 + $0x668] sm:$0xff]
    %v6294 = vld [vmem:[#allocation3 + $0x670] sm:$0xff]
    %v6295 = vld [vmem:[#allocation3 + $0x678] sm:$0xff]
    %v6296 = vld [vmem:[#allocation3 + $0x680] sm:$0xff]
    %v6297 = vld [vmem:[#allocation3 + $0x688] sm:$0xff]
    %v6298 = vld [vmem:[#allocation3 + $0x690] sm:$0xff]
    %v6299 = vld [vmem:[#allocation3 + $0x698] sm:$0xff]
    %v6300 = vld [vmem:[#allocation3 + $0x6a0] sm:$0xff]
    %v6301 = vld [vmem:[#allocation3 + $0x6a8] sm:$0xff]
    %v6302 = vld [vmem:[#allocation3 + $0x6b0] sm:$0xff]
    %v6303 = vld [vmem:[#allocation3 + $0x6b8] sm:$0xff]
    %v6304 = vld [vmem:[#allocation3 + $0x6c0] sm:$0xff]
    %v6305 = vld [vmem:[#allocation3 + $0x6c8] sm:$0xff]
    %v6306 = vld [vmem:[#allocation3 + $0x6d0] sm:$0xff]
    %v6307 = vld [vmem:[#allocation3 + $0x6d8] sm:$0xff]
    %v6308 = vld [vmem:[#allocation3 + $0x6e0] sm:$0xff]
    %v6309 = vld [vmem:[#allocation3 + $0x6e8] sm:$0xff]
    %v6310 = vld [vmem:[#allocation3 + $0x6f0] sm:$0xff]
    %v6311 = vld [vmem:[#allocation3 + $0x6f8] sm:$0xff]
    %v6312 = vld [vmem:[#allocation3 + $0x700] sm:$0xff]
    %v6313 = vld [vmem:[#allocation3 + $0x708] sm:$0xff]
    %v6314 = vld [vmem:[#allocation3 + $0x710] sm:$0xff]
    %v6315 = vld [vmem:[#allocation3 + $0x718] sm:$0xff]
    %v6316 = vld [vmem:[#allocation3 + $0x720] sm:$0xff]
    %v6317 = vld [vmem:[#allocation3 + $0x728] sm:$0xff]
    %v6318 = vld [vmem:[#allocation3 + $0x730] sm:$0xff]
    %v6319 = vld [vmem:[#allocation3 + $0x738] sm:$0xff]
    %v6320 = vld [vmem:[#allocation3 + $0x740] sm:$0xff]
    %v6321 = vld [vmem:[#allocation3 + $0x748] sm:$0xff]
    %v6322 = vld [vmem:[#allocation3 + $0x750] sm:$0xff]
    %v6323 = vld [vmem:[#allocation3 + $0x758] sm:$0xff]
    %v6324 = vld [vmem:[#allocation3 + $0x760] sm:$0xff]
    %v6325 = vld [vmem:[#allocation3 + $0x768] sm:$0xff]
    %v6326 = vld [vmem:[#allocation3 + $0x770] sm:$0xff]
    %v6327 = vld [vmem:[#allocation3 + $0x778] sm:$0xff]
    %v6328 = vld [vmem:[#allocation3 + $0x780] sm:$0xff]
    %v6329 = vld [vmem:[#allocation3 + $0x788] sm:$0xff]
    %v6330 = vld [vmem:[#allocation3 + $0x790] sm:$0xff]
    %v6331 = vld [vmem:[#allocation3 + $0x798] sm:$0xff]
    %v6332 = vld [vmem:[#allocation3 + $0x7a0] sm:$0xff]
    %v6333 = vld [vmem:[#allocation3 + $0x7a8] sm:$0xff]
    %v6334 = vld [vmem:[#allocation3 + $0x7b0] sm:$0xff]
    %v6335 = vld [vmem:[#allocation3 + $0x7b8] sm:$0xff]
    %v6336 = vld [vmem:[#allocation3 + $0x7c0] sm:$0xff]
    %v6337 = vld [vmem:[#allocation3 + $0x7c8] sm:$0xff]
    %v6338 = vld [vmem:[#allocation3 + $0x7d0] sm:$0xff]
    %v6339 = vld [vmem:[#allocation3 + $0x7d8] sm:$0xff]
    %v6340 = vld [vmem:[#allocation3 + $0x7e0] sm:$0xff]
    %v6341 = vld [vmem:[#allocation3 + $0x7e8] sm:$0xff]
    %v6342 = vld [vmem:[#allocation3 + $0x7f0] sm:$0xff]
    %v6343 = vld [vmem:[#allocation3 + $0x7f8] sm:$0xff]
    %v6344 = vld [vmem:[#allocation3 + $0x800] sm:$0xff]
    %v6345 = vld [vmem:[#allocation3 + $0x808] sm:$0xff]
    %v6346 = vld [vmem:[#allocation3 + $0x810] sm:$0xff]
    %v6347 = vld [vmem:[#allocation3 + $0x818] sm:$0xff]
    %v6348 = vld [vmem:[#allocation3 + $0x820] sm:$0xff]
    %v6349 = vld [vmem:[#allocation3 + $0x828] sm:$0xff]
    %v6350 = vld [vmem:[#allocation3 + $0x830] sm:$0xff]
    %v6351 = vld [vmem:[#allocation3 + $0x838] sm:$0xff]
    %v6352 = vld [vmem:[#allocation3 + $0x840] sm:$0xff]
    %v6353 = vld [vmem:[#allocation3 + $0x848] sm:$0xff]
    %v6354 = vld [vmem:[#allocation3 + $0x850] sm:$0xff]
    %v6355 = vld [vmem:[#allocation3 + $0x858] sm:$0xff]
    %v6356 = vld [vmem:[#allocation3 + $0x860] sm:$0xff]
    %v6357 = vld [vmem:[#allocation3 + $0x868] sm:$0xff]
    %v6358 = vld [vmem:[#allocation3 + $0x870] sm:$0xff]
    %v6359 = vld [vmem:[#allocation3 + $0x878] sm:$0xff]
    %v6360 = vld [vmem:[#allocation3 + $0x880] sm:$0xff]
    %v6361 = vld [vmem:[#allocation3 + $0x888] sm:$0xff]
    %v6362 = vld [vmem:[#allocation3 + $0x890] sm:$0xff]
    %v6363 = vld [vmem:[#allocation3 + $0x898] sm:$0xff]
    %v6364 = vld [vmem:[#allocation3 + $0x8a0] sm:$0xff]
    %v6365 = vld [vmem:[#allocation3 + $0x8a8] sm:$0xff]
    %v6366 = vld [vmem:[#allocation3 + $0x8b0] sm:$0xff]
    %v6367 = vld [vmem:[#allocation3 + $0x8b8] sm:$0xff]
    %v6368 = vld [vmem:[#allocation3 + $0x8c0] sm:$0xff]
    %v6369 = vld [vmem:[#allocation3 + $0x8c8] sm:$0xff]
    %v6370 = vld [vmem:[#allocation3 + $0x8d0] sm:$0xff]
    %v6371 = vld [vmem:[#allocation3 + $0x8d8] sm:$0xff]
    %v6372 = vld [vmem:[#allocation3 + $0x8e0] sm:$0xff]
    %v6373 = vld [vmem:[#allocation3 + $0x8e8] sm:$0xff]
    %v6374 = vld [vmem:[#allocation3 + $0x8f0] sm:$0xff]
    %v6375 = vld [vmem:[#allocation3 + $0x8f8] sm:$0xff]
    %v6376 = vld [vmem:[#allocation3 + $0x900] sm:$0xff]
    %v6377 = vld [vmem:[#allocation3 + $0x908] sm:$0xff]
    %v6378 = vld [vmem:[#allocation3 + $0x910] sm:$0xff]
    %v6379 = vld [vmem:[#allocation3 + $0x918] sm:$0xff]
    %v6380 = vld [vmem:[#allocation3 + $0x920] sm:$0xff]
    %v6381 = vld [vmem:[#allocation3 + $0x928] sm:$0xff]
    %v6382 = vld [vmem:[#allocation3 + $0x930] sm:$0xff]
    %v6383 = vld [vmem:[#allocation3 + $0x938] sm:$0xff]
    %v6384 = vld [vmem:[#allocation3 + $0x940] sm:$0xff]
    %v6385 = vld [vmem:[#allocation3 + $0x948] sm:$0xff]
    %v6386 = vld [vmem:[#allocation3 + $0x950] sm:$0xff]
    %v6387 = vld [vmem:[#allocation3 + $0x958] sm:$0xff]
    %v6388 = vld [vmem:[#allocation3 + $0x960] sm:$0xff]
    %v6389 = vld [vmem:[#allocation3 + $0x968] sm:$0xff]
    %v6390 = vld [vmem:[#allocation3 + $0x970] sm:$0xff]
    %v6391 = vld [vmem:[#allocation3 + $0x978] sm:$0xff]
    %v6392 = vld [vmem:[#allocation3 + $0x980] sm:$0xff]
    %v6393 = vld [vmem:[#allocation3 + $0x988] sm:$0xff]
    %v6394 = vld [vmem:[#allocation3 + $0x990] sm:$0xff]
    %v6395 = vld [vmem:[#allocation3 + $0x998] sm:$0xff]
    %v6396 = vld [vmem:[#allocation3 + $0x9a0] sm:$0xff]
    %v6397 = vld [vmem:[#allocation3 + $0x9a8] sm:$0xff]
    %v6398 = vld [vmem:[#allocation3 + $0x9b0] sm:$0xff]
    %v6399 = vld [vmem:[#allocation3 + $0x9b8] sm:$0xff]
    %v6400 = vld [vmem:[#allocation3 + $0x9c0] sm:$0xff]
    %v6401 = vld [vmem:[#allocation3 + $0x9c8] sm:$0xff]
    %v6402 = vld [vmem:[#allocation3 + $0x9d0] sm:$0xff]
    %v6403 = vld [vmem:[#allocation3 + $0x9d8] sm:$0xff]
    %v6404 = vld [vmem:[#allocation3 + $0x9e0] sm:$0xff]
    %v6405 = vld [vmem:[#allocation3 + $0x9e8] sm:$0xff]
    %v6406 = vld [vmem:[#allocation3 + $0x9f0] sm:$0xff]
    %v6407 = vld [vmem:[#allocation3 + $0x9f8] sm:$0xff]
    %v6408 = vld [vmem:[#allocation3 + $0xa00] sm:$0xff]
    %v6409 = vld [vmem:[#allocation3 + $0xa08] sm:$0xff]
    %v6410 = vld [vmem:[#allocation3 + $0xa10] sm:$0xff]
    %v6411 = vld [vmem:[#allocation3 + $0xa18] sm:$0xff]
    %v6412 = vld [vmem:[#allocation3 + $0xa20] sm:$0xff]
    %v6413 = vld [vmem:[#allocation3 + $0xa28] sm:$0xff]
    %v6414 = vld [vmem:[#allocation3 + $0xa30] sm:$0xff]
    %v6415 = vld [vmem:[#allocation3 + $0xa38] sm:$0xff]
    %v6416 = vld [vmem:[#allocation3 + $0xa40] sm:$0xff]
    %v6417 = vld [vmem:[#allocation3 + $0xa48] sm:$0xff]
    %v6418 = vld [vmem:[#allocation3 + $0xa50] sm:$0xff]
    %v6419 = vld [vmem:[#allocation3 + $0xa58] sm:$0xff]
    %v6420 = vld [vmem:[#allocation3 + $0xa60] sm:$0xff]
    %v6421 = vld [vmem:[#allocation3 + $0xa68] sm:$0xff]
    %v6422 = vld [vmem:[#allocation3 + $0xa70] sm:$0xff]
    %v6423 = vld [vmem:[#allocation3 + $0xa78] sm:$0xff]
    %v6424 = vld [vmem:[#allocation3 + $0xa80] sm:$0xff]
    %v6425 = vld [vmem:[#allocation3 + $0xa88] sm:$0xff]
    %v6426 = vld [vmem:[#allocation3 + $0xa90] sm:$0xff]
    %v6427 = vld [vmem:[#allocation3 + $0xa98] sm:$0xff]
    %v6428 = vld [vmem:[#allocation3 + $0xaa0] sm:$0xff]
    %v6429 = vld [vmem:[#allocation3 + $0xaa8] sm:$0xff]
    %v6430 = vld [vmem:[#allocation3 + $0xab0] sm:$0xff]
    %v6431 = vld [vmem:[#allocation3 + $0xab8] sm:$0xff]
    %v6432 = vld [vmem:[#allocation3 + $0xac0] sm:$0xff]
    %v6433 = vld [vmem:[#allocation3 + $0xac8] sm:$0xff]
    %v6434 = vld [vmem:[#allocation3 + $0xad0] sm:$0xff]
    %v6435 = vld [vmem:[#allocation3 + $0xad8] sm:$0xff]
    %v6436 = vld [vmem:[#allocation3 + $0xae0] sm:$0xff]
    %v6437 = vld [vmem:[#allocation3 + $0xae8] sm:$0xff]
    %v6438 = vld [vmem:[#allocation3 + $0xaf0] sm:$0xff]
    %v6439 = vld [vmem:[#allocation3 + $0xaf8] sm:$0xff]
    %v6440 = vld [vmem:[#allocation3 + $0xb00] sm:$0xff]
    %v6441 = vld [vmem:[#allocation3 + $0xb08] sm:$0xff]
    %v6442 = vld [vmem:[#allocation3 + $0xb10] sm:$0xff]
    %v6443 = vld [vmem:[#allocation3 + $0xb18] sm:$0xff]
    %v6444 = vld [vmem:[#allocation3 + $0xb20] sm:$0xff]
    %v6445 = vld [vmem:[#allocation3 + $0xb28] sm:$0xff]
    %v6446 = vld [vmem:[#allocation3 + $0xb30] sm:$0xff]
    %v6447 = vld [vmem:[#allocation3 + $0xb38] sm:$0xff]
    %v6448 = vld [vmem:[#allocation3 + $0xb40] sm:$0xff]
    %v6449 = vld [vmem:[#allocation3 + $0xb48] sm:$0xff]
    %v6450 = vld [vmem:[#allocation3 + $0xb50] sm:$0xff]
    %v6451 = vld [vmem:[#allocation3 + $0xb58] sm:$0xff]
    %v6452 = vld [vmem:[#allocation3 + $0xb60] sm:$0xff]
    %v6453 = vld [vmem:[#allocation3 + $0xb68] sm:$0xff]
    %v6454 = vld [vmem:[#allocation3 + $0xb70] sm:$0xff]
    %v6455 = vld [vmem:[#allocation3 + $0xb78] sm:$0xff]
    %v6456 = vld [vmem:[#allocation3 + $0xb80] sm:$0xff]
    %v6457 = vld [vmem:[#allocation3 + $0xb88] sm:$0xff]
    %v6458 = vld [vmem:[#allocation3 + $0xb90] sm:$0xff]
    %v6459 = vld [vmem:[#allocation3 + $0xb98] sm:$0xff]
    %v6460 = vld [vmem:[#allocation3 + $0xba0] sm:$0xff]
    %v6461 = vld [vmem:[#allocation3 + $0xba8] sm:$0xff]
    %v6462 = vld [vmem:[#allocation3 + $0xbb0] sm:$0xff]
    %v6463 = vld [vmem:[#allocation3 + $0xbb8] sm:$0xff]
    %v6464 = vld [vmem:[#allocation3 + $0xbc0] sm:$0xff]
    %v6465 = vld [vmem:[#allocation3 + $0xbc8] sm:$0xff]
    %v6466 = vld [vmem:[#allocation3 + $0xbd0] sm:$0xff]
    %v6467 = vld [vmem:[#allocation3 + $0xbd8] sm:$0xff]
    %v6468 = vld [vmem:[#allocation3 + $0xbe0] sm:$0xff]
    %v6469 = vld [vmem:[#allocation3 + $0xbe8] sm:$0xff]
    %v6470 = vld [vmem:[#allocation3 + $0xbf0] sm:$0xff]
    %v6471 = vld [vmem:[#allocation3 + $0xbf8] sm:$0xff]
    %v6472 = vld [vmem:[#allocation3 + $0xc00] sm:$0xff]
    %v6473 = vld [vmem:[#allocation3 + $0xc08] sm:$0xff]
    %v6474 = vld [vmem:[#allocation3 + $0xc10] sm:$0xff]
    %v6475 = vld [vmem:[#allocation3 + $0xc18] sm:$0xff]
    %v6476 = vld [vmem:[#allocation3 + $0xc20] sm:$0xff]
    %v6477 = vld [vmem:[#allocation3 + $0xc28] sm:$0xff]
    %v6478 = vld [vmem:[#allocation3 + $0xc30] sm:$0xff]
    %v6479 = vld [vmem:[#allocation3 + $0xc38] sm:$0xff]
    %v6480 = vld [vmem:[#allocation3 + $0xc40] sm:$0xff]
    %v6481 = vld [vmem:[#allocation3 + $0xc48] sm:$0xff]
    %v6482 = vld [vmem:[#allocation3 + $0xc50] sm:$0xff]
    %v6483 = vld [vmem:[#allocation3 + $0xc58] sm:$0xff]
    %v6484 = vld [vmem:[#allocation3 + $0xc60] sm:$0xff]
    %v6485 = vld [vmem:[#allocation3 + $0xc68] sm:$0xff]
    %v6486 = vld [vmem:[#allocation3 + $0xc70] sm:$0xff]
    %v6487 = vld [vmem:[#allocation3 + $0xc78] sm:$0xff]
    %v6488 = vld [vmem:[#allocation3 + $0xc80] sm:$0xff]
    %v6489 = vld [vmem:[#allocation3 + $0xc88] sm:$0xff]
    %v6490 = vld [vmem:[#allocation3 + $0xc90] sm:$0xff]
    %v6491 = vld [vmem:[#allocation3 + $0xc98] sm:$0xff]
    %v6492 = vld [vmem:[#allocation3 + $0xca0] sm:$0xff]
    %v6493 = vld [vmem:[#allocation3 + $0xca8] sm:$0xff]
    %v6494 = vld [vmem:[#allocation3 + $0xcb0] sm:$0xff]
    %v6495 = vld [vmem:[#allocation3 + $0xcb8] sm:$0xff]
    %v6496 = vld [vmem:[#allocation3 + $0xcc0] sm:$0xff]
    %v6497 = vld [vmem:[#allocation3 + $0xcc8] sm:$0xff]
    %v6498 = vld [vmem:[#allocation3 + $0xcd0] sm:$0xff]
    %v6499 = vld [vmem:[#allocation3 + $0xcd8] sm:$0xff]
    %v6500 = vld [vmem:[#allocation3 + $0xce0] sm:$0xff]
    %v6501 = vld [vmem:[#allocation3 + $0xce8] sm:$0xff]
    %v6502 = vld [vmem:[#allocation3 + $0xcf0] sm:$0xff]
    %v6503 = vld [vmem:[#allocation3 + $0xcf8] sm:$0xff]
    %v6504 = vld [vmem:[#allocation3 + $0xd00] sm:$0xff]
    %v6505 = vld [vmem:[#allocation3 + $0xd08] sm:$0xff]
    %v6506 = vld [vmem:[#allocation3 + $0xd10] sm:$0xff]
    %v6507 = vld [vmem:[#allocation3 + $0xd18] sm:$0xff]
    %v6508 = vld [vmem:[#allocation3 + $0xd20] sm:$0xff]
    %v6509 = vld [vmem:[#allocation3 + $0xd28] sm:$0xff]
    %v6510 = vld [vmem:[#allocation3 + $0xd30] sm:$0xff]
    %v6511 = vld [vmem:[#allocation3 + $0xd38] sm:$0xff]
    %v6512 = vld [vmem:[#allocation3 + $0xd40] sm:$0xff]
    %v6513 = vld [vmem:[#allocation3 + $0xd48] sm:$0xff]
    %v6514 = vld [vmem:[#allocation3 + $0xd50] sm:$0xff]
    %v6515 = vld [vmem:[#allocation3 + $0xd58] sm:$0xff]
    %v6516 = vld [vmem:[#allocation3 + $0xd60] sm:$0xff]
    %v6517 = vld [vmem:[#allocation3 + $0xd68] sm:$0xff]
    %v6518 = vld [vmem:[#allocation3 + $0xd70] sm:$0xff]
    %v6519 = vld [vmem:[#allocation3 + $0xd78] sm:$0xff]
    %v6520 = vld [vmem:[#allocation3 + $0xd80] sm:$0xff]
    %v6521 = vld [vmem:[#allocation3 + $0xd88] sm:$0xff]
    %v6522 = vld [vmem:[#allocation3 + $0xd90] sm:$0xff]
    %v6523 = vld [vmem:[#allocation3 + $0xd98] sm:$0xff]
    %v6524 = vld [vmem:[#allocation3 + $0xda0] sm:$0xff]
    %v6525 = vld [vmem:[#allocation3 + $0xda8] sm:$0xff]
    %v6526 = vld [vmem:[#allocation3 + $0xdb0] sm:$0xff]
    %v6527 = vld [vmem:[#allocation3 + $0xdb8] sm:$0xff]
    %v6528 = vld [vmem:[#allocation3 + $0xdc0] sm:$0xff]
    %v6529 = vld [vmem:[#allocation3 + $0xdc8] sm:$0xff]
    %v6530 = vld [vmem:[#allocation3 + $0xdd0] sm:$0xff]
    %v6531 = vld [vmem:[#allocation3 + $0xdd8] sm:$0xff]
    %v6532 = vld [vmem:[#allocation3 + $0xde0] sm:$0xff]
    %v6533 = vld [vmem:[#allocation3 + $0xde8] sm:$0xff]
    %v6534 = vld [vmem:[#allocation3 + $0xdf0] sm:$0xff]
    %v6535 = vld [vmem:[#allocation3 + $0xdf8] sm:$0xff]
    %v6536 = vld [vmem:[#allocation3 + $0xe00] sm:$0xff]
    %v6537 = vld [vmem:[#allocation3 + $0xe08] sm:$0xff]
    %v6538 = vld [vmem:[#allocation3 + $0xe10] sm:$0xff]
    %v6539 = vld [vmem:[#allocation3 + $0xe18] sm:$0xff]
    %v6540 = vld [vmem:[#allocation3 + $0xe20] sm:$0xff]
    %v6541 = vld [vmem:[#allocation3 + $0xe28] sm:$0xff]
    %v6542 = vld [vmem:[#allocation3 + $0xe30] sm:$0xff]
    %v6543 = vld [vmem:[#allocation3 + $0xe38] sm:$0xff]
    %v6544 = vld [vmem:[#allocation3 + $0xe40] sm:$0xff]
    %v6545 = vld [vmem:[#allocation3 + $0xe48] sm:$0xff]
    %v6546 = vld [vmem:[#allocation3 + $0xe50] sm:$0xff]
    %v6547 = vld [vmem:[#allocation3 + $0xe58] sm:$0xff]
    %v6548 = vld [vmem:[#allocation3 + $0xe60] sm:$0xff]
    %v6549 = vld [vmem:[#allocation3 + $0xe68] sm:$0xff]
    %v6550 = vld [vmem:[#allocation3 + $0xe70] sm:$0xff]
    %v6551 = vld [vmem:[#allocation3 + $0xe78] sm:$0xff]
    %v6552 = vld [vmem:[#allocation3 + $0xe80] sm:$0xff]
    %v6553 = vld [vmem:[#allocation3 + $0xe88] sm:$0xff]
    %v6554 = vld [vmem:[#allocation3 + $0xe90] sm:$0xff]
    %v6555 = vld [vmem:[#allocation3 + $0xe98] sm:$0xff]
    %v6556 = vld [vmem:[#allocation3 + $0xea0] sm:$0xff]
    %v6557 = vld [vmem:[#allocation3 + $0xea8] sm:$0xff]
    %v6558 = vld [vmem:[#allocation3 + $0xeb0] sm:$0xff]
    %v6559 = vld [vmem:[#allocation3 + $0xeb8] sm:$0xff]
    %v6560 = vld [vmem:[#allocation3 + $0xec0] sm:$0xff]
    %v6561 = vld [vmem:[#allocation3 + $0xec8] sm:$0xff]
    %v6562 = vld [vmem:[#allocation3 + $0xed0] sm:$0xff]
    %v6563 = vld [vmem:[#allocation3 + $0xed8] sm:$0xff]
    %v6564 = vld [vmem:[#allocation3 + $0xee0] sm:$0xff]
    %v6565 = vld [vmem:[#allocation3 + $0xee8] sm:$0xff]
    %v6566 = vld [vmem:[#allocation3 + $0xef0] sm:$0xff]
    %v6567 = vld [vmem:[#allocation3 + $0xef8] sm:$0xff]
    %v6568 = vld [vmem:[#allocation3 + $0xf00] sm:$0xff]
    %v6569 = vld [vmem:[#allocation3 + $0xf08] sm:$0xff]
    %v6570 = vld [vmem:[#allocation3 + $0xf10] sm:$0xff]
    %v6571 = vld [vmem:[#allocation3 + $0xf18] sm:$0xff]
    %v6572 = vld [vmem:[#allocation3 + $0xf20] sm:$0xff]
    %v6573 = vld [vmem:[#allocation3 + $0xf28] sm:$0xff]
    %v6574 = vld [vmem:[#allocation3 + $0xf30] sm:$0xff]
    %v6575 = vld [vmem:[#allocation3 + $0xf38] sm:$0xff]
    %v6576 = vld [vmem:[#allocation3 + $0xf40] sm:$0xff]
    %v6577 = vld [vmem:[#allocation3 + $0xf48] sm:$0xff]
    %v6578 = vld [vmem:[#allocation3 + $0xf50] sm:$0xff]
    %v6579 = vld [vmem:[#allocation3 + $0xf58] sm:$0xff]
    %v6580 = vld [vmem:[#allocation3 + $0xf60] sm:$0xff]
    %v6581 = vld [vmem:[#allocation3 + $0xf68] sm:$0xff]
    %v6582 = vld [vmem:[#allocation3 + $0xf70] sm:$0xff]
    %v6583 = vld [vmem:[#allocation3 + $0xf78] sm:$0xff]
    %v6584 = vld [vmem:[#allocation3 + $0xf80] sm:$0xff]
    %v6585 = vld [vmem:[#allocation3 + $0xf88] sm:$0xff]
    %v6586 = vld [vmem:[#allocation3 + $0xf90] sm:$0xff]
    %v6587 = vld [vmem:[#allocation3 + $0xf98] sm:$0xff]
    %v6588 = vld [vmem:[#allocation3 + $0xfa0] sm:$0xff]
    %v6589 = vld [vmem:[#allocation3 + $0xfa8] sm:$0xff]
    %v6590 = vld [vmem:[#allocation3 + $0xfb0] sm:$0xff]
    %v6591 = vld [vmem:[#allocation3 + $0xfb8] sm:$0xff]
    %v6592 = vld [vmem:[#allocation3 + $0xfc0] sm:$0xff]
    %v6593 = vld [vmem:[#allocation3 + $0xfc8] sm:$0xff]
    %v6594 = vld [vmem:[#allocation3 + $0xfd0] sm:$0xff]
    %v6595 = vld [vmem:[#allocation3 + $0xfd8] sm:$0xff]
    %v6596 = vld [vmem:[#allocation3 + $0xfe0] sm:$0xff]
    %v6597 = vld [vmem:[#allocation3 + $0xfe8] sm:$0xff]
    %v6598 = vld [vmem:[#allocation3 + $0xff0] sm:$0xff]
    %v6599 = vld [vmem:[#allocation3 + $0xff8] sm:$0xff]
    %v6600 = vpack.c.bf16 %v5574, %v5572
    %v6601 = vpack.c.bf16 %v5575, %v5573
    %v6602 = vpack.c.bf16 %v5578, %v5576
    %v6603 = vpack.c.bf16 %v5579, %v5577
    %v6604 = vpack.c.bf16 %v5582, %v5580
    %v6605 = vpack.c.bf16 %v5583, %v5581
    %v6606 = vpack.c.bf16 %v5586, %v5584
    %v6607 = vpack.c.bf16 %v5587, %v5585
    %v6608 = vpack.c.bf16 %v5590, %v5588
    %v6609 = vpack.c.bf16 %v5591, %v5589
    %v6610 = vpack.c.bf16 %v5594, %v5592
    %v6611 = vpack.c.bf16 %v5595, %v5593
    %v6612 = vpack.c.bf16 %v5598, %v5596
    %v6613 = vpack.c.bf16 %v5599, %v5597
    %v6614 = vpack.c.bf16 %v5602, %v5600
    %v6615 = vpack.c.bf16 %v5603, %v5601
    %v6616 = vpack.c.bf16 %v5606, %v5604
    %v6617 = vpack.c.bf16 %v5607, %v5605
    %v6618 = vpack.c.bf16 %v5610, %v5608
    %v6619 = vpack.c.bf16 %v5611, %v5609
    %v6620 = vpack.c.bf16 %v5614, %v5612
    %v6621 = vpack.c.bf16 %v5615, %v5613
    %v6622 = vpack.c.bf16 %v5618, %v5616
    %v6623 = vpack.c.bf16 %v5619, %v5617
    %v6624 = vpack.c.bf16 %v5622, %v5620
    %v6625 = vpack.c.bf16 %v5623, %v5621
    %v6626 = vpack.c.bf16 %v5626, %v5624
    %v6627 = vpack.c.bf16 %v5627, %v5625
    %v6628 = vpack.c.bf16 %v5630, %v5628
    %v6629 = vpack.c.bf16 %v5631, %v5629
    %v6630 = vpack.c.bf16 %v5634, %v5632
    %v6631 = vpack.c.bf16 %v5635, %v5633
    %v6632 = vpack.c.bf16 %v5638, %v5636
    %v6633 = vpack.c.bf16 %v5639, %v5637
    %v6634 = vpack.c.bf16 %v5642, %v5640
    %v6635 = vpack.c.bf16 %v5643, %v5641
    %v6636 = vpack.c.bf16 %v5646, %v5644
    %v6637 = vpack.c.bf16 %v5647, %v5645
    %v6638 = vpack.c.bf16 %v5650, %v5648
    %v6639 = vpack.c.bf16 %v5651, %v5649
    %v6640 = vpack.c.bf16 %v5654, %v5652
    %v6641 = vpack.c.bf16 %v5655, %v5653
    %v6642 = vpack.c.bf16 %v5658, %v5656
    %v6643 = vpack.c.bf16 %v5659, %v5657
    %v6644 = vpack.c.bf16 %v5662, %v5660
    %v6645 = vpack.c.bf16 %v5663, %v5661
    %v6646 = vpack.c.bf16 %v5666, %v5664
    %v6647 = vpack.c.bf16 %v5667, %v5665
    %v6648 = vpack.c.bf16 %v5670, %v5668
    %v6649 = vpack.c.bf16 %v5671, %v5669
    %v6650 = vpack.c.bf16 %v5674, %v5672
    %v6651 = vpack.c.bf16 %v5675, %v5673
    %v6652 = vpack.c.bf16 %v5678, %v5676
    %v6653 = vpack.c.bf16 %v5679, %v5677
    %v6654 = vpack.c.bf16 %v5682, %v5680
    %v6655 = vpack.c.bf16 %v5683, %v5681
    %v6656 = vpack.c.bf16 %v5686, %v5684
    %v6657 = vpack.c.bf16 %v5687, %v5685
    %v6658 = vpack.c.bf16 %v5690, %v5688
    %v6659 = vpack.c.bf16 %v5691, %v5689
    %v6660 = vpack.c.bf16 %v5694, %v5692
    %v6661 = vpack.c.bf16 %v5695, %v5693
    %v6662 = vpack.c.bf16 %v5698, %v5696
    %v6663 = vpack.c.bf16 %v5699, %v5697
    %v6664 = vpack.c.bf16 %v5702, %v5700
    %v6665 = vpack.c.bf16 %v5703, %v5701
    %v6666 = vpack.c.bf16 %v5706, %v5704
    %v6667 = vpack.c.bf16 %v5707, %v5705
    %v6668 = vpack.c.bf16 %v5710, %v5708
    %v6669 = vpack.c.bf16 %v5711, %v5709
    %v6670 = vpack.c.bf16 %v5714, %v5712
    %v6671 = vpack.c.bf16 %v5715, %v5713
    %v6672 = vpack.c.bf16 %v5718, %v5716
    %v6673 = vpack.c.bf16 %v5719, %v5717
    %v6674 = vpack.c.bf16 %v5722, %v5720
    %v6675 = vpack.c.bf16 %v5723, %v5721
    %v6676 = vpack.c.bf16 %v5726, %v5724
    %v6677 = vpack.c.bf16 %v5727, %v5725
    %v6678 = vpack.c.bf16 %v5730, %v5728
    %v6679 = vpack.c.bf16 %v5731, %v5729
    %v6680 = vpack.c.bf16 %v5734, %v5732
    %v6681 = vpack.c.bf16 %v5735, %v5733
    %v6682 = vpack.c.bf16 %v5738, %v5736
    %v6683 = vpack.c.bf16 %v5739, %v5737
    %v6684 = vpack.c.bf16 %v5742, %v5740
    %v6685 = vpack.c.bf16 %v5743, %v5741
    %v6686 = vpack.c.bf16 %v5746, %v5744
    %v6687 = vpack.c.bf16 %v5747, %v5745
    %v6688 = vpack.c.bf16 %v5750, %v5748
    %v6689 = vpack.c.bf16 %v5751, %v5749
    %v6690 = vpack.c.bf16 %v5754, %v5752
    %v6691 = vpack.c.bf16 %v5755, %v5753
    %v6692 = vpack.c.bf16 %v5758, %v5756
    %v6693 = vpack.c.bf16 %v5759, %v5757
    %v6694 = vpack.c.bf16 %v5762, %v5760
    %v6695 = vpack.c.bf16 %v5763, %v5761
    %v6696 = vpack.c.bf16 %v5766, %v5764
    %v6697 = vpack.c.bf16 %v5767, %v5765
    %v6698 = vpack.c.bf16 %v5770, %v5768
    %v6699 = vpack.c.bf16 %v5771, %v5769
    %v6700 = vpack.c.bf16 %v5774, %v5772
    %v6701 = vpack.c.bf16 %v5775, %v5773
    %v6702 = vpack.c.bf16 %v5778, %v5776
    %v6703 = vpack.c.bf16 %v5779, %v5777
    %v6704 = vpack.c.bf16 %v5782, %v5780
    %v6705 = vpack.c.bf16 %v5783, %v5781
    %v6706 = vpack.c.bf16 %v5786, %v5784
    %v6707 = vpack.c.bf16 %v5787, %v5785
    %v6708 = vpack.c.bf16 %v5790, %v5788
    %v6709 = vpack.c.bf16 %v5791, %v5789
    %v6710 = vpack.c.bf16 %v5794, %v5792
    %v6711 = vpack.c.bf16 %v5795, %v5793
    %v6712 = vpack.c.bf16 %v5798, %v5796
    %v6713 = vpack.c.bf16 %v5799, %v5797
    %v6714 = vpack.c.bf16 %v5802, %v5800
    %v6715 = vpack.c.bf16 %v5803, %v5801
    %v6716 = vpack.c.bf16 %v5806, %v5804
    %v6717 = vpack.c.bf16 %v5807, %v5805
    %v6718 = vpack.c.bf16 %v5810, %v5808
    %v6719 = vpack.c.bf16 %v5811, %v5809
    %v6720 = vpack.c.bf16 %v5814, %v5812
    %v6721 = vpack.c.bf16 %v5815, %v5813
    %v6722 = vpack.c.bf16 %v5818, %v5816
    %v6723 = vpack.c.bf16 %v5819, %v5817
    %v6724 = vpack.c.bf16 %v5822, %v5820
    %v6725 = vpack.c.bf16 %v5823, %v5821
    %v6726 = vpack.c.bf16 %v5826, %v5824
    %v6727 = vpack.c.bf16 %v5827, %v5825
    %v6728 = vpack.c.bf16 %v5830, %v5828
    %v6729 = vpack.c.bf16 %v5831, %v5829
    %v6730 = vpack.c.bf16 %v5834, %v5832
    %v6731 = vpack.c.bf16 %v5835, %v5833
    %v6732 = vpack.c.bf16 %v5838, %v5836
    %v6733 = vpack.c.bf16 %v5839, %v5837
    %v6734 = vpack.c.bf16 %v5842, %v5840
    %v6735 = vpack.c.bf16 %v5843, %v5841
    %v6736 = vpack.c.bf16 %v5846, %v5844
    %v6737 = vpack.c.bf16 %v5847, %v5845
    %v6738 = vpack.c.bf16 %v5850, %v5848
    %v6739 = vpack.c.bf16 %v5851, %v5849
    %v6740 = vpack.c.bf16 %v5854, %v5852
    %v6741 = vpack.c.bf16 %v5855, %v5853
    %v6742 = vpack.c.bf16 %v5858, %v5856
    %v6743 = vpack.c.bf16 %v5859, %v5857
    %v6744 = vpack.c.bf16 %v5862, %v5860
    %v6745 = vpack.c.bf16 %v5863, %v5861
    %v6746 = vpack.c.bf16 %v5866, %v5864
    %v6747 = vpack.c.bf16 %v5867, %v5865
    %v6748 = vpack.c.bf16 %v5870, %v5868
    %v6749 = vpack.c.bf16 %v5871, %v5869
    %v6750 = vpack.c.bf16 %v5874, %v5872
    %v6751 = vpack.c.bf16 %v5875, %v5873
    %v6752 = vpack.c.bf16 %v5878, %v5876
    %v6753 = vpack.c.bf16 %v5879, %v5877
    %v6754 = vpack.c.bf16 %v5882, %v5880
    %v6755 = vpack.c.bf16 %v5883, %v5881
    %v6756 = vpack.c.bf16 %v5886, %v5884
    %v6757 = vpack.c.bf16 %v5887, %v5885
    %v6758 = vpack.c.bf16 %v5890, %v5888
    %v6759 = vpack.c.bf16 %v5891, %v5889
    %v6760 = vpack.c.bf16 %v5894, %v5892
    %v6761 = vpack.c.bf16 %v5895, %v5893
    %v6762 = vpack.c.bf16 %v5898, %v5896
    %v6763 = vpack.c.bf16 %v5899, %v5897
    %v6764 = vpack.c.bf16 %v5902, %v5900
    %v6765 = vpack.c.bf16 %v5903, %v5901
    %v6766 = vpack.c.bf16 %v5906, %v5904
    %v6767 = vpack.c.bf16 %v5907, %v5905
    %v6768 = vpack.c.bf16 %v5910, %v5908
    %v6769 = vpack.c.bf16 %v5911, %v5909
    %v6770 = vpack.c.bf16 %v5914, %v5912
    %v6771 = vpack.c.bf16 %v5915, %v5913
    %v6772 = vpack.c.bf16 %v5918, %v5916
    %v6773 = vpack.c.bf16 %v5919, %v5917
    %v6774 = vpack.c.bf16 %v5922, %v5920
    %v6775 = vpack.c.bf16 %v5923, %v5921
    %v6776 = vpack.c.bf16 %v5926, %v5924
    %v6777 = vpack.c.bf16 %v5927, %v5925
    %v6778 = vpack.c.bf16 %v5930, %v5928
    %v6779 = vpack.c.bf16 %v5931, %v5929
    %v6780 = vpack.c.bf16 %v5934, %v5932
    %v6781 = vpack.c.bf16 %v5935, %v5933
    %v6782 = vpack.c.bf16 %v5938, %v5936
    %v6783 = vpack.c.bf16 %v5939, %v5937
    %v6784 = vpack.c.bf16 %v5942, %v5940
    %v6785 = vpack.c.bf16 %v5943, %v5941
    %v6786 = vpack.c.bf16 %v5946, %v5944
    %v6787 = vpack.c.bf16 %v5947, %v5945
    %v6788 = vpack.c.bf16 %v5950, %v5948
    %v6789 = vpack.c.bf16 %v5951, %v5949
    %v6790 = vpack.c.bf16 %v5954, %v5952
    %v6791 = vpack.c.bf16 %v5955, %v5953
    %v6792 = vpack.c.bf16 %v5958, %v5956
    %v6793 = vpack.c.bf16 %v5959, %v5957
    %v6794 = vpack.c.bf16 %v5962, %v5960
    %v6795 = vpack.c.bf16 %v5963, %v5961
    %v6796 = vpack.c.bf16 %v5966, %v5964
    %v6797 = vpack.c.bf16 %v5967, %v5965
    %v6798 = vpack.c.bf16 %v5970, %v5968
    %v6799 = vpack.c.bf16 %v5971, %v5969
    %v6800 = vpack.c.bf16 %v5974, %v5972
    %v6801 = vpack.c.bf16 %v5975, %v5973
    %v6802 = vpack.c.bf16 %v5978, %v5976
    %v6803 = vpack.c.bf16 %v5979, %v5977
    %v6804 = vpack.c.bf16 %v5982, %v5980
    %v6805 = vpack.c.bf16 %v5983, %v5981
    %v6806 = vpack.c.bf16 %v5986, %v5984
    %v6807 = vpack.c.bf16 %v5987, %v5985
    %v6808 = vpack.c.bf16 %v5990, %v5988
    %v6809 = vpack.c.bf16 %v5991, %v5989
    %v6810 = vpack.c.bf16 %v5994, %v5992
    %v6811 = vpack.c.bf16 %v5995, %v5993
    %v6812 = vpack.c.bf16 %v5998, %v5996
    %v6813 = vpack.c.bf16 %v5999, %v5997
    %v6814 = vpack.c.bf16 %v6002, %v6000
    %v6815 = vpack.c.bf16 %v6003, %v6001
    %v6816 = vpack.c.bf16 %v6006, %v6004
    %v6817 = vpack.c.bf16 %v6007, %v6005
    %v6818 = vpack.c.bf16 %v6010, %v6008
    %v6819 = vpack.c.bf16 %v6011, %v6009
    %v6820 = vpack.c.bf16 %v6014, %v6012
    %v6821 = vpack.c.bf16 %v6015, %v6013
    %v6822 = vpack.c.bf16 %v6018, %v6016
    %v6823 = vpack.c.bf16 %v6019, %v6017
    %v6824 = vpack.c.bf16 %v6022, %v6020
    %v6825 = vpack.c.bf16 %v6023, %v6021
    %v6826 = vpack.c.bf16 %v6026, %v6024
    %v6827 = vpack.c.bf16 %v6027, %v6025
    %v6828 = vpack.c.bf16 %v6030, %v6028
    %v6829 = vpack.c.bf16 %v6031, %v6029
    %v6830 = vpack.c.bf16 %v6034, %v6032
    %v6831 = vpack.c.bf16 %v6035, %v6033
    %v6832 = vpack.c.bf16 %v6038, %v6036
    %v6833 = vpack.c.bf16 %v6039, %v6037
    %v6834 = vpack.c.bf16 %v6042, %v6040
    %v6835 = vpack.c.bf16 %v6043, %v6041
    %v6836 = vpack.c.bf16 %v6046, %v6044
    %v6837 = vpack.c.bf16 %v6047, %v6045
    %v6838 = vpack.c.bf16 %v6050, %v6048
    %v6839 = vpack.c.bf16 %v6051, %v6049
    %v6840 = vpack.c.bf16 %v6054, %v6052
    %v6841 = vpack.c.bf16 %v6055, %v6053
    %v6842 = vpack.c.bf16 %v6058, %v6056
    %v6843 = vpack.c.bf16 %v6059, %v6057
    %v6844 = vpack.c.bf16 %v6062, %v6060
    %v6845 = vpack.c.bf16 %v6063, %v6061
    %v6846 = vpack.c.bf16 %v6066, %v6064
    %v6847 = vpack.c.bf16 %v6067, %v6065
    %v6848 = vpack.c.bf16 %v6070, %v6068
    %v6849 = vpack.c.bf16 %v6071, %v6069
    %v6850 = vpack.c.bf16 %v6074, %v6072
    %v6851 = vpack.c.bf16 %v6075, %v6073
    %v6852 = vpack.c.bf16 %v6078, %v6076
    %v6853 = vpack.c.bf16 %v6079, %v6077
    %v6854 = vpack.c.bf16 %v6082, %v6080
    %v6855 = vpack.c.bf16 %v6083, %v6081
    %v6856 = vld [vmem:[%s11] sm:$0xff]
    %v6857 = vld [vmem:[%s11 + $0x8] sm:$0xff]
    %v6858 = vld [vmem:[%s11 + $0x10] sm:$0xff]
    %v6859 = vld [vmem:[%s11 + $0x18] sm:$0xff]
    %v6860 = vld [vmem:[%s11 + $0x20] sm:$0xff]
    %v6861 = vld [vmem:[%s11 + $0x28] sm:$0xff]
    %v6862 = vld [vmem:[%s11 + $0x30] sm:$0xff]
    %v6863 = vld [vmem:[%s11 + $0x38] sm:$0xff]
    %v6864 = vld [vmem:[%s11 + $0x40] sm:$0xff]
    %v6865 = vld [vmem:[%s11 + $0x48] sm:$0xff]
    %v6866 = vld [vmem:[%s11 + $0x50] sm:$0xff]
    %v6867 = vld [vmem:[%s11 + $0x58] sm:$0xff]
    %v6868 = vld [vmem:[%s11 + $0x60] sm:$0xff]
    %v6869 = vld [vmem:[%s11 + $0x68] sm:$0xff]
    %v6870 = vld [vmem:[%s11 + $0x70] sm:$0xff]
    %v6871 = vld [vmem:[%s11 + $0x78] sm:$0xff]
    %v6872 = vld [vmem:[%s11 + $0x80] sm:$0xff]
    %v6873 = vld [vmem:[%s11 + $0x88] sm:$0xff]
    %v6874 = vld [vmem:[%s11 + $0x90] sm:$0xff]
    %v6875 = vld [vmem:[%s11 + $0x98] sm:$0xff]
    %v6876 = vld [vmem:[%s11 + $0xa0] sm:$0xff]
    %v6877 = vld [vmem:[%s11 + $0xa8] sm:$0xff]
    %v6878 = vld [vmem:[%s11 + $0xb0] sm:$0xff]
    %v6879 = vld [vmem:[%s11 + $0xb8] sm:$0xff]
    %v6880 = vld [vmem:[%s11 + $0xc0] sm:$0xff]
    %v6881 = vld [vmem:[%s11 + $0xc8] sm:$0xff]
    %v6882 = vld [vmem:[%s11 + $0xd0] sm:$0xff]
    %v6883 = vld [vmem:[%s11 + $0xd8] sm:$0xff]
    %v6884 = vld [vmem:[%s11 + $0xe0] sm:$0xff]
    %v6885 = vld [vmem:[%s11 + $0xe8] sm:$0xff]
    %v6886 = vld [vmem:[%s11 + $0xf0] sm:$0xff]
    %v6887 = vld [vmem:[%s11 + $0xf8] sm:$0xff]
    %v6888 = vld [vmem:[%s11 + $0x100] sm:$0xff]
    %v6889 = vld [vmem:[%s11 + $0x108] sm:$0xff]
    %v6890 = vld [vmem:[%s11 + $0x110] sm:$0xff]
    %v6891 = vld [vmem:[%s11 + $0x118] sm:$0xff]
    %v6892 = vld [vmem:[%s11 + $0x120] sm:$0xff]
    %v6893 = vld [vmem:[%s11 + $0x128] sm:$0xff]
    %v6894 = vld [vmem:[%s11 + $0x130] sm:$0xff]
    %v6895 = vld [vmem:[%s11 + $0x138] sm:$0xff]
    %v6896 = vld [vmem:[%s11 + $0x140] sm:$0xff]
    %v6897 = vld [vmem:[%s11 + $0x148] sm:$0xff]
    %v6898 = vld [vmem:[%s11 + $0x150] sm:$0xff]
    %v6899 = vld [vmem:[%s11 + $0x158] sm:$0xff]
    %v6900 = vld [vmem:[%s11 + $0x160] sm:$0xff]
    %v6901 = vld [vmem:[%s11 + $0x168] sm:$0xff]
    %v6902 = vld [vmem:[%s11 + $0x170] sm:$0xff]
    %v6903 = vld [vmem:[%s11 + $0x178] sm:$0xff]
    %v6904 = vld [vmem:[%s11 + $0x180] sm:$0xff]
    %v6905 = vld [vmem:[%s11 + $0x188] sm:$0xff]
    %v6906 = vld [vmem:[%s11 + $0x190] sm:$0xff]
    %v6907 = vld [vmem:[%s11 + $0x198] sm:$0xff]
    %v6908 = vld [vmem:[%s11 + $0x1a0] sm:$0xff]
    %v6909 = vld [vmem:[%s11 + $0x1a8] sm:$0xff]
    %v6910 = vld [vmem:[%s11 + $0x1b0] sm:$0xff]
    %v6911 = vld [vmem:[%s11 + $0x1b8] sm:$0xff]
    %v6912 = vld [vmem:[%s11 + $0x1c0] sm:$0xff]
    %v6913 = vld [vmem:[%s11 + $0x1c8] sm:$0xff]
    %v6914 = vld [vmem:[%s11 + $0x1d0] sm:$0xff]
    %v6915 = vld [vmem:[%s11 + $0x1d8] sm:$0xff]
    %v6916 = vld [vmem:[%s11 + $0x1e0] sm:$0xff]
    %v6917 = vld [vmem:[%s11 + $0x1e8] sm:$0xff]
    %v6918 = vld [vmem:[%s11 + $0x1f0] sm:$0xff]
    %v6919 = vld [vmem:[%s11 + $0x1f8] sm:$0xff]
    %6921 = vset.pattern.permute.xlu0 0
    %6922 = vperm.xlu0 %6921, %v6856
    %v6923 = vpop.permute.xlu0 %6922
    %6926 = vset.pattern.permute.xlu0 0
    %6927 = vperm.xlu0 %6926, %v6857
    %v6928 = vpop.permute.xlu0 %6927
    %6931 = vset.pattern.permute.xlu0 0
    %6932 = vperm.xlu0 %6931, %v6858
    %v6933 = vpop.permute.xlu0 %6932
    %6936 = vset.pattern.permute.xlu0 0
    %6937 = vperm.xlu0 %6936, %v6859
    %v6938 = vpop.permute.xlu0 %6937
    %6941 = vset.pattern.permute.xlu0 0
    %6942 = vperm.xlu0 %6941, %v6860
    %v6943 = vpop.permute.xlu0 %6942
    %6946 = vset.pattern.permute.xlu0 0
    %6947 = vperm.xlu0 %6946, %v6861
    %v6948 = vpop.permute.xlu0 %6947
    %6951 = vset.pattern.permute.xlu0 0
    %6952 = vperm.xlu0 %6951, %v6862
    %v6953 = vpop.permute.xlu0 %6952
    %6956 = vset.pattern.permute.xlu0 0
    %6957 = vperm.xlu0 %6956, %v6863
    %v6958 = vpop.permute.xlu0 %6957
    %6961 = vset.pattern.permute.xlu0 0
    %6962 = vperm.xlu0 %6961, %v6864
    %v6963 = vpop.permute.xlu0 %6962
    %6966 = vset.pattern.permute.xlu0 0
    %6967 = vperm.xlu0 %6966, %v6865
    %v6968 = vpop.permute.xlu0 %6967
    %6971 = vset.pattern.permute.xlu0 0
    %6972 = vperm.xlu0 %6971, %v6866
    %v6973 = vpop.permute.xlu0 %6972
    %6976 = vset.pattern.permute.xlu0 0
    %6977 = vperm.xlu0 %6976, %v6867
    %v6978 = vpop.permute.xlu0 %6977
    %6981 = vset.pattern.permute.xlu0 0
    %6982 = vperm.xlu0 %6981, %v6868
    %v6983 = vpop.permute.xlu0 %6982
    %6986 = vset.pattern.permute.xlu0 0
    %6987 = vperm.xlu0 %6986, %v6869
    %v6988 = vpop.permute.xlu0 %6987
    %6991 = vset.pattern.permute.xlu0 0
    %6992 = vperm.xlu0 %6991, %v6870
    %v6993 = vpop.permute.xlu0 %6992
    %6996 = vset.pattern.permute.xlu0 0
    %6997 = vperm.xlu0 %6996, %v6871
    %v6998 = vpop.permute.xlu0 %6997
    %7001 = vset.pattern.permute.xlu0 0
    %7002 = vperm.xlu0 %7001, %v6872
    %v7003 = vpop.permute.xlu0 %7002
    %7006 = vset.pattern.permute.xlu0 0
    %7007 = vperm.xlu0 %7006, %v6873
    %v7008 = vpop.permute.xlu0 %7007
    %7011 = vset.pattern.permute.xlu0 0
    %7012 = vperm.xlu0 %7011, %v6874
    %v7013 = vpop.permute.xlu0 %7012
    %7016 = vset.pattern.permute.xlu0 0
    %7017 = vperm.xlu0 %7016, %v6875
    %v7018 = vpop.permute.xlu0 %7017
    %7021 = vset.pattern.permute.xlu0 0
    %7022 = vperm.xlu0 %7021, %v6876
    %v7023 = vpop.permute.xlu0 %7022
    %7026 = vset.pattern.permute.xlu0 0
    %7027 = vperm.xlu0 %7026, %v6877
    %v7028 = vpop.permute.xlu0 %7027
    %7031 = vset.pattern.permute.xlu0 0
    %7032 = vperm.xlu0 %7031, %v6878
    %v7033 = vpop.permute.xlu0 %7032
    %7036 = vset.pattern.permute.xlu0 0
    %7037 = vperm.xlu0 %7036, %v6879
    %v7038 = vpop.permute.xlu0 %7037
    %7041 = vset.pattern.permute.xlu0 0
    %7042 = vperm.xlu0 %7041, %v6880
    %v7043 = vpop.permute.xlu0 %7042
    %7046 = vset.pattern.permute.xlu0 0
    %7047 = vperm.xlu0 %7046, %v6881
    %v7048 = vpop.permute.xlu0 %7047
    %7051 = vset.pattern.permute.xlu0 0
    %7052 = vperm.xlu0 %7051, %v6882
    %v7053 = vpop.permute.xlu0 %7052
    %7056 = vset.pattern.permute.xlu0 0
    %7057 = vperm.xlu0 %7056, %v6883
    %v7058 = vpop.permute.xlu0 %7057
    %7061 = vset.pattern.permute.xlu0 0
    %7062 = vperm.xlu0 %7061, %v6884
    %v7063 = vpop.permute.xlu0 %7062
    %7066 = vset.pattern.permute.xlu0 0
    %7067 = vperm.xlu0 %7066, %v6885
    %v7068 = vpop.permute.xlu0 %7067
    %7071 = vset.pattern.permute.xlu0 0
    %7072 = vperm.xlu0 %7071, %v6886
    %v7073 = vpop.permute.xlu0 %7072
    %7076 = vset.pattern.permute.xlu0 0
    %7077 = vperm.xlu0 %7076, %v6887
    %v7078 = vpop.permute.xlu0 %7077
    %7081 = vset.pattern.permute.xlu0 0
    %7082 = vperm.xlu0 %7081, %v6888
    %v7083 = vpop.permute.xlu0 %7082
    %7086 = vset.pattern.permute.xlu0 0
    %7087 = vperm.xlu0 %7086, %v6889
    %v7088 = vpop.permute.xlu0 %7087
    %7091 = vset.pattern.permute.xlu0 0
    %7092 = vperm.xlu0 %7091, %v6890
    %v7093 = vpop.permute.xlu0 %7092
    %7096 = vset.pattern.permute.xlu0 0
    %7097 = vperm.xlu0 %7096, %v6891
    %v7098 = vpop.permute.xlu0 %7097
    %7101 = vset.pattern.permute.xlu0 0
    %7102 = vperm.xlu0 %7101, %v6892
    %v7103 = vpop.permute.xlu0 %7102
    %7106 = vset.pattern.permute.xlu0 0
    %7107 = vperm.xlu0 %7106, %v6893
    %v7108 = vpop.permute.xlu0 %7107
    %7111 = vset.pattern.permute.xlu0 0
    %7112 = vperm.xlu0 %7111, %v6894
    %v7113 = vpop.permute.xlu0 %7112
    %7116 = vset.pattern.permute.xlu0 0
    %7117 = vperm.xlu0 %7116, %v6895
    %v7118 = vpop.permute.xlu0 %7117
    %7121 = vset.pattern.permute.xlu0 0
    %7122 = vperm.xlu0 %7121, %v6896
    %v7123 = vpop.permute.xlu0 %7122
    %7126 = vset.pattern.permute.xlu0 0
    %7127 = vperm.xlu0 %7126, %v6897
    %v7128 = vpop.permute.xlu0 %7127
    %7131 = vset.pattern.permute.xlu0 0
    %7132 = vperm.xlu0 %7131, %v6898
    %v7133 = vpop.permute.xlu0 %7132
    %7136 = vset.pattern.permute.xlu0 0
    %7137 = vperm.xlu0 %7136, %v6899
    %v7138 = vpop.permute.xlu0 %7137
    %7141 = vset.pattern.permute.xlu0 0
    %7142 = vperm.xlu0 %7141, %v6900
    %v7143 = vpop.permute.xlu0 %7142
    %7146 = vset.pattern.permute.xlu0 0
    %7147 = vperm.xlu0 %7146, %v6901
    %v7148 = vpop.permute.xlu0 %7147
    %7151 = vset.pattern.permute.xlu0 0
    %7152 = vperm.xlu0 %7151, %v6902
    %v7153 = vpop.permute.xlu0 %7152
    %7156 = vset.pattern.permute.xlu0 0
    %7157 = vperm.xlu0 %7156, %v6903
    %v7158 = vpop.permute.xlu0 %7157
    %7161 = vset.pattern.permute.xlu0 0
    %7162 = vperm.xlu0 %7161, %v6904
    %v7163 = vpop.permute.xlu0 %7162
    %7166 = vset.pattern.permute.xlu0 0
    %7167 = vperm.xlu0 %7166, %v6905
    %v7168 = vpop.permute.xlu0 %7167
    %7171 = vset.pattern.permute.xlu0 0
    %7172 = vperm.xlu0 %7171, %v6906
    %v7173 = vpop.permute.xlu0 %7172
    %7176 = vset.pattern.permute.xlu0 0
    %7177 = vperm.xlu0 %7176, %v6907
    %v7178 = vpop.permute.xlu0 %7177
    %7181 = vset.pattern.permute.xlu0 0
    %7182 = vperm.xlu0 %7181, %v6908
    %v7183 = vpop.permute.xlu0 %7182
    %7186 = vset.pattern.permute.xlu0 0
    %7187 = vperm.xlu0 %7186, %v6909
    %v7188 = vpop.permute.xlu0 %7187
    %7191 = vset.pattern.permute.xlu0 0
    %7192 = vperm.xlu0 %7191, %v6910
    %v7193 = vpop.permute.xlu0 %7192
    %7196 = vset.pattern.permute.xlu0 0
    %7197 = vperm.xlu0 %7196, %v6911
    %v7198 = vpop.permute.xlu0 %7197
    %7201 = vset.pattern.permute.xlu0 0
    %7202 = vperm.xlu0 %7201, %v6912
    %v7203 = vpop.permute.xlu0 %7202
    %7206 = vset.pattern.permute.xlu0 0
    %7207 = vperm.xlu0 %7206, %v6913
    %v7208 = vpop.permute.xlu0 %7207
    %7211 = vset.pattern.permute.xlu0 0
    %7212 = vperm.xlu0 %7211, %v6914
    %v7213 = vpop.permute.xlu0 %7212
    %7216 = vset.pattern.permute.xlu0 0
    %7217 = vperm.xlu0 %7216, %v6915
    %v7218 = vpop.permute.xlu0 %7217
    %7221 = vset.pattern.permute.xlu0 0
    %7222 = vperm.xlu0 %7221, %v6916
    %v7223 = vpop.permute.xlu0 %7222
    %7226 = vset.pattern.permute.xlu0 0
    %7227 = vperm.xlu0 %7226, %v6917
    %v7228 = vpop.permute.xlu0 %7227
    %7231 = vset.pattern.permute.xlu0 0
    %7232 = vperm.xlu0 %7231, %v6918
    %v7233 = vpop.permute.xlu0 %7232
    %7236 = vset.pattern.permute.xlu0 0
    %7237 = vperm.xlu0 %7236, %v6919
    %v7238 = vpop.permute.xlu0 %7237
    %v7752 = vunpack.c.l.b16 %v6088
    %v7753 = vunpack.c.h.b16 %v6088
    %v7754 = vunpack.c.l.b16 %v6089
    %v7755 = vunpack.c.h.b16 %v6089
    %v7756 = vunpack.c.l.b16 %v6090
    %v7757 = vunpack.c.h.b16 %v6090
    %v7758 = vunpack.c.l.b16 %v6091
    %v7759 = vunpack.c.h.b16 %v6091
    %v7760 = vunpack.c.l.b16 %v6092
    %v7761 = vunpack.c.h.b16 %v6092
    %v7762 = vunpack.c.l.b16 %v6093
    %v7763 = vunpack.c.h.b16 %v6093
    %v7764 = vunpack.c.l.b16 %v6094
    %v7765 = vunpack.c.h.b16 %v6094
    %v7766 = vunpack.c.l.b16 %v6095
    %v7767 = vunpack.c.h.b16 %v6095
    %v7768 = vunpack.c.l.b16 %v6096
    %v7769 = vunpack.c.h.b16 %v6096
    %v7770 = vunpack.c.l.b16 %v6097
    %v7771 = vunpack.c.h.b16 %v6097
    %v7772 = vunpack.c.l.b16 %v6098
    %v7773 = vunpack.c.h.b16 %v6098
    %v7774 = vunpack.c.l.b16 %v6099
    %v7775 = vunpack.c.h.b16 %v6099
    %v7776 = vunpack.c.l.b16 %v6100
    %v7777 = vunpack.c.h.b16 %v6100
    %v7778 = vunpack.c.l.b16 %v6101
    %v7779 = vunpack.c.h.b16 %v6101
    %v7780 = vunpack.c.l.b16 %v6102
    %v7781 = vunpack.c.h.b16 %v6102
    %v7782 = vunpack.c.l.b16 %v6103
    %v7783 = vunpack.c.h.b16 %v6103
    %v7784 = vunpack.c.l.b16 %v6104
    %v7785 = vunpack.c.h.b16 %v6104
    %v7786 = vunpack.c.l.b16 %v6105
    %v7787 = vunpack.c.h.b16 %v6105
    %v7788 = vunpack.c.l.b16 %v6106
    %v7789 = vunpack.c.h.b16 %v6106
    %v7790 = vunpack.c.l.b16 %v6107
    %v7791 = vunpack.c.h.b16 %v6107
    %v7792 = vunpack.c.l.b16 %v6108
    %v7793 = vunpack.c.h.b16 %v6108
    %v7794 = vunpack.c.l.b16 %v6109
    %v7795 = vunpack.c.h.b16 %v6109
    %v7796 = vunpack.c.l.b16 %v6110
    %v7797 = vunpack.c.h.b16 %v6110
    %v7798 = vunpack.c.l.b16 %v6111
    %v7799 = vunpack.c.h.b16 %v6111
    %v7800 = vunpack.c.l.b16 %v6112
    %v7801 = vunpack.c.h.b16 %v6112
    %v7802 = vunpack.c.l.b16 %v6113
    %v7803 = vunpack.c.h.b16 %v6113
    %v7804 = vunpack.c.l.b16 %v6114
    %v7805 = vunpack.c.h.b16 %v6114
    %v7806 = vunpack.c.l.b16 %v6115
    %v7807 = vunpack.c.h.b16 %v6115
    %v7808 = vunpack.c.l.b16 %v6116
    %v7809 = vunpack.c.h.b16 %v6116
    %v7810 = vunpack.c.l.b16 %v6117
    %v7811 = vunpack.c.h.b16 %v6117
    %v7812 = vunpack.c.l.b16 %v6118
    %v7813 = vunpack.c.h.b16 %v6118
    %v7814 = vunpack.c.l.b16 %v6119
    %v7815 = vunpack.c.h.b16 %v6119
    %v7816 = vunpack.c.l.b16 %v6120
    %v7817 = vunpack.c.h.b16 %v6120
    %v7818 = vunpack.c.l.b16 %v6121
    %v7819 = vunpack.c.h.b16 %v6121
    %v7820 = vunpack.c.l.b16 %v6122
    %v7821 = vunpack.c.h.b16 %v6122
    %v7822 = vunpack.c.l.b16 %v6123
    %v7823 = vunpack.c.h.b16 %v6123
    %v7824 = vunpack.c.l.b16 %v6124
    %v7825 = vunpack.c.h.b16 %v6124
    %v7826 = vunpack.c.l.b16 %v6125
    %v7827 = vunpack.c.h.b16 %v6125
    %v7828 = vunpack.c.l.b16 %v6126
    %v7829 = vunpack.c.h.b16 %v6126
    %v7830 = vunpack.c.l.b16 %v6127
    %v7831 = vunpack.c.h.b16 %v6127
    %v7832 = vunpack.c.l.b16 %v6128
    %v7833 = vunpack.c.h.b16 %v6128
    %v7834 = vunpack.c.l.b16 %v6129
    %v7835 = vunpack.c.h.b16 %v6129
    %v7836 = vunpack.c.l.b16 %v6130
    %v7837 = vunpack.c.h.b16 %v6130
    %v7838 = vunpack.c.l.b16 %v6131
    %v7839 = vunpack.c.h.b16 %v6131
    %v7840 = vunpack.c.l.b16 %v6132
    %v7841 = vunpack.c.h.b16 %v6132
    %v7842 = vunpack.c.l.b16 %v6133
    %v7843 = vunpack.c.h.b16 %v6133
    %v7844 = vunpack.c.l.b16 %v6134
    %v7845 = vunpack.c.h.b16 %v6134
    %v7846 = vunpack.c.l.b16 %v6135
    %v7847 = vunpack.c.h.b16 %v6135
    %v7848 = vunpack.c.l.b16 %v6136
    %v7849 = vunpack.c.h.b16 %v6136
    %v7850 = vunpack.c.l.b16 %v6137
    %v7851 = vunpack.c.h.b16 %v6137
    %v7852 = vunpack.c.l.b16 %v6138
    %v7853 = vunpack.c.h.b16 %v6138
    %v7854 = vunpack.c.l.b16 %v6139
    %v7855 = vunpack.c.h.b16 %v6139
    %v7856 = vunpack.c.l.b16 %v6140
    %v7857 = vunpack.c.h.b16 %v6140
    %v7858 = vunpack.c.l.b16 %v6141
    %v7859 = vunpack.c.h.b16 %v6141
    %v7860 = vunpack.c.l.b16 %v6142
    %v7861 = vunpack.c.h.b16 %v6142
    %v7862 = vunpack.c.l.b16 %v6143
    %v7863 = vunpack.c.h.b16 %v6143
    %v7864 = vunpack.c.l.b16 %v6144
    %v7865 = vunpack.c.h.b16 %v6144
    %v7866 = vunpack.c.l.b16 %v6145
    %v7867 = vunpack.c.h.b16 %v6145
    %v7868 = vunpack.c.l.b16 %v6146
    %v7869 = vunpack.c.h.b16 %v6146
    %v7870 = vunpack.c.l.b16 %v6147
    %v7871 = vunpack.c.h.b16 %v6147
    %v7872 = vunpack.c.l.b16 %v6148
    %v7873 = vunpack.c.h.b16 %v6148
    %v7874 = vunpack.c.l.b16 %v6149
    %v7875 = vunpack.c.h.b16 %v6149
    %v7876 = vunpack.c.l.b16 %v6150
    %v7877 = vunpack.c.h.b16 %v6150
    %v7878 = vunpack.c.l.b16 %v6151
    %v7879 = vunpack.c.h.b16 %v6151
    %v7880 = vunpack.c.l.b16 %v6152
    %v7881 = vunpack.c.h.b16 %v6152
    %v7882 = vunpack.c.l.b16 %v6153
    %v7883 = vunpack.c.h.b16 %v6153
    %v7884 = vunpack.c.l.b16 %v6154
    %v7885 = vunpack.c.h.b16 %v6154
    %v7886 = vunpack.c.l.b16 %v6155
    %v7887 = vunpack.c.h.b16 %v6155
    %v7888 = vunpack.c.l.b16 %v6156
    %v7889 = vunpack.c.h.b16 %v6156
    %v7890 = vunpack.c.l.b16 %v6157
    %v7891 = vunpack.c.h.b16 %v6157
    %v7892 = vunpack.c.l.b16 %v6158
    %v7893 = vunpack.c.h.b16 %v6158
    %v7894 = vunpack.c.l.b16 %v6159
    %v7895 = vunpack.c.h.b16 %v6159
    %v7896 = vunpack.c.l.b16 %v6160
    %v7897 = vunpack.c.h.b16 %v6160
    %v7898 = vunpack.c.l.b16 %v6161
    %v7899 = vunpack.c.h.b16 %v6161
    %v7900 = vunpack.c.l.b16 %v6162
    %v7901 = vunpack.c.h.b16 %v6162
    %v7902 = vunpack.c.l.b16 %v6163
    %v7903 = vunpack.c.h.b16 %v6163
    %v7904 = vunpack.c.l.b16 %v6164
    %v7905 = vunpack.c.h.b16 %v6164
    %v7906 = vunpack.c.l.b16 %v6165
    %v7907 = vunpack.c.h.b16 %v6165
    %v7908 = vunpack.c.l.b16 %v6166
    %v7909 = vunpack.c.h.b16 %v6166
    %v7910 = vunpack.c.l.b16 %v6167
    %v7911 = vunpack.c.h.b16 %v6167
    %v7912 = vunpack.c.l.b16 %v6168
    %v7913 = vunpack.c.h.b16 %v6168
    %v7914 = vunpack.c.l.b16 %v6169
    %v7915 = vunpack.c.h.b16 %v6169
    %v7916 = vunpack.c.l.b16 %v6170
    %v7917 = vunpack.c.h.b16 %v6170
    %v7918 = vunpack.c.l.b16 %v6171
    %v7919 = vunpack.c.h.b16 %v6171
    %v7920 = vunpack.c.l.b16 %v6172
    %v7921 = vunpack.c.h.b16 %v6172
    %v7922 = vunpack.c.l.b16 %v6173
    %v7923 = vunpack.c.h.b16 %v6173
    %v7924 = vunpack.c.l.b16 %v6174
    %v7925 = vunpack.c.h.b16 %v6174
    %v7926 = vunpack.c.l.b16 %v6175
    %v7927 = vunpack.c.h.b16 %v6175
    %v7928 = vunpack.c.l.b16 %v6176
    %v7929 = vunpack.c.h.b16 %v6176
    %v7930 = vunpack.c.l.b16 %v6177
    %v7931 = vunpack.c.h.b16 %v6177
    %v7932 = vunpack.c.l.b16 %v6178
    %v7933 = vunpack.c.h.b16 %v6178
    %v7934 = vunpack.c.l.b16 %v6179
    %v7935 = vunpack.c.h.b16 %v6179
    %v7936 = vunpack.c.l.b16 %v6180
    %v7937 = vunpack.c.h.b16 %v6180
    %v7938 = vunpack.c.l.b16 %v6181
    %v7939 = vunpack.c.h.b16 %v6181
    %v7940 = vunpack.c.l.b16 %v6182
    %v7941 = vunpack.c.h.b16 %v6182
    %v7942 = vunpack.c.l.b16 %v6183
    %v7943 = vunpack.c.h.b16 %v6183
    %v7944 = vunpack.c.l.b16 %v6184
    %v7945 = vunpack.c.h.b16 %v6184
    %v7946 = vunpack.c.l.b16 %v6185
    %v7947 = vunpack.c.h.b16 %v6185
    %v7948 = vunpack.c.l.b16 %v6186
    %v7949 = vunpack.c.h.b16 %v6186
    %v7950 = vunpack.c.l.b16 %v6187
    %v7951 = vunpack.c.h.b16 %v6187
    %v7952 = vunpack.c.l.b16 %v6188
    %v7953 = vunpack.c.h.b16 %v6188
    %v7954 = vunpack.c.l.b16 %v6189
    %v7955 = vunpack.c.h.b16 %v6189
    %v7956 = vunpack.c.l.b16 %v6190
    %v7957 = vunpack.c.h.b16 %v6190
    %v7958 = vunpack.c.l.b16 %v6191
    %v7959 = vunpack.c.h.b16 %v6191
    %v7960 = vunpack.c.l.b16 %v6192
    %v7961 = vunpack.c.h.b16 %v6192
    %v7962 = vunpack.c.l.b16 %v6193
    %v7963 = vunpack.c.h.b16 %v6193
    %v7964 = vunpack.c.l.b16 %v6194
    %v7965 = vunpack.c.h.b16 %v6194
    %v7966 = vunpack.c.l.b16 %v6195
    %v7967 = vunpack.c.h.b16 %v6195
    %v7968 = vunpack.c.l.b16 %v6196
    %v7969 = vunpack.c.h.b16 %v6196
    %v7970 = vunpack.c.l.b16 %v6197
    %v7971 = vunpack.c.h.b16 %v6197
    %v7972 = vunpack.c.l.b16 %v6198
    %v7973 = vunpack.c.h.b16 %v6198
    %v7974 = vunpack.c.l.b16 %v6199
    %v7975 = vunpack.c.h.b16 %v6199
    %v7976 = vunpack.c.l.b16 %v6200
    %v7977 = vunpack.c.h.b16 %v6200
    %v7978 = vunpack.c.l.b16 %v6201
    %v7979 = vunpack.c.h.b16 %v6201
    %v7980 = vunpack.c.l.b16 %v6202
    %v7981 = vunpack.c.h.b16 %v6202
    %v7982 = vunpack.c.l.b16 %v6203
    %v7983 = vunpack.c.h.b16 %v6203
    %v7984 = vunpack.c.l.b16 %v6204
    %v7985 = vunpack.c.h.b16 %v6204
    %v7986 = vunpack.c.l.b16 %v6205
    %v7987 = vunpack.c.h.b16 %v6205
    %v7988 = vunpack.c.l.b16 %v6206
    %v7989 = vunpack.c.h.b16 %v6206
    %v7990 = vunpack.c.l.b16 %v6207
    %v7991 = vunpack.c.h.b16 %v6207
    %v7992 = vunpack.c.l.b16 %v6208
    %v7993 = vunpack.c.h.b16 %v6208
    %v7994 = vunpack.c.l.b16 %v6209
    %v7995 = vunpack.c.h.b16 %v6209
    %v7996 = vunpack.c.l.b16 %v6210
    %v7997 = vunpack.c.h.b16 %v6210
    %v7998 = vunpack.c.l.b16 %v6211
    %v7999 = vunpack.c.h.b16 %v6211
    %v8000 = vunpack.c.l.b16 %v6212
    %v8001 = vunpack.c.h.b16 %v6212
    %v8002 = vunpack.c.l.b16 %v6213
    %v8003 = vunpack.c.h.b16 %v6213
    %v8004 = vunpack.c.l.b16 %v6214
    %v8005 = vunpack.c.h.b16 %v6214
    %v8006 = vunpack.c.l.b16 %v6215
    %v8007 = vunpack.c.h.b16 %v6215
    %v8008 = vunpack.c.l.b16 %v6216
    %v8009 = vunpack.c.h.b16 %v6216
    %v8010 = vunpack.c.l.b16 %v6217
    %v8011 = vunpack.c.h.b16 %v6217
    %v8012 = vunpack.c.l.b16 %v6218
    %v8013 = vunpack.c.h.b16 %v6218
    %v8014 = vunpack.c.l.b16 %v6219
    %v8015 = vunpack.c.h.b16 %v6219
    %v8016 = vunpack.c.l.b16 %v6220
    %v8017 = vunpack.c.h.b16 %v6220
    %v8018 = vunpack.c.l.b16 %v6221
    %v8019 = vunpack.c.h.b16 %v6221
    %v8020 = vunpack.c.l.b16 %v6222
    %v8021 = vunpack.c.h.b16 %v6222
    %v8022 = vunpack.c.l.b16 %v6223
    %v8023 = vunpack.c.h.b16 %v6223
    %v8024 = vunpack.c.l.b16 %v6224
    %v8025 = vunpack.c.h.b16 %v6224
    %v8026 = vunpack.c.l.b16 %v6225
    %v8027 = vunpack.c.h.b16 %v6225
    %v8028 = vunpack.c.l.b16 %v6226
    %v8029 = vunpack.c.h.b16 %v6226
    %v8030 = vunpack.c.l.b16 %v6227
    %v8031 = vunpack.c.h.b16 %v6227
    %v8032 = vunpack.c.l.b16 %v6228
    %v8033 = vunpack.c.h.b16 %v6228
    %v8034 = vunpack.c.l.b16 %v6229
    %v8035 = vunpack.c.h.b16 %v6229
    %v8036 = vunpack.c.l.b16 %v6230
    %v8037 = vunpack.c.h.b16 %v6230
    %v8038 = vunpack.c.l.b16 %v6231
    %v8039 = vunpack.c.h.b16 %v6231
    %v8040 = vunpack.c.l.b16 %v6232
    %v8041 = vunpack.c.h.b16 %v6232
    %v8042 = vunpack.c.l.b16 %v6233
    %v8043 = vunpack.c.h.b16 %v6233
    %v8044 = vunpack.c.l.b16 %v6234
    %v8045 = vunpack.c.h.b16 %v6234
    %v8046 = vunpack.c.l.b16 %v6235
    %v8047 = vunpack.c.h.b16 %v6235
    %v8048 = vunpack.c.l.b16 %v6236
    %v8049 = vunpack.c.h.b16 %v6236
    %v8050 = vunpack.c.l.b16 %v6237
    %v8051 = vunpack.c.h.b16 %v6237
    %v8052 = vunpack.c.l.b16 %v6238
    %v8053 = vunpack.c.h.b16 %v6238
    %v8054 = vunpack.c.l.b16 %v6239
    %v8055 = vunpack.c.h.b16 %v6239
    %v8056 = vunpack.c.l.b16 %v6240
    %v8057 = vunpack.c.h.b16 %v6240
    %v8058 = vunpack.c.l.b16 %v6241
    %v8059 = vunpack.c.h.b16 %v6241
    %v8060 = vunpack.c.l.b16 %v6242
    %v8061 = vunpack.c.h.b16 %v6242
    %v8062 = vunpack.c.l.b16 %v6243
    %v8063 = vunpack.c.h.b16 %v6243
    %v8064 = vunpack.c.l.b16 %v6244
    %v8065 = vunpack.c.h.b16 %v6244
    %v8066 = vunpack.c.l.b16 %v6245
    %v8067 = vunpack.c.h.b16 %v6245
    %v8068 = vunpack.c.l.b16 %v6246
    %v8069 = vunpack.c.h.b16 %v6246
    %v8070 = vunpack.c.l.b16 %v6247
    %v8071 = vunpack.c.h.b16 %v6247
    %v8072 = vunpack.c.l.b16 %v6248
    %v8073 = vunpack.c.h.b16 %v6248
    %v8074 = vunpack.c.l.b16 %v6249
    %v8075 = vunpack.c.h.b16 %v6249
    %v8076 = vunpack.c.l.b16 %v6250
    %v8077 = vunpack.c.h.b16 %v6250
    %v8078 = vunpack.c.l.b16 %v6251
    %v8079 = vunpack.c.h.b16 %v6251
    %v8080 = vunpack.c.l.b16 %v6252
    %v8081 = vunpack.c.h.b16 %v6252
    %v8082 = vunpack.c.l.b16 %v6253
    %v8083 = vunpack.c.h.b16 %v6253
    %v8084 = vunpack.c.l.b16 %v6254
    %v8085 = vunpack.c.h.b16 %v6254
    %v8086 = vunpack.c.l.b16 %v6255
    %v8087 = vunpack.c.h.b16 %v6255
    %v8088 = vunpack.c.l.b16 %v6256
    %v8089 = vunpack.c.h.b16 %v6256
    %v8090 = vunpack.c.l.b16 %v6257
    %v8091 = vunpack.c.h.b16 %v6257
    %v8092 = vunpack.c.l.b16 %v6258
    %v8093 = vunpack.c.h.b16 %v6258
    %v8094 = vunpack.c.l.b16 %v6259
    %v8095 = vunpack.c.h.b16 %v6259
    %v8096 = vunpack.c.l.b16 %v6260
    %v8097 = vunpack.c.h.b16 %v6260
    %v8098 = vunpack.c.l.b16 %v6261
    %v8099 = vunpack.c.h.b16 %v6261
    %v8100 = vunpack.c.l.b16 %v6262
    %v8101 = vunpack.c.h.b16 %v6262
    %v8102 = vunpack.c.l.b16 %v6263
    %v8103 = vunpack.c.h.b16 %v6263
    %v8104 = vunpack.c.l.b16 %v6264
    %v8105 = vunpack.c.h.b16 %v6264
    %v8106 = vunpack.c.l.b16 %v6265
    %v8107 = vunpack.c.h.b16 %v6265
    %v8108 = vunpack.c.l.b16 %v6266
    %v8109 = vunpack.c.h.b16 %v6266
    %v8110 = vunpack.c.l.b16 %v6267
    %v8111 = vunpack.c.h.b16 %v6267
    %v8112 = vunpack.c.l.b16 %v6268
    %v8113 = vunpack.c.h.b16 %v6268
    %v8114 = vunpack.c.l.b16 %v6269
    %v8115 = vunpack.c.h.b16 %v6269
    %v8116 = vunpack.c.l.b16 %v6270
    %v8117 = vunpack.c.h.b16 %v6270
    %v8118 = vunpack.c.l.b16 %v6271
    %v8119 = vunpack.c.h.b16 %v6271
    %v8120 = vunpack.c.l.b16 %v6272
    %v8121 = vunpack.c.h.b16 %v6272
    %v8122 = vunpack.c.l.b16 %v6273
    %v8123 = vunpack.c.h.b16 %v6273
    %v8124 = vunpack.c.l.b16 %v6274
    %v8125 = vunpack.c.h.b16 %v6274
    %v8126 = vunpack.c.l.b16 %v6275
    %v8127 = vunpack.c.h.b16 %v6275
    %v8128 = vunpack.c.l.b16 %v6276
    %v8129 = vunpack.c.h.b16 %v6276
    %v8130 = vunpack.c.l.b16 %v6277
    %v8131 = vunpack.c.h.b16 %v6277
    %v8132 = vunpack.c.l.b16 %v6278
    %v8133 = vunpack.c.h.b16 %v6278
    %v8134 = vunpack.c.l.b16 %v6279
    %v8135 = vunpack.c.h.b16 %v6279
    %v8136 = vunpack.c.l.b16 %v6280
    %v8137 = vunpack.c.h.b16 %v6280
    %v8138 = vunpack.c.l.b16 %v6281
    %v8139 = vunpack.c.h.b16 %v6281
    %v8140 = vunpack.c.l.b16 %v6282
    %v8141 = vunpack.c.h.b16 %v6282
    %v8142 = vunpack.c.l.b16 %v6283
    %v8143 = vunpack.c.h.b16 %v6283
    %v8144 = vunpack.c.l.b16 %v6284
    %v8145 = vunpack.c.h.b16 %v6284
    %v8146 = vunpack.c.l.b16 %v6285
    %v8147 = vunpack.c.h.b16 %v6285
    %v8148 = vunpack.c.l.b16 %v6286
    %v8149 = vunpack.c.h.b16 %v6286
    %v8150 = vunpack.c.l.b16 %v6287
    %v8151 = vunpack.c.h.b16 %v6287
    %v8152 = vunpack.c.l.b16 %v6288
    %v8153 = vunpack.c.h.b16 %v6288
    %v8154 = vunpack.c.l.b16 %v6289
    %v8155 = vunpack.c.h.b16 %v6289
    %v8156 = vunpack.c.l.b16 %v6290
    %v8157 = vunpack.c.h.b16 %v6290
    %v8158 = vunpack.c.l.b16 %v6291
    %v8159 = vunpack.c.h.b16 %v6291
    %v8160 = vunpack.c.l.b16 %v6292
    %v8161 = vunpack.c.h.b16 %v6292
    %v8162 = vunpack.c.l.b16 %v6293
    %v8163 = vunpack.c.h.b16 %v6293
    %v8164 = vunpack.c.l.b16 %v6294
    %v8165 = vunpack.c.h.b16 %v6294
    %v8166 = vunpack.c.l.b16 %v6295
    %v8167 = vunpack.c.h.b16 %v6295
    %v8168 = vunpack.c.l.b16 %v6296
    %v8169 = vunpack.c.h.b16 %v6296
    %v8170 = vunpack.c.l.b16 %v6297
    %v8171 = vunpack.c.h.b16 %v6297
    %v8172 = vunpack.c.l.b16 %v6298
    %v8173 = vunpack.c.h.b16 %v6298
    %v8174 = vunpack.c.l.b16 %v6299
    %v8175 = vunpack.c.h.b16 %v6299
    %v8176 = vunpack.c.l.b16 %v6300
    %v8177 = vunpack.c.h.b16 %v6300
    %v8178 = vunpack.c.l.b16 %v6301
    %v8179 = vunpack.c.h.b16 %v6301
    %v8180 = vunpack.c.l.b16 %v6302
    %v8181 = vunpack.c.h.b16 %v6302
    %v8182 = vunpack.c.l.b16 %v6303
    %v8183 = vunpack.c.h.b16 %v6303
    %v8184 = vunpack.c.l.b16 %v6304
    %v8185 = vunpack.c.h.b16 %v6304
    %v8186 = vunpack.c.l.b16 %v6305
    %v8187 = vunpack.c.h.b16 %v6305
    %v8188 = vunpack.c.l.b16 %v6306
    %v8189 = vunpack.c.h.b16 %v6306
    %v8190 = vunpack.c.l.b16 %v6307
    %v8191 = vunpack.c.h.b16 %v6307
    %v8192 = vunpack.c.l.b16 %v6308
    %v8193 = vunpack.c.h.b16 %v6308
    %v8194 = vunpack.c.l.b16 %v6309
    %v8195 = vunpack.c.h.b16 %v6309
    %v8196 = vunpack.c.l.b16 %v6310
    %v8197 = vunpack.c.h.b16 %v6310
    %v8198 = vunpack.c.l.b16 %v6311
    %v8199 = vunpack.c.h.b16 %v6311
    %v8200 = vunpack.c.l.b16 %v6312
    %v8201 = vunpack.c.h.b16 %v6312
    %v8202 = vunpack.c.l.b16 %v6313
    %v8203 = vunpack.c.h.b16 %v6313
    %v8204 = vunpack.c.l.b16 %v6314
    %v8205 = vunpack.c.h.b16 %v6314
    %v8206 = vunpack.c.l.b16 %v6315
    %v8207 = vunpack.c.h.b16 %v6315
    %v8208 = vunpack.c.l.b16 %v6316
    %v8209 = vunpack.c.h.b16 %v6316
    %v8210 = vunpack.c.l.b16 %v6317
    %v8211 = vunpack.c.h.b16 %v6317
    %v8212 = vunpack.c.l.b16 %v6318
    %v8213 = vunpack.c.h.b16 %v6318
    %v8214 = vunpack.c.l.b16 %v6319
    %v8215 = vunpack.c.h.b16 %v6319
    %v8216 = vunpack.c.l.b16 %v6320
    %v8217 = vunpack.c.h.b16 %v6320
    %v8218 = vunpack.c.l.b16 %v6321
    %v8219 = vunpack.c.h.b16 %v6321
    %v8220 = vunpack.c.l.b16 %v6322
    %v8221 = vunpack.c.h.b16 %v6322
    %v8222 = vunpack.c.l.b16 %v6323
    %v8223 = vunpack.c.h.b16 %v6323
    %v8224 = vunpack.c.l.b16 %v6324
    %v8225 = vunpack.c.h.b16 %v6324
    %v8226 = vunpack.c.l.b16 %v6325
    %v8227 = vunpack.c.h.b16 %v6325
    %v8228 = vunpack.c.l.b16 %v6326
    %v8229 = vunpack.c.h.b16 %v6326
    %v8230 = vunpack.c.l.b16 %v6327
    %v8231 = vunpack.c.h.b16 %v6327
    %v8232 = vunpack.c.l.b16 %v6328
    %v8233 = vunpack.c.h.b16 %v6328
    %v8234 = vunpack.c.l.b16 %v6329
    %v8235 = vunpack.c.h.b16 %v6329
    %v8236 = vunpack.c.l.b16 %v6330
    %v8237 = vunpack.c.h.b16 %v6330
    %v8238 = vunpack.c.l.b16 %v6331
    %v8239 = vunpack.c.h.b16 %v6331
    %v8240 = vunpack.c.l.b16 %v6332
    %v8241 = vunpack.c.h.b16 %v6332
    %v8242 = vunpack.c.l.b16 %v6333
    %v8243 = vunpack.c.h.b16 %v6333
    %v8244 = vunpack.c.l.b16 %v6334
    %v8245 = vunpack.c.h.b16 %v6334
    %v8246 = vunpack.c.l.b16 %v6335
    %v8247 = vunpack.c.h.b16 %v6335
    %v8248 = vunpack.c.l.b16 %v6336
    %v8249 = vunpack.c.h.b16 %v6336
    %v8250 = vunpack.c.l.b16 %v6337
    %v8251 = vunpack.c.h.b16 %v6337
    %v8252 = vunpack.c.l.b16 %v6338
    %v8253 = vunpack.c.h.b16 %v6338
    %v8254 = vunpack.c.l.b16 %v6339
    %v8255 = vunpack.c.h.b16 %v6339
    %v8256 = vunpack.c.l.b16 %v6340
    %v8257 = vunpack.c.h.b16 %v6340
    %v8258 = vunpack.c.l.b16 %v6341
    %v8259 = vunpack.c.h.b16 %v6341
    %v8260 = vunpack.c.l.b16 %v6342
    %v8261 = vunpack.c.h.b16 %v6342
    %v8262 = vunpack.c.l.b16 %v6343
    %v8263 = vunpack.c.h.b16 %v6343
    %v8264 = vunpack.c.l.b16 %v6344
    %v8265 = vunpack.c.h.b16 %v6344
    %v8266 = vunpack.c.l.b16 %v6345
    %v8267 = vunpack.c.h.b16 %v6345
    %v8268 = vunpack.c.l.b16 %v6346
    %v8269 = vunpack.c.h.b16 %v6346
    %v8270 = vunpack.c.l.b16 %v6347
    %v8271 = vunpack.c.h.b16 %v6347
    %v8272 = vunpack.c.l.b16 %v6348
    %v8273 = vunpack.c.h.b16 %v6348
    %v8274 = vunpack.c.l.b16 %v6349
    %v8275 = vunpack.c.h.b16 %v6349
    %v8276 = vunpack.c.l.b16 %v6350
    %v8277 = vunpack.c.h.b16 %v6350
    %v8278 = vunpack.c.l.b16 %v6351
    %v8279 = vunpack.c.h.b16 %v6351
    %v8280 = vunpack.c.l.b16 %v6352
    %v8281 = vunpack.c.h.b16 %v6352
    %v8282 = vunpack.c.l.b16 %v6353
    %v8283 = vunpack.c.h.b16 %v6353
    %v8284 = vunpack.c.l.b16 %v6354
    %v8285 = vunpack.c.h.b16 %v6354
    %v8286 = vunpack.c.l.b16 %v6355
    %v8287 = vunpack.c.h.b16 %v6355
    %v8288 = vunpack.c.l.b16 %v6356
    %v8289 = vunpack.c.h.b16 %v6356
    %v8290 = vunpack.c.l.b16 %v6357
    %v8291 = vunpack.c.h.b16 %v6357
    %v8292 = vunpack.c.l.b16 %v6358
    %v8293 = vunpack.c.h.b16 %v6358
    %v8294 = vunpack.c.l.b16 %v6359
    %v8295 = vunpack.c.h.b16 %v6359
    %v8296 = vunpack.c.l.b16 %v6360
    %v8297 = vunpack.c.h.b16 %v6360
    %v8298 = vunpack.c.l.b16 %v6361
    %v8299 = vunpack.c.h.b16 %v6361
    %v8300 = vunpack.c.l.b16 %v6362
    %v8301 = vunpack.c.h.b16 %v6362
    %v8302 = vunpack.c.l.b16 %v6363
    %v8303 = vunpack.c.h.b16 %v6363
    %v8304 = vunpack.c.l.b16 %v6364
    %v8305 = vunpack.c.h.b16 %v6364
    %v8306 = vunpack.c.l.b16 %v6365
    %v8307 = vunpack.c.h.b16 %v6365
    %v8308 = vunpack.c.l.b16 %v6366
    %v8309 = vunpack.c.h.b16 %v6366
    %v8310 = vunpack.c.l.b16 %v6367
    %v8311 = vunpack.c.h.b16 %v6367
    %v8312 = vunpack.c.l.b16 %v6368
    %v8313 = vunpack.c.h.b16 %v6368
    %v8314 = vunpack.c.l.b16 %v6369
    %v8315 = vunpack.c.h.b16 %v6369
    %v8316 = vunpack.c.l.b16 %v6370
    %v8317 = vunpack.c.h.b16 %v6370
    %v8318 = vunpack.c.l.b16 %v6371
    %v8319 = vunpack.c.h.b16 %v6371
    %v8320 = vunpack.c.l.b16 %v6372
    %v8321 = vunpack.c.h.b16 %v6372
    %v8322 = vunpack.c.l.b16 %v6373
    %v8323 = vunpack.c.h.b16 %v6373
    %v8324 = vunpack.c.l.b16 %v6374
    %v8325 = vunpack.c.h.b16 %v6374
    %v8326 = vunpack.c.l.b16 %v6375
    %v8327 = vunpack.c.h.b16 %v6375
    %v8328 = vunpack.c.l.b16 %v6376
    %v8329 = vunpack.c.h.b16 %v6376
    %v8330 = vunpack.c.l.b16 %v6377
    %v8331 = vunpack.c.h.b16 %v6377
    %v8332 = vunpack.c.l.b16 %v6378
    %v8333 = vunpack.c.h.b16 %v6378
    %v8334 = vunpack.c.l.b16 %v6379
    %v8335 = vunpack.c.h.b16 %v6379
    %v8336 = vunpack.c.l.b16 %v6380
    %v8337 = vunpack.c.h.b16 %v6380
    %v8338 = vunpack.c.l.b16 %v6381
    %v8339 = vunpack.c.h.b16 %v6381
    %v8340 = vunpack.c.l.b16 %v6382
    %v8341 = vunpack.c.h.b16 %v6382
    %v8342 = vunpack.c.l.b16 %v6383
    %v8343 = vunpack.c.h.b16 %v6383
    %v8344 = vunpack.c.l.b16 %v6384
    %v8345 = vunpack.c.h.b16 %v6384
    %v8346 = vunpack.c.l.b16 %v6385
    %v8347 = vunpack.c.h.b16 %v6385
    %v8348 = vunpack.c.l.b16 %v6386
    %v8349 = vunpack.c.h.b16 %v6386
    %v8350 = vunpack.c.l.b16 %v6387
    %v8351 = vunpack.c.h.b16 %v6387
    %v8352 = vunpack.c.l.b16 %v6388
    %v8353 = vunpack.c.h.b16 %v6388
    %v8354 = vunpack.c.l.b16 %v6389
    %v8355 = vunpack.c.h.b16 %v6389
    %v8356 = vunpack.c.l.b16 %v6390
    %v8357 = vunpack.c.h.b16 %v6390
    %v8358 = vunpack.c.l.b16 %v6391
    %v8359 = vunpack.c.h.b16 %v6391
    %v8360 = vunpack.c.l.b16 %v6392
    %v8361 = vunpack.c.h.b16 %v6392
    %v8362 = vunpack.c.l.b16 %v6393
    %v8363 = vunpack.c.h.b16 %v6393
    %v8364 = vunpack.c.l.b16 %v6394
    %v8365 = vunpack.c.h.b16 %v6394
    %v8366 = vunpack.c.l.b16 %v6395
    %v8367 = vunpack.c.h.b16 %v6395
    %v8368 = vunpack.c.l.b16 %v6396
    %v8369 = vunpack.c.h.b16 %v6396
    %v8370 = vunpack.c.l.b16 %v6397
    %v8371 = vunpack.c.h.b16 %v6397
    %v8372 = vunpack.c.l.b16 %v6398
    %v8373 = vunpack.c.h.b16 %v6398
    %v8374 = vunpack.c.l.b16 %v6399
    %v8375 = vunpack.c.h.b16 %v6399
    %v8376 = vunpack.c.l.b16 %v6400
    %v8377 = vunpack.c.h.b16 %v6400
    %v8378 = vunpack.c.l.b16 %v6401
    %v8379 = vunpack.c.h.b16 %v6401
    %v8380 = vunpack.c.l.b16 %v6402
    %v8381 = vunpack.c.h.b16 %v6402
    %v8382 = vunpack.c.l.b16 %v6403
    %v8383 = vunpack.c.h.b16 %v6403
    %v8384 = vunpack.c.l.b16 %v6404
    %v8385 = vunpack.c.h.b16 %v6404
    %v8386 = vunpack.c.l.b16 %v6405
    %v8387 = vunpack.c.h.b16 %v6405
    %v8388 = vunpack.c.l.b16 %v6406
    %v8389 = vunpack.c.h.b16 %v6406
    %v8390 = vunpack.c.l.b16 %v6407
    %v8391 = vunpack.c.h.b16 %v6407
    %v8392 = vunpack.c.l.b16 %v6408
    %v8393 = vunpack.c.h.b16 %v6408
    %v8394 = vunpack.c.l.b16 %v6409
    %v8395 = vunpack.c.h.b16 %v6409
    %v8396 = vunpack.c.l.b16 %v6410
    %v8397 = vunpack.c.h.b16 %v6410
    %v8398 = vunpack.c.l.b16 %v6411
    %v8399 = vunpack.c.h.b16 %v6411
    %v8400 = vunpack.c.l.b16 %v6412
    %v8401 = vunpack.c.h.b16 %v6412
    %v8402 = vunpack.c.l.b16 %v6413
    %v8403 = vunpack.c.h.b16 %v6413
    %v8404 = vunpack.c.l.b16 %v6414
    %v8405 = vunpack.c.h.b16 %v6414
    %v8406 = vunpack.c.l.b16 %v6415
    %v8407 = vunpack.c.h.b16 %v6415
    %v8408 = vunpack.c.l.b16 %v6416
    %v8409 = vunpack.c.h.b16 %v6416
    %v8410 = vunpack.c.l.b16 %v6417
    %v8411 = vunpack.c.h.b16 %v6417
    %v8412 = vunpack.c.l.b16 %v6418
    %v8413 = vunpack.c.h.b16 %v6418
    %v8414 = vunpack.c.l.b16 %v6419
    %v8415 = vunpack.c.h.b16 %v6419
    %v8416 = vunpack.c.l.b16 %v6420
    %v8417 = vunpack.c.h.b16 %v6420
    %v8418 = vunpack.c.l.b16 %v6421
    %v8419 = vunpack.c.h.b16 %v6421
    %v8420 = vunpack.c.l.b16 %v6422
    %v8421 = vunpack.c.h.b16 %v6422
    %v8422 = vunpack.c.l.b16 %v6423
    %v8423 = vunpack.c.h.b16 %v6423
    %v8424 = vunpack.c.l.b16 %v6424
    %v8425 = vunpack.c.h.b16 %v6424
    %v8426 = vunpack.c.l.b16 %v6425
    %v8427 = vunpack.c.h.b16 %v6425
    %v8428 = vunpack.c.l.b16 %v6426
    %v8429 = vunpack.c.h.b16 %v6426
    %v8430 = vunpack.c.l.b16 %v6427
    %v8431 = vunpack.c.h.b16 %v6427
    %v8432 = vunpack.c.l.b16 %v6428
    %v8433 = vunpack.c.h.b16 %v6428
    %v8434 = vunpack.c.l.b16 %v6429
    %v8435 = vunpack.c.h.b16 %v6429
    %v8436 = vunpack.c.l.b16 %v6430
    %v8437 = vunpack.c.h.b16 %v6430
    %v8438 = vunpack.c.l.b16 %v6431
    %v8439 = vunpack.c.h.b16 %v6431
    %v8440 = vunpack.c.l.b16 %v6432
    %v8441 = vunpack.c.h.b16 %v6432
    %v8442 = vunpack.c.l.b16 %v6433
    %v8443 = vunpack.c.h.b16 %v6433
    %v8444 = vunpack.c.l.b16 %v6434
    %v8445 = vunpack.c.h.b16 %v6434
    %v8446 = vunpack.c.l.b16 %v6435
    %v8447 = vunpack.c.h.b16 %v6435
    %v8448 = vunpack.c.l.b16 %v6436
    %v8449 = vunpack.c.h.b16 %v6436
    %v8450 = vunpack.c.l.b16 %v6437
    %v8451 = vunpack.c.h.b16 %v6437
    %v8452 = vunpack.c.l.b16 %v6438
    %v8453 = vunpack.c.h.b16 %v6438
    %v8454 = vunpack.c.l.b16 %v6439
    %v8455 = vunpack.c.h.b16 %v6439
    %v8456 = vunpack.c.l.b16 %v6440
    %v8457 = vunpack.c.h.b16 %v6440
    %v8458 = vunpack.c.l.b16 %v6441
    %v8459 = vunpack.c.h.b16 %v6441
    %v8460 = vunpack.c.l.b16 %v6442
    %v8461 = vunpack.c.h.b16 %v6442
    %v8462 = vunpack.c.l.b16 %v6443
    %v8463 = vunpack.c.h.b16 %v6443
    %v8464 = vunpack.c.l.b16 %v6444
    %v8465 = vunpack.c.h.b16 %v6444
    %v8466 = vunpack.c.l.b16 %v6445
    %v8467 = vunpack.c.h.b16 %v6445
    %v8468 = vunpack.c.l.b16 %v6446
    %v8469 = vunpack.c.h.b16 %v6446
    %v8470 = vunpack.c.l.b16 %v6447
    %v8471 = vunpack.c.h.b16 %v6447
    %v8472 = vunpack.c.l.b16 %v6448
    %v8473 = vunpack.c.h.b16 %v6448
    %v8474 = vunpack.c.l.b16 %v6449
    %v8475 = vunpack.c.h.b16 %v6449
    %v8476 = vunpack.c.l.b16 %v6450
    %v8477 = vunpack.c.h.b16 %v6450
    %v8478 = vunpack.c.l.b16 %v6451
    %v8479 = vunpack.c.h.b16 %v6451
    %v8480 = vunpack.c.l.b16 %v6452
    %v8481 = vunpack.c.h.b16 %v6452
    %v8482 = vunpack.c.l.b16 %v6453
    %v8483 = vunpack.c.h.b16 %v6453
    %v8484 = vunpack.c.l.b16 %v6454
    %v8485 = vunpack.c.h.b16 %v6454
    %v8486 = vunpack.c.l.b16 %v6455
    %v8487 = vunpack.c.h.b16 %v6455
    %v8488 = vunpack.c.l.b16 %v6456
    %v8489 = vunpack.c.h.b16 %v6456
    %v8490 = vunpack.c.l.b16 %v6457
    %v8491 = vunpack.c.h.b16 %v6457
    %v8492 = vunpack.c.l.b16 %v6458
    %v8493 = vunpack.c.h.b16 %v6458
    %v8494 = vunpack.c.l.b16 %v6459
    %v8495 = vunpack.c.h.b16 %v6459
    %v8496 = vunpack.c.l.b16 %v6460
    %v8497 = vunpack.c.h.b16 %v6460
    %v8498 = vunpack.c.l.b16 %v6461
    %v8499 = vunpack.c.h.b16 %v6461
    %v8500 = vunpack.c.l.b16 %v6462
    %v8501 = vunpack.c.h.b16 %v6462
    %v8502 = vunpack.c.l.b16 %v6463
    %v8503 = vunpack.c.h.b16 %v6463
    %v8504 = vunpack.c.l.b16 %v6464
    %v8505 = vunpack.c.h.b16 %v6464
    %v8506 = vunpack.c.l.b16 %v6465
    %v8507 = vunpack.c.h.b16 %v6465
    %v8508 = vunpack.c.l.b16 %v6466
    %v8509 = vunpack.c.h.b16 %v6466
    %v8510 = vunpack.c.l.b16 %v6467
    %v8511 = vunpack.c.h.b16 %v6467
    %v8512 = vunpack.c.l.b16 %v6468
    %v8513 = vunpack.c.h.b16 %v6468
    %v8514 = vunpack.c.l.b16 %v6469
    %v8515 = vunpack.c.h.b16 %v6469
    %v8516 = vunpack.c.l.b16 %v6470
    %v8517 = vunpack.c.h.b16 %v6470
    %v8518 = vunpack.c.l.b16 %v6471
    %v8519 = vunpack.c.h.b16 %v6471
    %v8520 = vunpack.c.l.b16 %v6472
    %v8521 = vunpack.c.h.b16 %v6472
    %v8522 = vunpack.c.l.b16 %v6473
    %v8523 = vunpack.c.h.b16 %v6473
    %v8524 = vunpack.c.l.b16 %v6474
    %v8525 = vunpack.c.h.b16 %v6474
    %v8526 = vunpack.c.l.b16 %v6475
    %v8527 = vunpack.c.h.b16 %v6475
    %v8528 = vunpack.c.l.b16 %v6476
    %v8529 = vunpack.c.h.b16 %v6476
    %v8530 = vunpack.c.l.b16 %v6477
    %v8531 = vunpack.c.h.b16 %v6477
    %v8532 = vunpack.c.l.b16 %v6478
    %v8533 = vunpack.c.h.b16 %v6478
    %v8534 = vunpack.c.l.b16 %v6479
    %v8535 = vunpack.c.h.b16 %v6479
    %v8536 = vunpack.c.l.b16 %v6480
    %v8537 = vunpack.c.h.b16 %v6480
    %v8538 = vunpack.c.l.b16 %v6481
    %v8539 = vunpack.c.h.b16 %v6481
    %v8540 = vunpack.c.l.b16 %v6482
    %v8541 = vunpack.c.h.b16 %v6482
    %v8542 = vunpack.c.l.b16 %v6483
    %v8543 = vunpack.c.h.b16 %v6483
    %v8544 = vunpack.c.l.b16 %v6484
    %v8545 = vunpack.c.h.b16 %v6484
    %v8546 = vunpack.c.l.b16 %v6485
    %v8547 = vunpack.c.h.b16 %v6485
    %v8548 = vunpack.c.l.b16 %v6486
    %v8549 = vunpack.c.h.b16 %v6486
    %v8550 = vunpack.c.l.b16 %v6487
    %v8551 = vunpack.c.h.b16 %v6487
    %v8552 = vunpack.c.l.b16 %v6488
    %v8553 = vunpack.c.h.b16 %v6488
    %v8554 = vunpack.c.l.b16 %v6489
    %v8555 = vunpack.c.h.b16 %v6489
    %v8556 = vunpack.c.l.b16 %v6490
    %v8557 = vunpack.c.h.b16 %v6490
    %v8558 = vunpack.c.l.b16 %v6491
    %v8559 = vunpack.c.h.b16 %v6491
    %v8560 = vunpack.c.l.b16 %v6492
    %v8561 = vunpack.c.h.b16 %v6492
    %v8562 = vunpack.c.l.b16 %v6493
    %v8563 = vunpack.c.h.b16 %v6493
    %v8564 = vunpack.c.l.b16 %v6494
    %v8565 = vunpack.c.h.b16 %v6494
    %v8566 = vunpack.c.l.b16 %v6495
    %v8567 = vunpack.c.h.b16 %v6495
    %v8568 = vunpack.c.l.b16 %v6496
    %v8569 = vunpack.c.h.b16 %v6496
    %v8570 = vunpack.c.l.b16 %v6497
    %v8571 = vunpack.c.h.b16 %v6497
    %v8572 = vunpack.c.l.b16 %v6498
    %v8573 = vunpack.c.h.b16 %v6498
    %v8574 = vunpack.c.l.b16 %v6499
    %v8575 = vunpack.c.h.b16 %v6499
    %v8576 = vunpack.c.l.b16 %v6500
    %v8577 = vunpack.c.h.b16 %v6500
    %v8578 = vunpack.c.l.b16 %v6501
    %v8579 = vunpack.c.h.b16 %v6501
    %v8580 = vunpack.c.l.b16 %v6502
    %v8581 = vunpack.c.h.b16 %v6502
    %v8582 = vunpack.c.l.b16 %v6503
    %v8583 = vunpack.c.h.b16 %v6503
    %v8584 = vunpack.c.l.b16 %v6504
    %v8585 = vunpack.c.h.b16 %v6504
    %v8586 = vunpack.c.l.b16 %v6505
    %v8587 = vunpack.c.h.b16 %v6505
    %v8588 = vunpack.c.l.b16 %v6506
    %v8589 = vunpack.c.h.b16 %v6506
    %v8590 = vunpack.c.l.b16 %v6507
    %v8591 = vunpack.c.h.b16 %v6507
    %v8592 = vunpack.c.l.b16 %v6508
    %v8593 = vunpack.c.h.b16 %v6508
    %v8594 = vunpack.c.l.b16 %v6509
    %v8595 = vunpack.c.h.b16 %v6509
    %v8596 = vunpack.c.l.b16 %v6510
    %v8597 = vunpack.c.h.b16 %v6510
    %v8598 = vunpack.c.l.b16 %v6511
    %v8599 = vunpack.c.h.b16 %v6511
    %v8600 = vunpack.c.l.b16 %v6512
    %v8601 = vunpack.c.h.b16 %v6512
    %v8602 = vunpack.c.l.b16 %v6513
    %v8603 = vunpack.c.h.b16 %v6513
    %v8604 = vunpack.c.l.b16 %v6514
    %v8605 = vunpack.c.h.b16 %v6514
    %v8606 = vunpack.c.l.b16 %v6515
    %v8607 = vunpack.c.h.b16 %v6515
    %v8608 = vunpack.c.l.b16 %v6516
    %v8609 = vunpack.c.h.b16 %v6516
    %v8610 = vunpack.c.l.b16 %v6517
    %v8611 = vunpack.c.h.b16 %v6517
    %v8612 = vunpack.c.l.b16 %v6518
    %v8613 = vunpack.c.h.b16 %v6518
    %v8614 = vunpack.c.l.b16 %v6519
    %v8615 = vunpack.c.h.b16 %v6519
    %v8616 = vunpack.c.l.b16 %v6520
    %v8617 = vunpack.c.h.b16 %v6520
    %v8618 = vunpack.c.l.b16 %v6521
    %v8619 = vunpack.c.h.b16 %v6521
    %v8620 = vunpack.c.l.b16 %v6522
    %v8621 = vunpack.c.h.b16 %v6522
    %v8622 = vunpack.c.l.b16 %v6523
    %v8623 = vunpack.c.h.b16 %v6523
    %v8624 = vunpack.c.l.b16 %v6524
    %v8625 = vunpack.c.h.b16 %v6524
    %v8626 = vunpack.c.l.b16 %v6525
    %v8627 = vunpack.c.h.b16 %v6525
    %v8628 = vunpack.c.l.b16 %v6526
    %v8629 = vunpack.c.h.b16 %v6526
    %v8630 = vunpack.c.l.b16 %v6527
    %v8631 = vunpack.c.h.b16 %v6527
    %v8632 = vunpack.c.l.b16 %v6528
    %v8633 = vunpack.c.h.b16 %v6528
    %v8634 = vunpack.c.l.b16 %v6529
    %v8635 = vunpack.c.h.b16 %v6529
    %v8636 = vunpack.c.l.b16 %v6530
    %v8637 = vunpack.c.h.b16 %v6530
    %v8638 = vunpack.c.l.b16 %v6531
    %v8639 = vunpack.c.h.b16 %v6531
    %v8640 = vunpack.c.l.b16 %v6532
    %v8641 = vunpack.c.h.b16 %v6532
    %v8642 = vunpack.c.l.b16 %v6533
    %v8643 = vunpack.c.h.b16 %v6533
    %v8644 = vunpack.c.l.b16 %v6534
    %v8645 = vunpack.c.h.b16 %v6534
    %v8646 = vunpack.c.l.b16 %v6535
    %v8647 = vunpack.c.h.b16 %v6535
    %v8648 = vunpack.c.l.b16 %v6536
    %v8649 = vunpack.c.h.b16 %v6536
    %v8650 = vunpack.c.l.b16 %v6537
    %v8651 = vunpack.c.h.b16 %v6537
    %v8652 = vunpack.c.l.b16 %v6538
    %v8653 = vunpack.c.h.b16 %v6538
    %v8654 = vunpack.c.l.b16 %v6539
    %v8655 = vunpack.c.h.b16 %v6539
    %v8656 = vunpack.c.l.b16 %v6540
    %v8657 = vunpack.c.h.b16 %v6540
    %v8658 = vunpack.c.l.b16 %v6541
    %v8659 = vunpack.c.h.b16 %v6541
    %v8660 = vunpack.c.l.b16 %v6542
    %v8661 = vunpack.c.h.b16 %v6542
    %v8662 = vunpack.c.l.b16 %v6543
    %v8663 = vunpack.c.h.b16 %v6543
    %v8664 = vunpack.c.l.b16 %v6544
    %v8665 = vunpack.c.h.b16 %v6544
    %v8666 = vunpack.c.l.b16 %v6545
    %v8667 = vunpack.c.h.b16 %v6545
    %v8668 = vunpack.c.l.b16 %v6546
    %v8669 = vunpack.c.h.b16 %v6546
    %v8670 = vunpack.c.l.b16 %v6547
    %v8671 = vunpack.c.h.b16 %v6547
    %v8672 = vunpack.c.l.b16 %v6548
    %v8673 = vunpack.c.h.b16 %v6548
    %v8674 = vunpack.c.l.b16 %v6549
    %v8675 = vunpack.c.h.b16 %v6549
    %v8676 = vunpack.c.l.b16 %v6550
    %v8677 = vunpack.c.h.b16 %v6550
    %v8678 = vunpack.c.l.b16 %v6551
    %v8679 = vunpack.c.h.b16 %v6551
    %v8680 = vunpack.c.l.b16 %v6552
    %v8681 = vunpack.c.h.b16 %v6552
    %v8682 = vunpack.c.l.b16 %v6553
    %v8683 = vunpack.c.h.b16 %v6553
    %v8684 = vunpack.c.l.b16 %v6554
    %v8685 = vunpack.c.h.b16 %v6554
    %v8686 = vunpack.c.l.b16 %v6555
    %v8687 = vunpack.c.h.b16 %v6555
    %v8688 = vunpack.c.l.b16 %v6556
    %v8689 = vunpack.c.h.b16 %v6556
    %v8690 = vunpack.c.l.b16 %v6557
    %v8691 = vunpack.c.h.b16 %v6557
    %v8692 = vunpack.c.l.b16 %v6558
    %v8693 = vunpack.c.h.b16 %v6558
    %v8694 = vunpack.c.l.b16 %v6559
    %v8695 = vunpack.c.h.b16 %v6559
    %v8696 = vunpack.c.l.b16 %v6560
    %v8697 = vunpack.c.h.b16 %v6560
    %v8698 = vunpack.c.l.b16 %v6561
    %v8699 = vunpack.c.h.b16 %v6561
    %v8700 = vunpack.c.l.b16 %v6562
    %v8701 = vunpack.c.h.b16 %v6562
    %v8702 = vunpack.c.l.b16 %v6563
    %v8703 = vunpack.c.h.b16 %v6563
    %v8704 = vunpack.c.l.b16 %v6564
    %v8705 = vunpack.c.h.b16 %v6564
    %v8706 = vunpack.c.l.b16 %v6565
    %v8707 = vunpack.c.h.b16 %v6565
    %v8708 = vunpack.c.l.b16 %v6566
    %v8709 = vunpack.c.h.b16 %v6566
    %v8710 = vunpack.c.l.b16 %v6567
    %v8711 = vunpack.c.h.b16 %v6567
    %v8712 = vunpack.c.l.b16 %v6568
    %v8713 = vunpack.c.h.b16 %v6568
    %v8714 = vunpack.c.l.b16 %v6569
    %v8715 = vunpack.c.h.b16 %v6569
    %v8716 = vunpack.c.l.b16 %v6570
    %v8717 = vunpack.c.h.b16 %v6570
    %v8718 = vunpack.c.l.b16 %v6571
    %v8719 = vunpack.c.h.b16 %v6571
    %v8720 = vunpack.c.l.b16 %v6572
    %v8721 = vunpack.c.h.b16 %v6572
    %v8722 = vunpack.c.l.b16 %v6573
    %v8723 = vunpack.c.h.b16 %v6573
    %v8724 = vunpack.c.l.b16 %v6574
    %v8725 = vunpack.c.h.b16 %v6574
    %v8726 = vunpack.c.l.b16 %v6575
    %v8727 = vunpack.c.h.b16 %v6575
    %v8728 = vunpack.c.l.b16 %v6576
    %v8729 = vunpack.c.h.b16 %v6576
    %v8730 = vunpack.c.l.b16 %v6577
    %v8731 = vunpack.c.h.b16 %v6577
    %v8732 = vunpack.c.l.b16 %v6578
    %v8733 = vunpack.c.h.b16 %v6578
    %v8734 = vunpack.c.l.b16 %v6579
    %v8735 = vunpack.c.h.b16 %v6579
    %v8736 = vunpack.c.l.b16 %v6580
    %v8737 = vunpack.c.h.b16 %v6580
    %v8738 = vunpack.c.l.b16 %v6581
    %v8739 = vunpack.c.h.b16 %v6581
    %v8740 = vunpack.c.l.b16 %v6582
    %v8741 = vunpack.c.h.b16 %v6582
    %v8742 = vunpack.c.l.b16 %v6583
    %v8743 = vunpack.c.h.b16 %v6583
    %v8744 = vunpack.c.l.b16 %v6584
    %v8745 = vunpack.c.h.b16 %v6584
    %v8746 = vunpack.c.l.b16 %v6585
    %v8747 = vunpack.c.h.b16 %v6585
    %v8748 = vunpack.c.l.b16 %v6586
    %v8749 = vunpack.c.h.b16 %v6586
    %v8750 = vunpack.c.l.b16 %v6587
    %v8751 = vunpack.c.h.b16 %v6587
    %v8752 = vunpack.c.l.b16 %v6588
    %v8753 = vunpack.c.h.b16 %v6588
    %v8754 = vunpack.c.l.b16 %v6589
    %v8755 = vunpack.c.h.b16 %v6589
    %v8756 = vunpack.c.l.b16 %v6590
    %v8757 = vunpack.c.h.b16 %v6590
    %v8758 = vunpack.c.l.b16 %v6591
    %v8759 = vunpack.c.h.b16 %v6591
    %v8760 = vunpack.c.l.b16 %v6592
    %v8761 = vunpack.c.h.b16 %v6592
    %v8762 = vunpack.c.l.b16 %v6593
    %v8763 = vunpack.c.h.b16 %v6593
    %v8764 = vunpack.c.l.b16 %v6594
    %v8765 = vunpack.c.h.b16 %v6594
    %v8766 = vunpack.c.l.b16 %v6595
    %v8767 = vunpack.c.h.b16 %v6595
    %v8768 = vunpack.c.l.b16 %v6596
    %v8769 = vunpack.c.h.b16 %v6596
    %v8770 = vunpack.c.l.b16 %v6597
    %v8771 = vunpack.c.h.b16 %v6597
    %v8772 = vunpack.c.l.b16 %v6598
    %v8773 = vunpack.c.h.b16 %v6598
    %v8774 = vunpack.c.l.b16 %v6599
    %v8775 = vunpack.c.h.b16 %v6599
    %v8776 = vpack.c.b16 %v7768, %v7752
    %v8777 = vpack.c.b16 %v7769, %v7753
    %v8778 = vpack.c.b16 %v7770, %v7754
    %v8779 = vpack.c.b16 %v7771, %v7755
    %v8780 = vpack.c.b16 %v7772, %v7756
    %v8781 = vpack.c.b16 %v7773, %v7757
    %v8782 = vpack.c.b16 %v7774, %v7758
    %v8783 = vpack.c.b16 %v7775, %v7759
    %v8784 = vpack.c.b16 %v7776, %v7760
    %v8785 = vpack.c.b16 %v7777, %v7761
    %v8786 = vpack.c.b16 %v7778, %v7762
    %v8787 = vpack.c.b16 %v7779, %v7763
    %v8788 = vpack.c.b16 %v7780, %v7764
    %v8789 = vpack.c.b16 %v7781, %v7765
    %v8790 = vpack.c.b16 %v7782, %v7766
    %v8791 = vpack.c.b16 %v7783, %v7767
    %v8792 = vpack.c.b16 %v7800, %v7784
    %v8793 = vpack.c.b16 %v7801, %v7785
    %v8794 = vpack.c.b16 %v7802, %v7786
    %v8795 = vpack.c.b16 %v7803, %v7787
    %v8796 = vpack.c.b16 %v7804, %v7788
    %v8797 = vpack.c.b16 %v7805, %v7789
    %v8798 = vpack.c.b16 %v7806, %v7790
    %v8799 = vpack.c.b16 %v7807, %v7791
    %v8800 = vpack.c.b16 %v7808, %v7792
    %v8801 = vpack.c.b16 %v7809, %v7793
    %v8802 = vpack.c.b16 %v7810, %v7794
    %v8803 = vpack.c.b16 %v7811, %v7795
    %v8804 = vpack.c.b16 %v7812, %v7796
    %v8805 = vpack.c.b16 %v7813, %v7797
    %v8806 = vpack.c.b16 %v7814, %v7798
    %v8807 = vpack.c.b16 %v7815, %v7799
    %v8808 = vpack.c.b16 %v7832, %v7816
    %v8809 = vpack.c.b16 %v7833, %v7817
    %v8810 = vpack.c.b16 %v7834, %v7818
    %v8811 = vpack.c.b16 %v7835, %v7819
    %v8812 = vpack.c.b16 %v7836, %v7820
    %v8813 = vpack.c.b16 %v7837, %v7821
    %v8814 = vpack.c.b16 %v7838, %v7822
    %v8815 = vpack.c.b16 %v7839, %v7823
    %v8816 = vpack.c.b16 %v7840, %v7824
    %v8817 = vpack.c.b16 %v7841, %v7825
    %v8818 = vpack.c.b16 %v7842, %v7826
    %v8819 = vpack.c.b16 %v7843, %v7827
    %v8820 = vpack.c.b16 %v7844, %v7828
    %v8821 = vpack.c.b16 %v7845, %v7829
    %v8822 = vpack.c.b16 %v7846, %v7830
    %v8823 = vpack.c.b16 %v7847, %v7831
    %v8824 = vpack.c.b16 %v7864, %v7848
    %v8825 = vpack.c.b16 %v7865, %v7849
    %v8826 = vpack.c.b16 %v7866, %v7850
    %v8827 = vpack.c.b16 %v7867, %v7851
    %v8828 = vpack.c.b16 %v7868, %v7852
    %v8829 = vpack.c.b16 %v7869, %v7853
    %v8830 = vpack.c.b16 %v7870, %v7854
    %v8831 = vpack.c.b16 %v7871, %v7855
    %v8832 = vpack.c.b16 %v7872, %v7856
    %v8833 = vpack.c.b16 %v7873, %v7857
    %v8834 = vpack.c.b16 %v7874, %v7858
    %v8835 = vpack.c.b16 %v7875, %v7859
    %v8836 = vpack.c.b16 %v7876, %v7860
    %v8837 = vpack.c.b16 %v7877, %v7861
    %v8838 = vpack.c.b16 %v7878, %v7862
    %v8839 = vpack.c.b16 %v7879, %v7863
    %v8840 = vpack.c.b16 %v7896, %v7880
    %v8841 = vpack.c.b16 %v7897, %v7881
    %v8842 = vpack.c.b16 %v7898, %v7882
    %v8843 = vpack.c.b16 %v7899, %v7883
    %v8844 = vpack.c.b16 %v7900, %v7884
    %v8845 = vpack.c.b16 %v7901, %v7885
    %v8846 = vpack.c.b16 %v7902, %v7886
    %v8847 = vpack.c.b16 %v7903, %v7887
    %v8848 = vpack.c.b16 %v7904, %v7888
    %v8849 = vpack.c.b16 %v7905, %v7889
    %v8850 = vpack.c.b16 %v7906, %v7890
    %v8851 = vpack.c.b16 %v7907, %v7891
    %v8852 = vpack.c.b16 %v7908, %v7892
    %v8853 = vpack.c.b16 %v7909, %v7893
    %v8854 = vpack.c.b16 %v7910, %v7894
    %v8855 = vpack.c.b16 %v7911, %v7895
    %v8856 = vpack.c.b16 %v7928, %v7912
    %v8857 = vpack.c.b16 %v7929, %v7913
    %v8858 = vpack.c.b16 %v7930, %v7914
    %v8859 = vpack.c.b16 %v7931, %v7915
    %v8860 = vpack.c.b16 %v7932, %v7916
    %v8861 = vpack.c.b16 %v7933, %v7917
    %v8862 = vpack.c.b16 %v7934, %v7918
    %v8863 = vpack.c.b16 %v7935, %v7919
    %v8864 = vpack.c.b16 %v7936, %v7920
    %v8865 = vpack.c.b16 %v7937, %v7921
    %v8866 = vpack.c.b16 %v7938, %v7922
    %v8867 = vpack.c.b16 %v7939, %v7923
    %v8868 = vpack.c.b16 %v7940, %v7924
    %v8869 = vpack.c.b16 %v7941, %v7925
    %v8870 = vpack.c.b16 %v7942, %v7926
    %v8871 = vpack.c.b16 %v7943, %v7927
    %v8872 = vpack.c.b16 %v7960, %v7944
    %v8873 = vpack.c.b16 %v7961, %v7945
    %v8874 = vpack.c.b16 %v7962, %v7946
    %v8875 = vpack.c.b16 %v7963, %v7947
    %v8876 = vpack.c.b16 %v7964, %v7948
    %v8877 = vpack.c.b16 %v7965, %v7949
    %v8878 = vpack.c.b16 %v7966, %v7950
    %v8879 = vpack.c.b16 %v7967, %v7951
    %v8880 = vpack.c.b16 %v7968, %v7952
    %v8881 = vpack.c.b16 %v7969, %v7953
    %v8882 = vpack.c.b16 %v7970, %v7954
    %v8883 = vpack.c.b16 %v7971, %v7955
    %v8884 = vpack.c.b16 %v7972, %v7956
    %v8885 = vpack.c.b16 %v7973, %v7957
    %v8886 = vpack.c.b16 %v7974, %v7958
    %v8887 = vpack.c.b16 %v7975, %v7959
    %v8888 = vpack.c.b16 %v7992, %v7976
    %v8889 = vpack.c.b16 %v7993, %v7977
    %v8890 = vpack.c.b16 %v7994, %v7978
    %v8891 = vpack.c.b16 %v7995, %v7979
    %v8892 = vpack.c.b16 %v7996, %v7980
    %v8893 = vpack.c.b16 %v7997, %v7981
    %v8894 = vpack.c.b16 %v7998, %v7982
    %v8895 = vpack.c.b16 %v7999, %v7983
    %v8896 = vpack.c.b16 %v8000, %v7984
    %v8897 = vpack.c.b16 %v8001, %v7985
    %v8898 = vpack.c.b16 %v8002, %v7986
    %v8899 = vpack.c.b16 %v8003, %v7987
    %v8900 = vpack.c.b16 %v8004, %v7988
    %v8901 = vpack.c.b16 %v8005, %v7989
    %v8902 = vpack.c.b16 %v8006, %v7990
    %v8903 = vpack.c.b16 %v8007, %v7991
    %v8904 = vpack.c.b16 %v8024, %v8008
    %v8905 = vpack.c.b16 %v8025, %v8009
    %v8906 = vpack.c.b16 %v8026, %v8010
    %v8907 = vpack.c.b16 %v8027, %v8011
    %v8908 = vpack.c.b16 %v8028, %v8012
    %v8909 = vpack.c.b16 %v8029, %v8013
    %v8910 = vpack.c.b16 %v8030, %v8014
    %v8911 = vpack.c.b16 %v8031, %v8015
    %v8912 = vpack.c.b16 %v8032, %v8016
    %v8913 = vpack.c.b16 %v8033, %v8017
    %v8914 = vpack.c.b16 %v8034, %v8018
    %v8915 = vpack.c.b16 %v8035, %v8019
    %v8916 = vpack.c.b16 %v8036, %v8020
    %v8917 = vpack.c.b16 %v8037, %v8021
    %v8918 = vpack.c.b16 %v8038, %v8022
    %v8919 = vpack.c.b16 %v8039, %v8023
    %v8920 = vpack.c.b16 %v8056, %v8040
    %v8921 = vpack.c.b16 %v8057, %v8041
    %v8922 = vpack.c.b16 %v8058, %v8042
    %v8923 = vpack.c.b16 %v8059, %v8043
    %v8924 = vpack.c.b16 %v8060, %v8044
    %v8925 = vpack.c.b16 %v8061, %v8045
    %v8926 = vpack.c.b16 %v8062, %v8046
    %v8927 = vpack.c.b16 %v8063, %v8047
    %v8928 = vpack.c.b16 %v8064, %v8048
    %v8929 = vpack.c.b16 %v8065, %v8049
    %v8930 = vpack.c.b16 %v8066, %v8050
    %v8931 = vpack.c.b16 %v8067, %v8051
    %v8932 = vpack.c.b16 %v8068, %v8052
    %v8933 = vpack.c.b16 %v8069, %v8053
    %v8934 = vpack.c.b16 %v8070, %v8054
    %v8935 = vpack.c.b16 %v8071, %v8055
    %v8936 = vpack.c.b16 %v8088, %v8072
    %v8937 = vpack.c.b16 %v8089, %v8073
    %v8938 = vpack.c.b16 %v8090, %v8074
    %v8939 = vpack.c.b16 %v8091, %v8075
    %v8940 = vpack.c.b16 %v8092, %v8076
    %v8941 = vpack.c.b16 %v8093, %v8077
    %v8942 = vpack.c.b16 %v8094, %v8078
    %v8943 = vpack.c.b16 %v8095, %v8079
    %v8944 = vpack.c.b16 %v8096, %v8080
    %v8945 = vpack.c.b16 %v8097, %v8081
    %v8946 = vpack.c.b16 %v8098, %v8082
    %v8947 = vpack.c.b16 %v8099, %v8083
    %v8948 = vpack.c.b16 %v8100, %v8084
    %v8949 = vpack.c.b16 %v8101, %v8085
    %v8950 = vpack.c.b16 %v8102, %v8086
    %v8951 = vpack.c.b16 %v8103, %v8087
    %v8952 = vpack.c.b16 %v8120, %v8104
    %v8953 = vpack.c.b16 %v8121, %v8105
    %v8954 = vpack.c.b16 %v8122, %v8106
    %v8955 = vpack.c.b16 %v8123, %v8107
    %v8956 = vpack.c.b16 %v8124, %v8108
    %v8957 = vpack.c.b16 %v8125, %v8109
    %v8958 = vpack.c.b16 %v8126, %v8110
    %v8959 = vpack.c.b16 %v8127, %v8111
    %v8960 = vpack.c.b16 %v8128, %v8112
    %v8961 = vpack.c.b16 %v8129, %v8113
    %v8962 = vpack.c.b16 %v8130, %v8114
    %v8963 = vpack.c.b16 %v8131, %v8115
    %v8964 = vpack.c.b16 %v8132, %v8116
    %v8965 = vpack.c.b16 %v8133, %v8117
    %v8966 = vpack.c.b16 %v8134, %v8118
    %v8967 = vpack.c.b16 %v8135, %v8119
    %v8968 = vpack.c.b16 %v8152, %v8136
    %v8969 = vpack.c.b16 %v8153, %v8137
    %v8970 = vpack.c.b16 %v8154, %v8138
    %v8971 = vpack.c.b16 %v8155, %v8139
    %v8972 = vpack.c.b16 %v8156, %v8140
    %v8973 = vpack.c.b16 %v8157, %v8141
    %v8974 = vpack.c.b16 %v8158, %v8142
    %v8975 = vpack.c.b16 %v8159, %v8143
    %v8976 = vpack.c.b16 %v8160, %v8144
    %v8977 = vpack.c.b16 %v8161, %v8145
    %v8978 = vpack.c.b16 %v8162, %v8146
    %v8979 = vpack.c.b16 %v8163, %v8147
    %v8980 = vpack.c.b16 %v8164, %v8148
    %v8981 = vpack.c.b16 %v8165, %v8149
    %v8982 = vpack.c.b16 %v8166, %v8150
    %v8983 = vpack.c.b16 %v8167, %v8151
    %v8984 = vpack.c.b16 %v8184, %v8168
    %v8985 = vpack.c.b16 %v8185, %v8169
    %v8986 = vpack.c.b16 %v8186, %v8170
    %v8987 = vpack.c.b16 %v8187, %v8171
    %v8988 = vpack.c.b16 %v8188, %v8172
    %v8989 = vpack.c.b16 %v8189, %v8173
    %v8990 = vpack.c.b16 %v8190, %v8174
    %v8991 = vpack.c.b16 %v8191, %v8175
    %v8992 = vpack.c.b16 %v8192, %v8176
    %v8993 = vpack.c.b16 %v8193, %v8177
    %v8994 = vpack.c.b16 %v8194, %v8178
    %v8995 = vpack.c.b16 %v8195, %v8179
    %v8996 = vpack.c.b16 %v8196, %v8180
    %v8997 = vpack.c.b16 %v8197, %v8181
    %v8998 = vpack.c.b16 %v8198, %v8182
    %v8999 = vpack.c.b16 %v8199, %v8183
    %v9000 = vpack.c.b16 %v8216, %v8200
    %v9001 = vpack.c.b16 %v8217, %v8201
    %v9002 = vpack.c.b16 %v8218, %v8202
    %v9003 = vpack.c.b16 %v8219, %v8203
    %v9004 = vpack.c.b16 %v8220, %v8204
    %v9005 = vpack.c.b16 %v8221, %v8205
    %v9006 = vpack.c.b16 %v8222, %v8206
    %v9007 = vpack.c.b16 %v8223, %v8207
    %v9008 = vpack.c.b16 %v8224, %v8208
    %v9009 = vpack.c.b16 %v8225, %v8209
    %v9010 = vpack.c.b16 %v8226, %v8210
    %v9011 = vpack.c.b16 %v8227, %v8211
    %v9012 = vpack.c.b16 %v8228, %v8212
    %v9013 = vpack.c.b16 %v8229, %v8213
    %v9014 = vpack.c.b16 %v8230, %v8214
    %v9015 = vpack.c.b16 %v8231, %v8215
    %v9016 = vpack.c.b16 %v8248, %v8232
    %v9017 = vpack.c.b16 %v8249, %v8233
    %v9018 = vpack.c.b16 %v8250, %v8234
    %v9019 = vpack.c.b16 %v8251, %v8235
    %v9020 = vpack.c.b16 %v8252, %v8236
    %v9021 = vpack.c.b16 %v8253, %v8237
    %v9022 = vpack.c.b16 %v8254, %v8238
    %v9023 = vpack.c.b16 %v8255, %v8239
    %v9024 = vpack.c.b16 %v8256, %v8240
    %v9025 = vpack.c.b16 %v8257, %v8241
    %v9026 = vpack.c.b16 %v8258, %v8242
    %v9027 = vpack.c.b16 %v8259, %v8243
    %v9028 = vpack.c.b16 %v8260, %v8244
    %v9029 = vpack.c.b16 %v8261, %v8245
    %v9030 = vpack.c.b16 %v8262, %v8246
    %v9031 = vpack.c.b16 %v8263, %v8247
    %v9032 = vpack.c.b16 %v8280, %v8264
    %v9033 = vpack.c.b16 %v8281, %v8265
    %v9034 = vpack.c.b16 %v8282, %v8266
    %v9035 = vpack.c.b16 %v8283, %v8267
    %v9036 = vpack.c.b16 %v8284, %v8268
    %v9037 = vpack.c.b16 %v8285, %v8269
    %v9038 = vpack.c.b16 %v8286, %v8270
    %v9039 = vpack.c.b16 %v8287, %v8271
    %v9040 = vpack.c.b16 %v8288, %v8272
    %v9041 = vpack.c.b16 %v8289, %v8273
    %v9042 = vpack.c.b16 %v8290, %v8274
    %v9043 = vpack.c.b16 %v8291, %v8275
    %v9044 = vpack.c.b16 %v8292, %v8276
    %v9045 = vpack.c.b16 %v8293, %v8277
    %v9046 = vpack.c.b16 %v8294, %v8278
    %v9047 = vpack.c.b16 %v8295, %v8279
    %v9048 = vpack.c.b16 %v8312, %v8296
    %v9049 = vpack.c.b16 %v8313, %v8297
    %v9050 = vpack.c.b16 %v8314, %v8298
    %v9051 = vpack.c.b16 %v8315, %v8299
    %v9052 = vpack.c.b16 %v8316, %v8300
    %v9053 = vpack.c.b16 %v8317, %v8301
    %v9054 = vpack.c.b16 %v8318, %v8302
    %v9055 = vpack.c.b16 %v8319, %v8303
    %v9056 = vpack.c.b16 %v8320, %v8304
    %v9057 = vpack.c.b16 %v8321, %v8305
    %v9058 = vpack.c.b16 %v8322, %v8306
    %v9059 = vpack.c.b16 %v8323, %v8307
    %v9060 = vpack.c.b16 %v8324, %v8308
    %v9061 = vpack.c.b16 %v8325, %v8309
    %v9062 = vpack.c.b16 %v8326, %v8310
    %v9063 = vpack.c.b16 %v8327, %v8311
    %v9064 = vpack.c.b16 %v8344, %v8328
    %v9065 = vpack.c.b16 %v8345, %v8329
    %v9066 = vpack.c.b16 %v8346, %v8330
    %v9067 = vpack.c.b16 %v8347, %v8331
    %v9068 = vpack.c.b16 %v8348, %v8332
    %v9069 = vpack.c.b16 %v8349, %v8333
    %v9070 = vpack.c.b16 %v8350, %v8334
    %v9071 = vpack.c.b16 %v8351, %v8335
    %v9072 = vpack.c.b16 %v8352, %v8336
    %v9073 = vpack.c.b16 %v8353, %v8337
    %v9074 = vpack.c.b16 %v8354, %v8338
    %v9075 = vpack.c.b16 %v8355, %v8339
    %v9076 = vpack.c.b16 %v8356, %v8340
    %v9077 = vpack.c.b16 %v8357, %v8341
    %v9078 = vpack.c.b16 %v8358, %v8342
    %v9079 = vpack.c.b16 %v8359, %v8343
    %v9080 = vpack.c.b16 %v8376, %v8360
    %v9081 = vpack.c.b16 %v8377, %v8361
    %v9082 = vpack.c.b16 %v8378, %v8362
    %v9083 = vpack.c.b16 %v8379, %v8363
    %v9084 = vpack.c.b16 %v8380, %v8364
    %v9085 = vpack.c.b16 %v8381, %v8365
    %v9086 = vpack.c.b16 %v8382, %v8366
    %v9087 = vpack.c.b16 %v8383, %v8367
    %v9088 = vpack.c.b16 %v8384, %v8368
    %v9089 = vpack.c.b16 %v8385, %v8369
    %v9090 = vpack.c.b16 %v8386, %v8370
    %v9091 = vpack.c.b16 %v8387, %v8371
    %v9092 = vpack.c.b16 %v8388, %v8372
    %v9093 = vpack.c.b16 %v8389, %v8373
    %v9094 = vpack.c.b16 %v8390, %v8374
    %v9095 = vpack.c.b16 %v8391, %v8375
    %v9096 = vpack.c.b16 %v8408, %v8392
    %v9097 = vpack.c.b16 %v8409, %v8393
    %v9098 = vpack.c.b16 %v8410, %v8394
    %v9099 = vpack.c.b16 %v8411, %v8395
    %v9100 = vpack.c.b16 %v8412, %v8396
    %v9101 = vpack.c.b16 %v8413, %v8397
    %v9102 = vpack.c.b16 %v8414, %v8398
    %v9103 = vpack.c.b16 %v8415, %v8399
    %v9104 = vpack.c.b16 %v8416, %v8400
    %v9105 = vpack.c.b16 %v8417, %v8401
    %v9106 = vpack.c.b16 %v8418, %v8402
    %v9107 = vpack.c.b16 %v8419, %v8403
    %v9108 = vpack.c.b16 %v8420, %v8404
    %v9109 = vpack.c.b16 %v8421, %v8405
    %v9110 = vpack.c.b16 %v8422, %v8406
    %v9111 = vpack.c.b16 %v8423, %v8407
    %v9112 = vpack.c.b16 %v8440, %v8424
    %v9113 = vpack.c.b16 %v8441, %v8425
    %v9114 = vpack.c.b16 %v8442, %v8426
    %v9115 = vpack.c.b16 %v8443, %v8427
    %v9116 = vpack.c.b16 %v8444, %v8428
    %v9117 = vpack.c.b16 %v8445, %v8429
    %v9118 = vpack.c.b16 %v8446, %v8430
    %v9119 = vpack.c.b16 %v8447, %v8431
    %v9120 = vpack.c.b16 %v8448, %v8432
    %v9121 = vpack.c.b16 %v8449, %v8433
    %v9122 = vpack.c.b16 %v8450, %v8434
    %v9123 = vpack.c.b16 %v8451, %v8435
    %v9124 = vpack.c.b16 %v8452, %v8436
    %v9125 = vpack.c.b16 %v8453, %v8437
    %v9126 = vpack.c.b16 %v8454, %v8438
    %v9127 = vpack.c.b16 %v8455, %v8439
    %v9128 = vpack.c.b16 %v8472, %v8456
    %v9129 = vpack.c.b16 %v8473, %v8457
    %v9130 = vpack.c.b16 %v8474, %v8458
    %v9131 = vpack.c.b16 %v8475, %v8459
    %v9132 = vpack.c.b16 %v8476, %v8460
    %v9133 = vpack.c.b16 %v8477, %v8461
    %v9134 = vpack.c.b16 %v8478, %v8462
    %v9135 = vpack.c.b16 %v8479, %v8463
    %v9136 = vpack.c.b16 %v8480, %v8464
    %v9137 = vpack.c.b16 %v8481, %v8465
    %v9138 = vpack.c.b16 %v8482, %v8466
    %v9139 = vpack.c.b16 %v8483, %v8467
    %v9140 = vpack.c.b16 %v8484, %v8468
    %v9141 = vpack.c.b16 %v8485, %v8469
    %v9142 = vpack.c.b16 %v8486, %v8470
    %v9143 = vpack.c.b16 %v8487, %v8471
    %v9144 = vpack.c.b16 %v8504, %v8488
    %v9145 = vpack.c.b16 %v8505, %v8489
    %v9146 = vpack.c.b16 %v8506, %v8490
    %v9147 = vpack.c.b16 %v8507, %v8491
    %v9148 = vpack.c.b16 %v8508, %v8492
    %v9149 = vpack.c.b16 %v8509, %v8493
    %v9150 = vpack.c.b16 %v8510, %v8494
    %v9151 = vpack.c.b16 %v8511, %v8495
    %v9152 = vpack.c.b16 %v8512, %v8496
    %v9153 = vpack.c.b16 %v8513, %v8497
    %v9154 = vpack.c.b16 %v8514, %v8498
    %v9155 = vpack.c.b16 %v8515, %v8499
    %v9156 = vpack.c.b16 %v8516, %v8500
    %v9157 = vpack.c.b16 %v8517, %v8501
    %v9158 = vpack.c.b16 %v8518, %v8502
    %v9159 = vpack.c.b16 %v8519, %v8503
    %v9160 = vpack.c.b16 %v8536, %v8520
    %v9161 = vpack.c.b16 %v8537, %v8521
    %v9162 = vpack.c.b16 %v8538, %v8522
    %v9163 = vpack.c.b16 %v8539, %v8523
    %v9164 = vpack.c.b16 %v8540, %v8524
    %v9165 = vpack.c.b16 %v8541, %v8525
    %v9166 = vpack.c.b16 %v8542, %v8526
    %v9167 = vpack.c.b16 %v8543, %v8527
    %v9168 = vpack.c.b16 %v8544, %v8528
    %v9169 = vpack.c.b16 %v8545, %v8529
    %v9170 = vpack.c.b16 %v8546, %v8530
    %v9171 = vpack.c.b16 %v8547, %v8531
    %v9172 = vpack.c.b16 %v8548, %v8532
    %v9173 = vpack.c.b16 %v8549, %v8533
    %v9174 = vpack.c.b16 %v8550, %v8534
    %v9175 = vpack.c.b16 %v8551, %v8535
    %v9176 = vpack.c.b16 %v8568, %v8552
    %v9177 = vpack.c.b16 %v8569, %v8553
    %v9178 = vpack.c.b16 %v8570, %v8554
    %v9179 = vpack.c.b16 %v8571, %v8555
    %v9180 = vpack.c.b16 %v8572, %v8556
    %v9181 = vpack.c.b16 %v8573, %v8557
    %v9182 = vpack.c.b16 %v8574, %v8558
    %v9183 = vpack.c.b16 %v8575, %v8559
    %v9184 = vpack.c.b16 %v8576, %v8560
    %v9185 = vpack.c.b16 %v8577, %v8561
    %v9186 = vpack.c.b16 %v8578, %v8562
    %v9187 = vpack.c.b16 %v8579, %v8563
    %v9188 = vpack.c.b16 %v8580, %v8564
    %v9189 = vpack.c.b16 %v8581, %v8565
    %v9190 = vpack.c.b16 %v8582, %v8566
    %v9191 = vpack.c.b16 %v8583, %v8567
    %v9192 = vpack.c.b16 %v8600, %v8584
    %v9193 = vpack.c.b16 %v8601, %v8585
    %v9194 = vpack.c.b16 %v8602, %v8586
    %v9195 = vpack.c.b16 %v8603, %v8587
    %v9196 = vpack.c.b16 %v8604, %v8588
    %v9197 = vpack.c.b16 %v8605, %v8589
    %v9198 = vpack.c.b16 %v8606, %v8590
    %v9199 = vpack.c.b16 %v8607, %v8591
    %v9200 = vpack.c.b16 %v8608, %v8592
    %v9201 = vpack.c.b16 %v8609, %v8593
    %v9202 = vpack.c.b16 %v8610, %v8594
    %v9203 = vpack.c.b16 %v8611, %v8595
    %v9204 = vpack.c.b16 %v8612, %v8596
    %v9205 = vpack.c.b16 %v8613, %v8597
    %v9206 = vpack.c.b16 %v8614, %v8598
    %v9207 = vpack.c.b16 %v8615, %v8599
    %v9208 = vpack.c.b16 %v8632, %v8616
    %v9209 = vpack.c.b16 %v8633, %v8617
    %v9210 = vpack.c.b16 %v8634, %v8618
    %v9211 = vpack.c.b16 %v8635, %v8619
    %v9212 = vpack.c.b16 %v8636, %v8620
    %v9213 = vpack.c.b16 %v8637, %v8621
    %v9214 = vpack.c.b16 %v8638, %v8622
    %v9215 = vpack.c.b16 %v8639, %v8623
    %v9216 = vpack.c.b16 %v8640, %v8624
    %v9217 = vpack.c.b16 %v8641, %v8625
    %v9218 = vpack.c.b16 %v8642, %v8626
    %v9219 = vpack.c.b16 %v8643, %v8627
    %v9220 = vpack.c.b16 %v8644, %v8628
    %v9221 = vpack.c.b16 %v8645, %v8629
    %v9222 = vpack.c.b16 %v8646, %v8630
    %v9223 = vpack.c.b16 %v8647, %v8631
    %v9224 = vpack.c.b16 %v8664, %v8648
    %v9225 = vpack.c.b16 %v8665, %v8649
    %v9226 = vpack.c.b16 %v8666, %v8650
    %v9227 = vpack.c.b16 %v8667, %v8651
    %v9228 = vpack.c.b16 %v8668, %v8652
    %v9229 = vpack.c.b16 %v8669, %v8653
    %v9230 = vpack.c.b16 %v8670, %v8654
    %v9231 = vpack.c.b16 %v8671, %v8655
    %v9232 = vpack.c.b16 %v8672, %v8656
    %v9233 = vpack.c.b16 %v8673, %v8657
    %v9234 = vpack.c.b16 %v8674, %v8658
    %v9235 = vpack.c.b16 %v8675, %v8659
    %v9236 = vpack.c.b16 %v8676, %v8660
    %v9237 = vpack.c.b16 %v8677, %v8661
    %v9238 = vpack.c.b16 %v8678, %v8662
    %v9239 = vpack.c.b16 %v8679, %v8663
    %v9240 = vpack.c.b16 %v8696, %v8680
    %v9241 = vpack.c.b16 %v8697, %v8681
    %v9242 = vpack.c.b16 %v8698, %v8682
    %v9243 = vpack.c.b16 %v8699, %v8683
    %v9244 = vpack.c.b16 %v8700, %v8684
    %v9245 = vpack.c.b16 %v8701, %v8685
    %v9246 = vpack.c.b16 %v8702, %v8686
    %v9247 = vpack.c.b16 %v8703, %v8687
    %v9248 = vpack.c.b16 %v8704, %v8688
    %v9249 = vpack.c.b16 %v8705, %v8689
    %v9250 = vpack.c.b16 %v8706, %v8690
    %v9251 = vpack.c.b16 %v8707, %v8691
    %v9252 = vpack.c.b16 %v8708, %v8692
    %v9253 = vpack.c.b16 %v8709, %v8693
    %v9254 = vpack.c.b16 %v8710, %v8694
    %v9255 = vpack.c.b16 %v8711, %v8695
    %v9256 = vpack.c.b16 %v8728, %v8712
    %v9257 = vpack.c.b16 %v8729, %v8713
    %v9258 = vpack.c.b16 %v8730, %v8714
    %v9259 = vpack.c.b16 %v8731, %v8715
    %v9260 = vpack.c.b16 %v8732, %v8716
    %v9261 = vpack.c.b16 %v8733, %v8717
    %v9262 = vpack.c.b16 %v8734, %v8718
    %v9263 = vpack.c.b16 %v8735, %v8719
    %v9264 = vpack.c.b16 %v8736, %v8720
    %v9265 = vpack.c.b16 %v8737, %v8721
    %v9266 = vpack.c.b16 %v8738, %v8722
    %v9267 = vpack.c.b16 %v8739, %v8723
    %v9268 = vpack.c.b16 %v8740, %v8724
    %v9269 = vpack.c.b16 %v8741, %v8725
    %v9270 = vpack.c.b16 %v8742, %v8726
    %v9271 = vpack.c.b16 %v8743, %v8727
    %v9272 = vpack.c.b16 %v8760, %v8744
    %v9273 = vpack.c.b16 %v8761, %v8745
    %v9274 = vpack.c.b16 %v8762, %v8746
    %v9275 = vpack.c.b16 %v8763, %v8747
    %v9276 = vpack.c.b16 %v8764, %v8748
    %v9277 = vpack.c.b16 %v8765, %v8749
    %v9278 = vpack.c.b16 %v8766, %v8750
    %v9279 = vpack.c.b16 %v8767, %v8751
    %v9280 = vpack.c.b16 %v8768, %v8752
    %v9281 = vpack.c.b16 %v8769, %v8753
    %v9282 = vpack.c.b16 %v8770, %v8754
    %v9283 = vpack.c.b16 %v8771, %v8755
    %v9284 = vpack.c.b16 %v8772, %v8756
    %v9285 = vpack.c.b16 %v8773, %v8757
    %v9286 = vpack.c.b16 %v8774, %v8758
    %v9287 = vpack.c.b16 %v8775, %v8759
    %9800 = vmatprep.subr.bf16.mxu0 %v6615
    %9801 = vmatpush1.bf16.msra.mxu0 %v6614
    %9802 = vmatprep.subr.bf16.mxu0 %v6613
    %9803 = vmatpush1.bf16.msra.mxu0 %v6612
    %9804 = vmatprep.subr.bf16.mxu0 %v6611
    %9805 = vmatpush1.bf16.msra.mxu0 %v6610
    %9806 = vmatprep.subr.bf16.mxu0 %v6609
    %9807 = vmatpush1.bf16.msra.mxu0 %v6608
    %9808 = vmatprep.subr.bf16.mxu0 %v6607
    %9809 = vmatpush1.bf16.msra.mxu0 %v6606
    %9810 = vmatprep.subr.bf16.mxu0 %v6605
    %9811 = vmatpush1.bf16.msra.mxu0 %v6604
    %9812 = vmatprep.subr.bf16.mxu0 %v6603
    %9813 = vmatpush1.bf16.msra.mxu0 %v6602
    %9814 = vmatprep.subr.bf16.mxu0 %v6601
    %9815 = vmatpush1.bf16.msra.mxu0 %v6600
    %9816 = vmatprep.subr.bf16.mxu0 %v6631
    %9817 = vmatpush2.bf16.msra.mxu0 %v6630
    %9818 = vmatprep.subr.bf16.mxu0 %v6629
    %9819 = vmatpush2.bf16.msra.mxu0 %v6628
    %9820 = vmatprep.subr.bf16.mxu0 %v6627
    %9821 = vmatpush2.bf16.msra.mxu0 %v6626
    %9822 = vmatprep.subr.bf16.mxu0 %v6625
    %9823 = vmatpush2.bf16.msra.mxu0 %v6624
    %9824 = vmatprep.subr.bf16.mxu0 %v6623
    %9825 = vmatpush2.bf16.msra.mxu0 %v6622
    %9826 = vmatprep.subr.bf16.mxu0 %v6621
    %9827 = vmatpush2.bf16.msra.mxu0 %v6620
    %9828 = vmatprep.subr.bf16.mxu0 %v6619
    %9829 = vmatpush2.bf16.msra.mxu0 %v6618
    %9830 = vmatprep.subr.bf16.mxu0 %v6617
    %9831 = vmatpush2.bf16.msra.mxu0 %v6616
    %9832 = vmatprep.mubr.bf16.mxu0 %v8777
    %9833 = vmatmul.mubr.bf16.gmra.mxu0 %v8776
    %v9834 = vpop.f32.mrf.mxu0
    %v9835 = vadd.f32 %v6923, %v9834
    %v9836 = vpop.f32.mrf.mxu0
    %v9837 = vadd.f32 %v6923, %v9836
    %v9838 = vpop.f32.mrf.mxu0
    %v9839 = vadd.f32 %v6928, %v9838
    %v9840 = vpop.f32.mrf.mxu0
    %v9841 = vadd.f32 %v6928, %v9840
    %9842 = vmatprep.mubr.bf16.mxu0 %v8793
    %9843 = vmatmul.mubr.bf16.gmra.mxu0 %v8792
    %v9844 = vpop.f32.mrf.mxu0
    %v9845 = vadd.f32 %v6933, %v9844
    %v9846 = vpop.f32.mrf.mxu0
    %v9847 = vadd.f32 %v6933, %v9846
    %v9848 = vpop.f32.mrf.mxu0
    %v9849 = vadd.f32 %v6938, %v9848
    %v9850 = vpop.f32.mrf.mxu0
    %v9851 = vadd.f32 %v6938, %v9850
    %9852 = vmatprep.mubr.bf16.mxu0 %v8809
    %9853 = vmatmul.mubr.bf16.gmra.mxu0 %v8808
    %v9854 = vpop.f32.mrf.mxu0
    %v9855 = vadd.f32 %v6943, %v9854
    %v9856 = vpop.f32.mrf.mxu0
    %v9857 = vadd.f32 %v6943, %v9856
    %v9858 = vpop.f32.mrf.mxu0
    %v9859 = vadd.f32 %v6948, %v9858
    %v9860 = vpop.f32.mrf.mxu0
    %v9861 = vadd.f32 %v6948, %v9860
    %9862 = vmatprep.mubr.bf16.mxu0 %v8825
    %9863 = vmatmul.mubr.bf16.gmra.mxu0 %v8824
    %v9864 = vpop.f32.mrf.mxu0
    %v9865 = vadd.f32 %v6953, %v9864
    %v9866 = vpop.f32.mrf.mxu0
    %v9867 = vadd.f32 %v6953, %v9866
    %v9868 = vpop.f32.mrf.mxu0
    %v9869 = vadd.f32 %v6958, %v9868
    %v9870 = vpop.f32.mrf.mxu0
    %v9871 = vadd.f32 %v6958, %v9870
    %9872 = vmatprep.mubr.bf16.mxu0 %v8841
    %9873 = vmatmul.mubr.bf16.gmra.mxu0 %v8840
    %v9874 = vpop.f32.mrf.mxu0
    %v9875 = vadd.f32 %v6963, %v9874
    %v9876 = vpop.f32.mrf.mxu0
    %v9877 = vadd.f32 %v6963, %v9876
    %v9878 = vpop.f32.mrf.mxu0
    %v9879 = vadd.f32 %v6968, %v9878
    %v9880 = vpop.f32.mrf.mxu0
    %v9881 = vadd.f32 %v6968, %v9880
    %9882 = vmatprep.mubr.bf16.mxu0 %v8857
    %9883 = vmatmul.mubr.bf16.gmra.mxu0 %v8856
    %v9884 = vpop.f32.mrf.mxu0
    %v9885 = vadd.f32 %v6973, %v9884
    %v9886 = vpop.f32.mrf.mxu0
    %v9887 = vadd.f32 %v6973, %v9886
    %v9888 = vpop.f32.mrf.mxu0
    %v9889 = vadd.f32 %v6978, %v9888
    %v9890 = vpop.f32.mrf.mxu0
    %v9891 = vadd.f32 %v6978, %v9890
    %9892 = vmatprep.mubr.bf16.mxu0 %v8873
    %9893 = vmatmul.mubr.bf16.gmra.mxu0 %v8872
    %v9894 = vpop.f32.mrf.mxu0
    %v9895 = vadd.f32 %v6983, %v9894
    %v9896 = vpop.f32.mrf.mxu0
    %v9897 = vadd.f32 %v6983, %v9896
    %v9898 = vpop.f32.mrf.mxu0
    %v9899 = vadd.f32 %v6988, %v9898
    %v9900 = vpop.f32.mrf.mxu0
    %v9901 = vadd.f32 %v6988, %v9900
    %9902 = vmatprep.mubr.bf16.mxu0 %v8889
    %9903 = vmatmul.mubr.bf16.gmra.mxu0 %v8888
    %v9904 = vpop.f32.mrf.mxu0
    %v9905 = vadd.f32 %v6993, %v9904
    %v9906 = vpop.f32.mrf.mxu0
    %v9907 = vadd.f32 %v6993, %v9906
    %v9908 = vpop.f32.mrf.mxu0
    %v9909 = vadd.f32 %v6998, %v9908
    %v9910 = vpop.f32.mrf.mxu0
    %v9911 = vadd.f32 %v6998, %v9910
    %9912 = vmatprep.mubr.bf16.mxu0 %v8905
    %9913 = vmatmul.mubr.bf16.gmra.mxu0 %v8904
    %v9914 = vpop.f32.mrf.mxu0
    %v9915 = vadd.f32 %v7003, %v9914
    %v9916 = vpop.f32.mrf.mxu0
    %v9917 = vadd.f32 %v7003, %v9916
    %v9918 = vpop.f32.mrf.mxu0
    %v9919 = vadd.f32 %v7008, %v9918
    %v9920 = vpop.f32.mrf.mxu0
    %v9921 = vadd.f32 %v7008, %v9920
    %9922 = vmatprep.mubr.bf16.mxu0 %v8921
    %9923 = vmatmul.mubr.bf16.gmra.mxu0 %v8920
    %v9924 = vpop.f32.mrf.mxu0
    %v9925 = vadd.f32 %v7013, %v9924
    %v9926 = vpop.f32.mrf.mxu0
    %v9927 = vadd.f32 %v7013, %v9926
    %v9928 = vpop.f32.mrf.mxu0
    %v9929 = vadd.f32 %v7018, %v9928
    %v9930 = vpop.f32.mrf.mxu0
    %v9931 = vadd.f32 %v7018, %v9930
    %9932 = vmatprep.mubr.bf16.mxu0 %v8937
    %9933 = vmatmul.mubr.bf16.gmra.mxu0 %v8936
    %v9934 = vpop.f32.mrf.mxu0
    %v9935 = vadd.f32 %v7023, %v9934
    %v9936 = vpop.f32.mrf.mxu0
    %v9937 = vadd.f32 %v7023, %v9936
    %v9938 = vpop.f32.mrf.mxu0
    %v9939 = vadd.f32 %v7028, %v9938
    %v9940 = vpop.f32.mrf.mxu0
    %v9941 = vadd.f32 %v7028, %v9940
    %9942 = vmatprep.mubr.bf16.mxu0 %v8953
    %9943 = vmatmul.mubr.bf16.gmra.mxu0 %v8952
    %v9944 = vpop.f32.mrf.mxu0
    %v9945 = vadd.f32 %v7033, %v9944
    %v9946 = vpop.f32.mrf.mxu0
    %v9947 = vadd.f32 %v7033, %v9946
    %v9948 = vpop.f32.mrf.mxu0
    %v9949 = vadd.f32 %v7038, %v9948
    %v9950 = vpop.f32.mrf.mxu0
    %v9951 = vadd.f32 %v7038, %v9950
    %9952 = vmatprep.mubr.bf16.mxu0 %v8969
    %9953 = vmatmul.mubr.bf16.gmra.mxu0 %v8968
    %v9954 = vpop.f32.mrf.mxu0
    %v9955 = vadd.f32 %v7043, %v9954
    %v9956 = vpop.f32.mrf.mxu0
    %v9957 = vadd.f32 %v7043, %v9956
    %v9958 = vpop.f32.mrf.mxu0
    %v9959 = vadd.f32 %v7048, %v9958
    %v9960 = vpop.f32.mrf.mxu0
    %v9961 = vadd.f32 %v7048, %v9960
    %9962 = vmatprep.mubr.bf16.mxu0 %v8985
    %9963 = vmatmul.mubr.bf16.gmra.mxu0 %v8984
    %v9964 = vpop.f32.mrf.mxu0
    %v9965 = vadd.f32 %v7053, %v9964
    %v9966 = vpop.f32.mrf.mxu0
    %v9967 = vadd.f32 %v7053, %v9966
    %v9968 = vpop.f32.mrf.mxu0
    %v9969 = vadd.f32 %v7058, %v9968
    %v9970 = vpop.f32.mrf.mxu0
    %v9971 = vadd.f32 %v7058, %v9970
    %9972 = vmatprep.mubr.bf16.mxu0 %v9001
    %9973 = vmatmul.mubr.bf16.gmra.mxu0 %v9000
    %v9974 = vpop.f32.mrf.mxu0
    %v9975 = vadd.f32 %v7063, %v9974
    %v9976 = vpop.f32.mrf.mxu0
    %v9977 = vadd.f32 %v7063, %v9976
    %v9978 = vpop.f32.mrf.mxu0
    %v9979 = vadd.f32 %v7068, %v9978
    %v9980 = vpop.f32.mrf.mxu0
    %v9981 = vadd.f32 %v7068, %v9980
    %9982 = vmatprep.mubr.bf16.mxu0 %v9017
    %9983 = vmatmul.mubr.bf16.gmra.mxu0 %v9016
    %v9984 = vpop.f32.mrf.mxu0
    %v9985 = vadd.f32 %v7073, %v9984
    %v9986 = vpop.f32.mrf.mxu0
    %v9987 = vadd.f32 %v7073, %v9986
    %v9988 = vpop.f32.mrf.mxu0
    %v9989 = vadd.f32 %v7078, %v9988
    %v9990 = vpop.f32.mrf.mxu0
    %v9991 = vadd.f32 %v7078, %v9990
    %9992 = vmatprep.mubr.bf16.mxu0 %v9033
    %9993 = vmatmul.mubr.bf16.gmra.mxu0 %v9032
    %v9994 = vpop.f32.mrf.mxu0
    %v9995 = vadd.f32 %v7083, %v9994
    %v9996 = vpop.f32.mrf.mxu0
    %v9997 = vadd.f32 %v7083, %v9996
    %v9998 = vpop.f32.mrf.mxu0
    %v9999 = vadd.f32 %v7088, %v9998
    %v10000 = vpop.f32.mrf.mxu0
    %v10001 = vadd.f32 %v7088, %v10000
    %10002 = vmatprep.mubr.bf16.mxu0 %v9049
    %10003 = vmatmul.mubr.bf16.gmra.mxu0 %v9048
    %v10004 = vpop.f32.mrf.mxu0
    %v10005 = vadd.f32 %v7093, %v10004
    %v10006 = vpop.f32.mrf.mxu0
    %v10007 = vadd.f32 %v7093, %v10006
    %v10008 = vpop.f32.mrf.mxu0
    %v10009 = vadd.f32 %v7098, %v10008
    %v10010 = vpop.f32.mrf.mxu0
    %v10011 = vadd.f32 %v7098, %v10010
    %10012 = vmatprep.mubr.bf16.mxu0 %v9065
    %10013 = vmatmul.mubr.bf16.gmra.mxu0 %v9064
    %v10014 = vpop.f32.mrf.mxu0
    %v10015 = vadd.f32 %v7103, %v10014
    %v10016 = vpop.f32.mrf.mxu0
    %v10017 = vadd.f32 %v7103, %v10016
    %v10018 = vpop.f32.mrf.mxu0
    %v10019 = vadd.f32 %v7108, %v10018
    %v10020 = vpop.f32.mrf.mxu0
    %v10021 = vadd.f32 %v7108, %v10020
    %10022 = vmatprep.mubr.bf16.mxu0 %v9081
    %10023 = vmatmul.mubr.bf16.gmra.mxu0 %v9080
    %v10024 = vpop.f32.mrf.mxu0
    %v10025 = vadd.f32 %v7113, %v10024
    %v10026 = vpop.f32.mrf.mxu0
    %v10027 = vadd.f32 %v7113, %v10026
    %v10028 = vpop.f32.mrf.mxu0
    %v10029 = vadd.f32 %v7118, %v10028
    %v10030 = vpop.f32.mrf.mxu0
    %v10031 = vadd.f32 %v7118, %v10030
    %10032 = vmatprep.mubr.bf16.mxu0 %v9097
    %10033 = vmatmul.mubr.bf16.gmra.mxu0 %v9096
    %v10034 = vpop.f32.mrf.mxu0
    %v10035 = vadd.f32 %v7123, %v10034
    %v10036 = vpop.f32.mrf.mxu0
    %v10037 = vadd.f32 %v7123, %v10036
    %v10038 = vpop.f32.mrf.mxu0
    %v10039 = vadd.f32 %v7128, %v10038
    %v10040 = vpop.f32.mrf.mxu0
    %v10041 = vadd.f32 %v7128, %v10040
    %10042 = vmatprep.mubr.bf16.mxu0 %v9113
    %10043 = vmatmul.mubr.bf16.gmra.mxu0 %v9112
    %v10044 = vpop.f32.mrf.mxu0
    %v10045 = vadd.f32 %v7133, %v10044
    %v10046 = vpop.f32.mrf.mxu0
    %v10047 = vadd.f32 %v7133, %v10046
    %v10048 = vpop.f32.mrf.mxu0
    %v10049 = vadd.f32 %v7138, %v10048
    %v10050 = vpop.f32.mrf.mxu0
    %v10051 = vadd.f32 %v7138, %v10050
    %10052 = vmatprep.mubr.bf16.mxu0 %v9129
    %10053 = vmatmul.mubr.bf16.gmra.mxu0 %v9128
    %v10054 = vpop.f32.mrf.mxu0
    %v10055 = vadd.f32 %v7143, %v10054
    %v10056 = vpop.f32.mrf.mxu0
    %v10057 = vadd.f32 %v7143, %v10056
    %v10058 = vpop.f32.mrf.mxu0
    %v10059 = vadd.f32 %v7148, %v10058
    %v10060 = vpop.f32.mrf.mxu0
    %v10061 = vadd.f32 %v7148, %v10060
    %10062 = vmatprep.mubr.bf16.mxu0 %v9145
    %10063 = vmatmul.mubr.bf16.gmra.mxu0 %v9144
    %v10064 = vpop.f32.mrf.mxu0
    %v10065 = vadd.f32 %v7153, %v10064
    %v10066 = vpop.f32.mrf.mxu0
    %v10067 = vadd.f32 %v7153, %v10066
    %v10068 = vpop.f32.mrf.mxu0
    %v10069 = vadd.f32 %v7158, %v10068
    %v10070 = vpop.f32.mrf.mxu0
    %v10071 = vadd.f32 %v7158, %v10070
    %10072 = vmatprep.mubr.bf16.mxu0 %v9161
    %10073 = vmatmul.mubr.bf16.gmra.mxu0 %v9160
    %v10074 = vpop.f32.mrf.mxu0
    %v10075 = vadd.f32 %v7163, %v10074
    %v10076 = vpop.f32.mrf.mxu0
    %v10077 = vadd.f32 %v7163, %v10076
    %v10078 = vpop.f32.mrf.mxu0
    %v10079 = vadd.f32 %v7168, %v10078
    %v10080 = vpop.f32.mrf.mxu0
    %v10081 = vadd.f32 %v7168, %v10080
    %10082 = vmatprep.mubr.bf16.mxu0 %v9177
    %10083 = vmatmul.mubr.bf16.gmra.mxu0 %v9176
    %v10084 = vpop.f32.mrf.mxu0
    %v10085 = vadd.f32 %v7173, %v10084
    %v10086 = vpop.f32.mrf.mxu0
    %v10087 = vadd.f32 %v7173, %v10086
    %v10088 = vpop.f32.mrf.mxu0
    %v10089 = vadd.f32 %v7178, %v10088
    %v10090 = vpop.f32.mrf.mxu0
    %v10091 = vadd.f32 %v7178, %v10090
    %10092 = vmatprep.mubr.bf16.mxu0 %v9193
    %10093 = vmatmul.mubr.bf16.gmra.mxu0 %v9192
    %v10094 = vpop.f32.mrf.mxu0
    %v10095 = vadd.f32 %v7183, %v10094
    %v10096 = vpop.f32.mrf.mxu0
    %v10097 = vadd.f32 %v7183, %v10096
    %v10098 = vpop.f32.mrf.mxu0
    %v10099 = vadd.f32 %v7188, %v10098
    %v10100 = vpop.f32.mrf.mxu0
    %v10101 = vadd.f32 %v7188, %v10100
    %10102 = vmatprep.mubr.bf16.mxu0 %v9209
    %10103 = vmatmul.mubr.bf16.gmra.mxu0 %v9208
    %v10104 = vpop.f32.mrf.mxu0
    %v10105 = vadd.f32 %v7193, %v10104
    %v10106 = vpop.f32.mrf.mxu0
    %v10107 = vadd.f32 %v7193, %v10106
    %v10108 = vpop.f32.mrf.mxu0
    %v10109 = vadd.f32 %v7198, %v10108
    %v10110 = vpop.f32.mrf.mxu0
    %v10111 = vadd.f32 %v7198, %v10110
    %10112 = vmatprep.mubr.bf16.mxu0 %v9225
    %10113 = vmatmul.mubr.bf16.gmra.mxu0 %v9224
    %v10114 = vpop.f32.mrf.mxu0
    %v10115 = vadd.f32 %v7203, %v10114
    %v10116 = vpop.f32.mrf.mxu0
    %v10117 = vadd.f32 %v7203, %v10116
    %v10118 = vpop.f32.mrf.mxu0
    %v10119 = vadd.f32 %v7208, %v10118
    %v10120 = vpop.f32.mrf.mxu0
    %v10121 = vadd.f32 %v7208, %v10120
    %10122 = vmatprep.mubr.bf16.mxu0 %v9241
    %10123 = vmatmul.mubr.bf16.gmra.mxu0 %v9240
    %v10124 = vpop.f32.mrf.mxu0
    %v10125 = vadd.f32 %v7213, %v10124
    %v10126 = vpop.f32.mrf.mxu0
    %v10127 = vadd.f32 %v7213, %v10126
    %v10128 = vpop.f32.mrf.mxu0
    %v10129 = vadd.f32 %v7218, %v10128
    %v10130 = vpop.f32.mrf.mxu0
    %v10131 = vadd.f32 %v7218, %v10130
    %10132 = vmatprep.mubr.bf16.mxu0 %v9257
    %10133 = vmatmul.mubr.bf16.gmra.mxu0 %v9256
    %v10134 = vpop.f32.mrf.mxu0
    %v10135 = vadd.f32 %v7223, %v10134
    %v10136 = vpop.f32.mrf.mxu0
    %v10137 = vadd.f32 %v7223, %v10136
    %v10138 = vpop.f32.mrf.mxu0
    %v10139 = vadd.f32 %v7228, %v10138
    %v10140 = vpop.f32.mrf.mxu0
    %v10141 = vadd.f32 %v7228, %v10140
    %10142 = vmatprep.mubr.bf16.mxu0 %v9273
    %10143 = vmatmul.mubr.bf16.gmra.mxu0 %v9272
    %v10144 = vpop.f32.mrf.mxu0
    %v10145 = vadd.f32 %v7233, %v10144
    %v10146 = vpop.f32.mrf.mxu0
    %v10147 = vadd.f32 %v7233, %v10146
    %v10148 = vpop.f32.mrf.mxu0
    %v10149 = vadd.f32 %v7238, %v10148
    %v10150 = vpop.f32.mrf.mxu0
    %v10151 = vadd.f32 %v7238, %v10150
    %10152 = vdwg.mxu0
    %10153 = vmatprep.subr.bf16.mxu0 %v6647
    %10154 = vmatpush1.bf16.msra.mxu0 %v6646
    %10155 = vmatprep.subr.bf16.mxu0 %v6645
    %10156 = vmatpush1.bf16.msra.mxu0 %v6644
    %10157 = vmatprep.subr.bf16.mxu0 %v6643
    %10158 = vmatpush1.bf16.msra.mxu0 %v6642
    %10159 = vmatprep.subr.bf16.mxu0 %v6641
    %10160 = vmatpush1.bf16.msra.mxu0 %v6640
    %10161 = vmatprep.subr.bf16.mxu0 %v6639
    %10162 = vmatpush1.bf16.msra.mxu0 %v6638
    %10163 = vmatprep.subr.bf16.mxu0 %v6637
    %10164 = vmatpush1.bf16.msra.mxu0 %v6636
    %10165 = vmatprep.subr.bf16.mxu0 %v6635
    %10166 = vmatpush1.bf16.msra.mxu0 %v6634
    %10167 = vmatprep.subr.bf16.mxu0 %v6633
    %10168 = vmatpush1.bf16.msra.mxu0 %v6632
    %10169 = vmatprep.subr.bf16.mxu0 %v6663
    %10170 = vmatpush2.bf16.msra.mxu0 %v6662
    %10171 = vmatprep.subr.bf16.mxu0 %v6661
    %10172 = vmatpush2.bf16.msra.mxu0 %v6660
    %10173 = vmatprep.subr.bf16.mxu0 %v6659
    %10174 = vmatpush2.bf16.msra.mxu0 %v6658
    %10175 = vmatprep.subr.bf16.mxu0 %v6657
    %10176 = vmatpush2.bf16.msra.mxu0 %v6656
    %10177 = vmatprep.subr.bf16.mxu0 %v6655
    %10178 = vmatpush2.bf16.msra.mxu0 %v6654
    %10179 = vmatprep.subr.bf16.mxu0 %v6653
    %10180 = vmatpush2.bf16.msra.mxu0 %v6652
    %10181 = vmatprep.subr.bf16.mxu0 %v6651
    %10182 = vmatpush2.bf16.msra.mxu0 %v6650
    %10183 = vmatprep.subr.bf16.mxu0 %v6649
    %10184 = vmatpush2.bf16.msra.mxu0 %v6648
    %10185 = vmatprep.mubr.bf16.mxu0 %v8779
    %10186 = vmatmul.mubr.bf16.gmra.mxu0 %v8778
    %v10187 = vpop.f32.mrf.mxu0
    %v10188 = vadd.f32 %v9835, %v10187
    %v10189 = vpop.f32.mrf.mxu0
    %v10190 = vadd.f32 %v9837, %v10189
    %v10191 = vpop.f32.mrf.mxu0
    %v10192 = vadd.f32 %v9839, %v10191
    %v10193 = vpop.f32.mrf.mxu0
    %v10194 = vadd.f32 %v9841, %v10193
    %10195 = vmatprep.mubr.bf16.mxu0 %v8795
    %10196 = vmatmul.mubr.bf16.gmra.mxu0 %v8794
    %v10197 = vpop.f32.mrf.mxu0
    %v10198 = vadd.f32 %v9845, %v10197
    %v10199 = vpop.f32.mrf.mxu0
    %v10200 = vadd.f32 %v9847, %v10199
    %v10201 = vpop.f32.mrf.mxu0
    %v10202 = vadd.f32 %v9849, %v10201
    %v10203 = vpop.f32.mrf.mxu0
    %v10204 = vadd.f32 %v9851, %v10203
    %10205 = vmatprep.mubr.bf16.mxu0 %v8811
    %10206 = vmatmul.mubr.bf16.gmra.mxu0 %v8810
    %v10207 = vpop.f32.mrf.mxu0
    %v10208 = vadd.f32 %v9855, %v10207
    %v10209 = vpop.f32.mrf.mxu0
    %v10210 = vadd.f32 %v9857, %v10209
    %v10211 = vpop.f32.mrf.mxu0
    %v10212 = vadd.f32 %v9859, %v10211
    %v10213 = vpop.f32.mrf.mxu0
    %v10214 = vadd.f32 %v9861, %v10213
    %10215 = vmatprep.mubr.bf16.mxu0 %v8827
    %10216 = vmatmul.mubr.bf16.gmra.mxu0 %v8826
    %v10217 = vpop.f32.mrf.mxu0
    %v10218 = vadd.f32 %v9865, %v10217
    %v10219 = vpop.f32.mrf.mxu0
    %v10220 = vadd.f32 %v9867, %v10219
    %v10221 = vpop.f32.mrf.mxu0
    %v10222 = vadd.f32 %v9869, %v10221
    %v10223 = vpop.f32.mrf.mxu0
    %v10224 = vadd.f32 %v9871, %v10223
    %10225 = vmatprep.mubr.bf16.mxu0 %v8843
    %10226 = vmatmul.mubr.bf16.gmra.mxu0 %v8842
    %v10227 = vpop.f32.mrf.mxu0
    %v10228 = vadd.f32 %v9875, %v10227
    %v10229 = vpop.f32.mrf.mxu0
    %v10230 = vadd.f32 %v9877, %v10229
    %v10231 = vpop.f32.mrf.mxu0
    %v10232 = vadd.f32 %v9879, %v10231
    %v10233 = vpop.f32.mrf.mxu0
    %v10234 = vadd.f32 %v9881, %v10233
    %10235 = vmatprep.mubr.bf16.mxu0 %v8859
    %10236 = vmatmul.mubr.bf16.gmra.mxu0 %v8858
    %v10237 = vpop.f32.mrf.mxu0
    %v10238 = vadd.f32 %v9885, %v10237
    %v10239 = vpop.f32.mrf.mxu0
    %v10240 = vadd.f32 %v9887, %v10239
    %v10241 = vpop.f32.mrf.mxu0
    %v10242 = vadd.f32 %v9889, %v10241
    %v10243 = vpop.f32.mrf.mxu0
    %v10244 = vadd.f32 %v9891, %v10243
    %10245 = vmatprep.mubr.bf16.mxu0 %v8875
    %10246 = vmatmul.mubr.bf16.gmra.mxu0 %v8874
    %v10247 = vpop.f32.mrf.mxu0
    %v10248 = vadd.f32 %v9895, %v10247
    %v10249 = vpop.f32.mrf.mxu0
    %v10250 = vadd.f32 %v9897, %v10249
    %v10251 = vpop.f32.mrf.mxu0
    %v10252 = vadd.f32 %v9899, %v10251
    %v10253 = vpop.f32.mrf.mxu0
    %v10254 = vadd.f32 %v9901, %v10253
    %10255 = vmatprep.mubr.bf16.mxu0 %v8891
    %10256 = vmatmul.mubr.bf16.gmra.mxu0 %v8890
    %v10257 = vpop.f32.mrf.mxu0
    %v10258 = vadd.f32 %v9905, %v10257
    %v10259 = vpop.f32.mrf.mxu0
    %v10260 = vadd.f32 %v9907, %v10259
    %v10261 = vpop.f32.mrf.mxu0
    %v10262 = vadd.f32 %v9909, %v10261
    %v10263 = vpop.f32.mrf.mxu0
    %v10264 = vadd.f32 %v9911, %v10263
    %10265 = vmatprep.mubr.bf16.mxu0 %v8907
    %10266 = vmatmul.mubr.bf16.gmra.mxu0 %v8906
    %v10267 = vpop.f32.mrf.mxu0
    %v10268 = vadd.f32 %v9915, %v10267
    %v10269 = vpop.f32.mrf.mxu0
    %v10270 = vadd.f32 %v9917, %v10269
    %v10271 = vpop.f32.mrf.mxu0
    %v10272 = vadd.f32 %v9919, %v10271
    %v10273 = vpop.f32.mrf.mxu0
    %v10274 = vadd.f32 %v9921, %v10273
    %10275 = vmatprep.mubr.bf16.mxu0 %v8923
    %10276 = vmatmul.mubr.bf16.gmra.mxu0 %v8922
    %v10277 = vpop.f32.mrf.mxu0
    %v10278 = vadd.f32 %v9925, %v10277
    %v10279 = vpop.f32.mrf.mxu0
    %v10280 = vadd.f32 %v9927, %v10279
    %v10281 = vpop.f32.mrf.mxu0
    %v10282 = vadd.f32 %v9929, %v10281
    %v10283 = vpop.f32.mrf.mxu0
    %v10284 = vadd.f32 %v9931, %v10283
    %10285 = vmatprep.mubr.bf16.mxu0 %v8939
    %10286 = vmatmul.mubr.bf16.gmra.mxu0 %v8938
    %v10287 = vpop.f32.mrf.mxu0
    %v10288 = vadd.f32 %v9935, %v10287
    %v10289 = vpop.f32.mrf.mxu0
    %v10290 = vadd.f32 %v9937, %v10289
    %v10291 = vpop.f32.mrf.mxu0
    %v10292 = vadd.f32 %v9939, %v10291
    %v10293 = vpop.f32.mrf.mxu0
    %v10294 = vadd.f32 %v9941, %v10293
    %10295 = vmatprep.mubr.bf16.mxu0 %v8955
    %10296 = vmatmul.mubr.bf16.gmra.mxu0 %v8954
    %v10297 = vpop.f32.mrf.mxu0
    %v10298 = vadd.f32 %v9945, %v10297
    %v10299 = vpop.f32.mrf.mxu0
    %v10300 = vadd.f32 %v9947, %v10299
    %v10301 = vpop.f32.mrf.mxu0
    %v10302 = vadd.f32 %v9949, %v10301
    %v10303 = vpop.f32.mrf.mxu0
    %v10304 = vadd.f32 %v9951, %v10303
    %10305 = vmatprep.mubr.bf16.mxu0 %v8971
    %10306 = vmatmul.mubr.bf16.gmra.mxu0 %v8970
    %v10307 = vpop.f32.mrf.mxu0
    %v10308 = vadd.f32 %v9955, %v10307
    %v10309 = vpop.f32.mrf.mxu0
    %v10310 = vadd.f32 %v9957, %v10309
    %v10311 = vpop.f32.mrf.mxu0
    %v10312 = vadd.f32 %v9959, %v10311
    %v10313 = vpop.f32.mrf.mxu0
    %v10314 = vadd.f32 %v9961, %v10313
    %10315 = vmatprep.mubr.bf16.mxu0 %v8987
    %10316 = vmatmul.mubr.bf16.gmra.mxu0 %v8986
    %v10317 = vpop.f32.mrf.mxu0
    %v10318 = vadd.f32 %v9965, %v10317
    %v10319 = vpop.f32.mrf.mxu0
    %v10320 = vadd.f32 %v9967, %v10319
    %v10321 = vpop.f32.mrf.mxu0
    %v10322 = vadd.f32 %v9969, %v10321
    %v10323 = vpop.f32.mrf.mxu0
    %v10324 = vadd.f32 %v9971, %v10323
    %10325 = vmatprep.mubr.bf16.mxu0 %v9003
    %10326 = vmatmul.mubr.bf16.gmra.mxu0 %v9002
    %v10327 = vpop.f32.mrf.mxu0
    %v10328 = vadd.f32 %v9975, %v10327
    %v10329 = vpop.f32.mrf.mxu0
    %v10330 = vadd.f32 %v9977, %v10329
    %v10331 = vpop.f32.mrf.mxu0
    %v10332 = vadd.f32 %v9979, %v10331
    %v10333 = vpop.f32.mrf.mxu0
    %v10334 = vadd.f32 %v9981, %v10333
    %10335 = vmatprep.mubr.bf16.mxu0 %v9019
    %10336 = vmatmul.mubr.bf16.gmra.mxu0 %v9018
    %v10337 = vpop.f32.mrf.mxu0
    %v10338 = vadd.f32 %v9985, %v10337
    %v10339 = vpop.f32.mrf.mxu0
    %v10340 = vadd.f32 %v9987, %v10339
    %v10341 = vpop.f32.mrf.mxu0
    %v10342 = vadd.f32 %v9989, %v10341
    %v10343 = vpop.f32.mrf.mxu0
    %v10344 = vadd.f32 %v9991, %v10343
    %10345 = vmatprep.mubr.bf16.mxu0 %v9035
    %10346 = vmatmul.mubr.bf16.gmra.mxu0 %v9034
    %v10347 = vpop.f32.mrf.mxu0
    %v10348 = vadd.f32 %v9995, %v10347
    %v10349 = vpop.f32.mrf.mxu0
    %v10350 = vadd.f32 %v9997, %v10349
    %v10351 = vpop.f32.mrf.mxu0
    %v10352 = vadd.f32 %v9999, %v10351
    %v10353 = vpop.f32.mrf.mxu0
    %v10354 = vadd.f32 %v10001, %v10353
    %10355 = vmatprep.mubr.bf16.mxu0 %v9051
    %10356 = vmatmul.mubr.bf16.gmra.mxu0 %v9050
    %v10357 = vpop.f32.mrf.mxu0
    %v10358 = vadd.f32 %v10005, %v10357
    %v10359 = vpop.f32.mrf.mxu0
    %v10360 = vadd.f32 %v10007, %v10359
    %v10361 = vpop.f32.mrf.mxu0
    %v10362 = vadd.f32 %v10009, %v10361
    %v10363 = vpop.f32.mrf.mxu0
    %v10364 = vadd.f32 %v10011, %v10363
    %10365 = vmatprep.mubr.bf16.mxu0 %v9067
    %10366 = vmatmul.mubr.bf16.gmra.mxu0 %v9066
    %v10367 = vpop.f32.mrf.mxu0
    %v10368 = vadd.f32 %v10015, %v10367
    %v10369 = vpop.f32.mrf.mxu0
    %v10370 = vadd.f32 %v10017, %v10369
    %v10371 = vpop.f32.mrf.mxu0
    %v10372 = vadd.f32 %v10019, %v10371
    %v10373 = vpop.f32.mrf.mxu0
    %v10374 = vadd.f32 %v10021, %v10373
    %10375 = vmatprep.mubr.bf16.mxu0 %v9083
    %10376 = vmatmul.mubr.bf16.gmra.mxu0 %v9082
    %v10377 = vpop.f32.mrf.mxu0
    %v10378 = vadd.f32 %v10025, %v10377
    %v10379 = vpop.f32.mrf.mxu0
    %v10380 = vadd.f32 %v10027, %v10379
    %v10381 = vpop.f32.mrf.mxu0
    %v10382 = vadd.f32 %v10029, %v10381
    %v10383 = vpop.f32.mrf.mxu0
    %v10384 = vadd.f32 %v10031, %v10383
    %10385 = vmatprep.mubr.bf16.mxu0 %v9099
    %10386 = vmatmul.mubr.bf16.gmra.mxu0 %v9098
    %v10387 = vpop.f32.mrf.mxu0
    %v10388 = vadd.f32 %v10035, %v10387
    %v10389 = vpop.f32.mrf.mxu0
    %v10390 = vadd.f32 %v10037, %v10389
    %v10391 = vpop.f32.mrf.mxu0
    %v10392 = vadd.f32 %v10039, %v10391
    %v10393 = vpop.f32.mrf.mxu0
    %v10394 = vadd.f32 %v10041, %v10393
    %10395 = vmatprep.mubr.bf16.mxu0 %v9115
    %10396 = vmatmul.mubr.bf16.gmra.mxu0 %v9114
    %v10397 = vpop.f32.mrf.mxu0
    %v10398 = vadd.f32 %v10045, %v10397
    %v10399 = vpop.f32.mrf.mxu0
    %v10400 = vadd.f32 %v10047, %v10399
    %v10401 = vpop.f32.mrf.mxu0
    %v10402 = vadd.f32 %v10049, %v10401
    %v10403 = vpop.f32.mrf.mxu0
    %v10404 = vadd.f32 %v10051, %v10403
    %10405 = vmatprep.mubr.bf16.mxu0 %v9131
    %10406 = vmatmul.mubr.bf16.gmra.mxu0 %v9130
    %v10407 = vpop.f32.mrf.mxu0
    %v10408 = vadd.f32 %v10055, %v10407
    %v10409 = vpop.f32.mrf.mxu0
    %v10410 = vadd.f32 %v10057, %v10409
    %v10411 = vpop.f32.mrf.mxu0
    %v10412 = vadd.f32 %v10059, %v10411
    %v10413 = vpop.f32.mrf.mxu0
    %v10414 = vadd.f32 %v10061, %v10413
    %10415 = vmatprep.mubr.bf16.mxu0 %v9147
    %10416 = vmatmul.mubr.bf16.gmra.mxu0 %v9146
    %v10417 = vpop.f32.mrf.mxu0
    %v10418 = vadd.f32 %v10065, %v10417
    %v10419 = vpop.f32.mrf.mxu0
    %v10420 = vadd.f32 %v10067, %v10419
    %v10421 = vpop.f32.mrf.mxu0
    %v10422 = vadd.f32 %v10069, %v10421
    %v10423 = vpop.f32.mrf.mxu0
    %v10424 = vadd.f32 %v10071, %v10423
    %10425 = vmatprep.mubr.bf16.mxu0 %v9163
    %10426 = vmatmul.mubr.bf16.gmra.mxu0 %v9162
    %v10427 = vpop.f32.mrf.mxu0
    %v10428 = vadd.f32 %v10075, %v10427
    %v10429 = vpop.f32.mrf.mxu0
    %v10430 = vadd.f32 %v10077, %v10429
    %v10431 = vpop.f32.mrf.mxu0
    %v10432 = vadd.f32 %v10079, %v10431
    %v10433 = vpop.f32.mrf.mxu0
    %v10434 = vadd.f32 %v10081, %v10433
    %10435 = vmatprep.mubr.bf16.mxu0 %v9179
    %10436 = vmatmul.mubr.bf16.gmra.mxu0 %v9178
    %v10437 = vpop.f32.mrf.mxu0
    %v10438 = vadd.f32 %v10085, %v10437
    %v10439 = vpop.f32.mrf.mxu0
    %v10440 = vadd.f32 %v10087, %v10439
    %v10441 = vpop.f32.mrf.mxu0
    %v10442 = vadd.f32 %v10089, %v10441
    %v10443 = vpop.f32.mrf.mxu0
    %v10444 = vadd.f32 %v10091, %v10443
    %10445 = vmatprep.mubr.bf16.mxu0 %v9195
    %10446 = vmatmul.mubr.bf16.gmra.mxu0 %v9194
    %v10447 = vpop.f32.mrf.mxu0
    %v10448 = vadd.f32 %v10095, %v10447
    %v10449 = vpop.f32.mrf.mxu0
    %v10450 = vadd.f32 %v10097, %v10449
    %v10451 = vpop.f32.mrf.mxu0
    %v10452 = vadd.f32 %v10099, %v10451
    %v10453 = vpop.f32.mrf.mxu0
    %v10454 = vadd.f32 %v10101, %v10453
    %10455 = vmatprep.mubr.bf16.mxu0 %v9211
    %10456 = vmatmul.mubr.bf16.gmra.mxu0 %v9210
    %v10457 = vpop.f32.mrf.mxu0
    %v10458 = vadd.f32 %v10105, %v10457
    %v10459 = vpop.f32.mrf.mxu0
    %v10460 = vadd.f32 %v10107, %v10459
    %v10461 = vpop.f32.mrf.mxu0
    %v10462 = vadd.f32 %v10109, %v10461
    %v10463 = vpop.f32.mrf.mxu0
    %v10464 = vadd.f32 %v10111, %v10463
    %10465 = vmatprep.mubr.bf16.mxu0 %v9227
    %10466 = vmatmul.mubr.bf16.gmra.mxu0 %v9226
    %v10467 = vpop.f32.mrf.mxu0
    %v10468 = vadd.f32 %v10115, %v10467
    %v10469 = vpop.f32.mrf.mxu0
    %v10470 = vadd.f32 %v10117, %v10469
    %v10471 = vpop.f32.mrf.mxu0
    %v10472 = vadd.f32 %v10119, %v10471
    %v10473 = vpop.f32.mrf.mxu0
    %v10474 = vadd.f32 %v10121, %v10473
    %10475 = vmatprep.mubr.bf16.mxu0 %v9243
    %10476 = vmatmul.mubr.bf16.gmra.mxu0 %v9242
    %v10477 = vpop.f32.mrf.mxu0
    %v10478 = vadd.f32 %v10125, %v10477
    %v10479 = vpop.f32.mrf.mxu0
    %v10480 = vadd.f32 %v10127, %v10479
    %v10481 = vpop.f32.mrf.mxu0
    %v10482 = vadd.f32 %v10129, %v10481
    %v10483 = vpop.f32.mrf.mxu0
    %v10484 = vadd.f32 %v10131, %v10483
    %10485 = vmatprep.mubr.bf16.mxu0 %v9259
    %10486 = vmatmul.mubr.bf16.gmra.mxu0 %v9258
    %v10487 = vpop.f32.mrf.mxu0
    %v10488 = vadd.f32 %v10135, %v10487
    %v10489 = vpop.f32.mrf.mxu0
    %v10490 = vadd.f32 %v10137, %v10489
    %v10491 = vpop.f32.mrf.mxu0
    %v10492 = vadd.f32 %v10139, %v10491
    %v10493 = vpop.f32.mrf.mxu0
    %v10494 = vadd.f32 %v10141, %v10493
    %10495 = vmatprep.mubr.bf16.mxu0 %v9275
    %10496 = vmatmul.mubr.bf16.gmra.mxu0 %v9274
    %v10497 = vpop.f32.mrf.mxu0
    %v10498 = vadd.f32 %v10145, %v10497
    %v10499 = vpop.f32.mrf.mxu0
    %v10500 = vadd.f32 %v10147, %v10499
    %v10501 = vpop.f32.mrf.mxu0
    %v10502 = vadd.f32 %v10149, %v10501
    %v10503 = vpop.f32.mrf.mxu0
    %v10504 = vadd.f32 %v10151, %v10503
    %10505 = vdwg.mxu0
    %10506 = vmatprep.subr.bf16.mxu0 %v6679
    %10507 = vmatpush1.bf16.msra.mxu0 %v6678
    %10508 = vmatprep.subr.bf16.mxu0 %v6677
    %10509 = vmatpush1.bf16.msra.mxu0 %v6676
    %10510 = vmatprep.subr.bf16.mxu0 %v6675
    %10511 = vmatpush1.bf16.msra.mxu0 %v6674
    %10512 = vmatprep.subr.bf16.mxu0 %v6673
    %10513 = vmatpush1.bf16.msra.mxu0 %v6672
    %10514 = vmatprep.subr.bf16.mxu0 %v6671
    %10515 = vmatpush1.bf16.msra.mxu0 %v6670
    %10516 = vmatprep.subr.bf16.mxu0 %v6669
    %10517 = vmatpush1.bf16.msra.mxu0 %v6668
    %10518 = vmatprep.subr.bf16.mxu0 %v6667
    %10519 = vmatpush1.bf16.msra.mxu0 %v6666
    %10520 = vmatprep.subr.bf16.mxu0 %v6665
    %10521 = vmatpush1.bf16.msra.mxu0 %v6664
    %10522 = vmatprep.subr.bf16.mxu0 %v6695
    %10523 = vmatpush2.bf16.msra.mxu0 %v6694
    %10524 = vmatprep.subr.bf16.mxu0 %v6693
    %10525 = vmatpush2.bf16.msra.mxu0 %v6692
    %10526 = vmatprep.subr.bf16.mxu0 %v6691
    %10527 = vmatpush2.bf16.msra.mxu0 %v6690
    %10528 = vmatprep.subr.bf16.mxu0 %v6689
    %10529 = vmatpush2.bf16.msra.mxu0 %v6688
    %10530 = vmatprep.subr.bf16.mxu0 %v6687
    %10531 = vmatpush2.bf16.msra.mxu0 %v6686
    %10532 = vmatprep.subr.bf16.mxu0 %v6685
    %10533 = vmatpush2.bf16.msra.mxu0 %v6684
    %10534 = vmatprep.subr.bf16.mxu0 %v6683
    %10535 = vmatpush2.bf16.msra.mxu0 %v6682
    %10536 = vmatprep.subr.bf16.mxu0 %v6681
    %10537 = vmatpush2.bf16.msra.mxu0 %v6680
    %10538 = vmatprep.mubr.bf16.mxu0 %v8781
    %10539 = vmatmul.mubr.bf16.gmra.mxu0 %v8780
    %v10540 = vpop.f32.mrf.mxu0
    %v10541 = vadd.f32 %v10188, %v10540
    %v10542 = vpop.f32.mrf.mxu0
    %v10543 = vadd.f32 %v10190, %v10542
    %v10544 = vpop.f32.mrf.mxu0
    %v10545 = vadd.f32 %v10192, %v10544
    %v10546 = vpop.f32.mrf.mxu0
    %v10547 = vadd.f32 %v10194, %v10546
    %10548 = vmatprep.mubr.bf16.mxu0 %v8797
    %10549 = vmatmul.mubr.bf16.gmra.mxu0 %v8796
    %v10550 = vpop.f32.mrf.mxu0
    %v10551 = vadd.f32 %v10198, %v10550
    %v10552 = vpop.f32.mrf.mxu0
    %v10553 = vadd.f32 %v10200, %v10552
    %v10554 = vpop.f32.mrf.mxu0
    %v10555 = vadd.f32 %v10202, %v10554
    %v10556 = vpop.f32.mrf.mxu0
    %v10557 = vadd.f32 %v10204, %v10556
    %10558 = vmatprep.mubr.bf16.mxu0 %v8813
    %10559 = vmatmul.mubr.bf16.gmra.mxu0 %v8812
    %v10560 = vpop.f32.mrf.mxu0
    %v10561 = vadd.f32 %v10208, %v10560
    %v10562 = vpop.f32.mrf.mxu0
    %v10563 = vadd.f32 %v10210, %v10562
    %v10564 = vpop.f32.mrf.mxu0
    %v10565 = vadd.f32 %v10212, %v10564
    %v10566 = vpop.f32.mrf.mxu0
    %v10567 = vadd.f32 %v10214, %v10566
    %10568 = vmatprep.mubr.bf16.mxu0 %v8829
    %10569 = vmatmul.mubr.bf16.gmra.mxu0 %v8828
    %v10570 = vpop.f32.mrf.mxu0
    %v10571 = vadd.f32 %v10218, %v10570
    %v10572 = vpop.f32.mrf.mxu0
    %v10573 = vadd.f32 %v10220, %v10572
    %v10574 = vpop.f32.mrf.mxu0
    %v10575 = vadd.f32 %v10222, %v10574
    %v10576 = vpop.f32.mrf.mxu0
    %v10577 = vadd.f32 %v10224, %v10576
    %10578 = vmatprep.mubr.bf16.mxu0 %v8845
    %10579 = vmatmul.mubr.bf16.gmra.mxu0 %v8844
    %v10580 = vpop.f32.mrf.mxu0
    %v10581 = vadd.f32 %v10228, %v10580
    %v10582 = vpop.f32.mrf.mxu0
    %v10583 = vadd.f32 %v10230, %v10582
    %v10584 = vpop.f32.mrf.mxu0
    %v10585 = vadd.f32 %v10232, %v10584
    %v10586 = vpop.f32.mrf.mxu0
    %v10587 = vadd.f32 %v10234, %v10586
    %10588 = vmatprep.mubr.bf16.mxu0 %v8861
    %10589 = vmatmul.mubr.bf16.gmra.mxu0 %v8860
    %v10590 = vpop.f32.mrf.mxu0
    %v10591 = vadd.f32 %v10238, %v10590
    %v10592 = vpop.f32.mrf.mxu0
    %v10593 = vadd.f32 %v10240, %v10592
    %v10594 = vpop.f32.mrf.mxu0
    %v10595 = vadd.f32 %v10242, %v10594
    %v10596 = vpop.f32.mrf.mxu0
    %v10597 = vadd.f32 %v10244, %v10596
    %10598 = vmatprep.mubr.bf16.mxu0 %v8877
    %10599 = vmatmul.mubr.bf16.gmra.mxu0 %v8876
    %v10600 = vpop.f32.mrf.mxu0
    %v10601 = vadd.f32 %v10248, %v10600
    %v10602 = vpop.f32.mrf.mxu0
    %v10603 = vadd.f32 %v10250, %v10602
    %v10604 = vpop.f32.mrf.mxu0
    %v10605 = vadd.f32 %v10252, %v10604
    %v10606 = vpop.f32.mrf.mxu0
    %v10607 = vadd.f32 %v10254, %v10606
    %10608 = vmatprep.mubr.bf16.mxu0 %v8893
    %10609 = vmatmul.mubr.bf16.gmra.mxu0 %v8892
    %v10610 = vpop.f32.mrf.mxu0
    %v10611 = vadd.f32 %v10258, %v10610
    %v10612 = vpop.f32.mrf.mxu0
    %v10613 = vadd.f32 %v10260, %v10612
    %v10614 = vpop.f32.mrf.mxu0
    %v10615 = vadd.f32 %v10262, %v10614
    %v10616 = vpop.f32.mrf.mxu0
    %v10617 = vadd.f32 %v10264, %v10616
    %10618 = vmatprep.mubr.bf16.mxu0 %v8909
    %10619 = vmatmul.mubr.bf16.gmra.mxu0 %v8908
    %v10620 = vpop.f32.mrf.mxu0
    %v10621 = vadd.f32 %v10268, %v10620
    %v10622 = vpop.f32.mrf.mxu0
    %v10623 = vadd.f32 %v10270, %v10622
    %v10624 = vpop.f32.mrf.mxu0
    %v10625 = vadd.f32 %v10272, %v10624
    %v10626 = vpop.f32.mrf.mxu0
    %v10627 = vadd.f32 %v10274, %v10626
    %10628 = vmatprep.mubr.bf16.mxu0 %v8925
    %10629 = vmatmul.mubr.bf16.gmra.mxu0 %v8924
    %v10630 = vpop.f32.mrf.mxu0
    %v10631 = vadd.f32 %v10278, %v10630
    %v10632 = vpop.f32.mrf.mxu0
    %v10633 = vadd.f32 %v10280, %v10632
    %v10634 = vpop.f32.mrf.mxu0
    %v10635 = vadd.f32 %v10282, %v10634
    %v10636 = vpop.f32.mrf.mxu0
    %v10637 = vadd.f32 %v10284, %v10636
    %10638 = vmatprep.mubr.bf16.mxu0 %v8941
    %10639 = vmatmul.mubr.bf16.gmra.mxu0 %v8940
    %v10640 = vpop.f32.mrf.mxu0
    %v10641 = vadd.f32 %v10288, %v10640
    %v10642 = vpop.f32.mrf.mxu0
    %v10643 = vadd.f32 %v10290, %v10642
    %v10644 = vpop.f32.mrf.mxu0
    %v10645 = vadd.f32 %v10292, %v10644
    %v10646 = vpop.f32.mrf.mxu0
    %v10647 = vadd.f32 %v10294, %v10646
    %10648 = vmatprep.mubr.bf16.mxu0 %v8957
    %10649 = vmatmul.mubr.bf16.gmra.mxu0 %v8956
    %v10650 = vpop.f32.mrf.mxu0
    %v10651 = vadd.f32 %v10298, %v10650
    %v10652 = vpop.f32.mrf.mxu0
    %v10653 = vadd.f32 %v10300, %v10652
    %v10654 = vpop.f32.mrf.mxu0
    %v10655 = vadd.f32 %v10302, %v10654
    %v10656 = vpop.f32.mrf.mxu0
    %v10657 = vadd.f32 %v10304, %v10656
    %10658 = vmatprep.mubr.bf16.mxu0 %v8973
    %10659 = vmatmul.mubr.bf16.gmra.mxu0 %v8972
    %v10660 = vpop.f32.mrf.mxu0
    %v10661 = vadd.f32 %v10308, %v10660
    %v10662 = vpop.f32.mrf.mxu0
    %v10663 = vadd.f32 %v10310, %v10662
    %v10664 = vpop.f32.mrf.mxu0
    %v10665 = vadd.f32 %v10312, %v10664
    %v10666 = vpop.f32.mrf.mxu0
    %v10667 = vadd.f32 %v10314, %v10666
    %10668 = vmatprep.mubr.bf16.mxu0 %v8989
    %10669 = vmatmul.mubr.bf16.gmra.mxu0 %v8988
    %v10670 = vpop.f32.mrf.mxu0
    %v10671 = vadd.f32 %v10318, %v10670
    %v10672 = vpop.f32.mrf.mxu0
    %v10673 = vadd.f32 %v10320, %v10672
    %v10674 = vpop.f32.mrf.mxu0
    %v10675 = vadd.f32 %v10322, %v10674
    %v10676 = vpop.f32.mrf.mxu0
    %v10677 = vadd.f32 %v10324, %v10676
    %10678 = vmatprep.mubr.bf16.mxu0 %v9005
    %10679 = vmatmul.mubr.bf16.gmra.mxu0 %v9004
    %v10680 = vpop.f32.mrf.mxu0
    %v10681 = vadd.f32 %v10328, %v10680
    %v10682 = vpop.f32.mrf.mxu0
    %v10683 = vadd.f32 %v10330, %v10682
    %v10684 = vpop.f32.mrf.mxu0
    %v10685 = vadd.f32 %v10332, %v10684
    %v10686 = vpop.f32.mrf.mxu0
    %v10687 = vadd.f32 %v10334, %v10686
    %10688 = vmatprep.mubr.bf16.mxu0 %v9021
    %10689 = vmatmul.mubr.bf16.gmra.mxu0 %v9020
    %v10690 = vpop.f32.mrf.mxu0
    %v10691 = vadd.f32 %v10338, %v10690
    %v10692 = vpop.f32.mrf.mxu0
    %v10693 = vadd.f32 %v10340, %v10692
    %v10694 = vpop.f32.mrf.mxu0
    %v10695 = vadd.f32 %v10342, %v10694
    %v10696 = vpop.f32.mrf.mxu0
    %v10697 = vadd.f32 %v10344, %v10696
    %10698 = vmatprep.mubr.bf16.mxu0 %v9037
    %10699 = vmatmul.mubr.bf16.gmra.mxu0 %v9036
    %v10700 = vpop.f32.mrf.mxu0
    %v10701 = vadd.f32 %v10348, %v10700
    %v10702 = vpop.f32.mrf.mxu0
    %v10703 = vadd.f32 %v10350, %v10702
    %v10704 = vpop.f32.mrf.mxu0
    %v10705 = vadd.f32 %v10352, %v10704
    %v10706 = vpop.f32.mrf.mxu0
    %v10707 = vadd.f32 %v10354, %v10706
    %10708 = vmatprep.mubr.bf16.mxu0 %v9053
    %10709 = vmatmul.mubr.bf16.gmra.mxu0 %v9052
    %v10710 = vpop.f32.mrf.mxu0
    %v10711 = vadd.f32 %v10358, %v10710
    %v10712 = vpop.f32.mrf.mxu0
    %v10713 = vadd.f32 %v10360, %v10712
    %v10714 = vpop.f32.mrf.mxu0
    %v10715 = vadd.f32 %v10362, %v10714
    %v10716 = vpop.f32.mrf.mxu0
    %v10717 = vadd.f32 %v10364, %v10716
    %10718 = vmatprep.mubr.bf16.mxu0 %v9069
    %10719 = vmatmul.mubr.bf16.gmra.mxu0 %v9068
    %v10720 = vpop.f32.mrf.mxu0
    %v10721 = vadd.f32 %v10368, %v10720
    %v10722 = vpop.f32.mrf.mxu0
    %v10723 = vadd.f32 %v10370, %v10722
    %v10724 = vpop.f32.mrf.mxu0
    %v10725 = vadd.f32 %v10372, %v10724
    %v10726 = vpop.f32.mrf.mxu0
    %v10727 = vadd.f32 %v10374, %v10726
    %10728 = vmatprep.mubr.bf16.mxu0 %v9085
    %10729 = vmatmul.mubr.bf16.gmra.mxu0 %v9084
    %v10730 = vpop.f32.mrf.mxu0
    %v10731 = vadd.f32 %v10378, %v10730
    %v10732 = vpop.f32.mrf.mxu0
    %v10733 = vadd.f32 %v10380, %v10732
    %v10734 = vpop.f32.mrf.mxu0
    %v10735 = vadd.f32 %v10382, %v10734
    %v10736 = vpop.f32.mrf.mxu0
    %v10737 = vadd.f32 %v10384, %v10736
    %10738 = vmatprep.mubr.bf16.mxu0 %v9101
    %10739 = vmatmul.mubr.bf16.gmra.mxu0 %v9100
    %v10740 = vpop.f32.mrf.mxu0
    %v10741 = vadd.f32 %v10388, %v10740
    %v10742 = vpop.f32.mrf.mxu0
    %v10743 = vadd.f32 %v10390, %v10742
    %v10744 = vpop.f32.mrf.mxu0
    %v10745 = vadd.f32 %v10392, %v10744
    %v10746 = vpop.f32.mrf.mxu0
    %v10747 = vadd.f32 %v10394, %v10746
    %10748 = vmatprep.mubr.bf16.mxu0 %v9117
    %10749 = vmatmul.mubr.bf16.gmra.mxu0 %v9116
    %v10750 = vpop.f32.mrf.mxu0
    %v10751 = vadd.f32 %v10398, %v10750
    %v10752 = vpop.f32.mrf.mxu0
    %v10753 = vadd.f32 %v10400, %v10752
    %v10754 = vpop.f32.mrf.mxu0
    %v10755 = vadd.f32 %v10402, %v10754
    %v10756 = vpop.f32.mrf.mxu0
    %v10757 = vadd.f32 %v10404, %v10756
    %10758 = vmatprep.mubr.bf16.mxu0 %v9133
    %10759 = vmatmul.mubr.bf16.gmra.mxu0 %v9132
    %v10760 = vpop.f32.mrf.mxu0
    %v10761 = vadd.f32 %v10408, %v10760
    %v10762 = vpop.f32.mrf.mxu0
    %v10763 = vadd.f32 %v10410, %v10762
    %v10764 = vpop.f32.mrf.mxu0
    %v10765 = vadd.f32 %v10412, %v10764
    %v10766 = vpop.f32.mrf.mxu0
    %v10767 = vadd.f32 %v10414, %v10766
    %10768 = vmatprep.mubr.bf16.mxu0 %v9149
    %10769 = vmatmul.mubr.bf16.gmra.mxu0 %v9148
    %v10770 = vpop.f32.mrf.mxu0
    %v10771 = vadd.f32 %v10418, %v10770
    %v10772 = vpop.f32.mrf.mxu0
    %v10773 = vadd.f32 %v10420, %v10772
    %v10774 = vpop.f32.mrf.mxu0
    %v10775 = vadd.f32 %v10422, %v10774
    %v10776 = vpop.f32.mrf.mxu0
    %v10777 = vadd.f32 %v10424, %v10776
    %10778 = vmatprep.mubr.bf16.mxu0 %v9165
    %10779 = vmatmul.mubr.bf16.gmra.mxu0 %v9164
    %v10780 = vpop.f32.mrf.mxu0
    %v10781 = vadd.f32 %v10428, %v10780
    %v10782 = vpop.f32.mrf.mxu0
    %v10783 = vadd.f32 %v10430, %v10782
    %v10784 = vpop.f32.mrf.mxu0
    %v10785 = vadd.f32 %v10432, %v10784
    %v10786 = vpop.f32.mrf.mxu0
    %v10787 = vadd.f32 %v10434, %v10786
    %10788 = vmatprep.mubr.bf16.mxu0 %v9181
    %10789 = vmatmul.mubr.bf16.gmra.mxu0 %v9180
    %v10790 = vpop.f32.mrf.mxu0
    %v10791 = vadd.f32 %v10438, %v10790
    %v10792 = vpop.f32.mrf.mxu0
    %v10793 = vadd.f32 %v10440, %v10792
    %v10794 = vpop.f32.mrf.mxu0
    %v10795 = vadd.f32 %v10442, %v10794
    %v10796 = vpop.f32.mrf.mxu0
    %v10797 = vadd.f32 %v10444, %v10796
    %10798 = vmatprep.mubr.bf16.mxu0 %v9197
    %10799 = vmatmul.mubr.bf16.gmra.mxu0 %v9196
    %v10800 = vpop.f32.mrf.mxu0
    %v10801 = vadd.f32 %v10448, %v10800
    %v10802 = vpop.f32.mrf.mxu0
    %v10803 = vadd.f32 %v10450, %v10802
    %v10804 = vpop.f32.mrf.mxu0
    %v10805 = vadd.f32 %v10452, %v10804
    %v10806 = vpop.f32.mrf.mxu0
    %v10807 = vadd.f32 %v10454, %v10806
    %10808 = vmatprep.mubr.bf16.mxu0 %v9213
    %10809 = vmatmul.mubr.bf16.gmra.mxu0 %v9212
    %v10810 = vpop.f32.mrf.mxu0
    %v10811 = vadd.f32 %v10458, %v10810
    %v10812 = vpop.f32.mrf.mxu0
    %v10813 = vadd.f32 %v10460, %v10812
    %v10814 = vpop.f32.mrf.mxu0
    %v10815 = vadd.f32 %v10462, %v10814
    %v10816 = vpop.f32.mrf.mxu0
    %v10817 = vadd.f32 %v10464, %v10816
    %10818 = vmatprep.mubr.bf16.mxu0 %v9229
    %10819 = vmatmul.mubr.bf16.gmra.mxu0 %v9228
    %v10820 = vpop.f32.mrf.mxu0
    %v10821 = vadd.f32 %v10468, %v10820
    %v10822 = vpop.f32.mrf.mxu0
    %v10823 = vadd.f32 %v10470, %v10822
    %v10824 = vpop.f32.mrf.mxu0
    %v10825 = vadd.f32 %v10472, %v10824
    %v10826 = vpop.f32.mrf.mxu0
    %v10827 = vadd.f32 %v10474, %v10826
    %10828 = vmatprep.mubr.bf16.mxu0 %v9245
    %10829 = vmatmul.mubr.bf16.gmra.mxu0 %v9244
    %v10830 = vpop.f32.mrf.mxu0
    %v10831 = vadd.f32 %v10478, %v10830
    %v10832 = vpop.f32.mrf.mxu0
    %v10833 = vadd.f32 %v10480, %v10832
    %v10834 = vpop.f32.mrf.mxu0
    %v10835 = vadd.f32 %v10482, %v10834
    %v10836 = vpop.f32.mrf.mxu0
    %v10837 = vadd.f32 %v10484, %v10836
    %10838 = vmatprep.mubr.bf16.mxu0 %v9261
    %10839 = vmatmul.mubr.bf16.gmra.mxu0 %v9260
    %v10840 = vpop.f32.mrf.mxu0
    %v10841 = vadd.f32 %v10488, %v10840
    %v10842 = vpop.f32.mrf.mxu0
    %v10843 = vadd.f32 %v10490, %v10842
    %v10844 = vpop.f32.mrf.mxu0
    %v10845 = vadd.f32 %v10492, %v10844
    %v10846 = vpop.f32.mrf.mxu0
    %v10847 = vadd.f32 %v10494, %v10846
    %10848 = vmatprep.mubr.bf16.mxu0 %v9277
    %10849 = vmatmul.mubr.bf16.gmra.mxu0 %v9276
    %v10850 = vpop.f32.mrf.mxu0
    %v10851 = vadd.f32 %v10498, %v10850
    %v10852 = vpop.f32.mrf.mxu0
    %v10853 = vadd.f32 %v10500, %v10852
    %v10854 = vpop.f32.mrf.mxu0
    %v10855 = vadd.f32 %v10502, %v10854
    %v10856 = vpop.f32.mrf.mxu0
    %v10857 = vadd.f32 %v10504, %v10856
    %10858 = vdwg.mxu0
    %10859 = vmatprep.subr.bf16.mxu0 %v6711
    %10860 = vmatpush1.bf16.msra.mxu0 %v6710
    %10861 = vmatprep.subr.bf16.mxu0 %v6709
    %10862 = vmatpush1.bf16.msra.mxu0 %v6708
    %10863 = vmatprep.subr.bf16.mxu0 %v6707
    %10864 = vmatpush1.bf16.msra.mxu0 %v6706
    %10865 = vmatprep.subr.bf16.mxu0 %v6705
    %10866 = vmatpush1.bf16.msra.mxu0 %v6704
    %10867 = vmatprep.subr.bf16.mxu0 %v6703
    %10868 = vmatpush1.bf16.msra.mxu0 %v6702
    %10869 = vmatprep.subr.bf16.mxu0 %v6701
    %10870 = vmatpush1.bf16.msra.mxu0 %v6700
    %10871 = vmatprep.subr.bf16.mxu0 %v6699
    %10872 = vmatpush1.bf16.msra.mxu0 %v6698
    %10873 = vmatprep.subr.bf16.mxu0 %v6697
    %10874 = vmatpush1.bf16.msra.mxu0 %v6696
    %10875 = vmatprep.subr.bf16.mxu0 %v6727
    %10876 = vmatpush2.bf16.msra.mxu0 %v6726
    %10877 = vmatprep.subr.bf16.mxu0 %v6725
    %10878 = vmatpush2.bf16.msra.mxu0 %v6724
    %10879 = vmatprep.subr.bf16.mxu0 %v6723
    %10880 = vmatpush2.bf16.msra.mxu0 %v6722
    %10881 = vmatprep.subr.bf16.mxu0 %v6721
    %10882 = vmatpush2.bf16.msra.mxu0 %v6720
    %10883 = vmatprep.subr.bf16.mxu0 %v6719
    %10884 = vmatpush2.bf16.msra.mxu0 %v6718
    %10885 = vmatprep.subr.bf16.mxu0 %v6717
    %10886 = vmatpush2.bf16.msra.mxu0 %v6716
    %10887 = vmatprep.subr.bf16.mxu0 %v6715
    %10888 = vmatpush2.bf16.msra.mxu0 %v6714
    %10889 = vmatprep.subr.bf16.mxu0 %v6713
    %10890 = vmatpush2.bf16.msra.mxu0 %v6712
    %10891 = vmatprep.mubr.bf16.mxu0 %v8783
    %10892 = vmatmul.mubr.bf16.gmra.mxu0 %v8782
    %v10893 = vpop.f32.mrf.mxu0
    %v10894 = vadd.f32 %v10541, %v10893
    %v10895 = vpop.f32.mrf.mxu0
    %v10896 = vadd.f32 %v10543, %v10895
    %v10897 = vpop.f32.mrf.mxu0
    %v10898 = vadd.f32 %v10545, %v10897
    %v10899 = vpop.f32.mrf.mxu0
    %v10900 = vadd.f32 %v10547, %v10899
    %10901 = vmatprep.mubr.bf16.mxu0 %v8799
    %10902 = vmatmul.mubr.bf16.gmra.mxu0 %v8798
    %v10903 = vpop.f32.mrf.mxu0
    %v10904 = vadd.f32 %v10551, %v10903
    %v10905 = vpop.f32.mrf.mxu0
    %v10906 = vadd.f32 %v10553, %v10905
    %v10907 = vpop.f32.mrf.mxu0
    %v10908 = vadd.f32 %v10555, %v10907
    %v10909 = vpop.f32.mrf.mxu0
    %v10910 = vadd.f32 %v10557, %v10909
    %10911 = vmatprep.mubr.bf16.mxu0 %v8815
    %10912 = vmatmul.mubr.bf16.gmra.mxu0 %v8814
    %v10913 = vpop.f32.mrf.mxu0
    %v10914 = vadd.f32 %v10561, %v10913
    %v10915 = vpop.f32.mrf.mxu0
    %v10916 = vadd.f32 %v10563, %v10915
    %v10917 = vpop.f32.mrf.mxu0
    %v10918 = vadd.f32 %v10565, %v10917
    %v10919 = vpop.f32.mrf.mxu0
    %v10920 = vadd.f32 %v10567, %v10919
    %10921 = vmatprep.mubr.bf16.mxu0 %v8831
    %10922 = vmatmul.mubr.bf16.gmra.mxu0 %v8830
    %v10923 = vpop.f32.mrf.mxu0
    %v10924 = vadd.f32 %v10571, %v10923
    %v10925 = vpop.f32.mrf.mxu0
    %v10926 = vadd.f32 %v10573, %v10925
    %v10927 = vpop.f32.mrf.mxu0
    %v10928 = vadd.f32 %v10575, %v10927
    %v10929 = vpop.f32.mrf.mxu0
    %v10930 = vadd.f32 %v10577, %v10929
    %10931 = vmatprep.mubr.bf16.mxu0 %v8847
    %10932 = vmatmul.mubr.bf16.gmra.mxu0 %v8846
    %v10933 = vpop.f32.mrf.mxu0
    %v10934 = vadd.f32 %v10581, %v10933
    %v10935 = vpop.f32.mrf.mxu0
    %v10936 = vadd.f32 %v10583, %v10935
    %v10937 = vpop.f32.mrf.mxu0
    %v10938 = vadd.f32 %v10585, %v10937
    %v10939 = vpop.f32.mrf.mxu0
    %v10940 = vadd.f32 %v10587, %v10939
    %10941 = vmatprep.mubr.bf16.mxu0 %v8863
    %10942 = vmatmul.mubr.bf16.gmra.mxu0 %v8862
    %v10943 = vpop.f32.mrf.mxu0
    %v10944 = vadd.f32 %v10591, %v10943
    %v10945 = vpop.f32.mrf.mxu0
    %v10946 = vadd.f32 %v10593, %v10945
    %v10947 = vpop.f32.mrf.mxu0
    %v10948 = vadd.f32 %v10595, %v10947
    %v10949 = vpop.f32.mrf.mxu0
    %v10950 = vadd.f32 %v10597, %v10949
    %10951 = vmatprep.mubr.bf16.mxu0 %v8879
    %10952 = vmatmul.mubr.bf16.gmra.mxu0 %v8878
    %v10953 = vpop.f32.mrf.mxu0
    %v10954 = vadd.f32 %v10601, %v10953
    %v10955 = vpop.f32.mrf.mxu0
    %v10956 = vadd.f32 %v10603, %v10955
    %v10957 = vpop.f32.mrf.mxu0
    %v10958 = vadd.f32 %v10605, %v10957
    %v10959 = vpop.f32.mrf.mxu0
    %v10960 = vadd.f32 %v10607, %v10959
    %10961 = vmatprep.mubr.bf16.mxu0 %v8895
    %10962 = vmatmul.mubr.bf16.gmra.mxu0 %v8894
    %v10963 = vpop.f32.mrf.mxu0
    %v10964 = vadd.f32 %v10611, %v10963
    %v10965 = vpop.f32.mrf.mxu0
    %v10966 = vadd.f32 %v10613, %v10965
    %v10967 = vpop.f32.mrf.mxu0
    %v10968 = vadd.f32 %v10615, %v10967
    %v10969 = vpop.f32.mrf.mxu0
    %v10970 = vadd.f32 %v10617, %v10969
    %10971 = vmatprep.mubr.bf16.mxu0 %v8911
    %10972 = vmatmul.mubr.bf16.gmra.mxu0 %v8910
    %v10973 = vpop.f32.mrf.mxu0
    %v10974 = vadd.f32 %v10621, %v10973
    %v10975 = vpop.f32.mrf.mxu0
    %v10976 = vadd.f32 %v10623, %v10975
    %v10977 = vpop.f32.mrf.mxu0
    %v10978 = vadd.f32 %v10625, %v10977
    %v10979 = vpop.f32.mrf.mxu0
    %v10980 = vadd.f32 %v10627, %v10979
    %10981 = vmatprep.mubr.bf16.mxu0 %v8927
    %10982 = vmatmul.mubr.bf16.gmra.mxu0 %v8926
    %v10983 = vpop.f32.mrf.mxu0
    %v10984 = vadd.f32 %v10631, %v10983
    %v10985 = vpop.f32.mrf.mxu0
    %v10986 = vadd.f32 %v10633, %v10985
    %v10987 = vpop.f32.mrf.mxu0
    %v10988 = vadd.f32 %v10635, %v10987
    %v10989 = vpop.f32.mrf.mxu0
    %v10990 = vadd.f32 %v10637, %v10989
    %10991 = vmatprep.mubr.bf16.mxu0 %v8943
    %10992 = vmatmul.mubr.bf16.gmra.mxu0 %v8942
    %v10993 = vpop.f32.mrf.mxu0
    %v10994 = vadd.f32 %v10641, %v10993
    %v10995 = vpop.f32.mrf.mxu0
    %v10996 = vadd.f32 %v10643, %v10995
    %v10997 = vpop.f32.mrf.mxu0
    %v10998 = vadd.f32 %v10645, %v10997
    %v10999 = vpop.f32.mrf.mxu0
    %v11000 = vadd.f32 %v10647, %v10999
    %11001 = vmatprep.mubr.bf16.mxu0 %v8959
    %11002 = vmatmul.mubr.bf16.gmra.mxu0 %v8958
    %v11003 = vpop.f32.mrf.mxu0
    %v11004 = vadd.f32 %v10651, %v11003
    %v11005 = vpop.f32.mrf.mxu0
    %v11006 = vadd.f32 %v10653, %v11005
    %v11007 = vpop.f32.mrf.mxu0
    %v11008 = vadd.f32 %v10655, %v11007
    %v11009 = vpop.f32.mrf.mxu0
    %v11010 = vadd.f32 %v10657, %v11009
    %11011 = vmatprep.mubr.bf16.mxu0 %v8975
    %11012 = vmatmul.mubr.bf16.gmra.mxu0 %v8974
    %v11013 = vpop.f32.mrf.mxu0
    %v11014 = vadd.f32 %v10661, %v11013
    %v11015 = vpop.f32.mrf.mxu0
    %v11016 = vadd.f32 %v10663, %v11015
    %v11017 = vpop.f32.mrf.mxu0
    %v11018 = vadd.f32 %v10665, %v11017
    %v11019 = vpop.f32.mrf.mxu0
    %v11020 = vadd.f32 %v10667, %v11019
    %11021 = vmatprep.mubr.bf16.mxu0 %v8991
    %11022 = vmatmul.mubr.bf16.gmra.mxu0 %v8990
    %v11023 = vpop.f32.mrf.mxu0
    %v11024 = vadd.f32 %v10671, %v11023
    %v11025 = vpop.f32.mrf.mxu0
    %v11026 = vadd.f32 %v10673, %v11025
    %v11027 = vpop.f32.mrf.mxu0
    %v11028 = vadd.f32 %v10675, %v11027
    %v11029 = vpop.f32.mrf.mxu0
    %v11030 = vadd.f32 %v10677, %v11029
    %11031 = vmatprep.mubr.bf16.mxu0 %v9007
    %11032 = vmatmul.mubr.bf16.gmra.mxu0 %v9006
    %v11033 = vpop.f32.mrf.mxu0
    %v11034 = vadd.f32 %v10681, %v11033
    %v11035 = vpop.f32.mrf.mxu0
    %v11036 = vadd.f32 %v10683, %v11035
    %v11037 = vpop.f32.mrf.mxu0
    %v11038 = vadd.f32 %v10685, %v11037
    %v11039 = vpop.f32.mrf.mxu0
    %v11040 = vadd.f32 %v10687, %v11039
    %11041 = vmatprep.mubr.bf16.mxu0 %v9023
    %11042 = vmatmul.mubr.bf16.gmra.mxu0 %v9022
    %v11043 = vpop.f32.mrf.mxu0
    %v11044 = vadd.f32 %v10691, %v11043
    %v11045 = vpop.f32.mrf.mxu0
    %v11046 = vadd.f32 %v10693, %v11045
    %v11047 = vpop.f32.mrf.mxu0
    %v11048 = vadd.f32 %v10695, %v11047
    %v11049 = vpop.f32.mrf.mxu0
    %v11050 = vadd.f32 %v10697, %v11049
    %11051 = vmatprep.mubr.bf16.mxu0 %v9039
    %11052 = vmatmul.mubr.bf16.gmra.mxu0 %v9038
    %v11053 = vpop.f32.mrf.mxu0
    %v11054 = vadd.f32 %v10701, %v11053
    %v11055 = vpop.f32.mrf.mxu0
    %v11056 = vadd.f32 %v10703, %v11055
    %v11057 = vpop.f32.mrf.mxu0
    %v11058 = vadd.f32 %v10705, %v11057
    %v11059 = vpop.f32.mrf.mxu0
    %v11060 = vadd.f32 %v10707, %v11059
    %11061 = vmatprep.mubr.bf16.mxu0 %v9055
    %11062 = vmatmul.mubr.bf16.gmra.mxu0 %v9054
    %v11063 = vpop.f32.mrf.mxu0
    %v11064 = vadd.f32 %v10711, %v11063
    %v11065 = vpop.f32.mrf.mxu0
    %v11066 = vadd.f32 %v10713, %v11065
    %v11067 = vpop.f32.mrf.mxu0
    %v11068 = vadd.f32 %v10715, %v11067
    %v11069 = vpop.f32.mrf.mxu0
    %v11070 = vadd.f32 %v10717, %v11069
    %11071 = vmatprep.mubr.bf16.mxu0 %v9071
    %11072 = vmatmul.mubr.bf16.gmra.mxu0 %v9070
    %v11073 = vpop.f32.mrf.mxu0
    %v11074 = vadd.f32 %v10721, %v11073
    %v11075 = vpop.f32.mrf.mxu0
    %v11076 = vadd.f32 %v10723, %v11075
    %v11077 = vpop.f32.mrf.mxu0
    %v11078 = vadd.f32 %v10725, %v11077
    %v11079 = vpop.f32.mrf.mxu0
    %v11080 = vadd.f32 %v10727, %v11079
    %11081 = vmatprep.mubr.bf16.mxu0 %v9087
    %11082 = vmatmul.mubr.bf16.gmra.mxu0 %v9086
    %v11083 = vpop.f32.mrf.mxu0
    %v11084 = vadd.f32 %v10731, %v11083
    %v11085 = vpop.f32.mrf.mxu0
    %v11086 = vadd.f32 %v10733, %v11085
    %v11087 = vpop.f32.mrf.mxu0
    %v11088 = vadd.f32 %v10735, %v11087
    %v11089 = vpop.f32.mrf.mxu0
    %v11090 = vadd.f32 %v10737, %v11089
    %11091 = vmatprep.mubr.bf16.mxu0 %v9103
    %11092 = vmatmul.mubr.bf16.gmra.mxu0 %v9102
    %v11093 = vpop.f32.mrf.mxu0
    %v11094 = vadd.f32 %v10741, %v11093
    %v11095 = vpop.f32.mrf.mxu0
    %v11096 = vadd.f32 %v10743, %v11095
    %v11097 = vpop.f32.mrf.mxu0
    %v11098 = vadd.f32 %v10745, %v11097
    %v11099 = vpop.f32.mrf.mxu0
    %v11100 = vadd.f32 %v10747, %v11099
    %11101 = vmatprep.mubr.bf16.mxu0 %v9119
    %11102 = vmatmul.mubr.bf16.gmra.mxu0 %v9118
    %v11103 = vpop.f32.mrf.mxu0
    %v11104 = vadd.f32 %v10751, %v11103
    %v11105 = vpop.f32.mrf.mxu0
    %v11106 = vadd.f32 %v10753, %v11105
    %v11107 = vpop.f32.mrf.mxu0
    %v11108 = vadd.f32 %v10755, %v11107
    %v11109 = vpop.f32.mrf.mxu0
    %v11110 = vadd.f32 %v10757, %v11109
    %11111 = vmatprep.mubr.bf16.mxu0 %v9135
    %11112 = vmatmul.mubr.bf16.gmra.mxu0 %v9134
    %v11113 = vpop.f32.mrf.mxu0
    %v11114 = vadd.f32 %v10761, %v11113
    %v11115 = vpop.f32.mrf.mxu0
    %v11116 = vadd.f32 %v10763, %v11115
    %v11117 = vpop.f32.mrf.mxu0
    %v11118 = vadd.f32 %v10765, %v11117
    %v11119 = vpop.f32.mrf.mxu0
    %v11120 = vadd.f32 %v10767, %v11119
    %11121 = vmatprep.mubr.bf16.mxu0 %v9151
    %11122 = vmatmul.mubr.bf16.gmra.mxu0 %v9150
    %v11123 = vpop.f32.mrf.mxu0
    %v11124 = vadd.f32 %v10771, %v11123
    %v11125 = vpop.f32.mrf.mxu0
    %v11126 = vadd.f32 %v10773, %v11125
    %v11127 = vpop.f32.mrf.mxu0
    %v11128 = vadd.f32 %v10775, %v11127
    %v11129 = vpop.f32.mrf.mxu0
    %v11130 = vadd.f32 %v10777, %v11129
    %11131 = vmatprep.mubr.bf16.mxu0 %v9167
    %11132 = vmatmul.mubr.bf16.gmra.mxu0 %v9166
    %v11133 = vpop.f32.mrf.mxu0
    %v11134 = vadd.f32 %v10781, %v11133
    %v11135 = vpop.f32.mrf.mxu0
    %v11136 = vadd.f32 %v10783, %v11135
    %v11137 = vpop.f32.mrf.mxu0
    %v11138 = vadd.f32 %v10785, %v11137
    %v11139 = vpop.f32.mrf.mxu0
    %v11140 = vadd.f32 %v10787, %v11139
    %11141 = vmatprep.mubr.bf16.mxu0 %v9183
    %11142 = vmatmul.mubr.bf16.gmra.mxu0 %v9182
    %v11143 = vpop.f32.mrf.mxu0
    %v11144 = vadd.f32 %v10791, %v11143
    %v11145 = vpop.f32.mrf.mxu0
    %v11146 = vadd.f32 %v10793, %v11145
    %v11147 = vpop.f32.mrf.mxu0
    %v11148 = vadd.f32 %v10795, %v11147
    %v11149 = vpop.f32.mrf.mxu0
    %v11150 = vadd.f32 %v10797, %v11149
    %11151 = vmatprep.mubr.bf16.mxu0 %v9199
    %11152 = vmatmul.mubr.bf16.gmra.mxu0 %v9198
    %v11153 = vpop.f32.mrf.mxu0
    %v11154 = vadd.f32 %v10801, %v11153
    %v11155 = vpop.f32.mrf.mxu0
    %v11156 = vadd.f32 %v10803, %v11155
    %v11157 = vpop.f32.mrf.mxu0
    %v11158 = vadd.f32 %v10805, %v11157
    %v11159 = vpop.f32.mrf.mxu0
    %v11160 = vadd.f32 %v10807, %v11159
    %11161 = vmatprep.mubr.bf16.mxu0 %v9215
    %11162 = vmatmul.mubr.bf16.gmra.mxu0 %v9214
    %v11163 = vpop.f32.mrf.mxu0
    %v11164 = vadd.f32 %v10811, %v11163
    %v11165 = vpop.f32.mrf.mxu0
    %v11166 = vadd.f32 %v10813, %v11165
    %v11167 = vpop.f32.mrf.mxu0
    %v11168 = vadd.f32 %v10815, %v11167
    %v11169 = vpop.f32.mrf.mxu0
    %v11170 = vadd.f32 %v10817, %v11169
    %11171 = vmatprep.mubr.bf16.mxu0 %v9231
    %11172 = vmatmul.mubr.bf16.gmra.mxu0 %v9230
    %v11173 = vpop.f32.mrf.mxu0
    %v11174 = vadd.f32 %v10821, %v11173
    %v11175 = vpop.f32.mrf.mxu0
    %v11176 = vadd.f32 %v10823, %v11175
    %v11177 = vpop.f32.mrf.mxu0
    %v11178 = vadd.f32 %v10825, %v11177
    %v11179 = vpop.f32.mrf.mxu0
    %v11180 = vadd.f32 %v10827, %v11179
    %11181 = vmatprep.mubr.bf16.mxu0 %v9247
    %11182 = vmatmul.mubr.bf16.gmra.mxu0 %v9246
    %v11183 = vpop.f32.mrf.mxu0
    %v11184 = vadd.f32 %v10831, %v11183
    %v11185 = vpop.f32.mrf.mxu0
    %v11186 = vadd.f32 %v10833, %v11185
    %v11187 = vpop.f32.mrf.mxu0
    %v11188 = vadd.f32 %v10835, %v11187
    %v11189 = vpop.f32.mrf.mxu0
    %v11190 = vadd.f32 %v10837, %v11189
    %11191 = vmatprep.mubr.bf16.mxu0 %v9263
    %11192 = vmatmul.mubr.bf16.gmra.mxu0 %v9262
    %v11193 = vpop.f32.mrf.mxu0
    %v11194 = vadd.f32 %v10841, %v11193
    %v11195 = vpop.f32.mrf.mxu0
    %v11196 = vadd.f32 %v10843, %v11195
    %v11197 = vpop.f32.mrf.mxu0
    %v11198 = vadd.f32 %v10845, %v11197
    %v11199 = vpop.f32.mrf.mxu0
    %v11200 = vadd.f32 %v10847, %v11199
    %11201 = vmatprep.mubr.bf16.mxu0 %v9279
    %11202 = vmatmul.mubr.bf16.gmra.mxu0 %v9278
    %v11203 = vpop.f32.mrf.mxu0
    %v11204 = vadd.f32 %v10851, %v11203
    %v11205 = vpop.f32.mrf.mxu0
    %v11206 = vadd.f32 %v10853, %v11205
    %v11207 = vpop.f32.mrf.mxu0
    %v11208 = vadd.f32 %v10855, %v11207
    %v11209 = vpop.f32.mrf.mxu0
    %v11210 = vadd.f32 %v10857, %v11209
    %11211 = vdwg.mxu0
    %11212 = vmatprep.subr.bf16.mxu0 %v6743
    %11213 = vmatpush1.bf16.msra.mxu0 %v6742
    %11214 = vmatprep.subr.bf16.mxu0 %v6741
    %11215 = vmatpush1.bf16.msra.mxu0 %v6740
    %11216 = vmatprep.subr.bf16.mxu0 %v6739
    %11217 = vmatpush1.bf16.msra.mxu0 %v6738
    %11218 = vmatprep.subr.bf16.mxu0 %v6737
    %11219 = vmatpush1.bf16.msra.mxu0 %v6736
    %11220 = vmatprep.subr.bf16.mxu0 %v6735
    %11221 = vmatpush1.bf16.msra.mxu0 %v6734
    %11222 = vmatprep.subr.bf16.mxu0 %v6733
    %11223 = vmatpush1.bf16.msra.mxu0 %v6732
    %11224 = vmatprep.subr.bf16.mxu0 %v6731
    %11225 = vmatpush1.bf16.msra.mxu0 %v6730
    %11226 = vmatprep.subr.bf16.mxu0 %v6729
    %11227 = vmatpush1.bf16.msra.mxu0 %v6728
    %11228 = vmatprep.subr.bf16.mxu0 %v6759
    %11229 = vmatpush2.bf16.msra.mxu0 %v6758
    %11230 = vmatprep.subr.bf16.mxu0 %v6757
    %11231 = vmatpush2.bf16.msra.mxu0 %v6756
    %11232 = vmatprep.subr.bf16.mxu0 %v6755
    %11233 = vmatpush2.bf16.msra.mxu0 %v6754
    %11234 = vmatprep.subr.bf16.mxu0 %v6753
    %11235 = vmatpush2.bf16.msra.mxu0 %v6752
    %11236 = vmatprep.subr.bf16.mxu0 %v6751
    %11237 = vmatpush2.bf16.msra.mxu0 %v6750
    %11238 = vmatprep.subr.bf16.mxu0 %v6749
    %11239 = vmatpush2.bf16.msra.mxu0 %v6748
    %11240 = vmatprep.subr.bf16.mxu0 %v6747
    %11241 = vmatpush2.bf16.msra.mxu0 %v6746
    %11242 = vmatprep.subr.bf16.mxu0 %v6745
    %11243 = vmatpush2.bf16.msra.mxu0 %v6744
    %11244 = vmatprep.mubr.bf16.mxu0 %v8785
    %11245 = vmatmul.mubr.bf16.gmra.mxu0 %v8784
    %v11246 = vpop.f32.mrf.mxu0
    %v11247 = vadd.f32 %v10894, %v11246
    %v11248 = vpop.f32.mrf.mxu0
    %v11249 = vadd.f32 %v10896, %v11248
    %v11250 = vpop.f32.mrf.mxu0
    %v11251 = vadd.f32 %v10898, %v11250
    %v11252 = vpop.f32.mrf.mxu0
    %v11253 = vadd.f32 %v10900, %v11252
    %11254 = vmatprep.mubr.bf16.mxu0 %v8801
    %11255 = vmatmul.mubr.bf16.gmra.mxu0 %v8800
    %v11256 = vpop.f32.mrf.mxu0
    %v11257 = vadd.f32 %v10904, %v11256
    %v11258 = vpop.f32.mrf.mxu0
    %v11259 = vadd.f32 %v10906, %v11258
    %v11260 = vpop.f32.mrf.mxu0
    %v11261 = vadd.f32 %v10908, %v11260
    %v11262 = vpop.f32.mrf.mxu0
    %v11263 = vadd.f32 %v10910, %v11262
    %11264 = vmatprep.mubr.bf16.mxu0 %v8817
    %11265 = vmatmul.mubr.bf16.gmra.mxu0 %v8816
    %v11266 = vpop.f32.mrf.mxu0
    %v11267 = vadd.f32 %v10914, %v11266
    %v11268 = vpop.f32.mrf.mxu0
    %v11269 = vadd.f32 %v10916, %v11268
    %v11270 = vpop.f32.mrf.mxu0
    %v11271 = vadd.f32 %v10918, %v11270
    %v11272 = vpop.f32.mrf.mxu0
    %v11273 = vadd.f32 %v10920, %v11272
    %11274 = vmatprep.mubr.bf16.mxu0 %v8833
    %11275 = vmatmul.mubr.bf16.gmra.mxu0 %v8832
    %v11276 = vpop.f32.mrf.mxu0
    %v11277 = vadd.f32 %v10924, %v11276
    %v11278 = vpop.f32.mrf.mxu0
    %v11279 = vadd.f32 %v10926, %v11278
    %v11280 = vpop.f32.mrf.mxu0
    %v11281 = vadd.f32 %v10928, %v11280
    %v11282 = vpop.f32.mrf.mxu0
    %v11283 = vadd.f32 %v10930, %v11282
    %11284 = vmatprep.mubr.bf16.mxu0 %v8849
    %11285 = vmatmul.mubr.bf16.gmra.mxu0 %v8848
    %v11286 = vpop.f32.mrf.mxu0
    %v11287 = vadd.f32 %v10934, %v11286
    %v11288 = vpop.f32.mrf.mxu0
    %v11289 = vadd.f32 %v10936, %v11288
    %v11290 = vpop.f32.mrf.mxu0
    %v11291 = vadd.f32 %v10938, %v11290
    %v11292 = vpop.f32.mrf.mxu0
    %v11293 = vadd.f32 %v10940, %v11292
    %11294 = vmatprep.mubr.bf16.mxu0 %v8865
    %11295 = vmatmul.mubr.bf16.gmra.mxu0 %v8864
    %v11296 = vpop.f32.mrf.mxu0
    %v11297 = vadd.f32 %v10944, %v11296
    %v11298 = vpop.f32.mrf.mxu0
    %v11299 = vadd.f32 %v10946, %v11298
    %v11300 = vpop.f32.mrf.mxu0
    %v11301 = vadd.f32 %v10948, %v11300
    %v11302 = vpop.f32.mrf.mxu0
    %v11303 = vadd.f32 %v10950, %v11302
    %11304 = vmatprep.mubr.bf16.mxu0 %v8881
    %11305 = vmatmul.mubr.bf16.gmra.mxu0 %v8880
    %v11306 = vpop.f32.mrf.mxu0
    %v11307 = vadd.f32 %v10954, %v11306
    %v11308 = vpop.f32.mrf.mxu0
    %v11309 = vadd.f32 %v10956, %v11308
    %v11310 = vpop.f32.mrf.mxu0
    %v11311 = vadd.f32 %v10958, %v11310
    %v11312 = vpop.f32.mrf.mxu0
    %v11313 = vadd.f32 %v10960, %v11312
    %11314 = vmatprep.mubr.bf16.mxu0 %v8897
    %11315 = vmatmul.mubr.bf16.gmra.mxu0 %v8896
    %v11316 = vpop.f32.mrf.mxu0
    %v11317 = vadd.f32 %v10964, %v11316
    %v11318 = vpop.f32.mrf.mxu0
    %v11319 = vadd.f32 %v10966, %v11318
    %v11320 = vpop.f32.mrf.mxu0
    %v11321 = vadd.f32 %v10968, %v11320
    %v11322 = vpop.f32.mrf.mxu0
    %v11323 = vadd.f32 %v10970, %v11322
    %11324 = vmatprep.mubr.bf16.mxu0 %v8913
    %11325 = vmatmul.mubr.bf16.gmra.mxu0 %v8912
    %v11326 = vpop.f32.mrf.mxu0
    %v11327 = vadd.f32 %v10974, %v11326
    %v11328 = vpop.f32.mrf.mxu0
    %v11329 = vadd.f32 %v10976, %v11328
    %v11330 = vpop.f32.mrf.mxu0
    %v11331 = vadd.f32 %v10978, %v11330
    %v11332 = vpop.f32.mrf.mxu0
    %v11333 = vadd.f32 %v10980, %v11332
    %11334 = vmatprep.mubr.bf16.mxu0 %v8929
    %11335 = vmatmul.mubr.bf16.gmra.mxu0 %v8928
    %v11336 = vpop.f32.mrf.mxu0
    %v11337 = vadd.f32 %v10984, %v11336
    %v11338 = vpop.f32.mrf.mxu0
    %v11339 = vadd.f32 %v10986, %v11338
    %v11340 = vpop.f32.mrf.mxu0
    %v11341 = vadd.f32 %v10988, %v11340
    %v11342 = vpop.f32.mrf.mxu0
    %v11343 = vadd.f32 %v10990, %v11342
    %11344 = vmatprep.mubr.bf16.mxu0 %v8945
    %11345 = vmatmul.mubr.bf16.gmra.mxu0 %v8944
    %v11346 = vpop.f32.mrf.mxu0
    %v11347 = vadd.f32 %v10994, %v11346
    %v11348 = vpop.f32.mrf.mxu0
    %v11349 = vadd.f32 %v10996, %v11348
    %v11350 = vpop.f32.mrf.mxu0
    %v11351 = vadd.f32 %v10998, %v11350
    %v11352 = vpop.f32.mrf.mxu0
    %v11353 = vadd.f32 %v11000, %v11352
    %11354 = vmatprep.mubr.bf16.mxu0 %v8961
    %11355 = vmatmul.mubr.bf16.gmra.mxu0 %v8960
    %v11356 = vpop.f32.mrf.mxu0
    %v11357 = vadd.f32 %v11004, %v11356
    %v11358 = vpop.f32.mrf.mxu0
    %v11359 = vadd.f32 %v11006, %v11358
    %v11360 = vpop.f32.mrf.mxu0
    %v11361 = vadd.f32 %v11008, %v11360
    %v11362 = vpop.f32.mrf.mxu0
    %v11363 = vadd.f32 %v11010, %v11362
    %11364 = vmatprep.mubr.bf16.mxu0 %v8977
    %11365 = vmatmul.mubr.bf16.gmra.mxu0 %v8976
    %v11366 = vpop.f32.mrf.mxu0
    %v11367 = vadd.f32 %v11014, %v11366
    %v11368 = vpop.f32.mrf.mxu0
    %v11369 = vadd.f32 %v11016, %v11368
    %v11370 = vpop.f32.mrf.mxu0
    %v11371 = vadd.f32 %v11018, %v11370
    %v11372 = vpop.f32.mrf.mxu0
    %v11373 = vadd.f32 %v11020, %v11372
    %11374 = vmatprep.mubr.bf16.mxu0 %v8993
    %11375 = vmatmul.mubr.bf16.gmra.mxu0 %v8992
    %v11376 = vpop.f32.mrf.mxu0
    %v11377 = vadd.f32 %v11024, %v11376
    %v11378 = vpop.f32.mrf.mxu0
    %v11379 = vadd.f32 %v11026, %v11378
    %v11380 = vpop.f32.mrf.mxu0
    %v11381 = vadd.f32 %v11028, %v11380
    %v11382 = vpop.f32.mrf.mxu0
    %v11383 = vadd.f32 %v11030, %v11382
    %11384 = vmatprep.mubr.bf16.mxu0 %v9009
    %11385 = vmatmul.mubr.bf16.gmra.mxu0 %v9008
    %v11386 = vpop.f32.mrf.mxu0
    %v11387 = vadd.f32 %v11034, %v11386
    %v11388 = vpop.f32.mrf.mxu0
    %v11389 = vadd.f32 %v11036, %v11388
    %v11390 = vpop.f32.mrf.mxu0
    %v11391 = vadd.f32 %v11038, %v11390
    %v11392 = vpop.f32.mrf.mxu0
    %v11393 = vadd.f32 %v11040, %v11392
    %11394 = vmatprep.mubr.bf16.mxu0 %v9025
    %11395 = vmatmul.mubr.bf16.gmra.mxu0 %v9024
    %v11396 = vpop.f32.mrf.mxu0
    %v11397 = vadd.f32 %v11044, %v11396
    %v11398 = vpop.f32.mrf.mxu0
    %v11399 = vadd.f32 %v11046, %v11398
    %v11400 = vpop.f32.mrf.mxu0
    %v11401 = vadd.f32 %v11048, %v11400
    %v11402 = vpop.f32.mrf.mxu0
    %v11403 = vadd.f32 %v11050, %v11402
    %11404 = vmatprep.mubr.bf16.mxu0 %v9041
    %11405 = vmatmul.mubr.bf16.gmra.mxu0 %v9040
    %v11406 = vpop.f32.mrf.mxu0
    %v11407 = vadd.f32 %v11054, %v11406
    %v11408 = vpop.f32.mrf.mxu0
    %v11409 = vadd.f32 %v11056, %v11408
    %v11410 = vpop.f32.mrf.mxu0
    %v11411 = vadd.f32 %v11058, %v11410
    %v11412 = vpop.f32.mrf.mxu0
    %v11413 = vadd.f32 %v11060, %v11412
    %11414 = vmatprep.mubr.bf16.mxu0 %v9057
    %11415 = vmatmul.mubr.bf16.gmra.mxu0 %v9056
    %v11416 = vpop.f32.mrf.mxu0
    %v11417 = vadd.f32 %v11064, %v11416
    %v11418 = vpop.f32.mrf.mxu0
    %v11419 = vadd.f32 %v11066, %v11418
    %v11420 = vpop.f32.mrf.mxu0
    %v11421 = vadd.f32 %v11068, %v11420
    %v11422 = vpop.f32.mrf.mxu0
    %v11423 = vadd.f32 %v11070, %v11422
    %11424 = vmatprep.mubr.bf16.mxu0 %v9073
    %11425 = vmatmul.mubr.bf16.gmra.mxu0 %v9072
    %v11426 = vpop.f32.mrf.mxu0
    %v11427 = vadd.f32 %v11074, %v11426
    %v11428 = vpop.f32.mrf.mxu0
    %v11429 = vadd.f32 %v11076, %v11428
    %v11430 = vpop.f32.mrf.mxu0
    %v11431 = vadd.f32 %v11078, %v11430
    %v11432 = vpop.f32.mrf.mxu0
    %v11433 = vadd.f32 %v11080, %v11432
    %11434 = vmatprep.mubr.bf16.mxu0 %v9089
    %11435 = vmatmul.mubr.bf16.gmra.mxu0 %v9088
    %v11436 = vpop.f32.mrf.mxu0
    %v11437 = vadd.f32 %v11084, %v11436
    %v11438 = vpop.f32.mrf.mxu0
    %v11439 = vadd.f32 %v11086, %v11438
    %v11440 = vpop.f32.mrf.mxu0
    %v11441 = vadd.f32 %v11088, %v11440
    %v11442 = vpop.f32.mrf.mxu0
    %v11443 = vadd.f32 %v11090, %v11442
    %11444 = vmatprep.mubr.bf16.mxu0 %v9105
    %11445 = vmatmul.mubr.bf16.gmra.mxu0 %v9104
    %v11446 = vpop.f32.mrf.mxu0
    %v11447 = vadd.f32 %v11094, %v11446
    %v11448 = vpop.f32.mrf.mxu0
    %v11449 = vadd.f32 %v11096, %v11448
    %v11450 = vpop.f32.mrf.mxu0
    %v11451 = vadd.f32 %v11098, %v11450
    %v11452 = vpop.f32.mrf.mxu0
    %v11453 = vadd.f32 %v11100, %v11452
    %11454 = vmatprep.mubr.bf16.mxu0 %v9121
    %11455 = vmatmul.mubr.bf16.gmra.mxu0 %v9120
    %v11456 = vpop.f32.mrf.mxu0
    %v11457 = vadd.f32 %v11104, %v11456
    %v11458 = vpop.f32.mrf.mxu0
    %v11459 = vadd.f32 %v11106, %v11458
    %v11460 = vpop.f32.mrf.mxu0
    %v11461 = vadd.f32 %v11108, %v11460
    %v11462 = vpop.f32.mrf.mxu0
    %v11463 = vadd.f32 %v11110, %v11462
    %11464 = vmatprep.mubr.bf16.mxu0 %v9137
    %11465 = vmatmul.mubr.bf16.gmra.mxu0 %v9136
    %v11466 = vpop.f32.mrf.mxu0
    %v11467 = vadd.f32 %v11114, %v11466
    %v11468 = vpop.f32.mrf.mxu0
    %v11469 = vadd.f32 %v11116, %v11468
    %v11470 = vpop.f32.mrf.mxu0
    %v11471 = vadd.f32 %v11118, %v11470
    %v11472 = vpop.f32.mrf.mxu0
    %v11473 = vadd.f32 %v11120, %v11472
    %11474 = vmatprep.mubr.bf16.mxu0 %v9153
    %11475 = vmatmul.mubr.bf16.gmra.mxu0 %v9152
    %v11476 = vpop.f32.mrf.mxu0
    %v11477 = vadd.f32 %v11124, %v11476
    %v11478 = vpop.f32.mrf.mxu0
    %v11479 = vadd.f32 %v11126, %v11478
    %v11480 = vpop.f32.mrf.mxu0
    %v11481 = vadd.f32 %v11128, %v11480
    %v11482 = vpop.f32.mrf.mxu0
    %v11483 = vadd.f32 %v11130, %v11482
    %11484 = vmatprep.mubr.bf16.mxu0 %v9169
    %11485 = vmatmul.mubr.bf16.gmra.mxu0 %v9168
    %v11486 = vpop.f32.mrf.mxu0
    %v11487 = vadd.f32 %v11134, %v11486
    %v11488 = vpop.f32.mrf.mxu0
    %v11489 = vadd.f32 %v11136, %v11488
    %v11490 = vpop.f32.mrf.mxu0
    %v11491 = vadd.f32 %v11138, %v11490
    %v11492 = vpop.f32.mrf.mxu0
    %v11493 = vadd.f32 %v11140, %v11492
    %11494 = vmatprep.mubr.bf16.mxu0 %v9185
    %11495 = vmatmul.mubr.bf16.gmra.mxu0 %v9184
    %v11496 = vpop.f32.mrf.mxu0
    %v11497 = vadd.f32 %v11144, %v11496
    %v11498 = vpop.f32.mrf.mxu0
    %v11499 = vadd.f32 %v11146, %v11498
    %v11500 = vpop.f32.mrf.mxu0
    %v11501 = vadd.f32 %v11148, %v11500
    %v11502 = vpop.f32.mrf.mxu0
    %v11503 = vadd.f32 %v11150, %v11502
    %11504 = vmatprep.mubr.bf16.mxu0 %v9201
    %11505 = vmatmul.mubr.bf16.gmra.mxu0 %v9200
    %v11506 = vpop.f32.mrf.mxu0
    %v11507 = vadd.f32 %v11154, %v11506
    %v11508 = vpop.f32.mrf.mxu0
    %v11509 = vadd.f32 %v11156, %v11508
    %v11510 = vpop.f32.mrf.mxu0
    %v11511 = vadd.f32 %v11158, %v11510
    %v11512 = vpop.f32.mrf.mxu0
    %v11513 = vadd.f32 %v11160, %v11512
    %11514 = vmatprep.mubr.bf16.mxu0 %v9217
    %11515 = vmatmul.mubr.bf16.gmra.mxu0 %v9216
    %v11516 = vpop.f32.mrf.mxu0
    %v11517 = vadd.f32 %v11164, %v11516
    %v11518 = vpop.f32.mrf.mxu0
    %v11519 = vadd.f32 %v11166, %v11518
    %v11520 = vpop.f32.mrf.mxu0
    %v11521 = vadd.f32 %v11168, %v11520
    %v11522 = vpop.f32.mrf.mxu0
    %v11523 = vadd.f32 %v11170, %v11522
    %11524 = vmatprep.mubr.bf16.mxu0 %v9233
    %11525 = vmatmul.mubr.bf16.gmra.mxu0 %v9232
    %v11526 = vpop.f32.mrf.mxu0
    %v11527 = vadd.f32 %v11174, %v11526
    %v11528 = vpop.f32.mrf.mxu0
    %v11529 = vadd.f32 %v11176, %v11528
    %v11530 = vpop.f32.mrf.mxu0
    %v11531 = vadd.f32 %v11178, %v11530
    %v11532 = vpop.f32.mrf.mxu0
    %v11533 = vadd.f32 %v11180, %v11532
    %11534 = vmatprep.mubr.bf16.mxu0 %v9249
    %11535 = vmatmul.mubr.bf16.gmra.mxu0 %v9248
    %v11536 = vpop.f32.mrf.mxu0
    %v11537 = vadd.f32 %v11184, %v11536
    %v11538 = vpop.f32.mrf.mxu0
    %v11539 = vadd.f32 %v11186, %v11538
    %v11540 = vpop.f32.mrf.mxu0
    %v11541 = vadd.f32 %v11188, %v11540
    %v11542 = vpop.f32.mrf.mxu0
    %v11543 = vadd.f32 %v11190, %v11542
    %11544 = vmatprep.mubr.bf16.mxu0 %v9265
    %11545 = vmatmul.mubr.bf16.gmra.mxu0 %v9264
    %v11546 = vpop.f32.mrf.mxu0
    %v11547 = vadd.f32 %v11194, %v11546
    %v11548 = vpop.f32.mrf.mxu0
    %v11549 = vadd.f32 %v11196, %v11548
    %v11550 = vpop.f32.mrf.mxu0
    %v11551 = vadd.f32 %v11198, %v11550
    %v11552 = vpop.f32.mrf.mxu0
    %v11553 = vadd.f32 %v11200, %v11552
    %11554 = vmatprep.mubr.bf16.mxu0 %v9281
    %11555 = vmatmul.mubr.bf16.gmra.mxu0 %v9280
    %v11556 = vpop.f32.mrf.mxu0
    %v11557 = vadd.f32 %v11204, %v11556
    %v11558 = vpop.f32.mrf.mxu0
    %v11559 = vadd.f32 %v11206, %v11558
    %v11560 = vpop.f32.mrf.mxu0
    %v11561 = vadd.f32 %v11208, %v11560
    %v11562 = vpop.f32.mrf.mxu0
    %v11563 = vadd.f32 %v11210, %v11562
    %11564 = vdwg.mxu0
    %11565 = vmatprep.subr.bf16.mxu0 %v6775
    %11566 = vmatpush1.bf16.msra.mxu0 %v6774
    %11567 = vmatprep.subr.bf16.mxu0 %v6773
    %11568 = vmatpush1.bf16.msra.mxu0 %v6772
    %11569 = vmatprep.subr.bf16.mxu0 %v6771
    %11570 = vmatpush1.bf16.msra.mxu0 %v6770
    %11571 = vmatprep.subr.bf16.mxu0 %v6769
    %11572 = vmatpush1.bf16.msra.mxu0 %v6768
    %11573 = vmatprep.subr.bf16.mxu0 %v6767
    %11574 = vmatpush1.bf16.msra.mxu0 %v6766
    %11575 = vmatprep.subr.bf16.mxu0 %v6765
    %11576 = vmatpush1.bf16.msra.mxu0 %v6764
    %11577 = vmatprep.subr.bf16.mxu0 %v6763
    %11578 = vmatpush1.bf16.msra.mxu0 %v6762
    %11579 = vmatprep.subr.bf16.mxu0 %v6761
    %11580 = vmatpush1.bf16.msra.mxu0 %v6760
    %11581 = vmatprep.subr.bf16.mxu0 %v6791
    %11582 = vmatpush2.bf16.msra.mxu0 %v6790
    %11583 = vmatprep.subr.bf16.mxu0 %v6789
    %11584 = vmatpush2.bf16.msra.mxu0 %v6788
    %11585 = vmatprep.subr.bf16.mxu0 %v6787
    %11586 = vmatpush2.bf16.msra.mxu0 %v6786
    %11587 = vmatprep.subr.bf16.mxu0 %v6785
    %11588 = vmatpush2.bf16.msra.mxu0 %v6784
    %11589 = vmatprep.subr.bf16.mxu0 %v6783
    %11590 = vmatpush2.bf16.msra.mxu0 %v6782
    %11591 = vmatprep.subr.bf16.mxu0 %v6781
    %11592 = vmatpush2.bf16.msra.mxu0 %v6780
    %11593 = vmatprep.subr.bf16.mxu0 %v6779
    %11594 = vmatpush2.bf16.msra.mxu0 %v6778
    %11595 = vmatprep.subr.bf16.mxu0 %v6777
    %11596 = vmatpush2.bf16.msra.mxu0 %v6776
    %11597 = vmatprep.mubr.bf16.mxu0 %v8787
    %11598 = vmatmul.mubr.bf16.gmra.mxu0 %v8786
    %v11599 = vpop.f32.mrf.mxu0
    %v11600 = vadd.f32 %v11247, %v11599
    %v11601 = vpop.f32.mrf.mxu0
    %v11602 = vadd.f32 %v11249, %v11601
    %v11603 = vpop.f32.mrf.mxu0
    %v11604 = vadd.f32 %v11251, %v11603
    %v11605 = vpop.f32.mrf.mxu0
    %v11606 = vadd.f32 %v11253, %v11605
    %11607 = vmatprep.mubr.bf16.mxu0 %v8803
    %11608 = vmatmul.mubr.bf16.gmra.mxu0 %v8802
    %v11609 = vpop.f32.mrf.mxu0
    %v11610 = vadd.f32 %v11257, %v11609
    %v11611 = vpop.f32.mrf.mxu0
    %v11612 = vadd.f32 %v11259, %v11611
    %v11613 = vpop.f32.mrf.mxu0
    %v11614 = vadd.f32 %v11261, %v11613
    %v11615 = vpop.f32.mrf.mxu0
    %v11616 = vadd.f32 %v11263, %v11615
    %11617 = vmatprep.mubr.bf16.mxu0 %v8819
    %11618 = vmatmul.mubr.bf16.gmra.mxu0 %v8818
    %v11619 = vpop.f32.mrf.mxu0
    %v11620 = vadd.f32 %v11267, %v11619
    %v11621 = vpop.f32.mrf.mxu0
    %v11622 = vadd.f32 %v11269, %v11621
    %v11623 = vpop.f32.mrf.mxu0
    %v11624 = vadd.f32 %v11271, %v11623
    %v11625 = vpop.f32.mrf.mxu0
    %v11626 = vadd.f32 %v11273, %v11625
    %11627 = vmatprep.mubr.bf16.mxu0 %v8835
    %11628 = vmatmul.mubr.bf16.gmra.mxu0 %v8834
    %v11629 = vpop.f32.mrf.mxu0
    %v11630 = vadd.f32 %v11277, %v11629
    %v11631 = vpop.f32.mrf.mxu0
    %v11632 = vadd.f32 %v11279, %v11631
    %v11633 = vpop.f32.mrf.mxu0
    %v11634 = vadd.f32 %v11281, %v11633
    %v11635 = vpop.f32.mrf.mxu0
    %v11636 = vadd.f32 %v11283, %v11635
    %11637 = vmatprep.mubr.bf16.mxu0 %v8851
    %11638 = vmatmul.mubr.bf16.gmra.mxu0 %v8850
    %v11639 = vpop.f32.mrf.mxu0
    %v11640 = vadd.f32 %v11287, %v11639
    %v11641 = vpop.f32.mrf.mxu0
    %v11642 = vadd.f32 %v11289, %v11641
    %v11643 = vpop.f32.mrf.mxu0
    %v11644 = vadd.f32 %v11291, %v11643
    %v11645 = vpop.f32.mrf.mxu0
    %v11646 = vadd.f32 %v11293, %v11645
    %11647 = vmatprep.mubr.bf16.mxu0 %v8867
    %11648 = vmatmul.mubr.bf16.gmra.mxu0 %v8866
    %v11649 = vpop.f32.mrf.mxu0
    %v11650 = vadd.f32 %v11297, %v11649
    %v11651 = vpop.f32.mrf.mxu0
    %v11652 = vadd.f32 %v11299, %v11651
    %v11653 = vpop.f32.mrf.mxu0
    %v11654 = vadd.f32 %v11301, %v11653
    %v11655 = vpop.f32.mrf.mxu0
    %v11656 = vadd.f32 %v11303, %v11655
    %11657 = vmatprep.mubr.bf16.mxu0 %v8883
    %11658 = vmatmul.mubr.bf16.gmra.mxu0 %v8882
    %v11659 = vpop.f32.mrf.mxu0
    %v11660 = vadd.f32 %v11307, %v11659
    %v11661 = vpop.f32.mrf.mxu0
    %v11662 = vadd.f32 %v11309, %v11661
    %v11663 = vpop.f32.mrf.mxu0
    %v11664 = vadd.f32 %v11311, %v11663
    %v11665 = vpop.f32.mrf.mxu0
    %v11666 = vadd.f32 %v11313, %v11665
    %11667 = vmatprep.mubr.bf16.mxu0 %v8899
    %11668 = vmatmul.mubr.bf16.gmra.mxu0 %v8898
    %v11669 = vpop.f32.mrf.mxu0
    %v11670 = vadd.f32 %v11317, %v11669
    %v11671 = vpop.f32.mrf.mxu0
    %v11672 = vadd.f32 %v11319, %v11671
    %v11673 = vpop.f32.mrf.mxu0
    %v11674 = vadd.f32 %v11321, %v11673
    %v11675 = vpop.f32.mrf.mxu0
    %v11676 = vadd.f32 %v11323, %v11675
    %11677 = vmatprep.mubr.bf16.mxu0 %v8915
    %11678 = vmatmul.mubr.bf16.gmra.mxu0 %v8914
    %v11679 = vpop.f32.mrf.mxu0
    %v11680 = vadd.f32 %v11327, %v11679
    %v11681 = vpop.f32.mrf.mxu0
    %v11682 = vadd.f32 %v11329, %v11681
    %v11683 = vpop.f32.mrf.mxu0
    %v11684 = vadd.f32 %v11331, %v11683
    %v11685 = vpop.f32.mrf.mxu0
    %v11686 = vadd.f32 %v11333, %v11685
    %11687 = vmatprep.mubr.bf16.mxu0 %v8931
    %11688 = vmatmul.mubr.bf16.gmra.mxu0 %v8930
    %v11689 = vpop.f32.mrf.mxu0
    %v11690 = vadd.f32 %v11337, %v11689
    %v11691 = vpop.f32.mrf.mxu0
    %v11692 = vadd.f32 %v11339, %v11691
    %v11693 = vpop.f32.mrf.mxu0
    %v11694 = vadd.f32 %v11341, %v11693
    %v11695 = vpop.f32.mrf.mxu0
    %v11696 = vadd.f32 %v11343, %v11695
    %11697 = vmatprep.mubr.bf16.mxu0 %v8947
    %11698 = vmatmul.mubr.bf16.gmra.mxu0 %v8946
    %v11699 = vpop.f32.mrf.mxu0
    %v11700 = vadd.f32 %v11347, %v11699
    %v11701 = vpop.f32.mrf.mxu0
    %v11702 = vadd.f32 %v11349, %v11701
    %v11703 = vpop.f32.mrf.mxu0
    %v11704 = vadd.f32 %v11351, %v11703
    %v11705 = vpop.f32.mrf.mxu0
    %v11706 = vadd.f32 %v11353, %v11705
    %11707 = vmatprep.mubr.bf16.mxu0 %v8963
    %11708 = vmatmul.mubr.bf16.gmra.mxu0 %v8962
    %v11709 = vpop.f32.mrf.mxu0
    %v11710 = vadd.f32 %v11357, %v11709
    %v11711 = vpop.f32.mrf.mxu0
    %v11712 = vadd.f32 %v11359, %v11711
    %v11713 = vpop.f32.mrf.mxu0
    %v11714 = vadd.f32 %v11361, %v11713
    %v11715 = vpop.f32.mrf.mxu0
    %v11716 = vadd.f32 %v11363, %v11715
    %11717 = vmatprep.mubr.bf16.mxu0 %v8979
    %11718 = vmatmul.mubr.bf16.gmra.mxu0 %v8978
    %v11719 = vpop.f32.mrf.mxu0
    %v11720 = vadd.f32 %v11367, %v11719
    %v11721 = vpop.f32.mrf.mxu0
    %v11722 = vadd.f32 %v11369, %v11721
    %v11723 = vpop.f32.mrf.mxu0
    %v11724 = vadd.f32 %v11371, %v11723
    %v11725 = vpop.f32.mrf.mxu0
    %v11726 = vadd.f32 %v11373, %v11725
    %11727 = vmatprep.mubr.bf16.mxu0 %v8995
    %11728 = vmatmul.mubr.bf16.gmra.mxu0 %v8994
    %v11729 = vpop.f32.mrf.mxu0
    %v11730 = vadd.f32 %v11377, %v11729
    %v11731 = vpop.f32.mrf.mxu0
    %v11732 = vadd.f32 %v11379, %v11731
    %v11733 = vpop.f32.mrf.mxu0
    %v11734 = vadd.f32 %v11381, %v11733
    %v11735 = vpop.f32.mrf.mxu0
    %v11736 = vadd.f32 %v11383, %v11735
    %11737 = vmatprep.mubr.bf16.mxu0 %v9011
    %11738 = vmatmul.mubr.bf16.gmra.mxu0 %v9010
    %v11739 = vpop.f32.mrf.mxu0
    %v11740 = vadd.f32 %v11387, %v11739
    %v11741 = vpop.f32.mrf.mxu0
    %v11742 = vadd.f32 %v11389, %v11741
    %v11743 = vpop.f32.mrf.mxu0
    %v11744 = vadd.f32 %v11391, %v11743
    %v11745 = vpop.f32.mrf.mxu0
    %v11746 = vadd.f32 %v11393, %v11745
    %11747 = vmatprep.mubr.bf16.mxu0 %v9027
    %11748 = vmatmul.mubr.bf16.gmra.mxu0 %v9026
    %v11749 = vpop.f32.mrf.mxu0
    %v11750 = vadd.f32 %v11397, %v11749
    %v11751 = vpop.f32.mrf.mxu0
    %v11752 = vadd.f32 %v11399, %v11751
    %v11753 = vpop.f32.mrf.mxu0
    %v11754 = vadd.f32 %v11401, %v11753
    %v11755 = vpop.f32.mrf.mxu0
    %v11756 = vadd.f32 %v11403, %v11755
    %11757 = vmatprep.mubr.bf16.mxu0 %v9043
    %11758 = vmatmul.mubr.bf16.gmra.mxu0 %v9042
    %v11759 = vpop.f32.mrf.mxu0
    %v11760 = vadd.f32 %v11407, %v11759
    %v11761 = vpop.f32.mrf.mxu0
    %v11762 = vadd.f32 %v11409, %v11761
    %v11763 = vpop.f32.mrf.mxu0
    %v11764 = vadd.f32 %v11411, %v11763
    %v11765 = vpop.f32.mrf.mxu0
    %v11766 = vadd.f32 %v11413, %v11765
    %11767 = vmatprep.mubr.bf16.mxu0 %v9059
    %11768 = vmatmul.mubr.bf16.gmra.mxu0 %v9058
    %v11769 = vpop.f32.mrf.mxu0
    %v11770 = vadd.f32 %v11417, %v11769
    %v11771 = vpop.f32.mrf.mxu0
    %v11772 = vadd.f32 %v11419, %v11771
    %v11773 = vpop.f32.mrf.mxu0
    %v11774 = vadd.f32 %v11421, %v11773
    %v11775 = vpop.f32.mrf.mxu0
    %v11776 = vadd.f32 %v11423, %v11775
    %11777 = vmatprep.mubr.bf16.mxu0 %v9075
    %11778 = vmatmul.mubr.bf16.gmra.mxu0 %v9074
    %v11779 = vpop.f32.mrf.mxu0
    %v11780 = vadd.f32 %v11427, %v11779
    %v11781 = vpop.f32.mrf.mxu0
    %v11782 = vadd.f32 %v11429, %v11781
    %v11783 = vpop.f32.mrf.mxu0
    %v11784 = vadd.f32 %v11431, %v11783
    %v11785 = vpop.f32.mrf.mxu0
    %v11786 = vadd.f32 %v11433, %v11785
    %11787 = vmatprep.mubr.bf16.mxu0 %v9091
    %11788 = vmatmul.mubr.bf16.gmra.mxu0 %v9090
    %v11789 = vpop.f32.mrf.mxu0
    %v11790 = vadd.f32 %v11437, %v11789
    %v11791 = vpop.f32.mrf.mxu0
    %v11792 = vadd.f32 %v11439, %v11791
    %v11793 = vpop.f32.mrf.mxu0
    %v11794 = vadd.f32 %v11441, %v11793
    %v11795 = vpop.f32.mrf.mxu0
    %v11796 = vadd.f32 %v11443, %v11795
    %11797 = vmatprep.mubr.bf16.mxu0 %v9107
    %11798 = vmatmul.mubr.bf16.gmra.mxu0 %v9106
    %v11799 = vpop.f32.mrf.mxu0
    %v11800 = vadd.f32 %v11447, %v11799
    %v11801 = vpop.f32.mrf.mxu0
    %v11802 = vadd.f32 %v11449, %v11801
    %v11803 = vpop.f32.mrf.mxu0
    %v11804 = vadd.f32 %v11451, %v11803
    %v11805 = vpop.f32.mrf.mxu0
    %v11806 = vadd.f32 %v11453, %v11805
    %11807 = vmatprep.mubr.bf16.mxu0 %v9123
    %11808 = vmatmul.mubr.bf16.gmra.mxu0 %v9122
    %v11809 = vpop.f32.mrf.mxu0
    %v11810 = vadd.f32 %v11457, %v11809
    %v11811 = vpop.f32.mrf.mxu0
    %v11812 = vadd.f32 %v11459, %v11811
    %v11813 = vpop.f32.mrf.mxu0
    %v11814 = vadd.f32 %v11461, %v11813
    %v11815 = vpop.f32.mrf.mxu0
    %v11816 = vadd.f32 %v11463, %v11815
    %11817 = vmatprep.mubr.bf16.mxu0 %v9139
    %11818 = vmatmul.mubr.bf16.gmra.mxu0 %v9138
    %v11819 = vpop.f32.mrf.mxu0
    %v11820 = vadd.f32 %v11467, %v11819
    %v11821 = vpop.f32.mrf.mxu0
    %v11822 = vadd.f32 %v11469, %v11821
    %v11823 = vpop.f32.mrf.mxu0
    %v11824 = vadd.f32 %v11471, %v11823
    %v11825 = vpop.f32.mrf.mxu0
    %v11826 = vadd.f32 %v11473, %v11825
    %11827 = vmatprep.mubr.bf16.mxu0 %v9155
    %11828 = vmatmul.mubr.bf16.gmra.mxu0 %v9154
    %v11829 = vpop.f32.mrf.mxu0
    %v11830 = vadd.f32 %v11477, %v11829
    %v11831 = vpop.f32.mrf.mxu0
    %v11832 = vadd.f32 %v11479, %v11831
    %v11833 = vpop.f32.mrf.mxu0
    %v11834 = vadd.f32 %v11481, %v11833
    %v11835 = vpop.f32.mrf.mxu0
    %v11836 = vadd.f32 %v11483, %v11835
    %11837 = vmatprep.mubr.bf16.mxu0 %v9171
    %11838 = vmatmul.mubr.bf16.gmra.mxu0 %v9170
    %v11839 = vpop.f32.mrf.mxu0
    %v11840 = vadd.f32 %v11487, %v11839
    %v11841 = vpop.f32.mrf.mxu0
    %v11842 = vadd.f32 %v11489, %v11841
    %v11843 = vpop.f32.mrf.mxu0
    %v11844 = vadd.f32 %v11491, %v11843
    %v11845 = vpop.f32.mrf.mxu0
    %v11846 = vadd.f32 %v11493, %v11845
    %11847 = vmatprep.mubr.bf16.mxu0 %v9187
    %11848 = vmatmul.mubr.bf16.gmra.mxu0 %v9186
    %v11849 = vpop.f32.mrf.mxu0
    %v11850 = vadd.f32 %v11497, %v11849
    %v11851 = vpop.f32.mrf.mxu0
    %v11852 = vadd.f32 %v11499, %v11851
    %v11853 = vpop.f32.mrf.mxu0
    %v11854 = vadd.f32 %v11501, %v11853
    %v11855 = vpop.f32.mrf.mxu0
    %v11856 = vadd.f32 %v11503, %v11855
    %11857 = vmatprep.mubr.bf16.mxu0 %v9203
    %11858 = vmatmul.mubr.bf16.gmra.mxu0 %v9202
    %v11859 = vpop.f32.mrf.mxu0
    %v11860 = vadd.f32 %v11507, %v11859
    %v11861 = vpop.f32.mrf.mxu0
    %v11862 = vadd.f32 %v11509, %v11861
    %v11863 = vpop.f32.mrf.mxu0
    %v11864 = vadd.f32 %v11511, %v11863
    %v11865 = vpop.f32.mrf.mxu0
    %v11866 = vadd.f32 %v11513, %v11865
    %11867 = vmatprep.mubr.bf16.mxu0 %v9219
    %11868 = vmatmul.mubr.bf16.gmra.mxu0 %v9218
    %v11869 = vpop.f32.mrf.mxu0
    %v11870 = vadd.f32 %v11517, %v11869
    %v11871 = vpop.f32.mrf.mxu0
    %v11872 = vadd.f32 %v11519, %v11871
    %v11873 = vpop.f32.mrf.mxu0
    %v11874 = vadd.f32 %v11521, %v11873
    %v11875 = vpop.f32.mrf.mxu0
    %v11876 = vadd.f32 %v11523, %v11875
    %11877 = vmatprep.mubr.bf16.mxu0 %v9235
    %11878 = vmatmul.mubr.bf16.gmra.mxu0 %v9234
    %v11879 = vpop.f32.mrf.mxu0
    %v11880 = vadd.f32 %v11527, %v11879
    %v11881 = vpop.f32.mrf.mxu0
    %v11882 = vadd.f32 %v11529, %v11881
    %v11883 = vpop.f32.mrf.mxu0
    %v11884 = vadd.f32 %v11531, %v11883
    %v11885 = vpop.f32.mrf.mxu0
    %v11886 = vadd.f32 %v11533, %v11885
    %11887 = vmatprep.mubr.bf16.mxu0 %v9251
    %11888 = vmatmul.mubr.bf16.gmra.mxu0 %v9250
    %v11889 = vpop.f32.mrf.mxu0
    %v11890 = vadd.f32 %v11537, %v11889
    %v11891 = vpop.f32.mrf.mxu0
    %v11892 = vadd.f32 %v11539, %v11891
    %v11893 = vpop.f32.mrf.mxu0
    %v11894 = vadd.f32 %v11541, %v11893
    %v11895 = vpop.f32.mrf.mxu0
    %v11896 = vadd.f32 %v11543, %v11895
    %11897 = vmatprep.mubr.bf16.mxu0 %v9267
    %11898 = vmatmul.mubr.bf16.gmra.mxu0 %v9266
    %v11899 = vpop.f32.mrf.mxu0
    %v11900 = vadd.f32 %v11547, %v11899
    %v11901 = vpop.f32.mrf.mxu0
    %v11902 = vadd.f32 %v11549, %v11901
    %v11903 = vpop.f32.mrf.mxu0
    %v11904 = vadd.f32 %v11551, %v11903
    %v11905 = vpop.f32.mrf.mxu0
    %v11906 = vadd.f32 %v11553, %v11905
    %11907 = vmatprep.mubr.bf16.mxu0 %v9283
    %11908 = vmatmul.mubr.bf16.gmra.mxu0 %v9282
    %v11909 = vpop.f32.mrf.mxu0
    %v11910 = vadd.f32 %v11557, %v11909
    %v11911 = vpop.f32.mrf.mxu0
    %v11912 = vadd.f32 %v11559, %v11911
    %v11913 = vpop.f32.mrf.mxu0
    %v11914 = vadd.f32 %v11561, %v11913
    %v11915 = vpop.f32.mrf.mxu0
    %v11916 = vadd.f32 %v11563, %v11915
    %11917 = vdwg.mxu0
    %11918 = vmatprep.subr.bf16.mxu0 %v6807
    %11919 = vmatpush1.bf16.msra.mxu0 %v6806
    %11920 = vmatprep.subr.bf16.mxu0 %v6805
    %11921 = vmatpush1.bf16.msra.mxu0 %v6804
    %11922 = vmatprep.subr.bf16.mxu0 %v6803
    %11923 = vmatpush1.bf16.msra.mxu0 %v6802
    %11924 = vmatprep.subr.bf16.mxu0 %v6801
    %11925 = vmatpush1.bf16.msra.mxu0 %v6800
    %11926 = vmatprep.subr.bf16.mxu0 %v6799
    %11927 = vmatpush1.bf16.msra.mxu0 %v6798
    %11928 = vmatprep.subr.bf16.mxu0 %v6797
    %11929 = vmatpush1.bf16.msra.mxu0 %v6796
    %11930 = vmatprep.subr.bf16.mxu0 %v6795
    %11931 = vmatpush1.bf16.msra.mxu0 %v6794
    %11932 = vmatprep.subr.bf16.mxu0 %v6793
    %11933 = vmatpush1.bf16.msra.mxu0 %v6792
    %11934 = vmatprep.subr.bf16.mxu0 %v6823
    %11935 = vmatpush2.bf16.msra.mxu0 %v6822
    %11936 = vmatprep.subr.bf16.mxu0 %v6821
    %11937 = vmatpush2.bf16.msra.mxu0 %v6820
    %11938 = vmatprep.subr.bf16.mxu0 %v6819
    %11939 = vmatpush2.bf16.msra.mxu0 %v6818
    %11940 = vmatprep.subr.bf16.mxu0 %v6817
    %11941 = vmatpush2.bf16.msra.mxu0 %v6816
    %11942 = vmatprep.subr.bf16.mxu0 %v6815
    %11943 = vmatpush2.bf16.msra.mxu0 %v6814
    %11944 = vmatprep.subr.bf16.mxu0 %v6813
    %11945 = vmatpush2.bf16.msra.mxu0 %v6812
    %11946 = vmatprep.subr.bf16.mxu0 %v6811
    %11947 = vmatpush2.bf16.msra.mxu0 %v6810
    %11948 = vmatprep.subr.bf16.mxu0 %v6809
    %11949 = vmatpush2.bf16.msra.mxu0 %v6808
    %11950 = vmatprep.mubr.bf16.mxu0 %v8789
    %11951 = vmatmul.mubr.bf16.gmra.mxu0 %v8788
    %v11952 = vpop.f32.mrf.mxu0
    %v11953 = vadd.f32 %v11600, %v11952
    %v11954 = vpop.f32.mrf.mxu0
    %v11955 = vadd.f32 %v11602, %v11954
    %v11956 = vpop.f32.mrf.mxu0
    %v11957 = vadd.f32 %v11604, %v11956
    %v11958 = vpop.f32.mrf.mxu0
    %v11959 = vadd.f32 %v11606, %v11958
    %11960 = vmatprep.mubr.bf16.mxu0 %v8805
    %11961 = vmatmul.mubr.bf16.gmra.mxu0 %v8804
    %v11962 = vpop.f32.mrf.mxu0
    %v11963 = vadd.f32 %v11610, %v11962
    %v11964 = vpop.f32.mrf.mxu0
    %v11965 = vadd.f32 %v11612, %v11964
    %v11966 = vpop.f32.mrf.mxu0
    %v11967 = vadd.f32 %v11614, %v11966
    %v11968 = vpop.f32.mrf.mxu0
    %v11969 = vadd.f32 %v11616, %v11968
    %11970 = vmatprep.mubr.bf16.mxu0 %v8821
    %11971 = vmatmul.mubr.bf16.gmra.mxu0 %v8820
    %v11972 = vpop.f32.mrf.mxu0
    %v11973 = vadd.f32 %v11620, %v11972
    %v11974 = vpop.f32.mrf.mxu0
    %v11975 = vadd.f32 %v11622, %v11974
    %v11976 = vpop.f32.mrf.mxu0
    %v11977 = vadd.f32 %v11624, %v11976
    %v11978 = vpop.f32.mrf.mxu0
    %v11979 = vadd.f32 %v11626, %v11978
    %11980 = vmatprep.mubr.bf16.mxu0 %v8837
    %11981 = vmatmul.mubr.bf16.gmra.mxu0 %v8836
    %v11982 = vpop.f32.mrf.mxu0
    %v11983 = vadd.f32 %v11630, %v11982
    %v11984 = vpop.f32.mrf.mxu0
    %v11985 = vadd.f32 %v11632, %v11984
    %v11986 = vpop.f32.mrf.mxu0
    %v11987 = vadd.f32 %v11634, %v11986
    %v11988 = vpop.f32.mrf.mxu0
    %v11989 = vadd.f32 %v11636, %v11988
    %11990 = vmatprep.mubr.bf16.mxu0 %v8853
    %11991 = vmatmul.mubr.bf16.gmra.mxu0 %v8852
    %v11992 = vpop.f32.mrf.mxu0
    %v11993 = vadd.f32 %v11640, %v11992
    %v11994 = vpop.f32.mrf.mxu0
    %v11995 = vadd.f32 %v11642, %v11994
    %v11996 = vpop.f32.mrf.mxu0
    %v11997 = vadd.f32 %v11644, %v11996
    %v11998 = vpop.f32.mrf.mxu0
    %v11999 = vadd.f32 %v11646, %v11998
    %12000 = vmatprep.mubr.bf16.mxu0 %v8869
    %12001 = vmatmul.mubr.bf16.gmra.mxu0 %v8868
    %v12002 = vpop.f32.mrf.mxu0
    %v12003 = vadd.f32 %v11650, %v12002
    %v12004 = vpop.f32.mrf.mxu0
    %v12005 = vadd.f32 %v11652, %v12004
    %v12006 = vpop.f32.mrf.mxu0
    %v12007 = vadd.f32 %v11654, %v12006
    %v12008 = vpop.f32.mrf.mxu0
    %v12009 = vadd.f32 %v11656, %v12008
    %12010 = vmatprep.mubr.bf16.mxu0 %v8885
    %12011 = vmatmul.mubr.bf16.gmra.mxu0 %v8884
    %v12012 = vpop.f32.mrf.mxu0
    %v12013 = vadd.f32 %v11660, %v12012
    %v12014 = vpop.f32.mrf.mxu0
    %v12015 = vadd.f32 %v11662, %v12014
    %v12016 = vpop.f32.mrf.mxu0
    %v12017 = vadd.f32 %v11664, %v12016
    %v12018 = vpop.f32.mrf.mxu0
    %v12019 = vadd.f32 %v11666, %v12018
    %12020 = vmatprep.mubr.bf16.mxu0 %v8901
    %12021 = vmatmul.mubr.bf16.gmra.mxu0 %v8900
    %v12022 = vpop.f32.mrf.mxu0
    %v12023 = vadd.f32 %v11670, %v12022
    %v12024 = vpop.f32.mrf.mxu0
    %v12025 = vadd.f32 %v11672, %v12024
    %v12026 = vpop.f32.mrf.mxu0
    %v12027 = vadd.f32 %v11674, %v12026
    %v12028 = vpop.f32.mrf.mxu0
    %v12029 = vadd.f32 %v11676, %v12028
    %12030 = vmatprep.mubr.bf16.mxu0 %v8917
    %12031 = vmatmul.mubr.bf16.gmra.mxu0 %v8916
    %v12032 = vpop.f32.mrf.mxu0
    %v12033 = vadd.f32 %v11680, %v12032
    %v12034 = vpop.f32.mrf.mxu0
    %v12035 = vadd.f32 %v11682, %v12034
    %v12036 = vpop.f32.mrf.mxu0
    %v12037 = vadd.f32 %v11684, %v12036
    %v12038 = vpop.f32.mrf.mxu0
    %v12039 = vadd.f32 %v11686, %v12038
    %12040 = vmatprep.mubr.bf16.mxu0 %v8933
    %12041 = vmatmul.mubr.bf16.gmra.mxu0 %v8932
    %v12042 = vpop.f32.mrf.mxu0
    %v12043 = vadd.f32 %v11690, %v12042
    %v12044 = vpop.f32.mrf.mxu0
    %v12045 = vadd.f32 %v11692, %v12044
    %v12046 = vpop.f32.mrf.mxu0
    %v12047 = vadd.f32 %v11694, %v12046
    %v12048 = vpop.f32.mrf.mxu0
    %v12049 = vadd.f32 %v11696, %v12048
    %12050 = vmatprep.mubr.bf16.mxu0 %v8949
    %12051 = vmatmul.mubr.bf16.gmra.mxu0 %v8948
    %v12052 = vpop.f32.mrf.mxu0
    %v12053 = vadd.f32 %v11700, %v12052
    %v12054 = vpop.f32.mrf.mxu0
    %v12055 = vadd.f32 %v11702, %v12054
    %v12056 = vpop.f32.mrf.mxu0
    %v12057 = vadd.f32 %v11704, %v12056
    %v12058 = vpop.f32.mrf.mxu0
    %v12059 = vadd.f32 %v11706, %v12058
    %12060 = vmatprep.mubr.bf16.mxu0 %v8965
    %12061 = vmatmul.mubr.bf16.gmra.mxu0 %v8964
    %v12062 = vpop.f32.mrf.mxu0
    %v12063 = vadd.f32 %v11710, %v12062
    %v12064 = vpop.f32.mrf.mxu0
    %v12065 = vadd.f32 %v11712, %v12064
    %v12066 = vpop.f32.mrf.mxu0
    %v12067 = vadd.f32 %v11714, %v12066
    %v12068 = vpop.f32.mrf.mxu0
    %v12069 = vadd.f32 %v11716, %v12068
    %12070 = vmatprep.mubr.bf16.mxu0 %v8981
    %12071 = vmatmul.mubr.bf16.gmra.mxu0 %v8980
    %v12072 = vpop.f32.mrf.mxu0
    %v12073 = vadd.f32 %v11720, %v12072
    %v12074 = vpop.f32.mrf.mxu0
    %v12075 = vadd.f32 %v11722, %v12074
    %v12076 = vpop.f32.mrf.mxu0
    %v12077 = vadd.f32 %v11724, %v12076
    %v12078 = vpop.f32.mrf.mxu0
    %v12079 = vadd.f32 %v11726, %v12078
    %12080 = vmatprep.mubr.bf16.mxu0 %v8997
    %12081 = vmatmul.mubr.bf16.gmra.mxu0 %v8996
    %v12082 = vpop.f32.mrf.mxu0
    %v12083 = vadd.f32 %v11730, %v12082
    %v12084 = vpop.f32.mrf.mxu0
    %v12085 = vadd.f32 %v11732, %v12084
    %v12086 = vpop.f32.mrf.mxu0
    %v12087 = vadd.f32 %v11734, %v12086
    %v12088 = vpop.f32.mrf.mxu0
    %v12089 = vadd.f32 %v11736, %v12088
    %12090 = vmatprep.mubr.bf16.mxu0 %v9013
    %12091 = vmatmul.mubr.bf16.gmra.mxu0 %v9012
    %v12092 = vpop.f32.mrf.mxu0
    %v12093 = vadd.f32 %v11740, %v12092
    %v12094 = vpop.f32.mrf.mxu0
    %v12095 = vadd.f32 %v11742, %v12094
    %v12096 = vpop.f32.mrf.mxu0
    %v12097 = vadd.f32 %v11744, %v12096
    %v12098 = vpop.f32.mrf.mxu0
    %v12099 = vadd.f32 %v11746, %v12098
    %12100 = vmatprep.mubr.bf16.mxu0 %v9029
    %12101 = vmatmul.mubr.bf16.gmra.mxu0 %v9028
    %v12102 = vpop.f32.mrf.mxu0
    %v12103 = vadd.f32 %v11750, %v12102
    %v12104 = vpop.f32.mrf.mxu0
    %v12105 = vadd.f32 %v11752, %v12104
    %v12106 = vpop.f32.mrf.mxu0
    %v12107 = vadd.f32 %v11754, %v12106
    %v12108 = vpop.f32.mrf.mxu0
    %v12109 = vadd.f32 %v11756, %v12108
    %12110 = vmatprep.mubr.bf16.mxu0 %v9045
    %12111 = vmatmul.mubr.bf16.gmra.mxu0 %v9044
    %v12112 = vpop.f32.mrf.mxu0
    %v12113 = vadd.f32 %v11760, %v12112
    %v12114 = vpop.f32.mrf.mxu0
    %v12115 = vadd.f32 %v11762, %v12114
    %v12116 = vpop.f32.mrf.mxu0
    %v12117 = vadd.f32 %v11764, %v12116
    %v12118 = vpop.f32.mrf.mxu0
    %v12119 = vadd.f32 %v11766, %v12118
    %12120 = vmatprep.mubr.bf16.mxu0 %v9061
    %12121 = vmatmul.mubr.bf16.gmra.mxu0 %v9060
    %v12122 = vpop.f32.mrf.mxu0
    %v12123 = vadd.f32 %v11770, %v12122
    %v12124 = vpop.f32.mrf.mxu0
    %v12125 = vadd.f32 %v11772, %v12124
    %v12126 = vpop.f32.mrf.mxu0
    %v12127 = vadd.f32 %v11774, %v12126
    %v12128 = vpop.f32.mrf.mxu0
    %v12129 = vadd.f32 %v11776, %v12128
    %12130 = vmatprep.mubr.bf16.mxu0 %v9077
    %12131 = vmatmul.mubr.bf16.gmra.mxu0 %v9076
    %v12132 = vpop.f32.mrf.mxu0
    %v12133 = vadd.f32 %v11780, %v12132
    %v12134 = vpop.f32.mrf.mxu0
    %v12135 = vadd.f32 %v11782, %v12134
    %v12136 = vpop.f32.mrf.mxu0
    %v12137 = vadd.f32 %v11784, %v12136
    %v12138 = vpop.f32.mrf.mxu0
    %v12139 = vadd.f32 %v11786, %v12138
    %12140 = vmatprep.mubr.bf16.mxu0 %v9093
    %12141 = vmatmul.mubr.bf16.gmra.mxu0 %v9092
    %v12142 = vpop.f32.mrf.mxu0
    %v12143 = vadd.f32 %v11790, %v12142
    %v12144 = vpop.f32.mrf.mxu0
    %v12145 = vadd.f32 %v11792, %v12144
    %v12146 = vpop.f32.mrf.mxu0
    %v12147 = vadd.f32 %v11794, %v12146
    %v12148 = vpop.f32.mrf.mxu0
    %v12149 = vadd.f32 %v11796, %v12148
    %12150 = vmatprep.mubr.bf16.mxu0 %v9109
    %12151 = vmatmul.mubr.bf16.gmra.mxu0 %v9108
    %v12152 = vpop.f32.mrf.mxu0
    %v12153 = vadd.f32 %v11800, %v12152
    %v12154 = vpop.f32.mrf.mxu0
    %v12155 = vadd.f32 %v11802, %v12154
    %v12156 = vpop.f32.mrf.mxu0
    %v12157 = vadd.f32 %v11804, %v12156
    %v12158 = vpop.f32.mrf.mxu0
    %v12159 = vadd.f32 %v11806, %v12158
    %12160 = vmatprep.mubr.bf16.mxu0 %v9125
    %12161 = vmatmul.mubr.bf16.gmra.mxu0 %v9124
    %v12162 = vpop.f32.mrf.mxu0
    %v12163 = vadd.f32 %v11810, %v12162
    %v12164 = vpop.f32.mrf.mxu0
    %v12165 = vadd.f32 %v11812, %v12164
    %v12166 = vpop.f32.mrf.mxu0
    %v12167 = vadd.f32 %v11814, %v12166
    %v12168 = vpop.f32.mrf.mxu0
    %v12169 = vadd.f32 %v11816, %v12168
    %12170 = vmatprep.mubr.bf16.mxu0 %v9141
    %12171 = vmatmul.mubr.bf16.gmra.mxu0 %v9140
    %v12172 = vpop.f32.mrf.mxu0
    %v12173 = vadd.f32 %v11820, %v12172
    %v12174 = vpop.f32.mrf.mxu0
    %v12175 = vadd.f32 %v11822, %v12174
    %v12176 = vpop.f32.mrf.mxu0
    %v12177 = vadd.f32 %v11824, %v12176
    %v12178 = vpop.f32.mrf.mxu0
    %v12179 = vadd.f32 %v11826, %v12178
    %12180 = vmatprep.mubr.bf16.mxu0 %v9157
    %12181 = vmatmul.mubr.bf16.gmra.mxu0 %v9156
    %v12182 = vpop.f32.mrf.mxu0
    %v12183 = vadd.f32 %v11830, %v12182
    %v12184 = vpop.f32.mrf.mxu0
    %v12185 = vadd.f32 %v11832, %v12184
    %v12186 = vpop.f32.mrf.mxu0
    %v12187 = vadd.f32 %v11834, %v12186
    %v12188 = vpop.f32.mrf.mxu0
    %v12189 = vadd.f32 %v11836, %v12188
    %12190 = vmatprep.mubr.bf16.mxu0 %v9173
    %12191 = vmatmul.mubr.bf16.gmra.mxu0 %v9172
    %v12192 = vpop.f32.mrf.mxu0
    %v12193 = vadd.f32 %v11840, %v12192
    %v12194 = vpop.f32.mrf.mxu0
    %v12195 = vadd.f32 %v11842, %v12194
    %v12196 = vpop.f32.mrf.mxu0
    %v12197 = vadd.f32 %v11844, %v12196
    %v12198 = vpop.f32.mrf.mxu0
    %v12199 = vadd.f32 %v11846, %v12198
    %12200 = vmatprep.mubr.bf16.mxu0 %v9189
    %12201 = vmatmul.mubr.bf16.gmra.mxu0 %v9188
    %v12202 = vpop.f32.mrf.mxu0
    %v12203 = vadd.f32 %v11850, %v12202
    %v12204 = vpop.f32.mrf.mxu0
    %v12205 = vadd.f32 %v11852, %v12204
    %v12206 = vpop.f32.mrf.mxu0
    %v12207 = vadd.f32 %v11854, %v12206
    %v12208 = vpop.f32.mrf.mxu0
    %v12209 = vadd.f32 %v11856, %v12208
    %12210 = vmatprep.mubr.bf16.mxu0 %v9205
    %12211 = vmatmul.mubr.bf16.gmra.mxu0 %v9204
    %v12212 = vpop.f32.mrf.mxu0
    %v12213 = vadd.f32 %v11860, %v12212
    %v12214 = vpop.f32.mrf.mxu0
    %v12215 = vadd.f32 %v11862, %v12214
    %v12216 = vpop.f32.mrf.mxu0
    %v12217 = vadd.f32 %v11864, %v12216
    %v12218 = vpop.f32.mrf.mxu0
    %v12219 = vadd.f32 %v11866, %v12218
    %12220 = vmatprep.mubr.bf16.mxu0 %v9221
    %12221 = vmatmul.mubr.bf16.gmra.mxu0 %v9220
    %v12222 = vpop.f32.mrf.mxu0
    %v12223 = vadd.f32 %v11870, %v12222
    %v12224 = vpop.f32.mrf.mxu0
    %v12225 = vadd.f32 %v11872, %v12224
    %v12226 = vpop.f32.mrf.mxu0
    %v12227 = vadd.f32 %v11874, %v12226
    %v12228 = vpop.f32.mrf.mxu0
    %v12229 = vadd.f32 %v11876, %v12228
    %12230 = vmatprep.mubr.bf16.mxu0 %v9237
    %12231 = vmatmul.mubr.bf16.gmra.mxu0 %v9236
    %v12232 = vpop.f32.mrf.mxu0
    %v12233 = vadd.f32 %v11880, %v12232
    %v12234 = vpop.f32.mrf.mxu0
    %v12235 = vadd.f32 %v11882, %v12234
    %v12236 = vpop.f32.mrf.mxu0
    %v12237 = vadd.f32 %v11884, %v12236
    %v12238 = vpop.f32.mrf.mxu0
    %v12239 = vadd.f32 %v11886, %v12238
    %12240 = vmatprep.mubr.bf16.mxu0 %v9253
    %12241 = vmatmul.mubr.bf16.gmra.mxu0 %v9252
    %v12242 = vpop.f32.mrf.mxu0
    %v12243 = vadd.f32 %v11890, %v12242
    %v12244 = vpop.f32.mrf.mxu0
    %v12245 = vadd.f32 %v11892, %v12244
    %v12246 = vpop.f32.mrf.mxu0
    %v12247 = vadd.f32 %v11894, %v12246
    %v12248 = vpop.f32.mrf.mxu0
    %v12249 = vadd.f32 %v11896, %v12248
    %12250 = vmatprep.mubr.bf16.mxu0 %v9269
    %12251 = vmatmul.mubr.bf16.gmra.mxu0 %v9268
    %v12252 = vpop.f32.mrf.mxu0
    %v12253 = vadd.f32 %v11900, %v12252
    %v12254 = vpop.f32.mrf.mxu0
    %v12255 = vadd.f32 %v11902, %v12254
    %v12256 = vpop.f32.mrf.mxu0
    %v12257 = vadd.f32 %v11904, %v12256
    %v12258 = vpop.f32.mrf.mxu0
    %v12259 = vadd.f32 %v11906, %v12258
    %12260 = vmatprep.mubr.bf16.mxu0 %v9285
    %12261 = vmatmul.mubr.bf16.gmra.mxu0 %v9284
    %v12262 = vpop.f32.mrf.mxu0
    %v12263 = vadd.f32 %v11910, %v12262
    %v12264 = vpop.f32.mrf.mxu0
    %v12265 = vadd.f32 %v11912, %v12264
    %v12266 = vpop.f32.mrf.mxu0
    %v12267 = vadd.f32 %v11914, %v12266
    %v12268 = vpop.f32.mrf.mxu0
    %v12269 = vadd.f32 %v11916, %v12268
    %12270 = vdwg.mxu0
    %12271 = vmatprep.subr.bf16.mxu0 %v6839
    %12272 = vmatpush1.bf16.msra.mxu0 %v6838
    %12273 = vmatprep.subr.bf16.mxu0 %v6837
    %12274 = vmatpush1.bf16.msra.mxu0 %v6836
    %12275 = vmatprep.subr.bf16.mxu0 %v6835
    %12276 = vmatpush1.bf16.msra.mxu0 %v6834
    %12277 = vmatprep.subr.bf16.mxu0 %v6833
    %12278 = vmatpush1.bf16.msra.mxu0 %v6832
    %12279 = vmatprep.subr.bf16.mxu0 %v6831
    %12280 = vmatpush1.bf16.msra.mxu0 %v6830
    %12281 = vmatprep.subr.bf16.mxu0 %v6829
    %12282 = vmatpush1.bf16.msra.mxu0 %v6828
    %12283 = vmatprep.subr.bf16.mxu0 %v6827
    %12284 = vmatpush1.bf16.msra.mxu0 %v6826
    %12285 = vmatprep.subr.bf16.mxu0 %v6825
    %12286 = vmatpush1.bf16.msra.mxu0 %v6824
    %12287 = vmatprep.subr.bf16.mxu0 %v6855
    %12288 = vmatpush2.bf16.msra.mxu0 %v6854
    %12289 = vmatprep.subr.bf16.mxu0 %v6853
    %12290 = vmatpush2.bf16.msra.mxu0 %v6852
    %12291 = vmatprep.subr.bf16.mxu0 %v6851
    %12292 = vmatpush2.bf16.msra.mxu0 %v6850
    %12293 = vmatprep.subr.bf16.mxu0 %v6849
    %12294 = vmatpush2.bf16.msra.mxu0 %v6848
    %12295 = vmatprep.subr.bf16.mxu0 %v6847
    %12296 = vmatpush2.bf16.msra.mxu0 %v6846
    %12297 = vmatprep.subr.bf16.mxu0 %v6845
    %12298 = vmatpush2.bf16.msra.mxu0 %v6844
    %12299 = vmatprep.subr.bf16.mxu0 %v6843
    %12300 = vmatpush2.bf16.msra.mxu0 %v6842
    %12301 = vmatprep.subr.bf16.mxu0 %v6841
    %12302 = vmatpush2.bf16.msra.mxu0 %v6840
    %12303 = vmatprep.mubr.bf16.mxu0 %v8791
    %12304 = vmatmul.mubr.bf16.gmra.mxu0 %v8790
    %v12305 = vpop.f32.mrf.mxu0
    %v12306 = vadd.f32 %v11953, %v12305
    %v12307 = vpop.f32.mrf.mxu0
    %v12308 = vadd.f32 %v11955, %v12307
    %v12309 = vpop.f32.mrf.mxu0
    %v12310 = vadd.f32 %v11957, %v12309
    %v12311 = vpop.f32.mrf.mxu0
    %v12312 = vadd.f32 %v11959, %v12311
    %12313 = vmatprep.mubr.bf16.mxu0 %v8807
    %12314 = vmatmul.mubr.bf16.gmra.mxu0 %v8806
    %v12315 = vpop.f32.mrf.mxu0
    %v12316 = vadd.f32 %v11963, %v12315
    %v12317 = vpop.f32.mrf.mxu0
    %v12318 = vadd.f32 %v11965, %v12317
    %v12319 = vpop.f32.mrf.mxu0
    %v12320 = vadd.f32 %v11967, %v12319
    %v12321 = vpop.f32.mrf.mxu0
    %v12322 = vadd.f32 %v11969, %v12321
    %12323 = vmatprep.mubr.bf16.mxu0 %v8823
    %12324 = vmatmul.mubr.bf16.gmra.mxu0 %v8822
    %v12325 = vpop.f32.mrf.mxu0
    %v12326 = vadd.f32 %v11973, %v12325
    %v12327 = vpop.f32.mrf.mxu0
    %v12328 = vadd.f32 %v11975, %v12327
    %v12329 = vpop.f32.mrf.mxu0
    %v12330 = vadd.f32 %v11977, %v12329
    %v12331 = vpop.f32.mrf.mxu0
    %v12332 = vadd.f32 %v11979, %v12331
    %12333 = vmatprep.mubr.bf16.mxu0 %v8839
    %12334 = vmatmul.mubr.bf16.gmra.mxu0 %v8838
    %v12335 = vpop.f32.mrf.mxu0
    %v12336 = vadd.f32 %v11983, %v12335
    %v12337 = vpop.f32.mrf.mxu0
    %v12338 = vadd.f32 %v11985, %v12337
    %v12339 = vpop.f32.mrf.mxu0
    %v12340 = vadd.f32 %v11987, %v12339
    %v12341 = vpop.f32.mrf.mxu0
    %v12342 = vadd.f32 %v11989, %v12341
    %12343 = vmatprep.mubr.bf16.mxu0 %v8855
    %12344 = vmatmul.mubr.bf16.gmra.mxu0 %v8854
    %v12345 = vpop.f32.mrf.mxu0
    %v12346 = vadd.f32 %v11993, %v12345
    %v12347 = vpop.f32.mrf.mxu0
    %v12348 = vadd.f32 %v11995, %v12347
    %v12349 = vpop.f32.mrf.mxu0
    %v12350 = vadd.f32 %v11997, %v12349
    %v12351 = vpop.f32.mrf.mxu0
    %v12352 = vadd.f32 %v11999, %v12351
    %12353 = vmatprep.mubr.bf16.mxu0 %v8871
    %12354 = vmatmul.mubr.bf16.gmra.mxu0 %v8870
    %v12355 = vpop.f32.mrf.mxu0
    %v12356 = vadd.f32 %v12003, %v12355
    %v12357 = vpop.f32.mrf.mxu0
    %v12358 = vadd.f32 %v12005, %v12357
    %v12359 = vpop.f32.mrf.mxu0
    %v12360 = vadd.f32 %v12007, %v12359
    %v12361 = vpop.f32.mrf.mxu0
    %v12362 = vadd.f32 %v12009, %v12361
    %12363 = vmatprep.mubr.bf16.mxu0 %v8887
    %12364 = vmatmul.mubr.bf16.gmra.mxu0 %v8886
    %v12365 = vpop.f32.mrf.mxu0
    %v12366 = vadd.f32 %v12013, %v12365
    %v12367 = vpop.f32.mrf.mxu0
    %v12368 = vadd.f32 %v12015, %v12367
    %v12369 = vpop.f32.mrf.mxu0
    %v12370 = vadd.f32 %v12017, %v12369
    %v12371 = vpop.f32.mrf.mxu0
    %v12372 = vadd.f32 %v12019, %v12371
    %12373 = vmatprep.mubr.bf16.mxu0 %v8903
    %12374 = vmatmul.mubr.bf16.gmra.mxu0 %v8902
    %v12375 = vpop.f32.mrf.mxu0
    %v12376 = vadd.f32 %v12023, %v12375
    %v12377 = vpop.f32.mrf.mxu0
    %v12378 = vadd.f32 %v12025, %v12377
    %v12379 = vpop.f32.mrf.mxu0
    %v12380 = vadd.f32 %v12027, %v12379
    %v12381 = vpop.f32.mrf.mxu0
    %v12382 = vadd.f32 %v12029, %v12381
    %12383 = vmatprep.mubr.bf16.mxu0 %v8919
    %12384 = vmatmul.mubr.bf16.gmra.mxu0 %v8918
    %v12385 = vpop.f32.mrf.mxu0
    %v12386 = vadd.f32 %v12033, %v12385
    %v12387 = vpop.f32.mrf.mxu0
    %v12388 = vadd.f32 %v12035, %v12387
    %v12389 = vpop.f32.mrf.mxu0
    %v12390 = vadd.f32 %v12037, %v12389
    %v12391 = vpop.f32.mrf.mxu0
    %v12392 = vadd.f32 %v12039, %v12391
    %12393 = vmatprep.mubr.bf16.mxu0 %v8935
    %12394 = vmatmul.mubr.bf16.gmra.mxu0 %v8934
    %v12395 = vpop.f32.mrf.mxu0
    %v12396 = vadd.f32 %v12043, %v12395
    %v12397 = vpop.f32.mrf.mxu0
    %v12398 = vadd.f32 %v12045, %v12397
    %v12399 = vpop.f32.mrf.mxu0
    %v12400 = vadd.f32 %v12047, %v12399
    %v12401 = vpop.f32.mrf.mxu0
    %v12402 = vadd.f32 %v12049, %v12401
    %12403 = vmatprep.mubr.bf16.mxu0 %v8951
    %12404 = vmatmul.mubr.bf16.gmra.mxu0 %v8950
    %v12405 = vpop.f32.mrf.mxu0
    %v12406 = vadd.f32 %v12053, %v12405
    %v12407 = vpop.f32.mrf.mxu0
    %v12408 = vadd.f32 %v12055, %v12407
    %v12409 = vpop.f32.mrf.mxu0
    %v12410 = vadd.f32 %v12057, %v12409
    %v12411 = vpop.f32.mrf.mxu0
    %v12412 = vadd.f32 %v12059, %v12411
    %12413 = vmatprep.mubr.bf16.mxu0 %v8967
    %12414 = vmatmul.mubr.bf16.gmra.mxu0 %v8966
    %v12415 = vpop.f32.mrf.mxu0
    %v12416 = vadd.f32 %v12063, %v12415
    %v12417 = vpop.f32.mrf.mxu0
    %v12418 = vadd.f32 %v12065, %v12417
    %v12419 = vpop.f32.mrf.mxu0
    %v12420 = vadd.f32 %v12067, %v12419
    %v12421 = vpop.f32.mrf.mxu0
    %v12422 = vadd.f32 %v12069, %v12421
    %12423 = vmatprep.mubr.bf16.mxu0 %v8983
    %12424 = vmatmul.mubr.bf16.gmra.mxu0 %v8982
    %v12425 = vpop.f32.mrf.mxu0
    %v12426 = vadd.f32 %v12073, %v12425
    %v12427 = vpop.f32.mrf.mxu0
    %v12428 = vadd.f32 %v12075, %v12427
    %v12429 = vpop.f32.mrf.mxu0
    %v12430 = vadd.f32 %v12077, %v12429
    %v12431 = vpop.f32.mrf.mxu0
    %v12432 = vadd.f32 %v12079, %v12431
    %12433 = vmatprep.mubr.bf16.mxu0 %v8999
    %12434 = vmatmul.mubr.bf16.gmra.mxu0 %v8998
    %v12435 = vpop.f32.mrf.mxu0
    %v12436 = vadd.f32 %v12083, %v12435
    %v12437 = vpop.f32.mrf.mxu0
    %v12438 = vadd.f32 %v12085, %v12437
    %v12439 = vpop.f32.mrf.mxu0
    %v12440 = vadd.f32 %v12087, %v12439
    %v12441 = vpop.f32.mrf.mxu0
    %v12442 = vadd.f32 %v12089, %v12441
    %12443 = vmatprep.mubr.bf16.mxu0 %v9015
    %12444 = vmatmul.mubr.bf16.gmra.mxu0 %v9014
    %v12445 = vpop.f32.mrf.mxu0
    %v12446 = vadd.f32 %v12093, %v12445
    %v12447 = vpop.f32.mrf.mxu0
    %v12448 = vadd.f32 %v12095, %v12447
    %v12449 = vpop.f32.mrf.mxu0
    %v12450 = vadd.f32 %v12097, %v12449
    %v12451 = vpop.f32.mrf.mxu0
    %v12452 = vadd.f32 %v12099, %v12451
    %12453 = vmatprep.mubr.bf16.mxu0 %v9031
    %12454 = vmatmul.mubr.bf16.gmra.mxu0 %v9030
    %v12455 = vpop.f32.mrf.mxu0
    %v12456 = vadd.f32 %v12103, %v12455
    %v12457 = vpop.f32.mrf.mxu0
    %v12458 = vadd.f32 %v12105, %v12457
    %v12459 = vpop.f32.mrf.mxu0
    %v12460 = vadd.f32 %v12107, %v12459
    %v12461 = vpop.f32.mrf.mxu0
    %v12462 = vadd.f32 %v12109, %v12461
    %12463 = vmatprep.mubr.bf16.mxu0 %v9047
    %12464 = vmatmul.mubr.bf16.gmra.mxu0 %v9046
    %v12465 = vpop.f32.mrf.mxu0
    %v12466 = vadd.f32 %v12113, %v12465
    %v12467 = vpop.f32.mrf.mxu0
    %v12468 = vadd.f32 %v12115, %v12467
    %v12469 = vpop.f32.mrf.mxu0
    %v12470 = vadd.f32 %v12117, %v12469
    %v12471 = vpop.f32.mrf.mxu0
    %v12472 = vadd.f32 %v12119, %v12471
    %12473 = vmatprep.mubr.bf16.mxu0 %v9063
    %12474 = vmatmul.mubr.bf16.gmra.mxu0 %v9062
    %v12475 = vpop.f32.mrf.mxu0
    %v12476 = vadd.f32 %v12123, %v12475
    %v12477 = vpop.f32.mrf.mxu0
    %v12478 = vadd.f32 %v12125, %v12477
    %v12479 = vpop.f32.mrf.mxu0
    %v12480 = vadd.f32 %v12127, %v12479
    %v12481 = vpop.f32.mrf.mxu0
    %v12482 = vadd.f32 %v12129, %v12481
    %12483 = vmatprep.mubr.bf16.mxu0 %v9079
    %12484 = vmatmul.mubr.bf16.gmra.mxu0 %v9078
    %v12485 = vpop.f32.mrf.mxu0
    %v12486 = vadd.f32 %v12133, %v12485
    %v12487 = vpop.f32.mrf.mxu0
    %v12488 = vadd.f32 %v12135, %v12487
    %v12489 = vpop.f32.mrf.mxu0
    %v12490 = vadd.f32 %v12137, %v12489
    %v12491 = vpop.f32.mrf.mxu0
    %v12492 = vadd.f32 %v12139, %v12491
    %12493 = vmatprep.mubr.bf16.mxu0 %v9095
    %12494 = vmatmul.mubr.bf16.gmra.mxu0 %v9094
    %v12495 = vpop.f32.mrf.mxu0
    %v12496 = vadd.f32 %v12143, %v12495
    %v12497 = vpop.f32.mrf.mxu0
    %v12498 = vadd.f32 %v12145, %v12497
    %v12499 = vpop.f32.mrf.mxu0
    %v12500 = vadd.f32 %v12147, %v12499
    %v12501 = vpop.f32.mrf.mxu0
    %v12502 = vadd.f32 %v12149, %v12501
    %12503 = vmatprep.mubr.bf16.mxu0 %v9111
    %12504 = vmatmul.mubr.bf16.gmra.mxu0 %v9110
    %v12505 = vpop.f32.mrf.mxu0
    %v12506 = vadd.f32 %v12153, %v12505
    %v12507 = vpop.f32.mrf.mxu0
    %v12508 = vadd.f32 %v12155, %v12507
    %v12509 = vpop.f32.mrf.mxu0
    %v12510 = vadd.f32 %v12157, %v12509
    %v12511 = vpop.f32.mrf.mxu0
    %v12512 = vadd.f32 %v12159, %v12511
    %12513 = vmatprep.mubr.bf16.mxu0 %v9127
    %12514 = vmatmul.mubr.bf16.gmra.mxu0 %v9126
    %v12515 = vpop.f32.mrf.mxu0
    %v12516 = vadd.f32 %v12163, %v12515
    %v12517 = vpop.f32.mrf.mxu0
    %v12518 = vadd.f32 %v12165, %v12517
    %v12519 = vpop.f32.mrf.mxu0
    %v12520 = vadd.f32 %v12167, %v12519
    %v12521 = vpop.f32.mrf.mxu0
    %v12522 = vadd.f32 %v12169, %v12521
    %12523 = vmatprep.mubr.bf16.mxu0 %v9143
    %12524 = vmatmul.mubr.bf16.gmra.mxu0 %v9142
    %v12525 = vpop.f32.mrf.mxu0
    %v12526 = vadd.f32 %v12173, %v12525
    %v12527 = vpop.f32.mrf.mxu0
    %v12528 = vadd.f32 %v12175, %v12527
    %v12529 = vpop.f32.mrf.mxu0
    %v12530 = vadd.f32 %v12177, %v12529
    %v12531 = vpop.f32.mrf.mxu0
    %v12532 = vadd.f32 %v12179, %v12531
    %12533 = vmatprep.mubr.bf16.mxu0 %v9159
    %12534 = vmatmul.mubr.bf16.gmra.mxu0 %v9158
    %v12535 = vpop.f32.mrf.mxu0
    %v12536 = vadd.f32 %v12183, %v12535
    %v12537 = vpop.f32.mrf.mxu0
    %v12538 = vadd.f32 %v12185, %v12537
    %v12539 = vpop.f32.mrf.mxu0
    %v12540 = vadd.f32 %v12187, %v12539
    %v12541 = vpop.f32.mrf.mxu0
    %v12542 = vadd.f32 %v12189, %v12541
    %12543 = vmatprep.mubr.bf16.mxu0 %v9175
    %12544 = vmatmul.mubr.bf16.gmra.mxu0 %v9174
    %v12545 = vpop.f32.mrf.mxu0
    %v12546 = vadd.f32 %v12193, %v12545
    %v12547 = vpop.f32.mrf.mxu0
    %v12548 = vadd.f32 %v12195, %v12547
    %v12549 = vpop.f32.mrf.mxu0
    %v12550 = vadd.f32 %v12197, %v12549
    %v12551 = vpop.f32.mrf.mxu0
    %v12552 = vadd.f32 %v12199, %v12551
    %12553 = vmatprep.mubr.bf16.mxu0 %v9191
    %12554 = vmatmul.mubr.bf16.gmra.mxu0 %v9190
    %v12555 = vpop.f32.mrf.mxu0
    %v12556 = vadd.f32 %v12203, %v12555
    %v12557 = vpop.f32.mrf.mxu0
    %v12558 = vadd.f32 %v12205, %v12557
    %v12559 = vpop.f32.mrf.mxu0
    %v12560 = vadd.f32 %v12207, %v12559
    %v12561 = vpop.f32.mrf.mxu0
    %v12562 = vadd.f32 %v12209, %v12561
    %12563 = vmatprep.mubr.bf16.mxu0 %v9207
    %12564 = vmatmul.mubr.bf16.gmra.mxu0 %v9206
    %v12565 = vpop.f32.mrf.mxu0
    %v12566 = vadd.f32 %v12213, %v12565
    %v12567 = vpop.f32.mrf.mxu0
    %v12568 = vadd.f32 %v12215, %v12567
    %v12569 = vpop.f32.mrf.mxu0
    %v12570 = vadd.f32 %v12217, %v12569
    %v12571 = vpop.f32.mrf.mxu0
    %v12572 = vadd.f32 %v12219, %v12571
    %12573 = vmatprep.mubr.bf16.mxu0 %v9223
    %12574 = vmatmul.mubr.bf16.gmra.mxu0 %v9222
    %v12575 = vpop.f32.mrf.mxu0
    %v12576 = vadd.f32 %v12223, %v12575
    %v12577 = vpop.f32.mrf.mxu0
    %v12578 = vadd.f32 %v12225, %v12577
    %v12579 = vpop.f32.mrf.mxu0
    %v12580 = vadd.f32 %v12227, %v12579
    %v12581 = vpop.f32.mrf.mxu0
    %v12582 = vadd.f32 %v12229, %v12581
    %12583 = vmatprep.mubr.bf16.mxu0 %v9239
    %12584 = vmatmul.mubr.bf16.gmra.mxu0 %v9238
    %v12585 = vpop.f32.mrf.mxu0
    %v12586 = vadd.f32 %v12233, %v12585
    %v12587 = vpop.f32.mrf.mxu0
    %v12588 = vadd.f32 %v12235, %v12587
    %v12589 = vpop.f32.mrf.mxu0
    %v12590 = vadd.f32 %v12237, %v12589
    %v12591 = vpop.f32.mrf.mxu0
    %v12592 = vadd.f32 %v12239, %v12591
    %12593 = vmatprep.mubr.bf16.mxu0 %v9255
    %12594 = vmatmul.mubr.bf16.gmra.mxu0 %v9254
    %v12595 = vpop.f32.mrf.mxu0
    %v12596 = vadd.f32 %v12243, %v12595
    %v12597 = vpop.f32.mrf.mxu0
    %v12598 = vadd.f32 %v12245, %v12597
    %v12599 = vpop.f32.mrf.mxu0
    %v12600 = vadd.f32 %v12247, %v12599
    %v12601 = vpop.f32.mrf.mxu0
    %v12602 = vadd.f32 %v12249, %v12601
    %12603 = vmatprep.mubr.bf16.mxu0 %v9271
    %12604 = vmatmul.mubr.bf16.gmra.mxu0 %v9270
    %v12605 = vpop.f32.mrf.mxu0
    %v12606 = vadd.f32 %v12253, %v12605
    %v12607 = vpop.f32.mrf.mxu0
    %v12608 = vadd.f32 %v12255, %v12607
    %v12609 = vpop.f32.mrf.mxu0
    %v12610 = vadd.f32 %v12257, %v12609
    %v12611 = vpop.f32.mrf.mxu0
    %v12612 = vadd.f32 %v12259, %v12611
    %12613 = vmatprep.mubr.bf16.mxu0 %v9287
    %12614 = vmatmul.mubr.bf16.gmra.mxu0 %v9286
    %v12615 = vpop.f32.mrf.mxu0
    %v12616 = vadd.f32 %v12263, %v12615
    %v12617 = vpop.f32.mrf.mxu0
    %v12618 = vadd.f32 %v12265, %v12617
    %v12619 = vpop.f32.mrf.mxu0
    %v12620 = vadd.f32 %v12267, %v12619
    %v12621 = vpop.f32.mrf.mxu0
    %v12622 = vadd.f32 %v12269, %v12621
    %12623 = vdwg.mxu0
    %v12624 = vmax.f32 %v12306, 0.0
    %v12625 = vmax.f32 %v12308, 0.0
    %v12626 = vmax.f32 %v12310, 0.0
    %v12627 = vmax.f32 %v12312, 0.0
    %v12628 = vmax.f32 %v12316, 0.0
    %v12629 = vmax.f32 %v12318, 0.0
    %v12630 = vmax.f32 %v12320, 0.0
    %v12631 = vmax.f32 %v12322, 0.0
    %v12632 = vmax.f32 %v12326, 0.0
    %v12633 = vmax.f32 %v12328, 0.0
    %v12634 = vmax.f32 %v12330, 0.0
    %v12635 = vmax.f32 %v12332, 0.0
    %v12636 = vmax.f32 %v12336, 0.0
    %v12637 = vmax.f32 %v12338, 0.0
    %v12638 = vmax.f32 %v12340, 0.0
    %v12639 = vmax.f32 %v12342, 0.0
    %v12640 = vmax.f32 %v12346, 0.0
    %v12641 = vmax.f32 %v12348, 0.0
    %v12642 = vmax.f32 %v12350, 0.0
    %v12643 = vmax.f32 %v12352, 0.0
    %v12644 = vmax.f32 %v12356, 0.0
    %v12645 = vmax.f32 %v12358, 0.0
    %v12646 = vmax.f32 %v12360, 0.0
    %v12647 = vmax.f32 %v12362, 0.0
    %v12648 = vmax.f32 %v12366, 0.0
    %v12649 = vmax.f32 %v12368, 0.0
    %v12650 = vmax.f32 %v12370, 0.0
    %v12651 = vmax.f32 %v12372, 0.0
    %v12652 = vmax.f32 %v12376, 0.0
    %v12653 = vmax.f32 %v12378, 0.0
    %v12654 = vmax.f32 %v12380, 0.0
    %v12655 = vmax.f32 %v12382, 0.0
    %v12656 = vmax.f32 %v12386, 0.0
    %v12657 = vmax.f32 %v12388, 0.0
    %v12658 = vmax.f32 %v12390, 0.0
    %v12659 = vmax.f32 %v12392, 0.0
    %v12660 = vmax.f32 %v12396, 0.0
    %v12661 = vmax.f32 %v12398, 0.0
    %v12662 = vmax.f32 %v12400, 0.0
    %v12663 = vmax.f32 %v12402, 0.0
    %v12664 = vmax.f32 %v12406, 0.0
    %v12665 = vmax.f32 %v12408, 0.0
    %v12666 = vmax.f32 %v12410, 0.0
    %v12667 = vmax.f32 %v12412, 0.0
    %v12668 = vmax.f32 %v12416, 0.0
    %v12669 = vmax.f32 %v12418, 0.0
    %v12670 = vmax.f32 %v12420, 0.0
    %v12671 = vmax.f32 %v12422, 0.0
    %v12672 = vmax.f32 %v12426, 0.0
    %v12673 = vmax.f32 %v12428, 0.0
    %v12674 = vmax.f32 %v12430, 0.0
    %v12675 = vmax.f32 %v12432, 0.0
    %v12676 = vmax.f32 %v12436, 0.0
    %v12677 = vmax.f32 %v12438, 0.0
    %v12678 = vmax.f32 %v12440, 0.0
    %v12679 = vmax.f32 %v12442, 0.0
    %v12680 = vmax.f32 %v12446, 0.0
    %v12681 = vmax.f32 %v12448, 0.0
    %v12682 = vmax.f32 %v12450, 0.0
    %v12683 = vmax.f32 %v12452, 0.0
    %v12684 = vmax.f32 %v12456, 0.0
    %v12685 = vmax.f32 %v12458, 0.0
    %v12686 = vmax.f32 %v12460, 0.0
    %v12687 = vmax.f32 %v12462, 0.0
    %v12688 = vmax.f32 %v12466, 0.0
    %v12689 = vmax.f32 %v12468, 0.0
    %v12690 = vmax.f32 %v12470, 0.0
    %v12691 = vmax.f32 %v12472, 0.0
    %v12692 = vmax.f32 %v12476, 0.0
    %v12693 = vmax.f32 %v12478, 0.0
    %v12694 = vmax.f32 %v12480, 0.0
    %v12695 = vmax.f32 %v12482, 0.0
    %v12696 = vmax.f32 %v12486, 0.0
    %v12697 = vmax.f32 %v12488, 0.0
    %v12698 = vmax.f32 %v12490, 0.0
    %v12699 = vmax.f32 %v12492, 0.0
    %v12700 = vmax.f32 %v12496, 0.0
    %v12701 = vmax.f32 %v12498, 0.0
    %v12702 = vmax.f32 %v12500, 0.0
    %v12703 = vmax.f32 %v12502, 0.0
    %v12704 = vmax.f32 %v12506, 0.0
    %v12705 = vmax.f32 %v12508, 0.0
    %v12706 = vmax.f32 %v12510, 0.0
    %v12707 = vmax.f32 %v12512, 0.0
    %v12708 = vmax.f32 %v12516, 0.0
    %v12709 = vmax.f32 %v12518, 0.0
    %v12710 = vmax.f32 %v12520, 0.0
    %v12711 = vmax.f32 %v12522, 0.0
    %v12712 = vmax.f32 %v12526, 0.0
    %v12713 = vmax.f32 %v12528, 0.0
    %v12714 = vmax.f32 %v12530, 0.0
    %v12715 = vmax.f32 %v12532, 0.0
    %v12716 = vmax.f32 %v12536, 0.0
    %v12717 = vmax.f32 %v12538, 0.0
    %v12718 = vmax.f32 %v12540, 0.0
    %v12719 = vmax.f32 %v12542, 0.0
    %v12720 = vmax.f32 %v12546, 0.0
    %v12721 = vmax.f32 %v12548, 0.0
    %v12722 = vmax.f32 %v12550, 0.0
    %v12723 = vmax.f32 %v12552, 0.0
    %v12724 = vmax.f32 %v12556, 0.0
    %v12725 = vmax.f32 %v12558, 0.0
    %v12726 = vmax.f32 %v12560, 0.0
    %v12727 = vmax.f32 %v12562, 0.0
    %v12728 = vmax.f32 %v12566, 0.0
    %v12729 = vmax.f32 %v12568, 0.0
    %v12730 = vmax.f32 %v12570, 0.0
    %v12731 = vmax.f32 %v12572, 0.0
    %v12732 = vmax.f32 %v12576, 0.0
    %v12733 = vmax.f32 %v12578, 0.0
    %v12734 = vmax.f32 %v12580, 0.0
    %v12735 = vmax.f32 %v12582, 0.0
    %v12736 = vmax.f32 %v12586, 0.0
    %v12737 = vmax.f32 %v12588, 0.0
    %v12738 = vmax.f32 %v12590, 0.0
    %v12739 = vmax.f32 %v12592, 0.0
    %v12740 = vmax.f32 %v12596, 0.0
    %v12741 = vmax.f32 %v12598, 0.0
    %v12742 = vmax.f32 %v12600, 0.0
    %v12743 = vmax.f32 %v12602, 0.0
    %v12744 = vmax.f32 %v12606, 0.0
    %v12745 = vmax.f32 %v12608, 0.0
    %v12746 = vmax.f32 %v12610, 0.0
    %v12747 = vmax.f32 %v12612, 0.0
    %v12748 = vmax.f32 %v12616, 0.0
    %v12749 = vmax.f32 %v12618, 0.0
    %v12750 = vmax.f32 %v12620, 0.0
    %v12751 = vmax.f32 %v12622, 0.0
    %v12752 = vld [vmem:[#allocation10] sm:$0xff]
    %v12753 = vld [vmem:[#allocation10 + $0x8] sm:$0xff]
    %v12754 = vpack.c.bf16 %v12626, %v12624
    %v12755 = vpack.c.bf16 %v12627, %v12625
    %v12756 = vpack.c.bf16 %v12630, %v12628
    %v12757 = vpack.c.bf16 %v12631, %v12629
    %v12758 = vpack.c.bf16 %v12634, %v12632
    %v12759 = vpack.c.bf16 %v12635, %v12633
    %v12760 = vpack.c.bf16 %v12638, %v12636
    %v12761 = vpack.c.bf16 %v12639, %v12637
    %v12762 = vpack.c.bf16 %v12642, %v12640
    %v12763 = vpack.c.bf16 %v12643, %v12641
    %v12764 = vpack.c.bf16 %v12646, %v12644
    %v12765 = vpack.c.bf16 %v12647, %v12645
    %v12766 = vpack.c.bf16 %v12650, %v12648
    %v12767 = vpack.c.bf16 %v12651, %v12649
    %v12768 = vpack.c.bf16 %v12654, %v12652
    %v12769 = vpack.c.bf16 %v12655, %v12653
    %v12770 = vpack.c.bf16 %v12658, %v12656
    %v12771 = vpack.c.bf16 %v12659, %v12657
    %v12772 = vpack.c.bf16 %v12662, %v12660
    %v12773 = vpack.c.bf16 %v12663, %v12661
    %v12774 = vpack.c.bf16 %v12666, %v12664
    %v12775 = vpack.c.bf16 %v12667, %v12665
    %v12776 = vpack.c.bf16 %v12670, %v12668
    %v12777 = vpack.c.bf16 %v12671, %v12669
    %v12778 = vpack.c.bf16 %v12674, %v12672
    %v12779 = vpack.c.bf16 %v12675, %v12673
    %v12780 = vpack.c.bf16 %v12678, %v12676
    %v12781 = vpack.c.bf16 %v12679, %v12677
    %v12782 = vpack.c.bf16 %v12682, %v12680
    %v12783 = vpack.c.bf16 %v12683, %v12681
    %v12784 = vpack.c.bf16 %v12686, %v12684
    %v12785 = vpack.c.bf16 %v12687, %v12685
    %v12786 = vpack.c.bf16 %v12690, %v12688
    %v12787 = vpack.c.bf16 %v12691, %v12689
    %v12788 = vpack.c.bf16 %v12694, %v12692
    %v12789 = vpack.c.bf16 %v12695, %v12693
    %v12790 = vpack.c.bf16 %v12698, %v12696
    %v12791 = vpack.c.bf16 %v12699, %v12697
    %v12792 = vpack.c.bf16 %v12702, %v12700
    %v12793 = vpack.c.bf16 %v12703, %v12701
    %v12794 = vpack.c.bf16 %v12706, %v12704
    %v12795 = vpack.c.bf16 %v12707, %v12705
    %v12796 = vpack.c.bf16 %v12710, %v12708
    %v12797 = vpack.c.bf16 %v12711, %v12709
    %v12798 = vpack.c.bf16 %v12714, %v12712
    %v12799 = vpack.c.bf16 %v12715, %v12713
    %v12800 = vpack.c.bf16 %v12718, %v12716
    %v12801 = vpack.c.bf16 %v12719, %v12717
    %v12802 = vpack.c.bf16 %v12722, %v12720
    %v12803 = vpack.c.bf16 %v12723, %v12721
    %v12804 = vpack.c.bf16 %v12726, %v12724
    %v12805 = vpack.c.bf16 %v12727, %v12725
    %v12806 = vpack.c.bf16 %v12730, %v12728
    %v12807 = vpack.c.bf16 %v12731, %v12729
    %v12808 = vpack.c.bf16 %v12734, %v12732
    %v12809 = vpack.c.bf16 %v12735, %v12733
    %v12810 = vpack.c.bf16 %v12738, %v12736
    %v12811 = vpack.c.bf16 %v12739, %v12737
    %v12812 = vpack.c.bf16 %v12742, %v12740
    %v12813 = vpack.c.bf16 %v12743, %v12741
    %v12814 = vpack.c.bf16 %v12746, %v12744
    %v12815 = vpack.c.bf16 %v12747, %v12745
    %v12816 = vpack.c.bf16 %v12750, %v12748
    %v12817 = vpack.c.bf16 %v12751, %v12749
    %v12818 = vld [vmem:[%s13] sm:$0xff]
    %12820 = vset.pattern.permute.xlu0 0
    %12821 = vperm.xlu0 %12820, %v12818
    %v12822 = vpop.permute.xlu0 %12821
    %v12826 = vunpack.c.l.b16 %v12752
    %v12827 = vunpack.c.h.b16 %v12752
    %v12828 = vunpack.c.l.b16 %v12753
    %v12829 = vunpack.c.h.b16 %v12753
    %v12830 = vpack.c.b16 %v12826, %v12826
    %v12831 = vpack.c.b16 %v12827, %v12827
    %v12832 = vpack.c.b16 %v12828, %v12828
    %v12833 = vpack.c.b16 %v12829, %v12829
    %12838 = vmatprep.subr.bf16.mxu0 %v12769
    %12839 = vmatpush1.bf16.msra.mxu0 %v12768
    %12840 = vmatprep.subr.bf16.mxu0 %v12767
    %12841 = vmatpush1.bf16.msra.mxu0 %v12766
    %12842 = vmatprep.subr.bf16.mxu0 %v12765
    %12843 = vmatpush1.bf16.msra.mxu0 %v12764
    %12844 = vmatprep.subr.bf16.mxu0 %v12763
    %12845 = vmatpush1.bf16.msra.mxu0 %v12762
    %12846 = vmatprep.subr.bf16.mxu0 %v12761
    %12847 = vmatpush1.bf16.msra.mxu0 %v12760
    %12848 = vmatprep.subr.bf16.mxu0 %v12759
    %12849 = vmatpush1.bf16.msra.mxu0 %v12758
    %12850 = vmatprep.subr.bf16.mxu0 %v12757
    %12851 = vmatpush1.bf16.msra.mxu0 %v12756
    %12852 = vmatprep.subr.bf16.mxu0 %v12755
    %12853 = vmatpush1.bf16.msra.mxu0 %v12754
    %12854 = vmatprep.subr.bf16.mxu0 %v12785
    %12855 = vmatpush2.bf16.msra.mxu0 %v12784
    %12856 = vmatprep.subr.bf16.mxu0 %v12783
    %12857 = vmatpush2.bf16.msra.mxu0 %v12782
    %12858 = vmatprep.subr.bf16.mxu0 %v12781
    %12859 = vmatpush2.bf16.msra.mxu0 %v12780
    %12860 = vmatprep.subr.bf16.mxu0 %v12779
    %12861 = vmatpush2.bf16.msra.mxu0 %v12778
    %12862 = vmatprep.subr.bf16.mxu0 %v12777
    %12863 = vmatpush2.bf16.msra.mxu0 %v12776
    %12864 = vmatprep.subr.bf16.mxu0 %v12775
    %12865 = vmatpush2.bf16.msra.mxu0 %v12774
    %12866 = vmatprep.subr.bf16.mxu0 %v12773
    %12867 = vmatpush2.bf16.msra.mxu0 %v12772
    %12868 = vmatprep.subr.bf16.mxu0 %v12771
    %12869 = vmatpush2.bf16.msra.mxu0 %v12770
    %12870 = vmatprep.mubr.bf16.mxu0 %v12831
    %12871 = vmatmul.mubr.bf16.gmra.mxu0 %v12830
    %v12872 = vpop.f32.mrf.mxu0
    %v12873 = vadd.f32 %v12822, %v12872
    %v12874 = vpop.f32.mrf.mxu0
    %v12875 = vadd.f32 %v12822, %v12874
    %v12876 = vpop.f32.mrf.mxu0
    %v12877 = vpop.f32.mrf.mxu0
    %12878 = vdwg.mxu0
    %12879 = vmatprep.subr.bf16.mxu0 %v12801
    %12880 = vmatpush1.bf16.msra.mxu0 %v12800
    %12881 = vmatprep.subr.bf16.mxu0 %v12799
    %12882 = vmatpush1.bf16.msra.mxu0 %v12798
    %12883 = vmatprep.subr.bf16.mxu0 %v12797
    %12884 = vmatpush1.bf16.msra.mxu0 %v12796
    %12885 = vmatprep.subr.bf16.mxu0 %v12795
    %12886 = vmatpush1.bf16.msra.mxu0 %v12794
    %12887 = vmatprep.subr.bf16.mxu0 %v12793
    %12888 = vmatpush1.bf16.msra.mxu0 %v12792
    %12889 = vmatprep.subr.bf16.mxu0 %v12791
    %12890 = vmatpush1.bf16.msra.mxu0 %v12790
    %12891 = vmatprep.subr.bf16.mxu0 %v12789
    %12892 = vmatpush1.bf16.msra.mxu0 %v12788
    %12893 = vmatprep.subr.bf16.mxu0 %v12787
    %12894 = vmatpush1.bf16.msra.mxu0 %v12786
    %12895 = vmatprep.subr.bf16.mxu0 %v12817
    %12896 = vmatpush2.bf16.msra.mxu0 %v12816
    %12897 = vmatprep.subr.bf16.mxu0 %v12815
    %12898 = vmatpush2.bf16.msra.mxu0 %v12814
    %12899 = vmatprep.subr.bf16.mxu0 %v12813
    %12900 = vmatpush2.bf16.msra.mxu0 %v12812
    %12901 = vmatprep.subr.bf16.mxu0 %v12811
    %12902 = vmatpush2.bf16.msra.mxu0 %v12810
    %12903 = vmatprep.subr.bf16.mxu0 %v12809
    %12904 = vmatpush2.bf16.msra.mxu0 %v12808
    %12905 = vmatprep.subr.bf16.mxu0 %v12807
    %12906 = vmatpush2.bf16.msra.mxu0 %v12806
    %12907 = vmatprep.subr.bf16.mxu0 %v12805
    %12908 = vmatpush2.bf16.msra.mxu0 %v12804
    %12909 = vmatprep.subr.bf16.mxu0 %v12803
    %12910 = vmatpush2.bf16.msra.mxu0 %v12802
    %12911 = vmatprep.mubr.bf16.mxu0 %v12833
    %12912 = vmatmul.mubr.bf16.gmra.mxu0 %v12832
    %v12913 = vpop.f32.mrf.mxu0
    %v12914 = vadd.f32 %v12873, %v12913
    %v12915 = vpop.f32.mrf.mxu0
    %v12916 = vadd.f32 %v12875, %v12915
    %v12917 = vpop.f32.mrf.mxu0
    %v12918 = vpop.f32.mrf.mxu0
    %12919 = vdwg.mxu0
    %12920 = vst [vmem:[%s14] sm:$0xff] %v12914
    %12921 = vst.msk [vmem:[%s14 + $0x8] sm:$0xff] %vm107, %v12916
    // Predicated region
    $region74: #{mario_buttons_forward.1} parent=1 // pred_check
      _
    $region75: #{mario_buttons_forward.1} parent=1 // pred_check_branch
      %12923 = sbr.rel (0) target = $region77
    $region76: #{mario_buttons_forward.1} parent=1 // pred_region
      _
    $region77: #{mario_buttons_forward.1} parent=1 // pred_fallthru
      _
    // Predicated region
    $region78: #{mario_buttons_forward.1} parent=1 // pred_check
      _
    $region79: #{mario_buttons_forward.1} parent=1 // pred_check_branch
      %12925 = sbr.rel (0) target = $region81
    $region80: #{mario_buttons_forward.1} parent=1 // pred_region
      _
    $region81: #{mario_buttons_forward.1} parent=1 // pred_fallthru
      _
    %12926 = vsyncpa [#allocation6], 1
    %12927 = vsyncpa [#allocation8], 1
    %12928 = vsyncpa [#allocation11], 1
  %12929 = vsyncmov [#allocation4]
  %s12930 = vpop.sfrf %12929
  %p12931 = scmp.eq.s32.totalorder %s12930, 0
  %p12932 = pneg %p12931
  %12934 = shalt.err (%p12932)

</llo_original>
